<compile_context>
chip_gen: v7x
topology: tpu7x:2x2x1
jax: 0.10.0
libtpu: 0.0.40
codegen_flags: <defaults>
</compile_context>

<pallas_src>
import functools

import numpy as np

import jax
import jax.numpy as jnp
from jax.experimental import pallas as pl
from jax.experimental.pallas import tpu as pltpu

# Fixed by the PyTorch module definition.
_CONV_KS = ((8, 4), (4, 2), (3, 1))          # (kernel, stride) per conv layer
_CONV_CH = (32, 64, 64)                      # output channels per conv layer
_HEAD_HIDDEN = (512, 512, 1024, 512, 128)    # hidden dims of policy/value MLPs


# ----------------------------------------------------------------------------
# Fully fused forward kernel: conv1 -> conv2 -> conv3 -> one MLP head
# (grid step i: i==0 policy head, i==1 value head)
# ----------------------------------------------------------------------------
def _fused_forward_kernel(*refs, n_head_layers, n_batch, n_pos3):
    (p1_ref, w1_ref, b1_ref,
     sel2_ref, w2_ref, b2_ref,
     sel3_ref, w3_ref, b3_ref) = refs[:9]
    hw_refs = refs[9:9 + n_head_layers]
    hb_refs = refs[9 + n_head_layers:9 + 2 * n_head_layers]
    o_ref = refs[9 + 2 * n_head_layers]
    co_ref = refs[9 + 2 * n_head_layers + 1]          # only used when n_pos3 > 1

    f32 = jnp.float32
    bf16 = jnp.bfloat16

    # ---- conv1: relu(patches1 @ W1 + b1) ------------------------------------
    h1 = jnp.dot(p1_ref[...], w1_ref[...], preferred_element_type=f32)
    h1 = jnp.maximum(h1 + b1_ref[...], 0.0).astype(bf16)          # (M1, 32)

    # ---- conv2: accumulate over the 16 kernel offsets -----------------------
    # Patch gathering is an exact 0/1-selector matmul (rows of h1), so no
    # strided reads / reshapes are needed inside the kernel.
    n_off2 = w2_ref.shape[0]
    acc2 = None
    for t in range(n_off2):
        g = jnp.dot(sel2_ref[t], h1, preferred_element_type=f32).astype(bf16)
        contrib = jnp.dot(g, w2_ref[t], preferred_element_type=f32)
        acc2 = contrib if acc2 is None else acc2 + contrib
    h2 = jnp.maximum(acc2 + b2_ref[...], 0.0).astype(bf16)         # (M2, 64)

    # ---- conv3 (+ flatten to (n_batch, n_pos3 * 64)) ------------------------
    n_off3 = w3_ref.shape[0]
    c3 = w3_ref.shape[2]
    conv_out = None
    for p in range(n_pos3):
        acc3 = None
        for t in range(n_off3):
            g = jnp.dot(sel3_ref[p * n_off3 + t], h2,
                        preferred_element_type=f32).astype(bf16)    # (N, M2)@(M2,64)
            contrib = jnp.dot(g, w3_ref[t], preferred_element_type=f32)
            acc3 = contrib if acc3 is None else acc3 + contrib
        y3 = jnp.maximum(acc3 + b3_ref[...], 0.0).astype(bf16)      # (N, 64)
        if n_pos3 == 1:
            conv_out = y3
        else:
            co_ref[:, p * c3:(p + 1) * c3] = y3
    if n_pos3 > 1:
        conv_out = co_ref[...]                                       # (N, P*64)

    # ---- this grid step's MLP head (6 Linears, ReLU between) ---------------
    h = conv_out
    y = None
    for l in range(n_head_layers):
        y = jnp.dot(h, hw_refs[l][0], preferred_element_type=f32) + hb_refs[l][0]
        if l < n_head_layers - 1:
            h = jnp.maximum(y, 0.0).astype(bf16)
    o_ref[0] = y.astype(o_ref.dtype)


def _const2(i):
    return (0, 0)


def _const3(i):
    return (0, 0, 0)


def _fused_forward(patches1, conv_params, sel2, sel3, head_w, head_b,
                   *, n_batch, n_pos3):
    """One pallas_call for the entire network. Returns (2, n_batch, NA) f32."""
    (w1, b1), (w2, b2), (w3, b3) = conv_params
    n_layers = len(head_w)
    NA = head_w[-1].shape[-1]
    c3 = w3.shape[2]

    in_specs = [
        pl.BlockSpec(patches1.shape, _const2),
        pl.BlockSpec(w1.shape, _const2),
        pl.BlockSpec(b1.shape, _const2),
        pl.BlockSpec(sel2.shape, _const3),
        pl.BlockSpec(w2.shape, _const3),
        pl.BlockSpec(b2.shape, _const2),
        pl.BlockSpec(sel3.shape, _const3),
        pl.BlockSpec(w3.shape, _const3),
        pl.BlockSpec(b3.shape, _const2),
    ]
    for w in head_w:
        in_specs.append(pl.BlockSpec((1,) + w.shape[1:], lambda i: (i, 0, 0)))
    for b in head_b:
        in_specs.append(pl.BlockSpec((1,) + b.shape[1:], lambda i: (i, 0, 0)))

    kernel = functools.partial(_fused_forward_kernel,
                               n_head_layers=n_layers,
                               n_batch=n_batch,
                               n_pos3=n_pos3)

    return pl.pallas_call(
        kernel,
        out_shape=jax.ShapeDtypeStruct((2, n_batch, NA), jnp.float32),
        grid=(2,),
        in_specs=in_specs,
        out_specs=pl.BlockSpec((1, n_batch, NA), lambda i: (i, 0, 0)),
        scratch_shapes=[pltpu.VMEM((n_batch, n_pos3 * c3), jnp.bfloat16)],
        compiler_params=pltpu.CompilerParams(
            dimension_semantics=("parallel",),
            vmem_limit_bytes=32 * 1024 * 1024),
    )(patches1, w1, b1, sel2, w2, b2, sel3, w3, b3, *head_w, *head_b)


# ----------------------------------------------------------------------------
# conv1 im2col (wrapper-side, a handful of XLA ops) + generic fallback
# Patch column order is always the canonical (kh, kw, cin).
# ----------------------------------------------------------------------------
def _im2col_generic(x, k, s):
    N, H, W, C = x.shape
    OH = (H - k) // s + 1
    OW = (W - k) // s + 1
    cols = []
    for i in range(k):
        for j in range(k):
            cols.append(x[:, i:i + s * (OH - 1) + 1:s, j:j + s * (OW - 1) + 1:s, :])
    patches = jnp.stack(cols, axis=3)                     # (N, OH, OW, k*k, C)
    return patches.reshape(N * OH * OW, k * k * C), N, OH, OW


def _im2col_conv1(x):
    k, s = _CONV_KS[0]
    N, H, W, C = x.shape
    OH = (H - k) // s + 1
    OW = (W - k) // s + 1
    if H % s == 0 and W % s == 0 and k % s == 0:
        q = k // s                                        # = 2 for conv1
        xb = x.reshape(N, H // s, s, W // s, s, C)
        pieces = []
        for bi in range(q):
            for bj in range(q):
                pieces.append(xb[:, bi:bi + OH, :, bj:bj + OW, :, :])
        cols = jnp.stack(pieces, axis=0).reshape(q, q, N, OH, s, OW, s, C)
        cols = jnp.transpose(cols, (2, 3, 5, 0, 4, 1, 6, 7))  # (N,OH,OW,bi,si,bj,sj,C)
        # (bi,si)->kh and (bj,sj)->kw flatten exactly to (kh, kw, cin) order.
        patches = cols.reshape(N * OH * OW, k * k * C)
        return patches, N, OH, OW
    return _im2col_generic(x, k, s)


# ----------------------------------------------------------------------------
# Conv geometry + in-kernel patch-gather selector constants
# ----------------------------------------------------------------------------
def _conv_dims(H, W):
    (k1, s1), (k2, s2), (k3, s3) = _CONV_KS
    OH1, OW1 = (H - k1) // s1 + 1, (W - k1) // s1 + 1
    OH2, OW2 = (OH1 - k2) // s2 + 1, (OW1 - k2) // s2 + 1
    OH3, OW3 = (OH2 - k3) // s3 + 1, (OW2 - k3) // s3 + 1
    return (OH1, OW1), (OH2, OW2), (OH3, OW3)


@functools.lru_cache(maxsize=None)
def _selectors(n_batch, H, W):
    (OH1, OW1), (OH2, OW2), (OH3, OW3) = _conv_dims(H, W)
    assert OH3 >= 1 and OW3 >= 1, "input too small for the conv stack"
    M1 = n_batch * OH1 * OW1
    M2 = n_batch * OH2 * OW2
    P = OH3 * OW3
    k2, s2 = _CONV_KS[1]
    k3, s3 = _CONV_KS[2]

    sel2 = np.zeros((k2 * k2, M2, M1), np.float32)
    for i in range(k2):
        for j in range(k2):
            t = i * k2 + j
            for n in range(n_batch):
                for oh in range(OH2):
                    for ow in range(OW2):
                        m2 = (n * OH2 + oh) * OW2 + ow
                        m1 = (n * OH1 + (s2 * oh + i)) * OW1 + (s2 * ow + j)
                        sel2[t, m2, m1] = 1.0

    sel3 = np.zeros((P * k3 * k3, n_batch, M2), np.float32)
    for oh in range(OH3):
        for ow in range(OW3):
            p = oh * OW3 + ow
            for i in range(k3):
                for j in range(k3):
                    t = i * k3 + j
                    for n in range(n_batch):
                        m2 = (n * OH2 + (s3 * oh + i)) * OW2 + (s3 * ow + j)
                        sel3[p * k3 * k3 + t, n, m2] = 1.0
    return sel2, sel3, P


# ----------------------------------------------------------------------------
# Parameter construction (deterministic, synthetic; weights pre-laid-out)
# ----------------------------------------------------------------------------
def init_params(key, input_shape, n_actions):
    C, H, W = input_shape
    (_, _), (_, _), (OH3, OW3) = _conv_dims(H, W)
    c_last = _CONV_CH[-1]
    conv_out_size = c_last * OH3 * OW3

    keys = iter(jax.random.split(key, 64))

    def dense(in_dim, out_dim):
        scale = 1.0 / jnp.sqrt(jnp.float32(in_dim))
        wm = jax.random.normal(next(keys), (in_dim, out_dim), jnp.float32) * scale
        bias = jax.random.normal(next(keys), (out_dim,), jnp.float32) * 0.01
        return wm, bias

    def conv_w(cin, cout, k):
        scale = 1.0 / jnp.sqrt(jnp.float32(cin * k * k))
        w_oihw = jax.random.normal(next(keys), (cout, cin, k, k), jnp.float32) * scale
        b = jax.random.normal(next(keys), (cout,), jnp.float32) * 0.01
        w_kkio = jnp.transpose(w_oihw, (2, 3, 1, 0))     # (kh, kw, cin, cout)
        return w_kkio, b

    (k1, _), (k2, _), (k3, _) = _CONV_KS
    c1, c2, c3 = _CONV_CH

    # conv1: GEMM matrix with the 1/256 input scale folded into the weights.
    w1_kkio, b1 = conv_w(C, c1, k1)
    w1 = (w1_kkio.reshape(k1 * k1 * C, c1) / 256.0).astype(jnp.bfloat16)
    # conv2/conv3: per-kernel-offset stacked (k*k, cin, cout) bf16 slabs.
    w2_kkio, b2 = conv_w(c1, c2, k2)
    w2 = w2_kkio.reshape(k2 * k2, c1, c2).astype(jnp.bfloat16)
    w3_kkio, b3 = conv_w(c2, c3, k3)
    w3 = w3_kkio.reshape(k3 * k3, c2, c3).astype(jnp.bfloat16)
    conv = [(w1, b1.reshape(1, -1).astype(jnp.float32)),
            (w2, b2.reshape(1, -1).astype(jnp.float32)),
            (w3, b3.reshape(1, -1).astype(jnp.float32))]

    # --- dense heads (PyTorch-layout rows first, then fold-in layout tweaks)
    dims = (conv_out_size,) + _HEAD_HIDDEN
    pol = [dense(a, b) for a, b in zip(dims, dims[1:])] + [dense(_HEAD_HIDDEN[-1], n_actions)]
    val = [dense(a, b) for a, b in zip(dims, dims[1:])] + [dense(_HEAD_HIDDEN[-1], 1)]

    # Fold the (h, w, c) -> PyTorch-(c, h, w) flatten permutation into the
    # first dense layer's rows, so the kernel's NHWC conv_out feeds it directly.
    perm = jnp.transpose(jnp.arange(conv_out_size).reshape(c_last, OH3, OW3),
                         (1, 2, 0)).reshape(-1)
    pol[0] = (pol[0][0][perm, :], pol[0][1])
    val[0] = (val[0][0][perm, :], val[0][1])

    # Zero-pad the value head's last layer to n_actions output columns so both
    # heads share one output slab (wrapper slices column 0 back out).
    pad_n = max(n_actions, 1) - 1
    wv_last, bv_last = val[-1]
    if pad_n > 0:
        wv_last = jnp.pad(wv_last, ((0, 0), (0, pad_n)))
        bv_last = jnp.pad(bv_last, ((0, pad_n),))
    val[-1] = (wv_last, bv_last)

    # Stack policy/value per layer: weights (2, K, N) bf16, biases (2, 1, N) f32.
    head_w, head_b = [], []
    for (wp, bp), (wv, bv) in zip(pol, val):
        head_w.append(jnp.stack([wp, wv]).astype(jnp.bfloat16))
        head_b.append(jnp.stack([bp.reshape(1, -1),
                                 bv.reshape(1, -1)]).astype(jnp.float32))

    return {"conv": conv, "head_w": head_w, "head_b": head_b}


# ----------------------------------------------------------------------------
# Forward pass (matches SheepherdingA2C.forward semantics; bf16 weights)
# ----------------------------------------------------------------------------
def sheepherding_a2c_forward(params, x_nchw):
    # PyTorch does x.float()/256 ; the 1/256 is folded into conv1's weights and
    # uint8 values 0..255 are exact in bf16, so we cast directly.
    N, C, H, W = x_nchw.shape
    x = jnp.transpose(x_nchw, (0, 2, 3, 1)).astype(jnp.bfloat16)    # NHWC bf16

    patches1, n, OH1, OW1 = _im2col_conv1(x)                        # (M1, k*k*C)
    sel2_np, sel3_np, n_pos3 = _selectors(N, H, W)
    sel2 = jnp.asarray(sel2_np, dtype=jnp.bfloat16)
    sel3 = jnp.asarray(sel3_np, dtype=jnp.bfloat16)

    heads = _fused_forward(patches1, params["conv"], sel2, sel3,
                           params["head_w"], params["head_b"],
                           n_batch=N, n_pos3=n_pos3)                # (2, N, NA)
    policy = heads[0]                                               # (N, n_actions)
    value = heads[1][:, :1]                                         # (N, 1)
    return policy, value


# ----------------------------------------------------------------------------
# Pure-JAX reference (same bf16 weights / bf16 activations) for a sanity check
# ----------------------------------------------------------------------------
def _reference_forward(params, x_nchw):
    (w1, b1), (w2, b2), (w3, b3) = params["conv"]
    h = jnp.transpose(x_nchw, (0, 2, 3, 1)).astype(jnp.bfloat16)
    convs = [(w1, b1, 8, 4),
             (w2.reshape(-1, w2.shape[-1]), b2, 4, 2),
             (w3.reshape(-1, w3.shape[-1]), b3, 3, 1)]
    for wmat, b, k, s in convs:
        cols, N, OH, OW = _im2col_generic(h, k, s)
        y = jnp.dot(cols, wmat, preferred_element_type=jnp.float32) + b
        h = jnp.maximum(y, 0.0).astype(jnp.bfloat16).reshape(N, OH, OW, -1)
    feat = h.reshape(h.shape[0], -1)
    outs = []
    for head in range(2):
        hh = feat
        y = None
        for l in range(len(params["head_w"])):
            y = jnp.dot(hh, params["head_w"][l][head],
                        preferred_element_type=jnp.float32) + params["head_b"][l][head]
            if l < len(params["head_w"]) - 1:
                hh = jnp.maximum(y, 0.0).astype(jnp.bfloat16)
        outs.append(y)
    return outs[0], outs[1][:, :1]


# ----------------------------------------------------------------------------
if __name__ == "__main__":
    # Smallest conv-stack-valid shape: (N=2, C=4, H=W=36)
    #   conv1(k8,s4): 36 -> 8 ; conv2(k4,s2): 8 -> 3 ; conv3(k3,s1): 3 -> 1
    #   conv_out_size = 64 * 1 * 1 = 64
    input_shape = (4, 36, 36)
    n_actions = 5
    batch = 2

    key = jax.random.PRNGKey(0)
    k_params, k_x = jax.random.split(key)

    params = init_params(k_params, input_shape, n_actions)
    x = jax.random.randint(k_x, (batch,) + input_shape, 0, 256,
                           dtype=jnp.int32).astype(jnp.uint8)

    fwd = jax.jit(sheepherding_a2c_forward)
    policy, value = fwd(params, x)
    jax.block_until_ready(policy)
    jax.block_until_ready(value)

    assert policy.shape == (batch, n_actions), policy.shape
    assert value.shape == (batch, 1), value.shape
    assert bool(jnp.all(jnp.isfinite(policy))) and bool(jnp.all(jnp.isfinite(value)))

    # Numerical sanity check against a plain-JAX reference using the same
    # bf16 weights / bf16 inter-layer activations.
    ref_policy, ref_value = _reference_forward(params, x)
    assert np.allclose(np.asarray(policy), np.asarray(ref_policy),
                       rtol=2e-2, atol=2e-2), "policy mismatch vs reference"
    assert np.allclose(np.asarray(value), np.asarray(ref_value),
                       rtol=2e-2, atol=2e-2), "value mismatch vs reference"

    print("KERNEL_OK")
</pallas_src>

<mosaic_0001>
module attributes {stable_mosaic.version = 11 : i64} {
  func.func @_fused_forward_kernel(%arg0: i32, %arg1: memref<128x256xbf16, #tpu.memory_space<vmem>>, %arg2: memref<256x32xbf16, #tpu.memory_space<vmem>>, %arg3: memref<1x32xf32, #tpu.memory_space<vmem>>, %arg4: memref<16x18x128xbf16, #tpu.memory_space<vmem>>, %arg5: memref<16x32x64xbf16, #tpu.memory_space<vmem>>, %arg6: memref<1x64xf32, #tpu.memory_space<vmem>>, %arg7: memref<9x2x18xbf16, #tpu.memory_space<vmem>>, %arg8: memref<9x64x64xbf16, #tpu.memory_space<vmem>>, %arg9: memref<1x64xf32, #tpu.memory_space<vmem>>, %arg10: memref<1x64x512xbf16, #tpu.memory_space<vmem>>, %arg11: memref<1x512x512xbf16, #tpu.memory_space<vmem>>, %arg12: memref<1x512x1024xbf16, #tpu.memory_space<vmem>>, %arg13: memref<1x1024x512xbf16, #tpu.memory_space<vmem>>, %arg14: memref<1x512x128xbf16, #tpu.memory_space<vmem>>, %arg15: memref<1x128x5xbf16, #tpu.memory_space<vmem>>, %arg16: memref<1x1x512xf32, #tpu.memory_space<vmem>>, %arg17: memref<1x1x512xf32, #tpu.memory_space<vmem>>, %arg18: memref<1x1x1024xf32, #tpu.memory_space<vmem>>, %arg19: memref<1x1x512xf32, #tpu.memory_space<vmem>>, %arg20: memref<1x1x128xf32, #tpu.memory_space<vmem>>, %arg21: memref<1x1x5xf32, #tpu.memory_space<vmem>>, %arg22: memref<1x2x5xf32, #tpu.memory_space<vmem>>, %arg23: memref<2x64xbf16, #tpu.memory_space<vmem>>) attributes {dimension_semantics = [#tpu.dimension_semantics<parallel>], iteration_bounds = array<i64: 2>, scalar_prefetch = 0 : i64, scratch_operands = 1 : i64, tpu.core_type = #tpu.core_type<tc>, window_params = [{pipeline_mode = #tpu.pipeline_mode<synchronous>, transform_indices = @transform_0, window_bounds = array<i64: 128, 256>}, {pipeline_mode = #tpu.pipeline_mode<synchronous>, transform_indices = @transform_1, window_bounds = array<i64: 256, 32>}, {pipeline_mode = #tpu.pipeline_mode<synchronous>, transform_indices = @transform_2, window_bounds = array<i64: 1, 32>}, {pipeline_mode = #tpu.pipeline_mode<synchronous>, transform_indices = @transform_3, window_bounds = array<i64: 16, 18, 128>}, {pipeline_mode = #tpu.pipeline_mode<synchronous>, transform_indices = @transform_4, window_bounds = array<i64: 16, 32, 64>}, {pipeline_mode = #tpu.pipeline_mode<synchronous>, transform_indices = @transform_5, window_bounds = array<i64: 1, 64>}, {pipeline_mode = #tpu.pipeline_mode<synchronous>, transform_indices = @transform_6, window_bounds = array<i64: 9, 2, 18>}, {pipeline_mode = #tpu.pipeline_mode<synchronous>, transform_indices = @transform_7, window_bounds = array<i64: 9, 64, 64>}, {pipeline_mode = #tpu.pipeline_mode<synchronous>, transform_indices = @transform_8, window_bounds = array<i64: 1, 64>}, {transform_indices = @transform_9, window_bounds = array<i64: 1, 64, 512>}, {transform_indices = @transform_10, window_bounds = array<i64: 1, 512, 512>}, {transform_indices = @transform_11, window_bounds = array<i64: 1, 512, 1024>}, {transform_indices = @transform_12, window_bounds = array<i64: 1, 1024, 512>}, {transform_indices = @transform_13, window_bounds = array<i64: 1, 512, 128>}, {transform_indices = @transform_14, window_bounds = array<i64: 1, 128, 5>}, {transform_indices = @transform_15, window_bounds = array<i64: 1, 1, 512>}, {transform_indices = @transform_16, window_bounds = array<i64: 1, 1, 512>}, {transform_indices = @transform_17, window_bounds = array<i64: 1, 1, 1024>}, {transform_indices = @transform_18, window_bounds = array<i64: 1, 1, 512>}, {transform_indices = @transform_19, window_bounds = array<i64: 1, 1, 128>}, {transform_indices = @transform_20, window_bounds = array<i64: 1, 1, 5>}, {transform_indices = @transform_21, window_bounds = array<i64: 1, 2, 5>}]} {
    %c0 = arith.constant 0 : index
    %c0_0 = arith.constant 0 : index
    %0 = vector.load %arg1[%c0, %c0_0] : memref<128x256xbf16, #tpu.memory_space<vmem>>, vector<128x256xbf16>
    %c0_1 = arith.constant 0 : index
    %c0_2 = arith.constant 0 : index
    %1 = vector.load %arg2[%c0_1, %c0_2] : memref<256x32xbf16, #tpu.memory_space<vmem>>, vector<256x32xbf16>
    %cst = arith.constant dense<0.000000e+00> : vector<128x32xf32>
    %2 = tpu.matmul %0, %1, %cst {dimension_numbers = #tpu.dot_dimension_numbers<[1], [0], [0], [1], [0, 0, 1, 1], [], []>} : vector<128x256xbf16>, vector<256x32xbf16>, vector<128x32xf32> -> vector<128x32xf32>
    %c0_3 = arith.constant 0 : index
    %c0_4 = arith.constant 0 : index
    %3 = vector.load %arg3[%c0_3, %c0_4] : memref<1x32xf32, #tpu.memory_space<vmem>>, vector<1x32xf32>
    %4 = vector.broadcast %3 : vector<1x32xf32> to vector<128x32xf32>
    %5 = arith.addf %2, %4 : vector<128x32xf32>
    %cst_5 = arith.constant 0.000000e+00 : f32
    %6 = vector.broadcast %cst_5 : f32 to vector<128x32xf32>
    %7 = arith.maximumf %5, %6 : vector<128x32xf32>
    %8 = arith.truncf %7 : vector<128x32xf32> to vector<128x32xbf16>
    %c0_6 = arith.constant 0 : index
    %c0_7 = arith.constant 0 : index
    %c0_8 = arith.constant 0 : index
    %9 = vector.load %arg4[%c0_6, %c0_7, %c0_8] : memref<16x18x128xbf16, #tpu.memory_space<vmem>>, vector<1x18x128xbf16>
    %10 = vector.shape_cast %9 : vector<1x18x128xbf16> to vector<18x128xbf16>
    %cst_9 = arith.constant dense<0.000000e+00> : vector<18x32xf32>
    %11 = tpu.matmul %10, %8, %cst_9 {dimension_numbers = #tpu.dot_dimension_numbers<[1], [0], [0], [1], [0, 0, 1, 1], [], []>} : vector<18x128xbf16>, vector<128x32xbf16>, vector<18x32xf32> -> vector<18x32xf32>
    %12 = arith.truncf %11 : vector<18x32xf32> to vector<18x32xbf16>
    %c0_10 = arith.constant 0 : index
    %c0_11 = arith.constant 0 : index
    %c0_12 = arith.constant 0 : index
    %13 = vector.load %arg5[%c0_10, %c0_11, %c0_12] : memref<16x32x64xbf16, #tpu.memory_space<vmem>>, vector<1x32x64xbf16>
    %14 = vector.shape_cast %13 : vector<1x32x64xbf16> to vector<32x64xbf16>
    %cst_13 = arith.constant dense<0.000000e+00> : vector<18x64xf32>
    %15 = tpu.matmul %12, %14, %cst_13 {dimension_numbers = #tpu.dot_dimension_numbers<[1], [0], [0], [1], [0, 0, 1, 1], [], []>} : vector<18x32xbf16>, vector<32x64xbf16>, vector<18x64xf32> -> vector<18x64xf32>
    %c1 = arith.constant 1 : index
    %c0_14 = arith.constant 0 : index
    %c0_15 = arith.constant 0 : index
    %16 = vector.load %arg4[%c1, %c0_14, %c0_15] : memref<16x18x128xbf16, #tpu.memory_space<vmem>>, vector<1x18x128xbf16>
    %17 = vector.shape_cast %16 : vector<1x18x128xbf16> to vector<18x128xbf16>
    %cst_16 = arith.constant dense<0.000000e+00> : vector<18x32xf32>
    %18 = tpu.matmul %17, %8, %cst_16 {dimension_numbers = #tpu.dot_dimension_numbers<[1], [0], [0], [1], [0, 0, 1, 1], [], []>} : vector<18x128xbf16>, vector<128x32xbf16>, vector<18x32xf32> -> vector<18x32xf32>
    %19 = arith.truncf %18 : vector<18x32xf32> to vector<18x32xbf16>
    %c1_17 = arith.constant 1 : index
    %c0_18 = arith.constant 0 : index
    %c0_19 = arith.constant 0 : index
    %20 = vector.load %arg5[%c1_17, %c0_18, %c0_19] : memref<16x32x64xbf16, #tpu.memory_space<vmem>>, vector<1x32x64xbf16>
    %21 = vector.shape_cast %20 : vector<1x32x64xbf16> to vector<32x64xbf16>
    %cst_20 = arith.constant dense<0.000000e+00> : vector<18x64xf32>
    %22 = tpu.matmul %19, %21, %cst_20 {dimension_numbers = #tpu.dot_dimension_numbers<[1], [0], [0], [1], [0, 0, 1, 1], [], []>} : vector<18x32xbf16>, vector<32x64xbf16>, vector<18x64xf32> -> vector<18x64xf32>
    %23 = arith.addf %15, %22 : vector<18x64xf32>
    %c2 = arith.constant 2 : index
    %c0_21 = arith.constant 0 : index
    %c0_22 = arith.constant 0 : index
    %24 = vector.load %arg4[%c2, %c0_21, %c0_22] : memref<16x18x128xbf16, #tpu.memory_space<vmem>>, vector<1x18x128xbf16>
    %25 = vector.shape_cast %24 : vector<1x18x128xbf16> to vector<18x128xbf16>
    %cst_23 = arith.constant dense<0.000000e+00> : vector<18x32xf32>
    %26 = tpu.matmul %25, %8, %cst_23 {dimension_numbers = #tpu.dot_dimension_numbers<[1], [0], [0], [1], [0, 0, 1, 1], [], []>} : vector<18x128xbf16>, vector<128x32xbf16>, vector<18x32xf32> -> vector<18x32xf32>
    %27 = arith.truncf %26 : vector<18x32xf32> to vector<18x32xbf16>
    %c2_24 = arith.constant 2 : index
    %c0_25 = arith.constant 0 : index
    %c0_26 = arith.constant 0 : index
    %28 = vector.load %arg5[%c2_24, %c0_25, %c0_26] : memref<16x32x64xbf16, #tpu.memory_space<vmem>>, vector<1x32x64xbf16>
    %29 = vector.shape_cast %28 : vector<1x32x64xbf16> to vector<32x64xbf16>
    %cst_27 = arith.constant dense<0.000000e+00> : vector<18x64xf32>
    %30 = tpu.matmul %27, %29, %cst_27 {dimension_numbers = #tpu.dot_dimension_numbers<[1], [0], [0], [1], [0, 0, 1, 1], [], []>} : vector<18x32xbf16>, vector<32x64xbf16>, vector<18x64xf32> -> vector<18x64xf32>
    %31 = arith.addf %23, %30 : vector<18x64xf32>
    %c3 = arith.constant 3 : index
    %c0_28 = arith.constant 0 : index
    %c0_29 = arith.constant 0 : index
    %32 = vector.load %arg4[%c3, %c0_28, %c0_29] : memref<16x18x128xbf16, #tpu.memory_space<vmem>>, vector<1x18x128xbf16>
    %33 = vector.shape_cast %32 : vector<1x18x128xbf16> to vector<18x128xbf16>
    %cst_30 = arith.constant dense<0.000000e+00> : vector<18x32xf32>
    %34 = tpu.matmul %33, %8, %cst_30 {dimension_numbers = #tpu.dot_dimension_numbers<[1], [0], [0], [1], [0, 0, 1, 1], [], []>} : vector<18x128xbf16>, vector<128x32xbf16>, vector<18x32xf32> -> vector<18x32xf32>
    %35 = arith.truncf %34 : vector<18x32xf32> to vector<18x32xbf16>
    %c3_31 = arith.constant 3 : index
    %c0_32 = arith.constant 0 : index
    %c0_33 = arith.constant 0 : index
    %36 = vector.load %arg5[%c3_31, %c0_32, %c0_33] : memref<16x32x64xbf16, #tpu.memory_space<vmem>>, vector<1x32x64xbf16>
    %37 = vector.shape_cast %36 : vector<1x32x64xbf16> to vector<32x64xbf16>
    %cst_34 = arith.constant dense<0.000000e+00> : vector<18x64xf32>
    %38 = tpu.matmul %35, %37, %cst_34 {dimension_numbers = #tpu.dot_dimension_numbers<[1], [0], [0], [1], [0, 0, 1, 1], [], []>} : vector<18x32xbf16>, vector<32x64xbf16>, vector<18x64xf32> -> vector<18x64xf32>
    %39 = arith.addf %31, %38 : vector<18x64xf32>
    %c4 = arith.constant 4 : index
    %c0_35 = arith.constant 0 : index
    %c0_36 = arith.constant 0 : index
    %40 = vector.load %arg4[%c4, %c0_35, %c0_36] : memref<16x18x128xbf16, #tpu.memory_space<vmem>>, vector<1x18x128xbf16>
    %41 = vector.shape_cast %40 : vector<1x18x128xbf16> to vector<18x128xbf16>
    %cst_37 = arith.constant dense<0.000000e+00> : vector<18x32xf32>
    %42 = tpu.matmul %41, %8, %cst_37 {dimension_numbers = #tpu.dot_dimension_numbers<[1], [0], [0], [1], [0, 0, 1, 1], [], []>} : vector<18x128xbf16>, vector<128x32xbf16>, vector<18x32xf32> -> vector<18x32xf32>
    %43 = arith.truncf %42 : vector<18x32xf32> to vector<18x32xbf16>
    %c4_38 = arith.constant 4 : index
    %c0_39 = arith.constant 0 : index
    %c0_40 = arith.constant 0 : index
    %44 = vector.load %arg5[%c4_38, %c0_39, %c0_40] : memref<16x32x64xbf16, #tpu.memory_space<vmem>>, vector<1x32x64xbf16>
    %45 = vector.shape_cast %44 : vector<1x32x64xbf16> to vector<32x64xbf16>
    %cst_41 = arith.constant dense<0.000000e+00> : vector<18x64xf32>
    %46 = tpu.matmul %43, %45, %cst_41 {dimension_numbers = #tpu.dot_dimension_numbers<[1], [0], [0], [1], [0, 0, 1, 1], [], []>} : vector<18x32xbf16>, vector<32x64xbf16>, vector<18x64xf32> -> vector<18x64xf32>
    %47 = arith.addf %39, %46 : vector<18x64xf32>
    %c5 = arith.constant 5 : index
    %c0_42 = arith.constant 0 : index
    %c0_43 = arith.constant 0 : index
    %48 = vector.load %arg4[%c5, %c0_42, %c0_43] : memref<16x18x128xbf16, #tpu.memory_space<vmem>>, vector<1x18x128xbf16>
    %49 = vector.shape_cast %48 : vector<1x18x128xbf16> to vector<18x128xbf16>
    %cst_44 = arith.constant dense<0.000000e+00> : vector<18x32xf32>
    %50 = tpu.matmul %49, %8, %cst_44 {dimension_numbers = #tpu.dot_dimension_numbers<[1], [0], [0], [1], [0, 0, 1, 1], [], []>} : vector<18x128xbf16>, vector<128x32xbf16>, vector<18x32xf32> -> vector<18x32xf32>
    %51 = arith.truncf %50 : vector<18x32xf32> to vector<18x32xbf16>
    %c5_45 = arith.constant 5 : index
    %c0_46 = arith.constant 0 : index
    %c0_47 = arith.constant 0 : index
    %52 = vector.load %arg5[%c5_45, %c0_46, %c0_47] : memref<16x32x64xbf16, #tpu.memory_space<vmem>>, vector<1x32x64xbf16>
    %53 = vector.shape_cast %52 : vector<1x32x64xbf16> to vector<32x64xbf16>
    %cst_48 = arith.constant dense<0.000000e+00> : vector<18x64xf32>
    %54 = tpu.matmul %51, %53, %cst_48 {dimension_numbers = #tpu.dot_dimension_numbers<[1], [0], [0], [1], [0, 0, 1, 1], [], []>} : vector<18x32xbf16>, vector<32x64xbf16>, vector<18x64xf32> -> vector<18x64xf32>
    %55 = arith.addf %47, %54 : vector<18x64xf32>
    %c6 = arith.constant 6 : index
    %c0_49 = arith.constant 0 : index
    %c0_50 = arith.constant 0 : index
    %56 = vector.load %arg4[%c6, %c0_49, %c0_50] : memref<16x18x128xbf16, #tpu.memory_space<vmem>>, vector<1x18x128xbf16>
    %57 = vector.shape_cast %56 : vector<1x18x128xbf16> to vector<18x128xbf16>
    %cst_51 = arith.constant dense<0.000000e+00> : vector<18x32xf32>
    %58 = tpu.matmul %57, %8, %cst_51 {dimension_numbers = #tpu.dot_dimension_numbers<[1], [0], [0], [1], [0, 0, 1, 1], [], []>} : vector<18x128xbf16>, vector<128x32xbf16>, vector<18x32xf32> -> vector<18x32xf32>
    %59 = arith.truncf %58 : vector<18x32xf32> to vector<18x32xbf16>
    %c6_52 = arith.constant 6 : index
    %c0_53 = arith.constant 0 : index
    %c0_54 = arith.constant 0 : index
    %60 = vector.load %arg5[%c6_52, %c0_53, %c0_54] : memref<16x32x64xbf16, #tpu.memory_space<vmem>>, vector<1x32x64xbf16>
    %61 = vector.shape_cast %60 : vector<1x32x64xbf16> to vector<32x64xbf16>
    %cst_55 = arith.constant dense<0.000000e+00> : vector<18x64xf32>
    %62 = tpu.matmul %59, %61, %cst_55 {dimension_numbers = #tpu.dot_dimension_numbers<[1], [0], [0], [1], [0, 0, 1, 1], [], []>} : vector<18x32xbf16>, vector<32x64xbf16>, vector<18x64xf32> -> vector<18x64xf32>
    %63 = arith.addf %55, %62 : vector<18x64xf32>
    %c7 = arith.constant 7 : index
    %c0_56 = arith.constant 0 : index
    %c0_57 = arith.constant 0 : index
    %64 = vector.load %arg4[%c7, %c0_56, %c0_57] : memref<16x18x128xbf16, #tpu.memory_space<vmem>>, vector<1x18x128xbf16>
    %65 = vector.shape_cast %64 : vector<1x18x128xbf16> to vector<18x128xbf16>
    %cst_58 = arith.constant dense<0.000000e+00> : vector<18x32xf32>
    %66 = tpu.matmul %65, %8, %cst_58 {dimension_numbers = #tpu.dot_dimension_numbers<[1], [0], [0], [1], [0, 0, 1, 1], [], []>} : vector<18x128xbf16>, vector<128x32xbf16>, vector<18x32xf32> -> vector<18x32xf32>
    %67 = arith.truncf %66 : vector<18x32xf32> to vector<18x32xbf16>
    %c7_59 = arith.constant 7 : index
    %c0_60 = arith.constant 0 : index
    %c0_61 = arith.constant 0 : index
    %68 = vector.load %arg5[%c7_59, %c0_60, %c0_61] : memref<16x32x64xbf16, #tpu.memory_space<vmem>>, vector<1x32x64xbf16>
    %69 = vector.shape_cast %68 : vector<1x32x64xbf16> to vector<32x64xbf16>
    %cst_62 = arith.constant dense<0.000000e+00> : vector<18x64xf32>
    %70 = tpu.matmul %67, %69, %cst_62 {dimension_numbers = #tpu.dot_dimension_numbers<[1], [0], [0], [1], [0, 0, 1, 1], [], []>} : vector<18x32xbf16>, vector<32x64xbf16>, vector<18x64xf32> -> vector<18x64xf32>
    %71 = arith.addf %63, %70 : vector<18x64xf32>
    %c8 = arith.constant 8 : index
    %c0_63 = arith.constant 0 : index
    %c0_64 = arith.constant 0 : index
    %72 = vector.load %arg4[%c8, %c0_63, %c0_64] : memref<16x18x128xbf16, #tpu.memory_space<vmem>>, vector<1x18x128xbf16>
    %73 = vector.shape_cast %72 : vector<1x18x128xbf16> to vector<18x128xbf16>
    %cst_65 = arith.constant dense<0.000000e+00> : vector<18x32xf32>
    %74 = tpu.matmul %73, %8, %cst_65 {dimension_numbers = #tpu.dot_dimension_numbers<[1], [0], [0], [1], [0, 0, 1, 1], [], []>} : vector<18x128xbf16>, vector<128x32xbf16>, vector<18x32xf32> -> vector<18x32xf32>
    %75 = arith.truncf %74 : vector<18x32xf32> to vector<18x32xbf16>
    %c8_66 = arith.constant 8 : index
    %c0_67 = arith.constant 0 : index
    %c0_68 = arith.constant 0 : index
    %76 = vector.load %arg5[%c8_66, %c0_67, %c0_68] : memref<16x32x64xbf16, #tpu.memory_space<vmem>>, vector<1x32x64xbf16>
    %77 = vector.shape_cast %76 : vector<1x32x64xbf16> to vector<32x64xbf16>
    %cst_69 = arith.constant dense<0.000000e+00> : vector<18x64xf32>
    %78 = tpu.matmul %75, %77, %cst_69 {dimension_numbers = #tpu.dot_dimension_numbers<[1], [0], [0], [1], [0, 0, 1, 1], [], []>} : vector<18x32xbf16>, vector<32x64xbf16>, vector<18x64xf32> -> vector<18x64xf32>
    %79 = arith.addf %71, %78 : vector<18x64xf32>
    %c9 = arith.constant 9 : index
    %c0_70 = arith.constant 0 : index
    %c0_71 = arith.constant 0 : index
    %80 = vector.load %arg4[%c9, %c0_70, %c0_71] : memref<16x18x128xbf16, #tpu.memory_space<vmem>>, vector<1x18x128xbf16>
    %81 = vector.shape_cast %80 : vector<1x18x128xbf16> to vector<18x128xbf16>
    %cst_72 = arith.constant dense<0.000000e+00> : vector<18x32xf32>
    %82 = tpu.matmul %81, %8, %cst_72 {dimension_numbers = #tpu.dot_dimension_numbers<[1], [0], [0], [1], [0, 0, 1, 1], [], []>} : vector<18x128xbf16>, vector<128x32xbf16>, vector<18x32xf32> -> vector<18x32xf32>
    %83 = arith.truncf %82 : vector<18x32xf32> to vector<18x32xbf16>
    %c9_73 = arith.constant 9 : index
    %c0_74 = arith.constant 0 : index
    %c0_75 = arith.constant 0 : index
    %84 = vector.load %arg5[%c9_73, %c0_74, %c0_75] : memref<16x32x64xbf16, #tpu.memory_space<vmem>>, vector<1x32x64xbf16>
    %85 = vector.shape_cast %84 : vector<1x32x64xbf16> to vector<32x64xbf16>
    %cst_76 = arith.constant dense<0.000000e+00> : vector<18x64xf32>
    %86 = tpu.matmul %83, %85, %cst_76 {dimension_numbers = #tpu.dot_dimension_numbers<[1], [0], [0], [1], [0, 0, 1, 1], [], []>} : vector<18x32xbf16>, vector<32x64xbf16>, vector<18x64xf32> -> vector<18x64xf32>
    %87 = arith.addf %79, %86 : vector<18x64xf32>
    %c10 = arith.constant 10 : index
    %c0_77 = arith.constant 0 : index
    %c0_78 = arith.constant 0 : index
    %88 = vector.load %arg4[%c10, %c0_77, %c0_78] : memref<16x18x128xbf16, #tpu.memory_space<vmem>>, vector<1x18x128xbf16>
    %89 = vector.shape_cast %88 : vector<1x18x128xbf16> to vector<18x128xbf16>
    %cst_79 = arith.constant dense<0.000000e+00> : vector<18x32xf32>
    %90 = tpu.matmul %89, %8, %cst_79 {dimension_numbers = #tpu.dot_dimension_numbers<[1], [0], [0], [1], [0, 0, 1, 1], [], []>} : vector<18x128xbf16>, vector<128x32xbf16>, vector<18x32xf32> -> vector<18x32xf32>
    %91 = arith.truncf %90 : vector<18x32xf32> to vector<18x32xbf16>
    %c10_80 = arith.constant 10 : index
    %c0_81 = arith.constant 0 : index
    %c0_82 = arith.constant 0 : index
    %92 = vector.load %arg5[%c10_80, %c0_81, %c0_82] : memref<16x32x64xbf16, #tpu.memory_space<vmem>>, vector<1x32x64xbf16>
    %93 = vector.shape_cast %92 : vector<1x32x64xbf16> to vector<32x64xbf16>
    %cst_83 = arith.constant dense<0.000000e+00> : vector<18x64xf32>
    %94 = tpu.matmul %91, %93, %cst_83 {dimension_numbers = #tpu.dot_dimension_numbers<[1], [0], [0], [1], [0, 0, 1, 1], [], []>} : vector<18x32xbf16>, vector<32x64xbf16>, vector<18x64xf32> -> vector<18x64xf32>
    %95 = arith.addf %87, %94 : vector<18x64xf32>
    %c11 = arith.constant 11 : index
    %c0_84 = arith.constant 0 : index
    %c0_85 = arith.constant 0 : index
    %96 = vector.load %arg4[%c11, %c0_84, %c0_85] : memref<16x18x128xbf16, #tpu.memory_space<vmem>>, vector<1x18x128xbf16>
    %97 = vector.shape_cast %96 : vector<1x18x128xbf16> to vector<18x128xbf16>
    %cst_86 = arith.constant dense<0.000000e+00> : vector<18x32xf32>
    %98 = tpu.matmul %97, %8, %cst_86 {dimension_numbers = #tpu.dot_dimension_numbers<[1], [0], [0], [1], [0, 0, 1, 1], [], []>} : vector<18x128xbf16>, vector<128x32xbf16>, vector<18x32xf32> -> vector<18x32xf32>
    %99 = arith.truncf %98 : vector<18x32xf32> to vector<18x32xbf16>
    %c11_87 = arith.constant 11 : index
    %c0_88 = arith.constant 0 : index
    %c0_89 = arith.constant 0 : index
    %100 = vector.load %arg5[%c11_87, %c0_88, %c0_89] : memref<16x32x64xbf16, #tpu.memory_space<vmem>>, vector<1x32x64xbf16>
    %101 = vector.shape_cast %100 : vector<1x32x64xbf16> to vector<32x64xbf16>
    %cst_90 = arith.constant dense<0.000000e+00> : vector<18x64xf32>
    %102 = tpu.matmul %99, %101, %cst_90 {dimension_numbers = #tpu.dot_dimension_numbers<[1], [0], [0], [1], [0, 0, 1, 1], [], []>} : vector<18x32xbf16>, vector<32x64xbf16>, vector<18x64xf32> -> vector<18x64xf32>
    %103 = arith.addf %95, %102 : vector<18x64xf32>
    %c12 = arith.constant 12 : index
    %c0_91 = arith.constant 0 : index
    %c0_92 = arith.constant 0 : index
    %104 = vector.load %arg4[%c12, %c0_91, %c0_92] : memref<16x18x128xbf16, #tpu.memory_space<vmem>>, vector<1x18x128xbf16>
    %105 = vector.shape_cast %104 : vector<1x18x128xbf16> to vector<18x128xbf16>
    %cst_93 = arith.constant dense<0.000000e+00> : vector<18x32xf32>
    %106 = tpu.matmul %105, %8, %cst_93 {dimension_numbers = #tpu.dot_dimension_numbers<[1], [0], [0], [1], [0, 0, 1, 1], [], []>} : vector<18x128xbf16>, vector<128x32xbf16>, vector<18x32xf32> -> vector<18x32xf32>
    %107 = arith.truncf %106 : vector<18x32xf32> to vector<18x32xbf16>
    %c12_94 = arith.constant 12 : index
    %c0_95 = arith.constant 0 : index
    %c0_96 = arith.constant 0 : index
    %108 = vector.load %arg5[%c12_94, %c0_95, %c0_96] : memref<16x32x64xbf16, #tpu.memory_space<vmem>>, vector<1x32x64xbf16>
    %109 = vector.shape_cast %108 : vector<1x32x64xbf16> to vector<32x64xbf16>
    %cst_97 = arith.constant dense<0.000000e+00> : vector<18x64xf32>
    %110 = tpu.matmul %107, %109, %cst_97 {dimension_numbers = #tpu.dot_dimension_numbers<[1], [0], [0], [1], [0, 0, 1, 1], [], []>} : vector<18x32xbf16>, vector<32x64xbf16>, vector<18x64xf32> -> vector<18x64xf32>
    %111 = arith.addf %103, %110 : vector<18x64xf32>
    %c13 = arith.constant 13 : index
    %c0_98 = arith.constant 0 : index
    %c0_99 = arith.constant 0 : index
    %112 = vector.load %arg4[%c13, %c0_98, %c0_99] : memref<16x18x128xbf16, #tpu.memory_space<vmem>>, vector<1x18x128xbf16>
    %113 = vector.shape_cast %112 : vector<1x18x128xbf16> to vector<18x128xbf16>
    %cst_100 = arith.constant dense<0.000000e+00> : vector<18x32xf32>
    %114 = tpu.matmul %113, %8, %cst_100 {dimension_numbers = #tpu.dot_dimension_numbers<[1], [0], [0], [1], [0, 0, 1, 1], [], []>} : vector<18x128xbf16>, vector<128x32xbf16>, vector<18x32xf32> -> vector<18x32xf32>
    %115 = arith.truncf %114 : vector<18x32xf32> to vector<18x32xbf16>
    %c13_101 = arith.constant 13 : index
    %c0_102 = arith.constant 0 : index
    %c0_103 = arith.constant 0 : index
    %116 = vector.load %arg5[%c13_101, %c0_102, %c0_103] : memref<16x32x64xbf16, #tpu.memory_space<vmem>>, vector<1x32x64xbf16>
    %117 = vector.shape_cast %116 : vector<1x32x64xbf16> to vector<32x64xbf16>
    %cst_104 = arith.constant dense<0.000000e+00> : vector<18x64xf32>
    %118 = tpu.matmul %115, %117, %cst_104 {dimension_numbers = #tpu.dot_dimension_numbers<[1], [0], [0], [1], [0, 0, 1, 1], [], []>} : vector<18x32xbf16>, vector<32x64xbf16>, vector<18x64xf32> -> vector<18x64xf32>
    %119 = arith.addf %111, %118 : vector<18x64xf32>
    %c14 = arith.constant 14 : index
    %c0_105 = arith.constant 0 : index
    %c0_106 = arith.constant 0 : index
    %120 = vector.load %arg4[%c14, %c0_105, %c0_106] : memref<16x18x128xbf16, #tpu.memory_space<vmem>>, vector<1x18x128xbf16>
    %121 = vector.shape_cast %120 : vector<1x18x128xbf16> to vector<18x128xbf16>
    %cst_107 = arith.constant dense<0.000000e+00> : vector<18x32xf32>
    %122 = tpu.matmul %121, %8, %cst_107 {dimension_numbers = #tpu.dot_dimension_numbers<[1], [0], [0], [1], [0, 0, 1, 1], [], []>} : vector<18x128xbf16>, vector<128x32xbf16>, vector<18x32xf32> -> vector<18x32xf32>
    %123 = arith.truncf %122 : vector<18x32xf32> to vector<18x32xbf16>
    %c14_108 = arith.constant 14 : index
    %c0_109 = arith.constant 0 : index
    %c0_110 = arith.constant 0 : index
    %124 = vector.load %arg5[%c14_108, %c0_109, %c0_110] : memref<16x32x64xbf16, #tpu.memory_space<vmem>>, vector<1x32x64xbf16>
    %125 = vector.shape_cast %124 : vector<1x32x64xbf16> to vector<32x64xbf16>
    %cst_111 = arith.constant dense<0.000000e+00> : vector<18x64xf32>
    %126 = tpu.matmul %123, %125, %cst_111 {dimension_numbers = #tpu.dot_dimension_numbers<[1], [0], [0], [1], [0, 0, 1, 1], [], []>} : vector<18x32xbf16>, vector<32x64xbf16>, vector<18x64xf32> -> vector<18x64xf32>
    %127 = arith.addf %119, %126 : vector<18x64xf32>
    %c15 = arith.constant 15 : index
    %c0_112 = arith.constant 0 : index
    %c0_113 = arith.constant 0 : index
    %128 = vector.load %arg4[%c15, %c0_112, %c0_113] : memref<16x18x128xbf16, #tpu.memory_space<vmem>>, vector<1x18x128xbf16>
    %129 = vector.shape_cast %128 : vector<1x18x128xbf16> to vector<18x128xbf16>
    %cst_114 = arith.constant dense<0.000000e+00> : vector<18x32xf32>
    %130 = tpu.matmul %129, %8, %cst_114 {dimension_numbers = #tpu.dot_dimension_numbers<[1], [0], [0], [1], [0, 0, 1, 1], [], []>} : vector<18x128xbf16>, vector<128x32xbf16>, vector<18x32xf32> -> vector<18x32xf32>
    %131 = arith.truncf %130 : vector<18x32xf32> to vector<18x32xbf16>
    %c15_115 = arith.constant 15 : index
    %c0_116 = arith.constant 0 : index
    %c0_117 = arith.constant 0 : index
    %132 = vector.load %arg5[%c15_115, %c0_116, %c0_117] : memref<16x32x64xbf16, #tpu.memory_space<vmem>>, vector<1x32x64xbf16>
    %133 = vector.shape_cast %132 : vector<1x32x64xbf16> to vector<32x64xbf16>
    %cst_118 = arith.constant dense<0.000000e+00> : vector<18x64xf32>
    %134 = tpu.matmul %131, %133, %cst_118 {dimension_numbers = #tpu.dot_dimension_numbers<[1], [0], [0], [1], [0, 0, 1, 1], [], []>} : vector<18x32xbf16>, vector<32x64xbf16>, vector<18x64xf32> -> vector<18x64xf32>
    %135 = arith.addf %127, %134 : vector<18x64xf32>
    %c0_119 = arith.constant 0 : index
    %c0_120 = arith.constant 0 : index
    %136 = vector.load %arg6[%c0_119, %c0_120] : memref<1x64xf32, #tpu.memory_space<vmem>>, vector<1x64xf32>
    %137 = vector.broadcast %136 : vector<1x64xf32> to vector<18x64xf32>
    %138 = arith.addf %135, %137 : vector<18x64xf32>
    %cst_121 = arith.constant 0.000000e+00 : f32
    %139 = vector.broadcast %cst_121 : f32 to vector<18x64xf32>
    %140 = arith.maximumf %138, %139 : vector<18x64xf32>
    %141 = arith.truncf %140 : vector<18x64xf32> to vector<18x64xbf16>
    %c0_122 = arith.constant 0 : index
    %c0_123 = arith.constant 0 : index
    %c0_124 = arith.constant 0 : index
    %142 = vector.load %arg7[%c0_122, %c0_123, %c0_124] : memref<9x2x18xbf16, #tpu.memory_space<vmem>>, vector<1x2x18xbf16>
    %143 = vector.shape_cast %142 : vector<1x2x18xbf16> to vector<2x18xbf16>
    %cst_125 = arith.constant dense<0.000000e+00> : vector<2x64xf32>
    %144 = tpu.matmul %143, %141, %cst_125 {dimension_numbers = #tpu.dot_dimension_numbers<[1], [0], [0], [1], [0, 0, 1, 1], [], []>} : vector<2x18xbf16>, vector<18x64xbf16>, vector<2x64xf32> -> vector<2x64xf32>
    %145 = arith.truncf %144 : vector<2x64xf32> to vector<2x64xbf16>
    %c0_126 = arith.constant 0 : index
    %c0_127 = arith.constant 0 : index
    %c0_128 = arith.constant 0 : index
    %146 = vector.load %arg8[%c0_126, %c0_127, %c0_128] : memref<9x64x64xbf16, #tpu.memory_space<vmem>>, vector<1x64x64xbf16>
    %147 = vector.shape_cast %146 : vector<1x64x64xbf16> to vector<64x64xbf16>
    %cst_129 = arith.constant dense<0.000000e+00> : vector<2x64xf32>
    %148 = tpu.matmul %145, %147, %cst_129 {dimension_numbers = #tpu.dot_dimension_numbers<[1], [0], [0], [1], [0, 0, 1, 1], [], []>} : vector<2x64xbf16>, vector<64x64xbf16>, vector<2x64xf32> -> vector<2x64xf32>
    %c1_130 = arith.constant 1 : index
    %c0_131 = arith.constant 0 : index
    %c0_132 = arith.constant 0 : index
    %149 = vector.load %arg7[%c1_130, %c0_131, %c0_132] : memref<9x2x18xbf16, #tpu.memory_space<vmem>>, vector<1x2x18xbf16>
    %150 = vector.shape_cast %149 : vector<1x2x18xbf16> to vector<2x18xbf16>
    %cst_133 = arith.constant dense<0.000000e+00> : vector<2x64xf32>
    %151 = tpu.matmul %150, %141, %cst_133 {dimension_numbers = #tpu.dot_dimension_numbers<[1], [0], [0], [1], [0, 0, 1, 1], [], []>} : vector<2x18xbf16>, vector<18x64xbf16>, vector<2x64xf32> -> vector<2x64xf32>
    %152 = arith.truncf %151 : vector<2x64xf32> to vector<2x64xbf16>
    %c1_134 = arith.constant 1 : index
    %c0_135 = arith.constant 0 : index
    %c0_136 = arith.constant 0 : index
    %153 = vector.load %arg8[%c1_134, %c0_135, %c0_136] : memref<9x64x64xbf16, #tpu.memory_space<vmem>>, vector<1x64x64xbf16>
    %154 = vector.shape_cast %153 : vector<1x64x64xbf16> to vector<64x64xbf16>
    %cst_137 = arith.constant dense<0.000000e+00> : vector<2x64xf32>
    %155 = tpu.matmul %152, %154, %cst_137 {dimension_numbers = #tpu.dot_dimension_numbers<[1], [0], [0], [1], [0, 0, 1, 1], [], []>} : vector<2x64xbf16>, vector<64x64xbf16>, vector<2x64xf32> -> vector<2x64xf32>
    %156 = arith.addf %148, %155 : vector<2x64xf32>
    %c2_138 = arith.constant 2 : index
    %c0_139 = arith.constant 0 : index
    %c0_140 = arith.constant 0 : index
    %157 = vector.load %arg7[%c2_138, %c0_139, %c0_140] : memref<9x2x18xbf16, #tpu.memory_space<vmem>>, vector<1x2x18xbf16>
    %158 = vector.shape_cast %157 : vector<1x2x18xbf16> to vector<2x18xbf16>
    %cst_141 = arith.constant dense<0.000000e+00> : vector<2x64xf32>
    %159 = tpu.matmul %158, %141, %cst_141 {dimension_numbers = #tpu.dot_dimension_numbers<[1], [0], [0], [1], [0, 0, 1, 1], [], []>} : vector<2x18xbf16>, vector<18x64xbf16>, vector<2x64xf32> -> vector<2x64xf32>
    %160 = arith.truncf %159 : vector<2x64xf32> to vector<2x64xbf16>
    %c2_142 = arith.constant 2 : index
    %c0_143 = arith.constant 0 : index
    %c0_144 = arith.constant 0 : index
    %161 = vector.load %arg8[%c2_142, %c0_143, %c0_144] : memref<9x64x64xbf16, #tpu.memory_space<vmem>>, vector<1x64x64xbf16>
    %162 = vector.shape_cast %161 : vector<1x64x64xbf16> to vector<64x64xbf16>
    %cst_145 = arith.constant dense<0.000000e+00> : vector<2x64xf32>
    %163 = tpu.matmul %160, %162, %cst_145 {dimension_numbers = #tpu.dot_dimension_numbers<[1], [0], [0], [1], [0, 0, 1, 1], [], []>} : vector<2x64xbf16>, vector<64x64xbf16>, vector<2x64xf32> -> vector<2x64xf32>
    %164 = arith.addf %156, %163 : vector<2x64xf32>
    %c3_146 = arith.constant 3 : index
    %c0_147 = arith.constant 0 : index
    %c0_148 = arith.constant 0 : index
    %165 = vector.load %arg7[%c3_146, %c0_147, %c0_148] : memref<9x2x18xbf16, #tpu.memory_space<vmem>>, vector<1x2x18xbf16>
    %166 = vector.shape_cast %165 : vector<1x2x18xbf16> to vector<2x18xbf16>
    %cst_149 = arith.constant dense<0.000000e+00> : vector<2x64xf32>
    %167 = tpu.matmul %166, %141, %cst_149 {dimension_numbers = #tpu.dot_dimension_numbers<[1], [0], [0], [1], [0, 0, 1, 1], [], []>} : vector<2x18xbf16>, vector<18x64xbf16>, vector<2x64xf32> -> vector<2x64xf32>
    %168 = arith.truncf %167 : vector<2x64xf32> to vector<2x64xbf16>
    %c3_150 = arith.constant 3 : index
    %c0_151 = arith.constant 0 : index
    %c0_152 = arith.constant 0 : index
    %169 = vector.load %arg8[%c3_150, %c0_151, %c0_152] : memref<9x64x64xbf16, #tpu.memory_space<vmem>>, vector<1x64x64xbf16>
    %170 = vector.shape_cast %169 : vector<1x64x64xbf16> to vector<64x64xbf16>
    %cst_153 = arith.constant dense<0.000000e+00> : vector<2x64xf32>
    %171 = tpu.matmul %168, %170, %cst_153 {dimension_numbers = #tpu.dot_dimension_numbers<[1], [0], [0], [1], [0, 0, 1, 1], [], []>} : vector<2x64xbf16>, vector<64x64xbf16>, vector<2x64xf32> -> vector<2x64xf32>
    %172 = arith.addf %164, %171 : vector<2x64xf32>
    %c4_154 = arith.constant 4 : index
    %c0_155 = arith.constant 0 : index
    %c0_156 = arith.constant 0 : index
    %173 = vector.load %arg7[%c4_154, %c0_155, %c0_156] : memref<9x2x18xbf16, #tpu.memory_space<vmem>>, vector<1x2x18xbf16>
    %174 = vector.shape_cast %173 : vector<1x2x18xbf16> to vector<2x18xbf16>
    %cst_157 = arith.constant dense<0.000000e+00> : vector<2x64xf32>
    %175 = tpu.matmul %174, %141, %cst_157 {dimension_numbers = #tpu.dot_dimension_numbers<[1], [0], [0], [1], [0, 0, 1, 1], [], []>} : vector<2x18xbf16>, vector<18x64xbf16>, vector<2x64xf32> -> vector<2x64xf32>
    %176 = arith.truncf %175 : vector<2x64xf32> to vector<2x64xbf16>
    %c4_158 = arith.constant 4 : index
    %c0_159 = arith.constant 0 : index
    %c0_160 = arith.constant 0 : index
    %177 = vector.load %arg8[%c4_158, %c0_159, %c0_160] : memref<9x64x64xbf16, #tpu.memory_space<vmem>>, vector<1x64x64xbf16>
    %178 = vector.shape_cast %177 : vector<1x64x64xbf16> to vector<64x64xbf16>
    %cst_161 = arith.constant dense<0.000000e+00> : vector<2x64xf32>
    %179 = tpu.matmul %176, %178, %cst_161 {dimension_numbers = #tpu.dot_dimension_numbers<[1], [0], [0], [1], [0, 0, 1, 1], [], []>} : vector<2x64xbf16>, vector<64x64xbf16>, vector<2x64xf32> -> vector<2x64xf32>
    %180 = arith.addf %172, %179 : vector<2x64xf32>
    %c5_162 = arith.constant 5 : index
    %c0_163 = arith.constant 0 : index
    %c0_164 = arith.constant 0 : index
    %181 = vector.load %arg7[%c5_162, %c0_163, %c0_164] : memref<9x2x18xbf16, #tpu.memory_space<vmem>>, vector<1x2x18xbf16>
    %182 = vector.shape_cast %181 : vector<1x2x18xbf16> to vector<2x18xbf16>
    %cst_165 = arith.constant dense<0.000000e+00> : vector<2x64xf32>
    %183 = tpu.matmul %182, %141, %cst_165 {dimension_numbers = #tpu.dot_dimension_numbers<[1], [0], [0], [1], [0, 0, 1, 1], [], []>} : vector<2x18xbf16>, vector<18x64xbf16>, vector<2x64xf32> -> vector<2x64xf32>
    %184 = arith.truncf %183 : vector<2x64xf32> to vector<2x64xbf16>
    %c5_166 = arith.constant 5 : index
    %c0_167 = arith.constant 0 : index
    %c0_168 = arith.constant 0 : index
    %185 = vector.load %arg8[%c5_166, %c0_167, %c0_168] : memref<9x64x64xbf16, #tpu.memory_space<vmem>>, vector<1x64x64xbf16>
    %186 = vector.shape_cast %185 : vector<1x64x64xbf16> to vector<64x64xbf16>
    %cst_169 = arith.constant dense<0.000000e+00> : vector<2x64xf32>
    %187 = tpu.matmul %184, %186, %cst_169 {dimension_numbers = #tpu.dot_dimension_numbers<[1], [0], [0], [1], [0, 0, 1, 1], [], []>} : vector<2x64xbf16>, vector<64x64xbf16>, vector<2x64xf32> -> vector<2x64xf32>
    %188 = arith.addf %180, %187 : vector<2x64xf32>
    %c6_170 = arith.constant 6 : index
    %c0_171 = arith.constant 0 : index
    %c0_172 = arith.constant 0 : index
    %189 = vector.load %arg7[%c6_170, %c0_171, %c0_172] : memref<9x2x18xbf16, #tpu.memory_space<vmem>>, vector<1x2x18xbf16>
    %190 = vector.shape_cast %189 : vector<1x2x18xbf16> to vector<2x18xbf16>
    %cst_173 = arith.constant dense<0.000000e+00> : vector<2x64xf32>
    %191 = tpu.matmul %190, %141, %cst_173 {dimension_numbers = #tpu.dot_dimension_numbers<[1], [0], [0], [1], [0, 0, 1, 1], [], []>} : vector<2x18xbf16>, vector<18x64xbf16>, vector<2x64xf32> -> vector<2x64xf32>
    %192 = arith.truncf %191 : vector<2x64xf32> to vector<2x64xbf16>
    %c6_174 = arith.constant 6 : index
    %c0_175 = arith.constant 0 : index
    %c0_176 = arith.constant 0 : index
    %193 = vector.load %arg8[%c6_174, %c0_175, %c0_176] : memref<9x64x64xbf16, #tpu.memory_space<vmem>>, vector<1x64x64xbf16>
    %194 = vector.shape_cast %193 : vector<1x64x64xbf16> to vector<64x64xbf16>
    %cst_177 = arith.constant dense<0.000000e+00> : vector<2x64xf32>
    %195 = tpu.matmul %192, %194, %cst_177 {dimension_numbers = #tpu.dot_dimension_numbers<[1], [0], [0], [1], [0, 0, 1, 1], [], []>} : vector<2x64xbf16>, vector<64x64xbf16>, vector<2x64xf32> -> vector<2x64xf32>
    %196 = arith.addf %188, %195 : vector<2x64xf32>
    %c7_178 = arith.constant 7 : index
    %c0_179 = arith.constant 0 : index
    %c0_180 = arith.constant 0 : index
    %197 = vector.load %arg7[%c7_178, %c0_179, %c0_180] : memref<9x2x18xbf16, #tpu.memory_space<vmem>>, vector<1x2x18xbf16>
    %198 = vector.shape_cast %197 : vector<1x2x18xbf16> to vector<2x18xbf16>
    %cst_181 = arith.constant dense<0.000000e+00> : vector<2x64xf32>
    %199 = tpu.matmul %198, %141, %cst_181 {dimension_numbers = #tpu.dot_dimension_numbers<[1], [0], [0], [1], [0, 0, 1, 1], [], []>} : vector<2x18xbf16>, vector<18x64xbf16>, vector<2x64xf32> -> vector<2x64xf32>
    %200 = arith.truncf %199 : vector<2x64xf32> to vector<2x64xbf16>
    %c7_182 = arith.constant 7 : index
    %c0_183 = arith.constant 0 : index
    %c0_184 = arith.constant 0 : index
    %201 = vector.load %arg8[%c7_182, %c0_183, %c0_184] : memref<9x64x64xbf16, #tpu.memory_space<vmem>>, vector<1x64x64xbf16>
    %202 = vector.shape_cast %201 : vector<1x64x64xbf16> to vector<64x64xbf16>
    %cst_185 = arith.constant dense<0.000000e+00> : vector<2x64xf32>
    %203 = tpu.matmul %200, %202, %cst_185 {dimension_numbers = #tpu.dot_dimension_numbers<[1], [0], [0], [1], [0, 0, 1, 1], [], []>} : vector<2x64xbf16>, vector<64x64xbf16>, vector<2x64xf32> -> vector<2x64xf32>
    %204 = arith.addf %196, %203 : vector<2x64xf32>
    %c8_186 = arith.constant 8 : index
    %c0_187 = arith.constant 0 : index
    %c0_188 = arith.constant 0 : index
    %205 = vector.load %arg7[%c8_186, %c0_187, %c0_188] : memref<9x2x18xbf16, #tpu.memory_space<vmem>>, vector<1x2x18xbf16>
    %206 = vector.shape_cast %205 : vector<1x2x18xbf16> to vector<2x18xbf16>
    %cst_189 = arith.constant dense<0.000000e+00> : vector<2x64xf32>
    %207 = tpu.matmul %206, %141, %cst_189 {dimension_numbers = #tpu.dot_dimension_numbers<[1], [0], [0], [1], [0, 0, 1, 1], [], []>} : vector<2x18xbf16>, vector<18x64xbf16>, vector<2x64xf32> -> vector<2x64xf32>
    %208 = arith.truncf %207 : vector<2x64xf32> to vector<2x64xbf16>
    %c8_190 = arith.constant 8 : index
    %c0_191 = arith.constant 0 : index
    %c0_192 = arith.constant 0 : index
    %209 = vector.load %arg8[%c8_190, %c0_191, %c0_192] : memref<9x64x64xbf16, #tpu.memory_space<vmem>>, vector<1x64x64xbf16>
    %210 = vector.shape_cast %209 : vector<1x64x64xbf16> to vector<64x64xbf16>
    %cst_193 = arith.constant dense<0.000000e+00> : vector<2x64xf32>
    %211 = tpu.matmul %208, %210, %cst_193 {dimension_numbers = #tpu.dot_dimension_numbers<[1], [0], [0], [1], [0, 0, 1, 1], [], []>} : vector<2x64xbf16>, vector<64x64xbf16>, vector<2x64xf32> -> vector<2x64xf32>
    %212 = arith.addf %204, %211 : vector<2x64xf32>
    %c0_194 = arith.constant 0 : index
    %c0_195 = arith.constant 0 : index
    %213 = vector.load %arg9[%c0_194, %c0_195] : memref<1x64xf32, #tpu.memory_space<vmem>>, vector<1x64xf32>
    %214 = vector.broadcast %213 : vector<1x64xf32> to vector<2x64xf32>
    %215 = arith.addf %212, %214 : vector<2x64xf32>
    %cst_196 = arith.constant 0.000000e+00 : f32
    %216 = vector.broadcast %cst_196 : f32 to vector<2x64xf32>
    %217 = arith.maximumf %215, %216 : vector<2x64xf32>
    %218 = arith.truncf %217 : vector<2x64xf32> to vector<2x64xbf16>
    %c0_197 = arith.constant 0 : index
    %c0_198 = arith.constant 0 : index
    %c0_199 = arith.constant 0 : index
    %219 = vector.load %arg10[%c0_197, %c0_198, %c0_199] : memref<1x64x512xbf16, #tpu.memory_space<vmem>>, vector<1x64x512xbf16>
    %220 = vector.shape_cast %219 : vector<1x64x512xbf16> to vector<64x512xbf16>
    %cst_200 = arith.constant dense<0.000000e+00> : vector<2x512xf32>
    %221 = tpu.matmul %218, %220, %cst_200 {dimension_numbers = #tpu.dot_dimension_numbers<[1], [0], [0], [1], [0, 0, 1, 1], [], []>} : vector<2x64xbf16>, vector<64x512xbf16>, vector<2x512xf32> -> vector<2x512xf32>
    %c0_201 = arith.constant 0 : index
    %c0_202 = arith.constant 0 : index
    %c0_203 = arith.constant 0 : index
    %222 = vector.load %arg16[%c0_201, %c0_202, %c0_203] : memref<1x1x512xf32, #tpu.memory_space<vmem>>, vector<1x1x512xf32>
    %223 = vector.shape_cast %222 : vector<1x1x512xf32> to vector<1x512xf32>
    %224 = vector.broadcast %223 : vector<1x512xf32> to vector<2x512xf32>
    %225 = arith.addf %221, %224 : vector<2x512xf32>
    %cst_204 = arith.constant 0.000000e+00 : f32
    %226 = vector.broadcast %cst_204 : f32 to vector<2x512xf32>
    %227 = arith.maximumf %225, %226 : vector<2x512xf32>
    %228 = arith.truncf %227 : vector<2x512xf32> to vector<2x512xbf16>
    %c0_205 = arith.constant 0 : index
    %c0_206 = arith.constant 0 : index
    %c0_207 = arith.constant 0 : index
    %229 = vector.load %arg11[%c0_205, %c0_206, %c0_207] : memref<1x512x512xbf16, #tpu.memory_space<vmem>>, vector<1x512x512xbf16>
    %230 = vector.shape_cast %229 : vector<1x512x512xbf16> to vector<512x512xbf16>
    %cst_208 = arith.constant dense<0.000000e+00> : vector<2x512xf32>
    %231 = tpu.matmul %228, %230, %cst_208 {dimension_numbers = #tpu.dot_dimension_numbers<[1], [0], [0], [1], [0, 0, 1, 1], [], []>} : vector<2x512xbf16>, vector<512x512xbf16>, vector<2x512xf32> -> vector<2x512xf32>
    %c0_209 = arith.constant 0 : index
    %c0_210 = arith.constant 0 : index
    %c0_211 = arith.constant 0 : index
    %232 = vector.load %arg17[%c0_209, %c0_210, %c0_211] : memref<1x1x512xf32, #tpu.memory_space<vmem>>, vector<1x1x512xf32>
    %233 = vector.shape_cast %232 : vector<1x1x512xf32> to vector<1x512xf32>
    %234 = vector.broadcast %233 : vector<1x512xf32> to vector<2x512xf32>
    %235 = arith.addf %231, %234 : vector<2x512xf32>
    %cst_212 = arith.constant 0.000000e+00 : f32
    %236 = vector.broadcast %cst_212 : f32 to vector<2x512xf32>
    %237 = arith.maximumf %235, %236 : vector<2x512xf32>
    %238 = arith.truncf %237 : vector<2x512xf32> to vector<2x512xbf16>
    %c0_213 = arith.constant 0 : index
    %c0_214 = arith.constant 0 : index
    %c0_215 = arith.constant 0 : index
    %239 = vector.load %arg12[%c0_213, %c0_214, %c0_215] : memref<1x512x1024xbf16, #tpu.memory_space<vmem>>, vector<1x512x1024xbf16>
    %240 = vector.shape_cast %239 : vector<1x512x1024xbf16> to vector<512x1024xbf16>
    %cst_216 = arith.constant dense<0.000000e+00> : vector<2x1024xf32>
    %241 = tpu.matmul %238, %240, %cst_216 {dimension_numbers = #tpu.dot_dimension_numbers<[1], [0], [0], [1], [0, 0, 1, 1], [], []>} : vector<2x512xbf16>, vector<512x1024xbf16>, vector<2x1024xf32> -> vector<2x1024xf32>
    %c0_217 = arith.constant 0 : index
    %c0_218 = arith.constant 0 : index
    %c0_219 = arith.constant 0 : index
    %242 = vector.load %arg18[%c0_217, %c0_218, %c0_219] : memref<1x1x1024xf32, #tpu.memory_space<vmem>>, vector<1x1x1024xf32>
    %243 = vector.shape_cast %242 : vector<1x1x1024xf32> to vector<1x1024xf32>
    %244 = vector.broadcast %243 : vector<1x1024xf32> to vector<2x1024xf32>
    %245 = arith.addf %241, %244 : vector<2x1024xf32>
    %cst_220 = arith.constant 0.000000e+00 : f32
    %246 = vector.broadcast %cst_220 : f32 to vector<2x1024xf32>
    %247 = arith.maximumf %245, %246 : vector<2x1024xf32>
    %248 = arith.truncf %247 : vector<2x1024xf32> to vector<2x1024xbf16>
    %c0_221 = arith.constant 0 : index
    %c0_222 = arith.constant 0 : index
    %c0_223 = arith.constant 0 : index
    %249 = vector.load %arg13[%c0_221, %c0_222, %c0_223] : memref<1x1024x512xbf16, #tpu.memory_space<vmem>>, vector<1x1024x512xbf16>
    %250 = vector.shape_cast %249 : vector<1x1024x512xbf16> to vector<1024x512xbf16>
    %cst_224 = arith.constant dense<0.000000e+00> : vector<2x512xf32>
    %251 = tpu.matmul %248, %250, %cst_224 {dimension_numbers = #tpu.dot_dimension_numbers<[1], [0], [0], [1], [0, 0, 1, 1], [], []>} : vector<2x1024xbf16>, vector<1024x512xbf16>, vector<2x512xf32> -> vector<2x512xf32>
    %c0_225 = arith.constant 0 : index
    %c0_226 = arith.constant 0 : index
    %c0_227 = arith.constant 0 : index
    %252 = vector.load %arg19[%c0_225, %c0_226, %c0_227] : memref<1x1x512xf32, #tpu.memory_space<vmem>>, vector<1x1x512xf32>
    %253 = vector.shape_cast %252 : vector<1x1x512xf32> to vector<1x512xf32>
    %254 = vector.broadcast %253 : vector<1x512xf32> to vector<2x512xf32>
    %255 = arith.addf %251, %254 : vector<2x512xf32>
    %cst_228 = arith.constant 0.000000e+00 : f32
    %256 = vector.broadcast %cst_228 : f32 to vector<2x512xf32>
    %257 = arith.maximumf %255, %256 : vector<2x512xf32>
    %258 = arith.truncf %257 : vector<2x512xf32> to vector<2x512xbf16>
    %c0_229 = arith.constant 0 : index
    %c0_230 = arith.constant 0 : index
    %c0_231 = arith.constant 0 : index
    %259 = vector.load %arg14[%c0_229, %c0_230, %c0_231] : memref<1x512x128xbf16, #tpu.memory_space<vmem>>, vector<1x512x128xbf16>
    %260 = vector.shape_cast %259 : vector<1x512x128xbf16> to vector<512x128xbf16>
    %cst_232 = arith.constant dense<0.000000e+00> : vector<2x128xf32>
    %261 = tpu.matmul %258, %260, %cst_232 {dimension_numbers = #tpu.dot_dimension_numbers<[1], [0], [0], [1], [0, 0, 1, 1], [], []>} : vector<2x512xbf16>, vector<512x128xbf16>, vector<2x128xf32> -> vector<2x128xf32>
    %c0_233 = arith.constant 0 : index
    %c0_234 = arith.constant 0 : index
    %c0_235 = arith.constant 0 : index
    %262 = vector.load %arg20[%c0_233, %c0_234, %c0_235] : memref<1x1x128xf32, #tpu.memory_space<vmem>>, vector<1x1x128xf32>
    %263 = vector.shape_cast %262 : vector<1x1x128xf32> to vector<1x128xf32>
    %264 = vector.broadcast %263 : vector<1x128xf32> to vector<2x128xf32>
    %265 = arith.addf %261, %264 : vector<2x128xf32>
    %cst_236 = arith.constant 0.000000e+00 : f32
    %266 = vector.broadcast %cst_236 : f32 to vector<2x128xf32>
    %267 = arith.maximumf %265, %266 : vector<2x128xf32>
    %268 = arith.truncf %267 : vector<2x128xf32> to vector<2x128xbf16>
    %c0_237 = arith.constant 0 : index
    %c0_238 = arith.constant 0 : index
    %c0_239 = arith.constant 0 : index
    %269 = vector.load %arg15[%c0_237, %c0_238, %c0_239] : memref<1x128x5xbf16, #tpu.memory_space<vmem>>, vector<1x128x5xbf16>
    %270 = vector.shape_cast %269 : vector<1x128x5xbf16> to vector<128x5xbf16>
    %cst_240 = arith.constant dense<0.000000e+00> : vector<2x5xf32>
    %271 = tpu.matmul %268, %270, %cst_240 {dimension_numbers = #tpu.dot_dimension_numbers<[1], [0], [0], [1], [0, 0, 1, 1], [], []>} : vector<2x128xbf16>, vector<128x5xbf16>, vector<2x5xf32> -> vector<2x5xf32>
    %c0_241 = arith.constant 0 : index
    %c0_242 = arith.constant 0 : index
    %c0_243 = arith.constant 0 : index
    %272 = vector.load %arg21[%c0_241, %c0_242, %c0_243] : memref<1x1x5xf32, #tpu.memory_space<vmem>>, vector<1x1x5xf32>
    %273 = vector.shape_cast %272 : vector<1x1x5xf32> to vector<1x5xf32>
    %274 = vector.broadcast %273 : vector<1x5xf32> to vector<2x5xf32>
    %275 = arith.addf %271, %274 : vector<2x5xf32>
    %c0_244 = arith.constant 0 : index
    %c0_245 = arith.constant 0 : index
    %c0_246 = arith.constant 0 : index
    %276 = vector.load %arg22[%c0_244, %c0_245, %c0_246] : memref<1x2x5xf32, #tpu.memory_space<vmem>>, vector<1x2x5xf32>
    %277 = vector.shape_cast %276 : vector<1x2x5xf32> to vector<2x5xf32>
    %278 = vector.shape_cast %275 : vector<2x5xf32> to vector<1x2x5xf32>
    tpu.vector_store %arg22[%c0_244, %c0_245, %c0_246], %278 {strides = array<i32>} : memref<1x2x5xf32, #tpu.memory_space<vmem>>, vector<1x2x5xf32>,
    return
  }
  func.func @transform_0(%arg0: i32) -> (i32, i32) {
    %c0_i32 = arith.constant 0 : i32
    %c0_i32_0 = arith.constant 0 : i32
    %c0_i32_1 = arith.constant 0 : i32
    return %c0_i32, %c0_i32_0 : i32, i32
  }
  func.func @transform_1(%arg0: i32) -> (i32, i32) {
    %c0_i32 = arith.constant 0 : i32
    %c0_i32_0 = arith.constant 0 : i32
    %c0_i32_1 = arith.constant 0 : i32
    return %c0_i32, %c0_i32_0 : i32, i32
  }
  func.func @transform_2(%arg0: i32) -> (i32, i32) {
    %c0_i32 = arith.constant 0 : i32
    %c0_i32_0 = arith.constant 0 : i32
    %c0_i32_1 = arith.constant 0 : i32
    return %c0_i32, %c0_i32_0 : i32, i32
  }
  func.func @transform_3(%arg0: i32) -> (i32, i32, i32) {
    %c0_i32 = arith.constant 0 : i32
    %c0_i32_0 = arith.constant 0 : i32
    %c0_i32_1 = arith.constant 0 : i32
    %c0_i32_2 = arith.constant 0 : i32
    return %c0_i32, %c0_i32_0, %c0_i32_1 : i32, i32, i32
  }
  func.func @transform_4(%arg0: i32) -> (i32, i32, i32) {
    %c0_i32 = arith.constant 0 : i32
    %c0_i32_0 = arith.constant 0 : i32
    %c0_i32_1 = arith.constant 0 : i32
    %c0_i32_2 = arith.constant 0 : i32
    return %c0_i32, %c0_i32_0, %c0_i32_1 : i32, i32, i32
  }
  func.func @transform_5(%arg0: i32) -> (i32, i32) {
    %c0_i32 = arith.constant 0 : i32
    %c0_i32_0 = arith.constant 0 : i32
    %c0_i32_1 = arith.constant 0 : i32
    return %c0_i32, %c0_i32_0 : i32, i32
  }
  func.func @transform_6(%arg0: i32) -> (i32, i32, i32) {
    %c0_i32 = arith.constant 0 : i32
    %c0_i32_0 = arith.constant 0 : i32
    %c0_i32_1 = arith.constant 0 : i32
    %c0_i32_2 = arith.constant 0 : i32
    return %c0_i32, %c0_i32_0, %c0_i32_1 : i32, i32, i32
  }
  func.func @transform_7(%arg0: i32) -> (i32, i32, i32) {
    %c0_i32 = arith.constant 0 : i32
    %c0_i32_0 = arith.constant 0 : i32
    %c0_i32_1 = arith.constant 0 : i32
    %c0_i32_2 = arith.constant 0 : i32
    return %c0_i32, %c0_i32_0, %c0_i32_1 : i32, i32, i32
  }
  func.func @transform_8(%arg0: i32) -> (i32, i32) {
    %c0_i32 = arith.constant 0 : i32
    %c0_i32_0 = arith.constant 0 : i32
    %c0_i32_1 = arith.constant 0 : i32
    return %c0_i32, %c0_i32_0 : i32, i32
  }
  func.func @transform_9(%arg0: i32) -> (i32, i32, i32) {
    %c0_i32 = arith.constant 0 : i32
    %c0_i32_0 = arith.constant 0 : i32
    %c0_i32_1 = arith.constant 0 : i32
    return %arg0, %c0_i32, %c0_i32_0 : i32, i32, i32
  }
  func.func @transform_10(%arg0: i32) -> (i32, i32, i32) {
    %c0_i32 = arith.constant 0 : i32
    %c0_i32_0 = arith.constant 0 : i32
    %c0_i32_1 = arith.constant 0 : i32
    return %arg0, %c0_i32, %c0_i32_0 : i32, i32, i32
  }
  func.func @transform_11(%arg0: i32) -> (i32, i32, i32) {
    %c0_i32 = arith.constant 0 : i32
    %c0_i32_0 = arith.constant 0 : i32
    %c0_i32_1 = arith.constant 0 : i32
    return %arg0, %c0_i32, %c0_i32_0 : i32, i32, i32
  }
  func.func @transform_12(%arg0: i32) -> (i32, i32, i32) {
    %c0_i32 = arith.constant 0 : i32
    %c0_i32_0 = arith.constant 0 : i32
    %c0_i32_1 = arith.constant 0 : i32
    return %arg0, %c0_i32, %c0_i32_0 : i32, i32, i32
  }
  func.func @transform_13(%arg0: i32) -> (i32, i32, i32) {
    %c0_i32 = arith.constant 0 : i32
    %c0_i32_0 = arith.constant 0 : i32
    %c0_i32_1 = arith.constant 0 : i32
    return %arg0, %c0_i32, %c0_i32_0 : i32, i32, i32
  }
  func.func @transform_14(%arg0: i32) -> (i32, i32, i32) {
    %c0_i32 = arith.constant 0 : i32
    %c0_i32_0 = arith.constant 0 : i32
    %c0_i32_1 = arith.constant 0 : i32
    return %arg0, %c0_i32, %c0_i32_0 : i32, i32, i32
  }
  func.func @transform_15(%arg0: i32) -> (i32, i32, i32) {
    %c0_i32 = arith.constant 0 : i32
    %c0_i32_0 = arith.constant 0 : i32
    %c0_i32_1 = arith.constant 0 : i32
    return %arg0, %c0_i32, %c0_i32_0 : i32, i32, i32
  }
  func.func @transform_16(%arg0: i32) -> (i32, i32, i32) {
    %c0_i32 = arith.constant 0 : i32
    %c0_i32_0 = arith.constant 0 : i32
    %c0_i32_1 = arith.constant 0 : i32
    return %arg0, %c0_i32, %c0_i32_0 : i32, i32, i32
  }
  func.func @transform_17(%arg0: i32) -> (i32, i32, i32) {
    %c0_i32 = arith.constant 0 : i32
    %c0_i32_0 = arith.constant 0 : i32
    %c0_i32_1 = arith.constant 0 : i32
    return %arg0, %c0_i32, %c0_i32_0 : i32, i32, i32
  }
  func.func @transform_18(%arg0: i32) -> (i32, i32, i32) {
    %c0_i32 = arith.constant 0 : i32
    %c0_i32_0 = arith.constant 0 : i32
    %c0_i32_1 = arith.constant 0 : i32
    return %arg0, %c0_i32, %c0_i32_0 : i32, i32, i32
  }
  func.func @transform_19(%arg0: i32) -> (i32, i32, i32) {
    %c0_i32 = arith.constant 0 : i32
    %c0_i32_0 = arith.constant 0 : i32
    %c0_i32_1 = arith.constant 0 : i32
    return %arg0, %c0_i32, %c0_i32_0 : i32, i32, i32
  }
  func.func @transform_20(%arg0: i32) -> (i32, i32, i32) {
    %c0_i32 = arith.constant 0 : i32
    %c0_i32_0 = arith.constant 0 : i32
    %c0_i32_1 = arith.constant 0 : i32
    return %arg0, %c0_i32, %c0_i32_0 : i32, i32, i32
  }
  func.func @transform_21(%arg0: i32) -> (i32, i32, i32) {
    %c0_i32 = arith.constant 0 : i32
    %c0_i32_0 = arith.constant 0 : i32
    %c0_i32_1 = arith.constant 0 : i32
    return %arg0, %c0_i32, %c0_i32_0 : i32, i32, i32
  }
}

</mosaic_0001>

<llo_original>
// kernel: sheepherding_a2c_forward.1
$region0: #{sheepherding_a2c_forward.1}
  #allocation0 [shape = 'u32[]', space=smem, size = 0x4, offset = 0x4, fixed_abs, tag = 'smem constant byte address 0x4 - core index']
  #allocation1 [shape = 'u32[144,128]{1,0:T(1,128)}', space=vmem, size = 0x12000, scoped, tag = 'internal scratch']
  #allocation2 [shape = 'bf16[2,64]{1,0:T(2,128)(2,1)}', space=vmem, size = 0x200, scoped, tag = 'scratch operand']
  %s0 = inlined_call_operand.vmem [shape: bf16[128,256], index: 0, kind: input, shape index: {}]
  %s1 = inlined_call_operand.vmem [shape: bf16[256,32], index: 1, kind: input, shape index: {}]
  %s2 = inlined_call_operand.vmem [shape: f32[1,32], index: 2, kind: input, shape index: {}]
  %s3 = inlined_call_operand.vmem [shape: bf16[16,18,128], index: 3, kind: input, shape index: {}]
  %s4 = inlined_call_operand.vmem [shape: bf16[16,32,64], index: 4, kind: input, shape index: {}]
  %s5 = inlined_call_operand.vmem [shape: f32[1,64], index: 5, kind: input, shape index: {}]
  %s6 = inlined_call_operand.vmem [shape: bf16[9,2,18], index: 6, kind: input, shape index: {}]
  %s7 = inlined_call_operand.vmem [shape: bf16[9,64,64], index: 7, kind: input, shape index: {}]
  %s8 = inlined_call_operand.vmem [shape: f32[1,64], index: 8, kind: input, shape index: {}]
  %s9 = inlined_call_operand.vmem [shape: bf16[2,64,512], index: 9, kind: input, shape index: {}]
  %s10 = inlined_call_operand.vmem [shape: bf16[2,512,512], index: 10, kind: input, shape index: {}]
  %s11 = inlined_call_operand.vmem [shape: bf16[2,512,1024], index: 11, kind: input, shape index: {}]
  %s12 = inlined_call_operand.vmem [shape: bf16[2,1024,512], index: 12, kind: input, shape index: {}]
  %s13 = inlined_call_operand.vmem [shape: bf16[2,512,128], index: 13, kind: input, shape index: {}]
  %s14 = inlined_call_operand.vmem [shape: bf16[2,128,5], index: 14, kind: input, shape index: {}]
  %s15 = inlined_call_operand.vmem [shape: f32[2,1,512], index: 15, kind: input, shape index: {}]
  %s16 = inlined_call_operand.vmem [shape: f32[2,1,512], index: 16, kind: input, shape index: {}]
  %s17 = inlined_call_operand.vmem [shape: f32[2,1,1024], index: 17, kind: input, shape index: {}]
  %s18 = inlined_call_operand.vmem [shape: f32[2,1,512], index: 18, kind: input, shape index: {}]
  %s19 = inlined_call_operand.vmem [shape: f32[2,1,128], index: 19, kind: input, shape index: {}]
  %s20 = inlined_call_operand.vmem [shape: f32[2,1,5], index: 20, kind: input, shape index: {}]
  %s21 = inlined_call_operand.vmem [shape: f32[2,2,5], index: 21, kind: output, shape index: {}]
  %s22 = sld [smem:[#allocation0]]
  $region117: #{sheepherding_a2c_forward.1} parent=0
    _
  %s24 = ssub.s32 1, %s22
  %s25 = scalar_select 0, %s24, %s22
  loop: start=0, step=1, limit=4
  $region2: #{sheepherding_a2c_forward.1} parent=0 // loop_pre_header
    _
  $region3: #{sheepherding_a2c_forward.1} parent=0 // loop_header
    %s27 = sphi 0, %s31
    %p28 = scmp.ge.s32.totalorder %s27, 4
    %s35 = sphi 0, %s35
    %s37 = sphi 0, %s35
    %s38 = sphi 0, %s37
    %s52 = sphi 0, %s38
    %s56 = sphi 0, %s56
    %s58 = sphi 0, %s56
    %s59 = sphi 0, %s58
    %s73 = sphi 0, %s59
    %s77 = sphi 0, %s77
    %s79 = sphi 0, %s77
    %s80 = sphi 0, %s79
    %s94 = sphi 0, %s80
    %s98 = sphi 0, %s98
    %s100 = sphi 0, %s98
    %s101 = sphi 0, %s100
    %s115 = sphi 0, %s101
    %s119 = sphi 0, %s119
    %s121 = sphi 0, %s119
    %s122 = sphi 0, %s121
    %s136 = sphi 0, %s122
    %s140 = sphi 0, %s140
    %s142 = sphi 0, %s140
    %s143 = sphi 0, %s142
    %s157 = sphi 0, %s143
    %s161 = sphi 0, %s161
    %s163 = sphi 0, %s161
    %s164 = sphi 0, %s163
    %s178 = sphi 0, %s164
    %s182 = sphi 0, %s182
    %s184 = sphi 0, %s182
    %s185 = sphi 0, %s184
    %s199 = sphi 0, %s185
    %s203 = sphi 0, %s203
    %s205 = sphi 0, %s203
    %s206 = sphi 0, %s205
    %s220 = sphi 0, %s206
    %s226 = sphi 0, %s228
    %s229 = sphi 0, %s226
    %s230 = sphi 0, %s229
    %s246 = sphi 0, %s230
    %s252 = sphi 0, %s254
    %s255 = sphi 0, %s252
    %s256 = sphi 0, %s255
    %s272 = sphi 0, %s256
    %s278 = sphi 0, %s280
    %s281 = sphi 0, %s278
    %s282 = sphi 0, %s281
    %s298 = sphi 0, %s282
    %s304 = sphi 0, %s306
    %s307 = sphi 0, %s304
    %s308 = sphi 0, %s307
    %s324 = sphi 0, %s308
    %s330 = sphi 0, %s332
    %s333 = sphi 0, %s330
    %s334 = sphi 0, %s333
    %s350 = sphi 0, %s334
    %s356 = sphi 0, %s358
    %s359 = sphi 0, %s356
    %s360 = sphi 0, %s359
    %s376 = sphi 0, %s360
    %s382 = sphi 0, %s384
    %s385 = sphi 0, %s382
    %s386 = sphi 0, %s385
    %s402 = sphi 0, %s386
    %s408 = sphi 0, %s410
    %s411 = sphi 0, %s408
    %s412 = sphi 0, %s411
    %s428 = sphi 0, %s412
    %s434 = sphi 0, %s436
    %s437 = sphi 0, %s434
    %s438 = sphi 0, %s437
    %s454 = sphi 0, %s438
    %s460 = sphi 0, %s462
    %s463 = sphi 0, %s460
    %s464 = sphi 0, %s463
    %s480 = sphi 0, %s464
    %s486 = sphi 0, %s488
    %s489 = sphi 0, %s486
    %s490 = sphi 0, %s489
    %s506 = sphi 0, %s490
    %s512 = sphi 0, %s514
    %s515 = sphi 0, %s512
    %s516 = sphi 0, %s515
    %s532 = sphi 0, %s516
    %s538 = sphi 0, %s540
    %s541 = sphi 0, %s538
    %s542 = sphi 0, %s541
    %s558 = sphi 0, %s542
  $region4: #{sheepherding_a2c_forward.1} parent=0 // loop_header_branch
    %30 = sbr.rel (%p28) target = $region8
  $region5: #{sheepherding_a2c_forward.1} parent=0 // loop_body
    %s32 = ssub.s32 %s27, 1
    %s33 = ssub.s32 %s27, 2
    %s34 = sadd.s32 %s27, 1
    %s36 = sadd.s32 %s35, 1
    %p39 = scmp.eq.s32.totalorder %s27, 1
    %p40 = scmp.ne.s32.totalorder %s35, %s37
    %p41 = scmp.eq.s32.totalorder %s27, 0
    %p42 = por %p40, %p41
    %p43 = scmp.ne.s32.totalorder %s35, %s37
    %p44 = scmp.eq.s32.totalorder %s32, 1
    %p45 = por %p43, %p44
    %p46 = scmp.ne.s32.totalorder %s37, %s38
    %p47 = scmp.eq.s32.totalorder %s32, 0
    %p48 = por %p46, %p47
    %p49 = scmp.ne.s32.totalorder %s37, %s38
    %p50 = scmp.eq.s32.totalorder %s33, 1
    %p51 = por %p49, %p50
    %p53 = scmp.ne.s32.totalorder %s38, %s52
    %p54 = scmp.eq.s32.totalorder %s33, 0
    %p55 = por %p53, %p54
    %s57 = sadd.s32 %s56, 1
    %p60 = scmp.eq.s32.totalorder %s27, 1
    %p61 = scmp.ne.s32.totalorder %s56, %s58
    %p62 = scmp.eq.s32.totalorder %s27, 0
    %p63 = por %p61, %p62
    %p64 = scmp.ne.s32.totalorder %s56, %s58
    %p65 = scmp.eq.s32.totalorder %s32, 1
    %p66 = por %p64, %p65
    %p67 = scmp.ne.s32.totalorder %s58, %s59
    %p68 = scmp.eq.s32.totalorder %s32, 0
    %p69 = por %p67, %p68
    %p70 = scmp.ne.s32.totalorder %s58, %s59
    %p71 = scmp.eq.s32.totalorder %s33, 1
    %p72 = por %p70, %p71
    %p74 = scmp.ne.s32.totalorder %s59, %s73
    %p75 = scmp.eq.s32.totalorder %s33, 0
    %p76 = por %p74, %p75
    %s78 = sadd.s32 %s77, 1
    %p81 = scmp.eq.s32.totalorder %s27, 1
    %p82 = scmp.ne.s32.totalorder %s77, %s79
    %p83 = scmp.eq.s32.totalorder %s27, 0
    %p84 = por %p82, %p83
    %p85 = scmp.ne.s32.totalorder %s77, %s79
    %p86 = scmp.eq.s32.totalorder %s32, 1
    %p87 = por %p85, %p86
    %p88 = scmp.ne.s32.totalorder %s79, %s80
    %p89 = scmp.eq.s32.totalorder %s32, 0
    %p90 = por %p88, %p89
    %p91 = scmp.ne.s32.totalorder %s79, %s80
    %p92 = scmp.eq.s32.totalorder %s33, 1
    %p93 = por %p91, %p92
    %p95 = scmp.ne.s32.totalorder %s80, %s94
    %p96 = scmp.eq.s32.totalorder %s33, 0
    %p97 = por %p95, %p96
    %s99 = sadd.s32 %s98, 1
    %p102 = scmp.eq.s32.totalorder %s27, 1
    %p103 = scmp.ne.s32.totalorder %s98, %s100
    %p104 = scmp.eq.s32.totalorder %s27, 0
    %p105 = por %p103, %p104
    %p106 = scmp.ne.s32.totalorder %s98, %s100
    %p107 = scmp.eq.s32.totalorder %s32, 1
    %p108 = por %p106, %p107
    %p109 = scmp.ne.s32.totalorder %s100, %s101
    %p110 = scmp.eq.s32.totalorder %s32, 0
    %p111 = por %p109, %p110
    %p112 = scmp.ne.s32.totalorder %s100, %s101
    %p113 = scmp.eq.s32.totalorder %s33, 1
    %p114 = por %p112, %p113
    %p116 = scmp.ne.s32.totalorder %s101, %s115
    %p117 = scmp.eq.s32.totalorder %s33, 0
    %p118 = por %p116, %p117
    %s120 = sadd.s32 %s119, 1
    %p123 = scmp.eq.s32.totalorder %s27, 1
    %p124 = scmp.ne.s32.totalorder %s119, %s121
    %p125 = scmp.eq.s32.totalorder %s27, 0
    %p126 = por %p124, %p125
    %p127 = scmp.ne.s32.totalorder %s119, %s121
    %p128 = scmp.eq.s32.totalorder %s32, 1
    %p129 = por %p127, %p128
    %p130 = scmp.ne.s32.totalorder %s121, %s122
    %p131 = scmp.eq.s32.totalorder %s32, 0
    %p132 = por %p130, %p131
    %p133 = scmp.ne.s32.totalorder %s121, %s122
    %p134 = scmp.eq.s32.totalorder %s33, 1
    %p135 = por %p133, %p134
    %p137 = scmp.ne.s32.totalorder %s122, %s136
    %p138 = scmp.eq.s32.totalorder %s33, 0
    %p139 = por %p137, %p138
    %s141 = sadd.s32 %s140, 1
    %p144 = scmp.eq.s32.totalorder %s27, 1
    %p145 = scmp.ne.s32.totalorder %s140, %s142
    %p146 = scmp.eq.s32.totalorder %s27, 0
    %p147 = por %p145, %p146
    %p148 = scmp.ne.s32.totalorder %s140, %s142
    %p149 = scmp.eq.s32.totalorder %s32, 1
    %p150 = por %p148, %p149
    %p151 = scmp.ne.s32.totalorder %s142, %s143
    %p152 = scmp.eq.s32.totalorder %s32, 0
    %p153 = por %p151, %p152
    %p154 = scmp.ne.s32.totalorder %s142, %s143
    %p155 = scmp.eq.s32.totalorder %s33, 1
    %p156 = por %p154, %p155
    %p158 = scmp.ne.s32.totalorder %s143, %s157
    %p159 = scmp.eq.s32.totalorder %s33, 0
    %p160 = por %p158, %p159
    %s162 = sadd.s32 %s161, 1
    %p165 = scmp.eq.s32.totalorder %s27, 1
    %p166 = scmp.ne.s32.totalorder %s161, %s163
    %p167 = scmp.eq.s32.totalorder %s27, 0
    %p168 = por %p166, %p167
    %p169 = scmp.ne.s32.totalorder %s161, %s163
    %p170 = scmp.eq.s32.totalorder %s32, 1
    %p171 = por %p169, %p170
    %p172 = scmp.ne.s32.totalorder %s163, %s164
    %p173 = scmp.eq.s32.totalorder %s32, 0
    %p174 = por %p172, %p173
    %p175 = scmp.ne.s32.totalorder %s163, %s164
    %p176 = scmp.eq.s32.totalorder %s33, 1
    %p177 = por %p175, %p176
    %p179 = scmp.ne.s32.totalorder %s164, %s178
    %p180 = scmp.eq.s32.totalorder %s33, 0
    %p181 = por %p179, %p180
    %s183 = sadd.s32 %s182, 1
    %p186 = scmp.eq.s32.totalorder %s27, 1
    %p187 = scmp.ne.s32.totalorder %s182, %s184
    %p188 = scmp.eq.s32.totalorder %s27, 0
    %p189 = por %p187, %p188
    %p190 = scmp.ne.s32.totalorder %s182, %s184
    %p191 = scmp.eq.s32.totalorder %s32, 1
    %p192 = por %p190, %p191
    %p193 = scmp.ne.s32.totalorder %s184, %s185
    %p194 = scmp.eq.s32.totalorder %s32, 0
    %p195 = por %p193, %p194
    %p196 = scmp.ne.s32.totalorder %s184, %s185
    %p197 = scmp.eq.s32.totalorder %s33, 1
    %p198 = por %p196, %p197
    %p200 = scmp.ne.s32.totalorder %s185, %s199
    %p201 = scmp.eq.s32.totalorder %s33, 0
    %p202 = por %p200, %p201
    %s204 = sadd.s32 %s203, 1
    %p207 = scmp.eq.s32.totalorder %s27, 1
    %p208 = scmp.ne.s32.totalorder %s203, %s205
    %p209 = scmp.eq.s32.totalorder %s27, 0
    %p210 = por %p208, %p209
    %p211 = scmp.ne.s32.totalorder %s203, %s205
    %p212 = scmp.eq.s32.totalorder %s32, 1
    %p213 = por %p211, %p212
    %p214 = scmp.ne.s32.totalorder %s205, %s206
    %p215 = scmp.eq.s32.totalorder %s32, 0
    %p216 = por %p214, %p215
    %p217 = scmp.ne.s32.totalorder %s205, %s206
    %p218 = scmp.eq.s32.totalorder %s33, 1
    %p219 = por %p217, %p218
    %p221 = scmp.ne.s32.totalorder %s206, %s220
    %p222 = scmp.eq.s32.totalorder %s33, 0
    %p223 = por %p221, %p222
    %s224 = ssub.s32 %s27, %s34
    %p225 = scmp.eq.s32.totalorder %s224, 0
    %s227 = sadd.s32 %s226, 1
    %s228 = scalar_select %p225, %s226, %s227
    %p231 = pneg %p225
    %p232 = scmp.eq.s32.totalorder %s27, 1
    %p233 = por %p231, %p232
    %p234 = scmp.ne.s32.totalorder %s226, %s229
    %p235 = scmp.eq.s32.totalorder %s27, 0
    %p236 = por %p234, %p235
    %p237 = scmp.ne.s32.totalorder %s226, %s229
    %p238 = scmp.eq.s32.totalorder %s32, 1
    %p239 = por %p237, %p238
    %p240 = scmp.ne.s32.totalorder %s229, %s230
    %p241 = scmp.eq.s32.totalorder %s32, 0
    %p242 = por %p240, %p241
    %p243 = scmp.ne.s32.totalorder %s229, %s230
    %p244 = scmp.eq.s32.totalorder %s33, 1
    %p245 = por %p243, %p244
    %p247 = scmp.ne.s32.totalorder %s230, %s246
    %p248 = scmp.eq.s32.totalorder %s33, 0
    %p249 = por %p247, %p248
    %s250 = ssub.s32 %s27, %s34
    %p251 = scmp.eq.s32.totalorder %s250, 0
    %s253 = sadd.s32 %s252, 1
    %s254 = scalar_select %p251, %s252, %s253
    %p257 = pneg %p251
    %p258 = scmp.eq.s32.totalorder %s27, 1
    %p259 = por %p257, %p258
    %p260 = scmp.ne.s32.totalorder %s252, %s255
    %p261 = scmp.eq.s32.totalorder %s27, 0
    %p262 = por %p260, %p261
    %p263 = scmp.ne.s32.totalorder %s252, %s255
    %p264 = scmp.eq.s32.totalorder %s32, 1
    %p265 = por %p263, %p264
    %p266 = scmp.ne.s32.totalorder %s255, %s256
    %p267 = scmp.eq.s32.totalorder %s32, 0
    %p268 = por %p266, %p267
    %p269 = scmp.ne.s32.totalorder %s255, %s256
    %p270 = scmp.eq.s32.totalorder %s33, 1
    %p271 = por %p269, %p270
    %p273 = scmp.ne.s32.totalorder %s256, %s272
    %p274 = scmp.eq.s32.totalorder %s33, 0
    %p275 = por %p273, %p274
    %s276 = ssub.s32 %s27, %s34
    %p277 = scmp.eq.s32.totalorder %s276, 0
    %s279 = sadd.s32 %s278, 1
    %s280 = scalar_select %p277, %s278, %s279
    %p283 = pneg %p277
    %p284 = scmp.eq.s32.totalorder %s27, 1
    %p285 = por %p283, %p284
    %p286 = scmp.ne.s32.totalorder %s278, %s281
    %p287 = scmp.eq.s32.totalorder %s27, 0
    %p288 = por %p286, %p287
    %p289 = scmp.ne.s32.totalorder %s278, %s281
    %p290 = scmp.eq.s32.totalorder %s32, 1
    %p291 = por %p289, %p290
    %p292 = scmp.ne.s32.totalorder %s281, %s282
    %p293 = scmp.eq.s32.totalorder %s32, 0
    %p294 = por %p292, %p293
    %p295 = scmp.ne.s32.totalorder %s281, %s282
    %p296 = scmp.eq.s32.totalorder %s33, 1
    %p297 = por %p295, %p296
    %p299 = scmp.ne.s32.totalorder %s282, %s298
    %p300 = scmp.eq.s32.totalorder %s33, 0
    %p301 = por %p299, %p300
    %s302 = ssub.s32 %s27, %s34
    %p303 = scmp.eq.s32.totalorder %s302, 0
    %s305 = sadd.s32 %s304, 1
    %s306 = scalar_select %p303, %s304, %s305
    %p309 = pneg %p303
    %p310 = scmp.eq.s32.totalorder %s27, 1
    %p311 = por %p309, %p310
    %p312 = scmp.ne.s32.totalorder %s304, %s307
    %p313 = scmp.eq.s32.totalorder %s27, 0
    %p314 = por %p312, %p313
    %p315 = scmp.ne.s32.totalorder %s304, %s307
    %p316 = scmp.eq.s32.totalorder %s32, 1
    %p317 = por %p315, %p316
    %p318 = scmp.ne.s32.totalorder %s307, %s308
    %p319 = scmp.eq.s32.totalorder %s32, 0
    %p320 = por %p318, %p319
    %p321 = scmp.ne.s32.totalorder %s307, %s308
    %p322 = scmp.eq.s32.totalorder %s33, 1
    %p323 = por %p321, %p322
    %p325 = scmp.ne.s32.totalorder %s308, %s324
    %p326 = scmp.eq.s32.totalorder %s33, 0
    %p327 = por %p325, %p326
    %s328 = ssub.s32 %s27, %s34
    %p329 = scmp.eq.s32.totalorder %s328, 0
    %s331 = sadd.s32 %s330, 1
    %s332 = scalar_select %p329, %s330, %s331
    %p335 = pneg %p329
    %p336 = scmp.eq.s32.totalorder %s27, 1
    %p337 = por %p335, %p336
    %p338 = scmp.ne.s32.totalorder %s330, %s333
    %p339 = scmp.eq.s32.totalorder %s27, 0
    %p340 = por %p338, %p339
    %p341 = scmp.ne.s32.totalorder %s330, %s333
    %p342 = scmp.eq.s32.totalorder %s32, 1
    %p343 = por %p341, %p342
    %p344 = scmp.ne.s32.totalorder %s333, %s334
    %p345 = scmp.eq.s32.totalorder %s32, 0
    %p346 = por %p344, %p345
    %p347 = scmp.ne.s32.totalorder %s333, %s334
    %p348 = scmp.eq.s32.totalorder %s33, 1
    %p349 = por %p347, %p348
    %p351 = scmp.ne.s32.totalorder %s334, %s350
    %p352 = scmp.eq.s32.totalorder %s33, 0
    %p353 = por %p351, %p352
    %s354 = ssub.s32 %s27, %s34
    %p355 = scmp.eq.s32.totalorder %s354, 0
    %s357 = sadd.s32 %s356, 1
    %s358 = scalar_select %p355, %s356, %s357
    %p361 = pneg %p355
    %p362 = scmp.eq.s32.totalorder %s27, 1
    %p363 = por %p361, %p362
    %p364 = scmp.ne.s32.totalorder %s356, %s359
    %p365 = scmp.eq.s32.totalorder %s27, 0
    %p366 = por %p364, %p365
    %p367 = scmp.ne.s32.totalorder %s356, %s359
    %p368 = scmp.eq.s32.totalorder %s32, 1
    %p369 = por %p367, %p368
    %p370 = scmp.ne.s32.totalorder %s359, %s360
    %p371 = scmp.eq.s32.totalorder %s32, 0
    %p372 = por %p370, %p371
    %p373 = scmp.ne.s32.totalorder %s359, %s360
    %p374 = scmp.eq.s32.totalorder %s33, 1
    %p375 = por %p373, %p374
    %p377 = scmp.ne.s32.totalorder %s360, %s376
    %p378 = scmp.eq.s32.totalorder %s33, 0
    %p379 = por %p377, %p378
    %s380 = ssub.s32 %s27, %s34
    %p381 = scmp.eq.s32.totalorder %s380, 0
    %s383 = sadd.s32 %s382, 1
    %s384 = scalar_select %p381, %s382, %s383
    %p387 = pneg %p381
    %p388 = scmp.eq.s32.totalorder %s27, 1
    %p389 = por %p387, %p388
    %p390 = scmp.ne.s32.totalorder %s382, %s385
    %p391 = scmp.eq.s32.totalorder %s27, 0
    %p392 = por %p390, %p391
    %p393 = scmp.ne.s32.totalorder %s382, %s385
    %p394 = scmp.eq.s32.totalorder %s32, 1
    %p395 = por %p393, %p394
    %p396 = scmp.ne.s32.totalorder %s385, %s386
    %p397 = scmp.eq.s32.totalorder %s32, 0
    %p398 = por %p396, %p397
    %p399 = scmp.ne.s32.totalorder %s385, %s386
    %p400 = scmp.eq.s32.totalorder %s33, 1
    %p401 = por %p399, %p400
    %p403 = scmp.ne.s32.totalorder %s386, %s402
    %p404 = scmp.eq.s32.totalorder %s33, 0
    %p405 = por %p403, %p404
    %s406 = ssub.s32 %s27, %s34
    %p407 = scmp.eq.s32.totalorder %s406, 0
    %s409 = sadd.s32 %s408, 1
    %s410 = scalar_select %p407, %s408, %s409
    %p413 = pneg %p407
    %p414 = scmp.eq.s32.totalorder %s27, 1
    %p415 = por %p413, %p414
    %p416 = scmp.ne.s32.totalorder %s408, %s411
    %p417 = scmp.eq.s32.totalorder %s27, 0
    %p418 = por %p416, %p417
    %p419 = scmp.ne.s32.totalorder %s408, %s411
    %p420 = scmp.eq.s32.totalorder %s32, 1
    %p421 = por %p419, %p420
    %p422 = scmp.ne.s32.totalorder %s411, %s412
    %p423 = scmp.eq.s32.totalorder %s32, 0
    %p424 = por %p422, %p423
    %p425 = scmp.ne.s32.totalorder %s411, %s412
    %p426 = scmp.eq.s32.totalorder %s33, 1
    %p427 = por %p425, %p426
    %p429 = scmp.ne.s32.totalorder %s412, %s428
    %p430 = scmp.eq.s32.totalorder %s33, 0
    %p431 = por %p429, %p430
    %s432 = ssub.s32 %s27, %s34
    %p433 = scmp.eq.s32.totalorder %s432, 0
    %s435 = sadd.s32 %s434, 1
    %s436 = scalar_select %p433, %s434, %s435
    %p439 = pneg %p433
    %p440 = scmp.eq.s32.totalorder %s27, 1
    %p441 = por %p439, %p440
    %p442 = scmp.ne.s32.totalorder %s434, %s437
    %p443 = scmp.eq.s32.totalorder %s27, 0
    %p444 = por %p442, %p443
    %p445 = scmp.ne.s32.totalorder %s434, %s437
    %p446 = scmp.eq.s32.totalorder %s32, 1
    %p447 = por %p445, %p446
    %p448 = scmp.ne.s32.totalorder %s437, %s438
    %p449 = scmp.eq.s32.totalorder %s32, 0
    %p450 = por %p448, %p449
    %p451 = scmp.ne.s32.totalorder %s437, %s438
    %p452 = scmp.eq.s32.totalorder %s33, 1
    %p453 = por %p451, %p452
    %p455 = scmp.ne.s32.totalorder %s438, %s454
    %p456 = scmp.eq.s32.totalorder %s33, 0
    %p457 = por %p455, %p456
    %s458 = ssub.s32 %s27, %s34
    %p459 = scmp.eq.s32.totalorder %s458, 0
    %s461 = sadd.s32 %s460, 1
    %s462 = scalar_select %p459, %s460, %s461
    %p465 = pneg %p459
    %p466 = scmp.eq.s32.totalorder %s27, 1
    %p467 = por %p465, %p466
    %p468 = scmp.ne.s32.totalorder %s460, %s463
    %p469 = scmp.eq.s32.totalorder %s27, 0
    %p470 = por %p468, %p469
    %p471 = scmp.ne.s32.totalorder %s460, %s463
    %p472 = scmp.eq.s32.totalorder %s32, 1
    %p473 = por %p471, %p472
    %p474 = scmp.ne.s32.totalorder %s463, %s464
    %p475 = scmp.eq.s32.totalorder %s32, 0
    %p476 = por %p474, %p475
    %p477 = scmp.ne.s32.totalorder %s463, %s464
    %p478 = scmp.eq.s32.totalorder %s33, 1
    %p479 = por %p477, %p478
    %p481 = scmp.ne.s32.totalorder %s464, %s480
    %p482 = scmp.eq.s32.totalorder %s33, 0
    %p483 = por %p481, %p482
    %s484 = ssub.s32 %s27, %s34
    %p485 = scmp.eq.s32.totalorder %s484, 0
    %s487 = sadd.s32 %s486, 1
    %s488 = scalar_select %p485, %s486, %s487
    %p491 = pneg %p485
    %p492 = scmp.eq.s32.totalorder %s27, 1
    %p493 = por %p491, %p492
    %p494 = scmp.ne.s32.totalorder %s486, %s489
    %p495 = scmp.eq.s32.totalorder %s27, 0
    %p496 = por %p494, %p495
    %p497 = scmp.ne.s32.totalorder %s486, %s489
    %p498 = scmp.eq.s32.totalorder %s32, 1
    %p499 = por %p497, %p498
    %p500 = scmp.ne.s32.totalorder %s489, %s490
    %p501 = scmp.eq.s32.totalorder %s32, 0
    %p502 = por %p500, %p501
    %p503 = scmp.ne.s32.totalorder %s489, %s490
    %p504 = scmp.eq.s32.totalorder %s33, 1
    %p505 = por %p503, %p504
    %p507 = scmp.ne.s32.totalorder %s490, %s506
    %p508 = scmp.eq.s32.totalorder %s33, 0
    %p509 = por %p507, %p508
    %s510 = ssub.s32 %s27, %s34
    %p511 = scmp.eq.s32.totalorder %s510, 0
    %s513 = sadd.s32 %s512, 1
    %s514 = scalar_select %p511, %s512, %s513
    %p517 = pneg %p511
    %p518 = scmp.eq.s32.totalorder %s27, 1
    %p519 = por %p517, %p518
    %p520 = scmp.ne.s32.totalorder %s512, %s515
    %p521 = scmp.eq.s32.totalorder %s27, 0
    %p522 = por %p520, %p521
    %p523 = scmp.ne.s32.totalorder %s512, %s515
    %p524 = scmp.eq.s32.totalorder %s32, 1
    %p525 = por %p523, %p524
    %p526 = scmp.ne.s32.totalorder %s515, %s516
    %p527 = scmp.eq.s32.totalorder %s32, 0
    %p528 = por %p526, %p527
    %p529 = scmp.ne.s32.totalorder %s515, %s516
    %p530 = scmp.eq.s32.totalorder %s33, 1
    %p531 = por %p529, %p530
    %p533 = scmp.ne.s32.totalorder %s516, %s532
    %p534 = scmp.eq.s32.totalorder %s33, 0
    %p535 = por %p533, %p534
    %s536 = ssub.s32 %s27, %s34
    %p537 = scmp.eq.s32.totalorder %s536, 0
    %s539 = sadd.s32 %s538, 1
    %s540 = scalar_select %p537, %s538, %s539
    %p543 = pneg %p537
    %p544 = scmp.eq.s32.totalorder %s27, 1
    %p545 = por %p543, %p544
    %p546 = scmp.ne.s32.totalorder %s538, %s541
    %p547 = scmp.eq.s32.totalorder %s27, 0
    %p548 = por %p546, %p547
    %p549 = scmp.ne.s32.totalorder %s538, %s541
    %p550 = scmp.eq.s32.totalorder %s32, 1
    %p551 = por %p549, %p550
    %p552 = scmp.ne.s32.totalorder %s541, %s542
    %p553 = scmp.eq.s32.totalorder %s32, 0
    %p554 = por %p552, %p553
    %p555 = scmp.ne.s32.totalorder %s541, %s542
    %p556 = scmp.eq.s32.totalorder %s33, 1
    %p557 = por %p555, %p556
    %p559 = scmp.ne.s32.totalorder %s542, %s558
    %p560 = scmp.eq.s32.totalorder %s33, 0
    %p561 = por %p559, %p560
    %p562 = scmp.le.s32.totalorder 1, %s27
    %p563 = scmp.lt.s32.totalorder %s27, 3
    %p564 = pnand %p562, %p563
    %p565 = pneg %p564
    // Predicated region
    $region9: #{sheepherding_a2c_forward.1} parent=5 // pred_check
      _
    $region10: #{sheepherding_a2c_forward.1} parent=5 // pred_check_branch
      %567 = sbr.rel (%p564) target = $region12
    $region11: #{sheepherding_a2c_forward.1} parent=5 // pred_region
      %s568 = ssub.s32 %s27, 1
      // Predicated region
      $region13: #{sheepherding_a2c_forward.1} parent=11 // pred_check
        %p569 = pneg %p48
      $region14: #{sheepherding_a2c_forward.1} parent=11 // pred_check_branch
        %571 = sbr.rel (%p569) target = $region16
      $region15: #{sheepherding_a2c_forward.1} parent=11 // pred_region
        _
      $region16: #{sheepherding_a2c_forward.1} parent=11 // pred_fallthru
        _
      // Predicated region
      $region17: #{sheepherding_a2c_forward.1} parent=11 // pred_check
        %p572 = pneg %p69
      $region18: #{sheepherding_a2c_forward.1} parent=11 // pred_check_branch
        %574 = sbr.rel (%p572) target = $region20
      $region19: #{sheepherding_a2c_forward.1} parent=11 // pred_region
        _
      $region20: #{sheepherding_a2c_forward.1} parent=11 // pred_fallthru
        _
      // Predicated region
      $region21: #{sheepherding_a2c_forward.1} parent=11 // pred_check
        %p575 = pneg %p90
      $region22: #{sheepherding_a2c_forward.1} parent=11 // pred_check_branch
        %577 = sbr.rel (%p575) target = $region24
      $region23: #{sheepherding_a2c_forward.1} parent=11 // pred_region
        _
      $region24: #{sheepherding_a2c_forward.1} parent=11 // pred_fallthru
        _
      // Predicated region
      $region25: #{sheepherding_a2c_forward.1} parent=11 // pred_check
        %p578 = pneg %p111
      $region26: #{sheepherding_a2c_forward.1} parent=11 // pred_check_branch
        %580 = sbr.rel (%p578) target = $region28
      $region27: #{sheepherding_a2c_forward.1} parent=11 // pred_region
        _
      $region28: #{sheepherding_a2c_forward.1} parent=11 // pred_fallthru
        _
      // Predicated region
      $region29: #{sheepherding_a2c_forward.1} parent=11 // pred_check
        %p581 = pneg %p132
      $region30: #{sheepherding_a2c_forward.1} parent=11 // pred_check_branch
        %583 = sbr.rel (%p581) target = $region32
      $region31: #{sheepherding_a2c_forward.1} parent=11 // pred_region
        _
      $region32: #{sheepherding_a2c_forward.1} parent=11 // pred_fallthru
        _
      // Predicated region
      $region33: #{sheepherding_a2c_forward.1} parent=11 // pred_check
        %p584 = pneg %p153
      $region34: #{sheepherding_a2c_forward.1} parent=11 // pred_check_branch
        %586 = sbr.rel (%p584) target = $region36
      $region35: #{sheepherding_a2c_forward.1} parent=11 // pred_region
        _
      $region36: #{sheepherding_a2c_forward.1} parent=11 // pred_fallthru
        _
      // Predicated region
      $region37: #{sheepherding_a2c_forward.1} parent=11 // pred_check
        %p587 = pneg %p174
      $region38: #{sheepherding_a2c_forward.1} parent=11 // pred_check_branch
        %589 = sbr.rel (%p587) target = $region40
      $region39: #{sheepherding_a2c_forward.1} parent=11 // pred_region
        _
      $region40: #{sheepherding_a2c_forward.1} parent=11 // pred_fallthru
        _
      // Predicated region
      $region41: #{sheepherding_a2c_forward.1} parent=11 // pred_check
        %p590 = pneg %p195
      $region42: #{sheepherding_a2c_forward.1} parent=11 // pred_check_branch
        %592 = sbr.rel (%p590) target = $region44
      $region43: #{sheepherding_a2c_forward.1} parent=11 // pred_region
        _
      $region44: #{sheepherding_a2c_forward.1} parent=11 // pred_fallthru
        _
      // Predicated region
      $region45: #{sheepherding_a2c_forward.1} parent=11 // pred_check
        %p593 = pneg %p216
      $region46: #{sheepherding_a2c_forward.1} parent=11 // pred_check_branch
        %595 = sbr.rel (%p593) target = $region48
      $region47: #{sheepherding_a2c_forward.1} parent=11 // pred_region
        _
      $region48: #{sheepherding_a2c_forward.1} parent=11 // pred_fallthru
        _
    $region12: #{sheepherding_a2c_forward.1} parent=5 // pred_fallthru
      _
    %p596 = scmp.lt.s32.totalorder %s27, 2
    // Predicated region
    $region49: #{sheepherding_a2c_forward.1} parent=5 // pred_check
      %p597 = pneg %p596
    $region50: #{sheepherding_a2c_forward.1} parent=5 // pred_check_branch
      %599 = sbr.rel (%p597) target = $region52
    $region51: #{sheepherding_a2c_forward.1} parent=5 // pred_region
      // Predicated region
      $region53: #{sheepherding_a2c_forward.1} parent=51 // pred_check
        %p600 = pneg %p236
      $region54: #{sheepherding_a2c_forward.1} parent=51 // pred_check_branch
        %602 = sbr.rel (%p600) target = $region56
      $region55: #{sheepherding_a2c_forward.1} parent=51 // pred_region
        %p603 = scmp.lt.s32.totalorder %s27, 1
        %s604 = scalar_select %p603, %s27, 1
        %s605 = smul.addr %s604, 32
        %s606 = smul.addr %s605, 4
        %s607 = scalar_lea.vmem %s9, %s606
      $region56: #{sheepherding_a2c_forward.1} parent=51 // pred_fallthru
        _
      // Predicated region
      $region57: #{sheepherding_a2c_forward.1} parent=51 // pred_check
        %p608 = pneg %p262
      $region58: #{sheepherding_a2c_forward.1} parent=51 // pred_check_branch
        %610 = sbr.rel (%p608) target = $region60
      $region59: #{sheepherding_a2c_forward.1} parent=51 // pred_region
        %p611 = scmp.lt.s32.totalorder %s27, 1
        %s612 = scalar_select %p611, %s27, 1
        %s613 = smul.addr %s612, 256
        %s614 = smul.addr %s613, 4
        %s615 = scalar_lea.vmem %s10, %s614
      $region60: #{sheepherding_a2c_forward.1} parent=51 // pred_fallthru
        _
      // Predicated region
      $region61: #{sheepherding_a2c_forward.1} parent=51 // pred_check
        %p616 = pneg %p288
      $region62: #{sheepherding_a2c_forward.1} parent=51 // pred_check_branch
        %618 = sbr.rel (%p616) target = $region64
      $region63: #{sheepherding_a2c_forward.1} parent=51 // pred_region
        %p619 = scmp.lt.s32.totalorder %s27, 1
        %s620 = scalar_select %p619, %s27, 1
        %s621 = smul.addr %s620, 512
        %s622 = smul.addr %s621, 4
        %s623 = scalar_lea.vmem %s11, %s622
      $region64: #{sheepherding_a2c_forward.1} parent=51 // pred_fallthru
        _
      // Predicated region
      $region65: #{sheepherding_a2c_forward.1} parent=51 // pred_check
        %p624 = pneg %p314
      $region66: #{sheepherding_a2c_forward.1} parent=51 // pred_check_branch
        %626 = sbr.rel (%p624) target = $region68
      $region67: #{sheepherding_a2c_forward.1} parent=51 // pred_region
        %p627 = scmp.lt.s32.totalorder %s27, 1
        %s628 = scalar_select %p627, %s27, 1
        %s629 = smul.addr %s628, 512
        %s630 = smul.addr %s629, 4
        %s631 = scalar_lea.vmem %s12, %s630
      $region68: #{sheepherding_a2c_forward.1} parent=51 // pred_fallthru
        _
      // Predicated region
      $region69: #{sheepherding_a2c_forward.1} parent=51 // pred_check
        %p632 = pneg %p340
      $region70: #{sheepherding_a2c_forward.1} parent=51 // pred_check_branch
        %634 = sbr.rel (%p632) target = $region72
      $region71: #{sheepherding_a2c_forward.1} parent=51 // pred_region
        %p635 = scmp.lt.s32.totalorder %s27, 1
        %s636 = scalar_select %p635, %s27, 1
        %s637 = smul.addr %s636, 64
        %s638 = smul.addr %s637, 4
        %s639 = scalar_lea.vmem %s13, %s638
      $region72: #{sheepherding_a2c_forward.1} parent=51 // pred_fallthru
        _
      // Predicated region
      $region73: #{sheepherding_a2c_forward.1} parent=51 // pred_check
        %p640 = pneg %p366
      $region74: #{sheepherding_a2c_forward.1} parent=51 // pred_check_branch
        %642 = sbr.rel (%p640) target = $region76
      $region75: #{sheepherding_a2c_forward.1} parent=51 // pred_region
        %p643 = scmp.lt.s32.totalorder %s27, 1
        %s644 = scalar_select %p643, %s27, 1
        %s645 = smul.addr %s644, 16
        %s646 = smul.addr %s645, 4
        %s647 = scalar_lea.vmem %s14, %s646
      $region76: #{sheepherding_a2c_forward.1} parent=51 // pred_fallthru
        _
      // Predicated region
      $region77: #{sheepherding_a2c_forward.1} parent=51 // pred_check
        %p648 = pneg %p392
      $region78: #{sheepherding_a2c_forward.1} parent=51 // pred_check_branch
        %650 = sbr.rel (%p648) target = $region80
      $region79: #{sheepherding_a2c_forward.1} parent=51 // pred_region
        %p651 = scmp.lt.s32.totalorder %s27, 1
        %s652 = scalar_select %p651, %s27, 1
        %s653 = smul.addr %s652, 4
        %s654 = scalar_lea.vmem %s15, %s653
      $region80: #{sheepherding_a2c_forward.1} parent=51 // pred_fallthru
        _
      // Predicated region
      $region81: #{sheepherding_a2c_forward.1} parent=51 // pred_check
        %p655 = pneg %p418
      $region82: #{sheepherding_a2c_forward.1} parent=51 // pred_check_branch
        %657 = sbr.rel (%p655) target = $region84
      $region83: #{sheepherding_a2c_forward.1} parent=51 // pred_region
        %p658 = scmp.lt.s32.totalorder %s27, 1
        %s659 = scalar_select %p658, %s27, 1
        %s660 = smul.addr %s659, 4
        %s661 = scalar_lea.vmem %s16, %s660
      $region84: #{sheepherding_a2c_forward.1} parent=51 // pred_fallthru
        _
      // Predicated region
      $region85: #{sheepherding_a2c_forward.1} parent=51 // pred_check
        %p662 = pneg %p444
      $region86: #{sheepherding_a2c_forward.1} parent=51 // pred_check_branch
        %664 = sbr.rel (%p662) target = $region88
      $region87: #{sheepherding_a2c_forward.1} parent=51 // pred_region
        %p665 = scmp.lt.s32.totalorder %s27, 1
        %s666 = scalar_select %p665, %s27, 1
        %s667 = smul.addr %s666, 8
        %s668 = scalar_lea.vmem %s17, %s667
      $region88: #{sheepherding_a2c_forward.1} parent=51 // pred_fallthru
        _
      // Predicated region
      $region89: #{sheepherding_a2c_forward.1} parent=51 // pred_check
        %p669 = pneg %p470
      $region90: #{sheepherding_a2c_forward.1} parent=51 // pred_check_branch
        %671 = sbr.rel (%p669) target = $region92
      $region91: #{sheepherding_a2c_forward.1} parent=51 // pred_region
        %p672 = scmp.lt.s32.totalorder %s27, 1
        %s673 = scalar_select %p672, %s27, 1
        %s674 = smul.addr %s673, 4
        %s675 = scalar_lea.vmem %s18, %s674
      $region92: #{sheepherding_a2c_forward.1} parent=51 // pred_fallthru
        _
      // Predicated region
      $region93: #{sheepherding_a2c_forward.1} parent=51 // pred_check
        %p676 = pneg %p496
      $region94: #{sheepherding_a2c_forward.1} parent=51 // pred_check_branch
        %678 = sbr.rel (%p676) target = $region96
      $region95: #{sheepherding_a2c_forward.1} parent=51 // pred_region
        %p679 = scmp.lt.s32.totalorder %s27, 1
        %s680 = scalar_select %p679, %s27, 1
        %s681 = scalar_lea.vmem %s19, %s680
      $region96: #{sheepherding_a2c_forward.1} parent=51 // pred_fallthru
        _
      // Predicated region
      $region97: #{sheepherding_a2c_forward.1} parent=51 // pred_check
        %p682 = pneg %p522
      $region98: #{sheepherding_a2c_forward.1} parent=51 // pred_check_branch
        %684 = sbr.rel (%p682) target = $region100
      $region99: #{sheepherding_a2c_forward.1} parent=51 // pred_region
        %p685 = scmp.lt.s32.totalorder %s27, 1
        %s686 = scalar_select %p685, %s27, 1
        %s687 = scalar_lea.vmem %s20, %s686
      $region100: #{sheepherding_a2c_forward.1} parent=51 // pred_fallthru
        _
    $region52: #{sheepherding_a2c_forward.1} parent=5 // pred_fallthru
      _
    %p688 = scmp.le.s32.totalorder 1, %s27
    %p689 = scmp.lt.s32.totalorder %s27, 3
    %p690 = pnand %p688, %p689
    %p691 = pneg %p690
    // Predicated region
    $region101: #{sheepherding_a2c_forward.1} parent=5 // pred_check
      _
    $region102: #{sheepherding_a2c_forward.1} parent=5 // pred_check_branch
      %693 = sbr.rel (%p690) target = $region104
    $region103: #{sheepherding_a2c_forward.1} parent=5 // pred_region
      %s694 = ssub.s32 %s27, 1
      %p695 = pneg %p48
      %p696 = pneg %p45
      %p697 = pneg %p69
      %p698 = pneg %p66
      %p699 = pneg %p90
      %p700 = pneg %p87
      %p701 = pneg %p111
      %p702 = pneg %p108
      %p703 = pneg %p132
      %p704 = pneg %p129
      %p705 = pneg %p153
      %p706 = pneg %p150
      %p707 = pneg %p174
      %p708 = pneg %p171
      %p709 = pneg %p195
      %p710 = pneg %p192
      %p711 = pneg %p216
      %p712 = pneg %p213
      %p713 = scmp.lt.s32.totalorder %s32, 1
      %s714 = scalar_select %p713, %s32, 1
      %s715 = smul.addr %s714, 32
      %s716 = smul.addr %s715, 4
      %s717 = scalar_lea.vmem %s9, %s716
      %p718 = pneg %p242
      %p719 = pneg %p239
      %p720 = scmp.lt.s32.totalorder %s32, 1
      %s721 = scalar_select %p720, %s32, 1
      %s722 = smul.addr %s721, 256
      %s723 = smul.addr %s722, 4
      %s724 = scalar_lea.vmem %s10, %s723
      %p725 = pneg %p268
      %p726 = pneg %p265
      %p727 = scmp.lt.s32.totalorder %s32, 1
      %s728 = scalar_select %p727, %s32, 1
      %s729 = smul.addr %s728, 512
      %s730 = smul.addr %s729, 4
      %s731 = scalar_lea.vmem %s11, %s730
      %p732 = pneg %p294
      %p733 = pneg %p291
      %p734 = scmp.lt.s32.totalorder %s32, 1
      %s735 = scalar_select %p734, %s32, 1
      %s736 = smul.addr %s735, 512
      %s737 = smul.addr %s736, 4
      %s738 = scalar_lea.vmem %s12, %s737
      %p739 = pneg %p320
      %p740 = pneg %p317
      %p741 = scmp.lt.s32.totalorder %s32, 1
      %s742 = scalar_select %p741, %s32, 1
      %s743 = smul.addr %s742, 64
      %s744 = smul.addr %s743, 4
      %s745 = scalar_lea.vmem %s13, %s744
      %p746 = pneg %p346
      %p747 = pneg %p343
      %p748 = scmp.lt.s32.totalorder %s32, 1
      %s749 = scalar_select %p748, %s32, 1
      %s750 = smul.addr %s749, 16
      %s751 = smul.addr %s750, 4
      %s752 = scalar_lea.vmem %s14, %s751
      %p753 = pneg %p372
      %p754 = pneg %p369
      %p755 = scmp.lt.s32.totalorder %s32, 1
      %s756 = scalar_select %p755, %s32, 1
      %s757 = smul.addr %s756, 4
      %s758 = scalar_lea.vmem %s15, %s757
      %p759 = pneg %p398
      %p760 = pneg %p395
      %p761 = scmp.lt.s32.totalorder %s32, 1
      %s762 = scalar_select %p761, %s32, 1
      %s763 = smul.addr %s762, 4
      %s764 = scalar_lea.vmem %s16, %s763
      %p765 = pneg %p424
      %p766 = pneg %p421
      %p767 = scmp.lt.s32.totalorder %s32, 1
      %s768 = scalar_select %p767, %s32, 1
      %s769 = smul.addr %s768, 8
      %s770 = scalar_lea.vmem %s17, %s769
      %p771 = pneg %p450
      %p772 = pneg %p447
      %p773 = scmp.lt.s32.totalorder %s32, 1
      %s774 = scalar_select %p773, %s32, 1
      %s775 = smul.addr %s774, 4
      %s776 = scalar_lea.vmem %s18, %s775
      %p777 = pneg %p476
      %p778 = pneg %p473
      %p779 = scmp.lt.s32.totalorder %s32, 1
      %s780 = scalar_select %p779, %s32, 1
      %s781 = scalar_lea.vmem %s19, %s780
      %p782 = pneg %p502
      %p783 = pneg %p499
      %p784 = scmp.lt.s32.totalorder %s32, 1
      %s785 = scalar_select %p784, %s32, 1
      %s786 = scalar_lea.vmem %s20, %s785
      %p787 = pneg %p528
      %p788 = pneg %p525
      %p789 = pneg %p554
      %p790 = pneg %p551
      %p791 = scmp.lt.s32.totalorder %s32, 1
      %s792 = scalar_select %p791, %s32, 1
      %s793 = smul.addr %s792, 2
      %s794 = scalar_lea.vmem %s21, %s793
      %p795 = scmp.lt.s32.totalorder %s32, 1
      %s796 = scalar_select %p795, %s32, 1
      %s797 = smul.addr %s796, 32
      %s798 = smul.addr %s797, 4
      %s799 = scalar_lea.vmem %s9, %s798
      %p800 = scmp.lt.s32.totalorder %s32, 1
      %s801 = scalar_select %p800, %s32, 1
      %s802 = smul.addr %s801, 256
      %s803 = smul.addr %s802, 4
      %s804 = scalar_lea.vmem %s10, %s803
      %p805 = scmp.lt.s32.totalorder %s32, 1
      %s806 = scalar_select %p805, %s32, 1
      %s807 = smul.addr %s806, 512
      %s808 = smul.addr %s807, 4
      %s809 = scalar_lea.vmem %s11, %s808
      %p810 = scmp.lt.s32.totalorder %s32, 1
      %s811 = scalar_select %p810, %s32, 1
      %s812 = smul.addr %s811, 512
      %s813 = smul.addr %s812, 4
      %s814 = scalar_lea.vmem %s12, %s813
      %p815 = scmp.lt.s32.totalorder %s32, 1
      %s816 = scalar_select %p815, %s32, 1
      %s817 = smul.addr %s816, 64
      %s818 = smul.addr %s817, 4
      %s819 = scalar_lea.vmem %s13, %s818
      %p820 = scmp.lt.s32.totalorder %s32, 1
      %s821 = scalar_select %p820, %s32, 1
      %s822 = smul.addr %s821, 16
      %s823 = smul.addr %s822, 4
      %s824 = scalar_lea.vmem %s14, %s823
      %p825 = scmp.lt.s32.totalorder %s32, 1
      %s826 = scalar_select %p825, %s32, 1
      %s827 = smul.addr %s826, 4
      %s828 = scalar_lea.vmem %s15, %s827
      %p829 = scmp.lt.s32.totalorder %s32, 1
      %s830 = scalar_select %p829, %s32, 1
      %s831 = smul.addr %s830, 4
      %s832 = scalar_lea.vmem %s16, %s831
      %p833 = scmp.lt.s32.totalorder %s32, 1
      %s834 = scalar_select %p833, %s32, 1
      %s835 = smul.addr %s834, 8
      %s836 = scalar_lea.vmem %s17, %s835
      %p837 = scmp.lt.s32.totalorder %s32, 1
      %s838 = scalar_select %p837, %s32, 1
      %s839 = smul.addr %s838, 4
      %s840 = scalar_lea.vmem %s18, %s839
      %p841 = scmp.lt.s32.totalorder %s32, 1
      %s842 = scalar_select %p841, %s32, 1
      %s843 = scalar_lea.vmem %s19, %s842
      %p844 = scmp.lt.s32.totalorder %s32, 1
      %s845 = scalar_select %p844, %s32, 1
      %s846 = scalar_lea.vmem %s20, %s845
      %p847 = scmp.lt.s32.totalorder %s32, 1
      %s848 = scalar_select %p847, %s32, 1
      %s849 = smul.addr %s848, 2
      %s850 = scalar_lea.vmem %s21, %s849
      %v852 = vld [vmem:[%s0] sm:$0xff]
      %v853 = vld [vmem:[%s0 + $0x8] sm:$0xff]
      %v854 = vld [vmem:[%s0 + $0x10] sm:$0xff]
      %v855 = vld [vmem:[%s0 + $0x18] sm:$0xff]
      %v856 = vld [vmem:[%s0 + $0x20] sm:$0xff]
      %v857 = vld [vmem:[%s0 + $0x28] sm:$0xff]
      %v858 = vld [vmem:[%s0 + $0x30] sm:$0xff]
      %v859 = vld [vmem:[%s0 + $0x38] sm:$0xff]
      %v860 = vld [vmem:[%s0 + $0x40] sm:$0xff]
      %v861 = vld [vmem:[%s0 + $0x48] sm:$0xff]
      %v862 = vld [vmem:[%s0 + $0x50] sm:$0xff]
      %v863 = vld [vmem:[%s0 + $0x58] sm:$0xff]
      %v864 = vld [vmem:[%s0 + $0x60] sm:$0xff]
      %v865 = vld [vmem:[%s0 + $0x68] sm:$0xff]
      %v866 = vld [vmem:[%s0 + $0x70] sm:$0xff]
      %v867 = vld [vmem:[%s0 + $0x78] sm:$0xff]
      %v868 = vld [vmem:[%s1] sm:$0xf]
      %v869 = vld [vmem:[%s1 + $0x4] sm:$0xf]
      %v870 = vld [vmem:[%s1 + $0x8] sm:$0xf]
      %v871 = vld [vmem:[%s1 + $0xc] sm:$0xf]
      %v872 = vld [vmem:[%s1 + $0x10] sm:$0xf]
      %v873 = vld [vmem:[%s1 + $0x14] sm:$0xf]
      %v874 = vld [vmem:[%s1 + $0x18] sm:$0xf]
      %v875 = vld [vmem:[%s1 + $0x1c] sm:$0xf]
      %v876 = vld [vmem:[%s1 + $0x20] sm:$0xf]
      %v877 = vld [vmem:[%s1 + $0x24] sm:$0xf]
      %v878 = vld [vmem:[%s1 + $0x28] sm:$0xf]
      %v879 = vld [vmem:[%s1 + $0x2c] sm:$0xf]
      %v880 = vld [vmem:[%s1 + $0x30] sm:$0xf]
      %v881 = vld [vmem:[%s1 + $0x34] sm:$0xf]
      %v882 = vld [vmem:[%s1 + $0x38] sm:$0xf]
      %v883 = vld [vmem:[%s1 + $0x3c] sm:$0xf]
      %v884 = vld [vmem:[%s1 + $0x40] sm:$0xf]
      %v885 = vld [vmem:[%s1 + $0x44] sm:$0xf]
      %v886 = vld [vmem:[%s1 + $0x48] sm:$0xf]
      %v887 = vld [vmem:[%s1 + $0x4c] sm:$0xf]
      %v888 = vld [vmem:[%s1 + $0x50] sm:$0xf]
      %v889 = vld [vmem:[%s1 + $0x54] sm:$0xf]
      %v890 = vld [vmem:[%s1 + $0x58] sm:$0xf]
      %v891 = vld [vmem:[%s1 + $0x5c] sm:$0xf]
      %v892 = vld [vmem:[%s1 + $0x60] sm:$0xf]
      %v893 = vld [vmem:[%s1 + $0x64] sm:$0xf]
      %v894 = vld [vmem:[%s1 + $0x68] sm:$0xf]
      %v895 = vld [vmem:[%s1 + $0x6c] sm:$0xf]
      %v896 = vld [vmem:[%s1 + $0x70] sm:$0xf]
      %v897 = vld [vmem:[%s1 + $0x74] sm:$0xf]
      %v898 = vld [vmem:[%s1 + $0x78] sm:$0xf]
      %v899 = vld [vmem:[%s1 + $0x7c] sm:$0xf]
      %v900 = vld [vmem:[%s2] sm:$0x1]
      %v902 = vlaneseq
      %v903 = vshrl.u32 %v902, 7
      %v904 = vsub.s32 0, %v903
      %v905 = vrot.slane %v900, %v904
      %v923 = vunpack.c.l.b16 %v852
      %v924 = vunpack.c.h.b16 %v852
      %v925 = vunpack.c.l.b16 %v853
      %v926 = vunpack.c.h.b16 %v853
      %v927 = vunpack.c.l.b16 %v854
      %v928 = vunpack.c.h.b16 %v854
      %v929 = vunpack.c.l.b16 %v855
      %v930 = vunpack.c.h.b16 %v855
      %v931 = vunpack.c.l.b16 %v856
      %v932 = vunpack.c.h.b16 %v856
      %v933 = vunpack.c.l.b16 %v857
      %v934 = vunpack.c.h.b16 %v857
      %v935 = vunpack.c.l.b16 %v858
      %v936 = vunpack.c.h.b16 %v858
      %v937 = vunpack.c.l.b16 %v859
      %v938 = vunpack.c.h.b16 %v859
      %v939 = vunpack.c.l.b16 %v860
      %v940 = vunpack.c.h.b16 %v860
      %v941 = vunpack.c.l.b16 %v861
      %v942 = vunpack.c.h.b16 %v861
      %v943 = vunpack.c.l.b16 %v862
      %v944 = vunpack.c.h.b16 %v862
      %v945 = vunpack.c.l.b16 %v863
      %v946 = vunpack.c.h.b16 %v863
      %v947 = vunpack.c.l.b16 %v864
      %v948 = vunpack.c.h.b16 %v864
      %v949 = vunpack.c.l.b16 %v865
      %v950 = vunpack.c.h.b16 %v865
      %v951 = vunpack.c.l.b16 %v866
      %v952 = vunpack.c.h.b16 %v866
      %v953 = vunpack.c.l.b16 %v867
      %v954 = vunpack.c.h.b16 %v867
      %v955 = vpack.c.b16 %v925, %v923
      %v956 = vpack.c.b16 %v926, %v924
      %v957 = vpack.c.b16 %v929, %v927
      %v958 = vpack.c.b16 %v930, %v928
      %v959 = vpack.c.b16 %v933, %v931
      %v960 = vpack.c.b16 %v934, %v932
      %v961 = vpack.c.b16 %v937, %v935
      %v962 = vpack.c.b16 %v938, %v936
      %v963 = vpack.c.b16 %v941, %v939
      %v964 = vpack.c.b16 %v942, %v940
      %v965 = vpack.c.b16 %v945, %v943
      %v966 = vpack.c.b16 %v946, %v944
      %v967 = vpack.c.b16 %v949, %v947
      %v968 = vpack.c.b16 %v950, %v948
      %v969 = vpack.c.b16 %v953, %v951
      %v970 = vpack.c.b16 %v954, %v952
      %v1019 = vunpack.c.l.b16 %v868
      %v1020 = vunpack.c.l.b16 %v869
      %v1021 = vunpack.c.l.b16 %v870
      %v1022 = vunpack.c.l.b16 %v871
      %v1023 = vunpack.c.l.b16 %v872
      %v1024 = vunpack.c.l.b16 %v873
      %v1025 = vunpack.c.l.b16 %v874
      %v1026 = vunpack.c.l.b16 %v875
      %v1027 = vunpack.c.l.b16 %v876
      %v1028 = vunpack.c.l.b16 %v877
      %v1029 = vunpack.c.l.b16 %v878
      %v1030 = vunpack.c.l.b16 %v879
      %v1031 = vunpack.c.l.b16 %v880
      %v1032 = vunpack.c.l.b16 %v881
      %v1033 = vunpack.c.l.b16 %v882
      %v1034 = vunpack.c.l.b16 %v883
      %v1035 = vunpack.c.l.b16 %v884
      %v1036 = vunpack.c.l.b16 %v885
      %v1037 = vunpack.c.l.b16 %v886
      %v1038 = vunpack.c.l.b16 %v887
      %v1039 = vunpack.c.l.b16 %v888
      %v1040 = vunpack.c.l.b16 %v889
      %v1041 = vunpack.c.l.b16 %v890
      %v1042 = vunpack.c.l.b16 %v891
      %v1043 = vunpack.c.l.b16 %v892
      %v1044 = vunpack.c.l.b16 %v893
      %v1045 = vunpack.c.l.b16 %v894
      %v1046 = vunpack.c.l.b16 %v895
      %v1047 = vunpack.c.l.b16 %v896
      %v1048 = vunpack.c.l.b16 %v897
      %v1049 = vunpack.c.l.b16 %v898
      %v1050 = vunpack.c.l.b16 %v899
      %v1051 = vpack.c.b16 %v1020, %v1019
      %v1052 = vpack.c.b16 %v1022, %v1021
      %v1053 = vpack.c.b16 %v1024, %v1023
      %v1054 = vpack.c.b16 %v1026, %v1025
      %v1055 = vpack.c.b16 %v1028, %v1027
      %v1056 = vpack.c.b16 %v1030, %v1029
      %v1057 = vpack.c.b16 %v1032, %v1031
      %v1058 = vpack.c.b16 %v1034, %v1033
      %v1059 = vpack.c.b16 %v1036, %v1035
      %v1060 = vpack.c.b16 %v1038, %v1037
      %v1061 = vpack.c.b16 %v1040, %v1039
      %v1062 = vpack.c.b16 %v1042, %v1041
      %v1063 = vpack.c.b16 %v1044, %v1043
      %v1064 = vpack.c.b16 %v1046, %v1045
      %v1065 = vpack.c.b16 %v1048, %v1047
      %v1066 = vpack.c.b16 %v1050, %v1049
      %1083 = vmatprep.subr.bf16.mxu0 0
      %1084 = vmatpush1.bf16.msra.mxu0 %v1051
      %1085 = vmatprep.subr.bf16.mxu0 0
      %1086 = vmatpush1.bf16.msra.mxu0 %v1052
      %1087 = vmatprep.subr.bf16.mxu0 0
      %1088 = vmatpush1.bf16.msra.mxu0 %v1053
      %1089 = vmatprep.subr.bf16.mxu0 0
      %1090 = vmatpush1.bf16.msra.mxu0 %v1054
      %1091 = vmatprep.subr.bf16.mxu0 0
      %1092 = vmatpush1.bf16.msra.mxu0 %v1055
      %1093 = vmatprep.subr.bf16.mxu0 0
      %1094 = vmatpush1.bf16.msra.mxu0 %v1056
      %1095 = vmatprep.subr.bf16.mxu0 0
      %1096 = vmatpush1.bf16.msra.mxu0 %v1057
      %1097 = vmatprep.subr.bf16.mxu0 0
      %1098 = vmatpush1.bf16.msra.mxu0 %v1058
      %1099 = vmatprep.subr.bf16.mxu0 0
      %1100 = vmatpush1.bf16.msra.mxu0 %v1059
      %1101 = vmatprep.subr.bf16.mxu0 0
      %1102 = vmatpush1.bf16.msra.mxu0 %v1060
      %1103 = vmatprep.subr.bf16.mxu0 0
      %1104 = vmatpush1.bf16.msra.mxu0 %v1061
      %1105 = vmatprep.subr.bf16.mxu0 0
      %1106 = vmatpush1.bf16.msra.mxu0 %v1062
      %1107 = vmatprep.subr.bf16.mxu0 0
      %1108 = vmatpush1.bf16.msra.mxu0 %v1063
      %1109 = vmatprep.subr.bf16.mxu0 0
      %1110 = vmatpush1.bf16.msra.mxu0 %v1064
      %1111 = vmatprep.subr.bf16.mxu0 0
      %1112 = vmatpush1.bf16.msra.mxu0 %v1065
      %1113 = vmatprep.subr.bf16.mxu0 0
      %1114 = vmatpush1.bf16.msra.mxu0 %v1066
      %1115 = vmatprep.mubr.bf16.mxu0 %v956
      %1116 = vmatmul.mubr.bf16.gmra.mrb[0].mxu0 %v955
      %v1117 = vpop.f32.mrb[0].mxu0
      %v1118 = vadd.f32 %v905, %v1117
      %v1119 = vpop.f32.mrb[0].mxu0
      %v1120 = vpop.f32.mrb[0].mxu0
      %v1121 = vadd.f32 %v905, %v1120
      %v1122 = vpop.f32.mrb[0].mxu0
      %1123 = vmatprep.mubr.bf16.mxu0 %v958
      %1124 = vmatmul.mubr.bf16.gmra.mrb[0].mxu0 %v957
      %v1125 = vpop.f32.mrb[0].mxu0
      %v1126 = vadd.f32 %v905, %v1125
      %v1127 = vpop.f32.mrb[0].mxu0
      %v1128 = vpop.f32.mrb[0].mxu0
      %v1129 = vadd.f32 %v905, %v1128
      %v1130 = vpop.f32.mrb[0].mxu0
      %1131 = vmatprep.mubr.bf16.mxu0 %v960
      %1132 = vmatmul.mubr.bf16.gmra.mrb[0].mxu0 %v959
      %v1133 = vpop.f32.mrb[0].mxu0
      %v1134 = vadd.f32 %v905, %v1133
      %v1135 = vpop.f32.mrb[0].mxu0
      %v1136 = vpop.f32.mrb[0].mxu0
      %v1137 = vadd.f32 %v905, %v1136
      %v1138 = vpop.f32.mrb[0].mxu0
      %1139 = vmatprep.mubr.bf16.mxu0 %v962
      %1140 = vmatmul.mubr.bf16.gmra.mrb[0].mxu0 %v961
      %v1141 = vpop.f32.mrb[0].mxu0
      %v1142 = vadd.f32 %v905, %v1141
      %v1143 = vpop.f32.mrb[0].mxu0
      %v1144 = vpop.f32.mrb[0].mxu0
      %v1145 = vadd.f32 %v905, %v1144
      %v1146 = vpop.f32.mrb[0].mxu0
      %1147 = vmatprep.mubr.bf16.mxu0 %v964
      %1148 = vmatmul.mubr.bf16.gmra.mrb[0].mxu0 %v963
      %v1149 = vpop.f32.mrb[0].mxu0
      %v1150 = vadd.f32 %v905, %v1149
      %v1151 = vpop.f32.mrb[0].mxu0
      %v1152 = vpop.f32.mrb[0].mxu0
      %v1153 = vadd.f32 %v905, %v1152
      %v1154 = vpop.f32.mrb[0].mxu0
      %1155 = vmatprep.mubr.bf16.mxu0 %v966
      %1156 = vmatmul.mubr.bf16.gmra.mrb[0].mxu0 %v965
      %v1157 = vpop.f32.mrb[0].mxu0
      %v1158 = vadd.f32 %v905, %v1157
      %v1159 = vpop.f32.mrb[0].mxu0
      %v1160 = vpop.f32.mrb[0].mxu0
      %v1161 = vadd.f32 %v905, %v1160
      %v1162 = vpop.f32.mrb[0].mxu0
      %1163 = vmatprep.mubr.bf16.mxu0 %v968
      %1164 = vmatmul.mubr.bf16.gmra.mrb[0].mxu0 %v967
      %v1165 = vpop.f32.mrb[0].mxu0
      %v1166 = vadd.f32 %v905, %v1165
      %v1167 = vpop.f32.mrb[0].mxu0
      %v1168 = vpop.f32.mrb[0].mxu0
      %v1169 = vadd.f32 %v905, %v1168
      %v1170 = vpop.f32.mrb[0].mxu0
      %1171 = vmatprep.mubr.bf16.mxu0 %v970
      %1172 = vmatmul.mubr.bf16.gmra.mrb[0].mxu0 %v969
      %v1173 = vpop.f32.mrb[0].mxu0
      %v1174 = vadd.f32 %v905, %v1173
      %v1175 = vpop.f32.mrb[0].mxu0
      %v1176 = vpop.f32.mrb[0].mxu0
      %v1177 = vadd.f32 %v905, %v1176
      %v1178 = vpop.f32.mrb[0].mxu0
      %1179 = vdwg.mxu0
      %v1180 = vmax.f32 %v1118, 0.0
      %v1181 = vmax.f32 %v1121, 0.0
      %v1182 = vmax.f32 %v1126, 0.0
      %v1183 = vmax.f32 %v1129, 0.0
      %v1184 = vmax.f32 %v1134, 0.0
      %v1185 = vmax.f32 %v1137, 0.0
      %v1186 = vmax.f32 %v1142, 0.0
      %v1187 = vmax.f32 %v1145, 0.0
      %v1188 = vmax.f32 %v1150, 0.0
      %v1189 = vmax.f32 %v1153, 0.0
      %v1190 = vmax.f32 %v1158, 0.0
      %v1191 = vmax.f32 %v1161, 0.0
      %v1192 = vmax.f32 %v1166, 0.0
      %v1193 = vmax.f32 %v1169, 0.0
      %v1194 = vmax.f32 %v1174, 0.0
      %v1195 = vmax.f32 %v1177, 0.0
      %v1196 = vpack.c.bf16 %v1181, %v1180
      %v1197 = vpack.c.bf16 %v1183, %v1182
      %v1198 = vpack.c.bf16 %v1185, %v1184
      %v1199 = vpack.c.bf16 %v1187, %v1186
      %v1200 = vpack.c.bf16 %v1189, %v1188
      %v1201 = vpack.c.bf16 %v1191, %v1190
      %v1202 = vpack.c.bf16 %v1193, %v1192
      %v1203 = vpack.c.bf16 %v1195, %v1194
      %v1204 = vld [vmem:[%s3] sm:$0xf]
      %v1205 = vld [vmem:[%s3 + $0x4] sm:$0xf]
      %v1206 = vld [vmem:[%s3 + $0x8] sm:$0x1]
      %v1210 = vunpack.c.l.b16 %v1204
      %v1211 = vunpack.c.l.b16 %v1205
      %v1212 = vunpack.c.l.b16 %v1206
      %v1213 = vpack.c.b16 %v1211, %v1210
      %v1214 = vpack.c.b16 %v1212, %v1212
      %1217 = vmatprep.subr.bf16.mxu0 0
      %1218 = vmatpush1.bf16.msra.mxu0 %v1196
      %1219 = vmatprep.subr.bf16.mxu0 0
      %1220 = vmatpush1.bf16.msra.mxu0 %v1197
      %1221 = vmatprep.subr.bf16.mxu0 0
      %1222 = vmatpush1.bf16.msra.mxu0 %v1198
      %1223 = vmatprep.subr.bf16.mxu0 0
      %1224 = vmatpush1.bf16.msra.mxu0 %v1199
      %1225 = vmatprep.subr.bf16.mxu0 0
      %1226 = vmatpush1.bf16.msra.mxu0 %v1200
      %1227 = vmatprep.subr.bf16.mxu0 0
      %1228 = vmatpush1.bf16.msra.mxu0 %v1201
      %1229 = vmatprep.subr.bf16.mxu0 0
      %1230 = vmatpush1.bf16.msra.mxu0 %v1202
      %1231 = vmatprep.subr.bf16.mxu0 0
      %1232 = vmatpush1.bf16.msra.mxu0 %v1203
      %1233 = vmatprep.subr.bf16.mxu0 0
      %1234 = vmatpush1.bf16.msra.mxu0 0
      %1235 = vmatprep.subr.bf16.mxu0 0
      %1236 = vmatpush1.bf16.msra.mxu0 0
      %1237 = vmatprep.subr.bf16.mxu0 0
      %1238 = vmatpush1.bf16.msra.mxu0 0
      %1239 = vmatprep.subr.bf16.mxu0 0
      %1240 = vmatpush1.bf16.msra.mxu0 0
      %1241 = vmatprep.subr.bf16.mxu0 0
      %1242 = vmatpush1.bf16.msra.mxu0 0
      %1243 = vmatprep.subr.bf16.mxu0 0
      %1244 = vmatpush1.bf16.msra.mxu0 0
      %1245 = vmatprep.subr.bf16.mxu0 0
      %1246 = vmatpush1.bf16.msra.mxu0 0
      %1247 = vmatprep.subr.bf16.mxu0 0
      %1248 = vmatpush1.bf16.msra.mxu0 0
      %1249 = vmatprep.mubr.bf16.mxu0 0
      %1250 = vmatmul.mubr.bf16.gmra.mrb[0].mxu0 %v1213
      %v1251 = vpop.f32.mrb[0].mxu0
      %v1252 = vadd.f32 0.0, %v1251
      %v1253 = vpop.f32.mrb[0].mxu0
      %v1254 = vpop.f32.mrb[0].mxu0
      %v1255 = vadd.f32 0.0, %v1254
      %v1256 = vpop.f32.mrb[0].mxu0
      %1257 = vmatprep.mubr.bf16.mxu0 0
      %1258 = vmatmul.mubr.bf16.gmra.mrb[0].mxu0 %v1214
      %v1259 = vpop.f32.mrb[0].mxu0
      %v1260 = vadd.f32 0.0, %v1259
      %v1261 = vpop.f32.mrb[0].mxu0
      %v1262 = vpop.f32.mrb[0].mxu0
      %v1263 = vpop.f32.mrb[0].mxu0
      %1264 = vdwg.mxu0
      %v1265 = vpack.c.bf16 %v1255, %v1252
      %v1266 = vpack.c.bf16 %v1260, %v1260
      %v1267 = vld [vmem:[%s4] sm:$0xf]
      %v1268 = vld [vmem:[%s4 + $0x4] sm:$0xf]
      %v1269 = vld [vmem:[%s4 + $0x8] sm:$0xf]
      %v1270 = vld [vmem:[%s4 + $0xc] sm:$0xf]
      %s1271 = scalar_lea.vmem %s3, 12
      %v1272 = vld [vmem:[%s1271] sm:$0xf]
      %v1273 = vld [vmem:[%s1271 + $0x4] sm:$0xf]
      %v1274 = vld [vmem:[%s1271 + $0x8] sm:$0x1]
      %v1278 = vunpack.c.l.b16 %v1272
      %v1279 = vunpack.c.l.b16 %v1273
      %v1280 = vunpack.c.l.b16 %v1274
      %v1281 = vpack.c.b16 %v1279, %v1278
      %v1282 = vpack.c.b16 %v1280, %v1280
      %1285 = vmatprep.subr.bf16.mxu0 0
      %1286 = vmatpush1.bf16.msra.mxu0 %v1196
      %1287 = vmatprep.subr.bf16.mxu0 0
      %1288 = vmatpush1.bf16.msra.mxu0 %v1197
      %1289 = vmatprep.subr.bf16.mxu0 0
      %1290 = vmatpush1.bf16.msra.mxu0 %v1198
      %1291 = vmatprep.subr.bf16.mxu0 0
      %1292 = vmatpush1.bf16.msra.mxu0 %v1199
      %1293 = vmatprep.subr.bf16.mxu0 0
      %1294 = vmatpush1.bf16.msra.mxu0 %v1200
      %1295 = vmatprep.subr.bf16.mxu0 0
      %1296 = vmatpush1.bf16.msra.mxu0 %v1201
      %1297 = vmatprep.subr.bf16.mxu0 0
      %1298 = vmatpush1.bf16.msra.mxu0 %v1202
      %1299 = vmatprep.subr.bf16.mxu0 0
      %1300 = vmatpush1.bf16.msra.mxu0 %v1203
      %1301 = vmatprep.subr.bf16.mxu0 0
      %1302 = vmatpush1.bf16.msra.mxu0 0
      %1303 = vmatprep.subr.bf16.mxu0 0
      %1304 = vmatpush1.bf16.msra.mxu0 0
      %1305 = vmatprep.subr.bf16.mxu0 0
      %1306 = vmatpush1.bf16.msra.mxu0 0
      %1307 = vmatprep.subr.bf16.mxu0 0
      %1308 = vmatpush1.bf16.msra.mxu0 0
      %1309 = vmatprep.subr.bf16.mxu0 0
      %1310 = vmatpush1.bf16.msra.mxu0 0
      %1311 = vmatprep.subr.bf16.mxu0 0
      %1312 = vmatpush1.bf16.msra.mxu0 0
      %1313 = vmatprep.subr.bf16.mxu0 0
      %1314 = vmatpush1.bf16.msra.mxu0 0
      %1315 = vmatprep.subr.bf16.mxu0 0
      %1316 = vmatpush1.bf16.msra.mxu0 0
      %1317 = vmatprep.mubr.bf16.mxu0 0
      %1318 = vmatmul.mubr.bf16.gmra.mrb[0].mxu0 %v1281
      %v1319 = vpop.f32.mrb[0].mxu0
      %v1320 = vadd.f32 0.0, %v1319
      %v1321 = vpop.f32.mrb[0].mxu0
      %v1322 = vpop.f32.mrb[0].mxu0
      %v1323 = vadd.f32 0.0, %v1322
      %v1324 = vpop.f32.mrb[0].mxu0
      %1325 = vmatprep.mubr.bf16.mxu0 0
      %1326 = vmatmul.mubr.bf16.gmra.mrb[0].mxu0 %v1282
      %v1327 = vpop.f32.mrb[0].mxu0
      %v1328 = vadd.f32 0.0, %v1327
      %v1329 = vpop.f32.mrb[0].mxu0
      %v1330 = vpop.f32.mrb[0].mxu0
      %v1331 = vpop.f32.mrb[0].mxu0
      %1332 = vdwg.mxu0
      %v1333 = vpack.c.bf16 %v1323, %v1320
      %v1334 = vpack.c.bf16 %v1328, %v1328
      %s1335 = scalar_lea.vmem %s4, 16
      %v1336 = vld [vmem:[%s1335] sm:$0xf]
      %v1337 = vld [vmem:[%s1335 + $0x4] sm:$0xf]
      %v1338 = vld [vmem:[%s1335 + $0x8] sm:$0xf]
      %v1339 = vld [vmem:[%s1335 + $0xc] sm:$0xf]
      %v1344 = vunpack.c.l.b16 %v1336
      %v1345 = vunpack.c.l.b16 %v1337
      %v1346 = vunpack.c.l.b16 %v1338
      %v1347 = vunpack.c.l.b16 %v1339
      %v1348 = vpack.c.b16 %v1345, %v1344
      %v1349 = vpack.c.b16 %v1347, %v1346
      %vm1352 = vcmask 261120
      %v1354 = vsel %vm1352, %v1333, 0
      %v1357 = vsel %vm1352, %v1334, 0
      %1359 = vmatprep.subr.bf16.mxu0 0
      %1360 = vmatpush1.bf16.msra.mxu0 %v1348
      %1361 = vmatprep.subr.bf16.mxu0 0
      %1362 = vmatpush1.bf16.msra.mxu0 %v1349
      %1363 = vmatprep.subr.bf16.mxu0 0
      %1364 = vmatpush1.bf16.msra.mxu0 0
      %1365 = vmatprep.subr.bf16.mxu0 0
      %1366 = vmatpush1.bf16.msra.mxu0 0
      %1367 = vmatprep.subr.bf16.mxu0 0
      %1368 = vmatpush1.bf16.msra.mxu0 0
      %1369 = vmatprep.subr.bf16.mxu0 0
      %1370 = vmatpush1.bf16.msra.mxu0 0
      %1371 = vmatprep.subr.bf16.mxu0 0
      %1372 = vmatpush1.bf16.msra.mxu0 0
      %1373 = vmatprep.subr.bf16.mxu0 0
      %1374 = vmatpush1.bf16.msra.mxu0 0
      %1375 = vmatprep.subr.bf16.mxu0 0
      %1376 = vmatpush1.bf16.msra.mxu0 0
      %1377 = vmatprep.subr.bf16.mxu0 0
      %1378 = vmatpush1.bf16.msra.mxu0 0
      %1379 = vmatprep.subr.bf16.mxu0 0
      %1380 = vmatpush1.bf16.msra.mxu0 0
      %1381 = vmatprep.subr.bf16.mxu0 0
      %1382 = vmatpush1.bf16.msra.mxu0 0
      %1383 = vmatprep.subr.bf16.mxu0 0
      %1384 = vmatpush1.bf16.msra.mxu0 0
      %1385 = vmatprep.subr.bf16.mxu0 0
      %1386 = vmatpush1.bf16.msra.mxu0 0
      %1387 = vmatprep.subr.bf16.mxu0 0
      %1388 = vmatpush1.bf16.msra.mxu0 0
      %1389 = vmatprep.subr.bf16.mxu0 0
      %1390 = vmatpush1.bf16.msra.mxu0 0
      %1391 = vmatprep.mubr.bf16.mxu0 0
      %1392 = vmatmul.mubr.bf16.gmra.mrb[0].mxu0 %v1354
      %v1393 = vpop.f32.mrb[0].mxu0
      %v1394 = vadd.f32 0.0, %v1393
      %v1395 = vpop.f32.mrb[0].mxu0
      %v1396 = vpop.f32.mrb[0].mxu0
      %v1397 = vadd.f32 0.0, %v1396
      %v1398 = vpop.f32.mrb[0].mxu0
      %1399 = vmatprep.mubr.bf16.mxu0 0
      %1400 = vmatmul.mubr.bf16.gmra.mrb[0].mxu0 %v1357
      %v1401 = vpop.f32.mrb[0].mxu0
      %v1402 = vadd.f32 0.0, %v1401
      %v1403 = vpop.f32.mrb[0].mxu0
      %v1404 = vpop.f32.mrb[0].mxu0
      %v1405 = vpop.f32.mrb[0].mxu0
      %1406 = vdwg.mxu0
      %v1411 = vunpack.c.l.b16 %v1267
      %v1412 = vunpack.c.l.b16 %v1268
      %v1413 = vunpack.c.l.b16 %v1269
      %v1414 = vunpack.c.l.b16 %v1270
      %v1415 = vpack.c.b16 %v1412, %v1411
      %v1416 = vpack.c.b16 %v1414, %v1413
      %v1420 = vsel %vm1352, %v1265, 0
      %v1423 = vsel %vm1352, %v1266, 0
      %1425 = vmatprep.subr.bf16.mxu0 0
      %1426 = vmatpush1.bf16.msra.mxu0 %v1415
      %1427 = vmatprep.subr.bf16.mxu0 0
      %1428 = vmatpush1.bf16.msra.mxu0 %v1416
      %1429 = vmatprep.subr.bf16.mxu0 0
      %1430 = vmatpush1.bf16.msra.mxu0 0
      %1431 = vmatprep.subr.bf16.mxu0 0
      %1432 = vmatpush1.bf16.msra.mxu0 0
      %1433 = vmatprep.subr.bf16.mxu0 0
      %1434 = vmatpush1.bf16.msra.mxu0 0
      %1435 = vmatprep.subr.bf16.mxu0 0
      %1436 = vmatpush1.bf16.msra.mxu0 0
      %1437 = vmatprep.subr.bf16.mxu0 0
      %1438 = vmatpush1.bf16.msra.mxu0 0
      %1439 = vmatprep.subr.bf16.mxu0 0
      %1440 = vmatpush1.bf16.msra.mxu0 0
      %1441 = vmatprep.subr.bf16.mxu0 0
      %1442 = vmatpush1.bf16.msra.mxu0 0
      %1443 = vmatprep.subr.bf16.mxu0 0
      %1444 = vmatpush1.bf16.msra.mxu0 0
      %1445 = vmatprep.subr.bf16.mxu0 0
      %1446 = vmatpush1.bf16.msra.mxu0 0
      %1447 = vmatprep.subr.bf16.mxu0 0
      %1448 = vmatpush1.bf16.msra.mxu0 0
      %1449 = vmatprep.subr.bf16.mxu0 0
      %1450 = vmatpush1.bf16.msra.mxu0 0
      %1451 = vmatprep.subr.bf16.mxu0 0
      %1452 = vmatpush1.bf16.msra.mxu0 0
      %1453 = vmatprep.subr.bf16.mxu0 0
      %1454 = vmatpush1.bf16.msra.mxu0 0
      %1455 = vmatprep.subr.bf16.mxu0 0
      %1456 = vmatpush1.bf16.msra.mxu0 0
      %1457 = vmatprep.mubr.bf16.mxu0 0
      %1458 = vmatmul.mubr.bf16.gmra.mrb[0].mxu0 %v1420
      %v1459 = vpop.f32.mrb[0].mxu0
      %v1460 = vadd.f32 %v1394, %v1459
      %v1461 = vpop.f32.mrb[0].mxu0
      %v1462 = vpop.f32.mrb[0].mxu0
      %v1463 = vadd.f32 %v1397, %v1462
      %v1464 = vpop.f32.mrb[0].mxu0
      %1465 = vmatprep.mubr.bf16.mxu0 0
      %1466 = vmatmul.mubr.bf16.gmra.mrb[0].mxu0 %v1423
      %v1467 = vpop.f32.mrb[0].mxu0
      %v1468 = vadd.f32 %v1402, %v1467
      %v1469 = vpop.f32.mrb[0].mxu0
      %v1470 = vpop.f32.mrb[0].mxu0
      %v1471 = vpop.f32.mrb[0].mxu0
      %1472 = vdwg.mxu0
      %s1473 = scalar_lea.vmem %s3, 24
      %v1474 = vld [vmem:[%s1473] sm:$0xf]
      %v1475 = vld [vmem:[%s1473 + $0x4] sm:$0xf]
      %v1476 = vld [vmem:[%s1473 + $0x8] sm:$0x1]
      %v1480 = vunpack.c.l.b16 %v1474
      %v1481 = vunpack.c.l.b16 %v1475
      %v1482 = vunpack.c.l.b16 %v1476
      %v1483 = vpack.c.b16 %v1481, %v1480
      %v1484 = vpack.c.b16 %v1482, %v1482
      %1487 = vmatprep.subr.bf16.mxu0 0
      %1488 = vmatpush1.bf16.msra.mxu0 %v1196
      %1489 = vmatprep.subr.bf16.mxu0 0
      %1490 = vmatpush1.bf16.msra.mxu0 %v1197
      %1491 = vmatprep.subr.bf16.mxu0 0
      %1492 = vmatpush1.bf16.msra.mxu0 %v1198
      %1493 = vmatprep.subr.bf16.mxu0 0
      %1494 = vmatpush1.bf16.msra.mxu0 %v1199
      %1495 = vmatprep.subr.bf16.mxu0 0
      %1496 = vmatpush1.bf16.msra.mxu0 %v1200
      %1497 = vmatprep.subr.bf16.mxu0 0
      %1498 = vmatpush1.bf16.msra.mxu0 %v1201
      %1499 = vmatprep.subr.bf16.mxu0 0
      %1500 = vmatpush1.bf16.msra.mxu0 %v1202
      %1501 = vmatprep.subr.bf16.mxu0 0
      %1502 = vmatpush1.bf16.msra.mxu0 %v1203
      %1503 = vmatprep.subr.bf16.mxu0 0
      %1504 = vmatpush1.bf16.msra.mxu0 0
      %1505 = vmatprep.subr.bf16.mxu0 0
      %1506 = vmatpush1.bf16.msra.mxu0 0
      %1507 = vmatprep.subr.bf16.mxu0 0
      %1508 = vmatpush1.bf16.msra.mxu0 0
      %1509 = vmatprep.subr.bf16.mxu0 0
      %1510 = vmatpush1.bf16.msra.mxu0 0
      %1511 = vmatprep.subr.bf16.mxu0 0
      %1512 = vmatpush1.bf16.msra.mxu0 0
      %1513 = vmatprep.subr.bf16.mxu0 0
      %1514 = vmatpush1.bf16.msra.mxu0 0
      %1515 = vmatprep.subr.bf16.mxu0 0
      %1516 = vmatpush1.bf16.msra.mxu0 0
      %1517 = vmatprep.subr.bf16.mxu0 0
      %1518 = vmatpush1.bf16.msra.mxu0 0
      %1519 = vmatprep.mubr.bf16.mxu0 0
      %1520 = vmatmul.mubr.bf16.gmra.mrb[0].mxu0 %v1483
      %v1521 = vpop.f32.mrb[0].mxu0
      %v1522 = vadd.f32 0.0, %v1521
      %v1523 = vpop.f32.mrb[0].mxu0
      %v1524 = vpop.f32.mrb[0].mxu0
      %v1525 = vadd.f32 0.0, %v1524
      %v1526 = vpop.f32.mrb[0].mxu0
      %1527 = vmatprep.mubr.bf16.mxu0 0
      %1528 = vmatmul.mubr.bf16.gmra.mrb[0].mxu0 %v1484
      %v1529 = vpop.f32.mrb[0].mxu0
      %v1530 = vadd.f32 0.0, %v1529
      %v1531 = vpop.f32.mrb[0].mxu0
      %v1532 = vpop.f32.mrb[0].mxu0
      %v1533 = vpop.f32.mrb[0].mxu0
      %1534 = vdwg.mxu0
      %v1535 = vpack.c.bf16 %v1525, %v1522
      %v1536 = vpack.c.bf16 %v1530, %v1530
      %s1537 = scalar_lea.vmem %s4, 32
      %v1538 = vld [vmem:[%s1537] sm:$0xf]
      %v1539 = vld [vmem:[%s1537 + $0x4] sm:$0xf]
      %v1540 = vld [vmem:[%s1537 + $0x8] sm:$0xf]
      %v1541 = vld [vmem:[%s1537 + $0xc] sm:$0xf]
      %v1546 = vunpack.c.l.b16 %v1538
      %v1547 = vunpack.c.l.b16 %v1539
      %v1548 = vunpack.c.l.b16 %v1540
      %v1549 = vunpack.c.l.b16 %v1541
      %v1550 = vpack.c.b16 %v1547, %v1546
      %v1551 = vpack.c.b16 %v1549, %v1548
      %v1555 = vsel %vm1352, %v1535, 0
      %v1558 = vsel %vm1352, %v1536, 0
      %1560 = vmatprep.subr.bf16.mxu0 0
      %1561 = vmatpush1.bf16.msra.mxu0 %v1550
      %1562 = vmatprep.subr.bf16.mxu0 0
      %1563 = vmatpush1.bf16.msra.mxu0 %v1551
      %1564 = vmatprep.subr.bf16.mxu0 0
      %1565 = vmatpush1.bf16.msra.mxu0 0
      %1566 = vmatprep.subr.bf16.mxu0 0
      %1567 = vmatpush1.bf16.msra.mxu0 0
      %1568 = vmatprep.subr.bf16.mxu0 0
      %1569 = vmatpush1.bf16.msra.mxu0 0
      %1570 = vmatprep.subr.bf16.mxu0 0
      %1571 = vmatpush1.bf16.msra.mxu0 0
      %1572 = vmatprep.subr.bf16.mxu0 0
      %1573 = vmatpush1.bf16.msra.mxu0 0
      %1574 = vmatprep.subr.bf16.mxu0 0
      %1575 = vmatpush1.bf16.msra.mxu0 0
      %1576 = vmatprep.subr.bf16.mxu0 0
      %1577 = vmatpush1.bf16.msra.mxu0 0
      %1578 = vmatprep.subr.bf16.mxu0 0
      %1579 = vmatpush1.bf16.msra.mxu0 0
      %1580 = vmatprep.subr.bf16.mxu0 0
      %1581 = vmatpush1.bf16.msra.mxu0 0
      %1582 = vmatprep.subr.bf16.mxu0 0
      %1583 = vmatpush1.bf16.msra.mxu0 0
      %1584 = vmatprep.subr.bf16.mxu0 0
      %1585 = vmatpush1.bf16.msra.mxu0 0
      %1586 = vmatprep.subr.bf16.mxu0 0
      %1587 = vmatpush1.bf16.msra.mxu0 0
      %1588 = vmatprep.subr.bf16.mxu0 0
      %1589 = vmatpush1.bf16.msra.mxu0 0
      %1590 = vmatprep.subr.bf16.mxu0 0
      %1591 = vmatpush1.bf16.msra.mxu0 0
      %1592 = vmatprep.mubr.bf16.mxu0 0
      %1593 = vmatmul.mubr.bf16.gmra.mrb[0].mxu0 %v1555
      %v1594 = vpop.f32.mrb[0].mxu0
      %v1595 = vadd.f32 0.0, %v1594
      %v1596 = vpop.f32.mrb[0].mxu0
      %v1597 = vpop.f32.mrb[0].mxu0
      %v1598 = vadd.f32 0.0, %v1597
      %v1599 = vpop.f32.mrb[0].mxu0
      %1600 = vmatprep.mubr.bf16.mxu0 0
      %1601 = vmatmul.mubr.bf16.gmra.mrb[0].mxu0 %v1558
      %v1602 = vpop.f32.mrb[0].mxu0
      %v1603 = vadd.f32 0.0, %v1602
      %v1604 = vpop.f32.mrb[0].mxu0
      %v1605 = vpop.f32.mrb[0].mxu0
      %v1606 = vpop.f32.mrb[0].mxu0
      %1607 = vdwg.mxu0
      %v1608 = vadd.f32 %v1460, %v1595
      %v1609 = vadd.f32 %v1463, %v1598
      %v1610 = vadd.f32 %v1468, %v1603
      %s1611 = scalar_lea.vmem %s3, 36
      %v1612 = vld [vmem:[%s1611] sm:$0xf]
      %v1613 = vld [vmem:[%s1611 + $0x4] sm:$0xf]
      %v1614 = vld [vmem:[%s1611 + $0x8] sm:$0x1]
      %v1618 = vunpack.c.l.b16 %v1612
      %v1619 = vunpack.c.l.b16 %v1613
      %v1620 = vunpack.c.l.b16 %v1614
      %v1621 = vpack.c.b16 %v1619, %v1618
      %v1622 = vpack.c.b16 %v1620, %v1620
      %1625 = vmatprep.subr.bf16.mxu0 0
      %1626 = vmatpush1.bf16.msra.mxu0 %v1196
      %1627 = vmatprep.subr.bf16.mxu0 0
      %1628 = vmatpush1.bf16.msra.mxu0 %v1197
      %1629 = vmatprep.subr.bf16.mxu0 0
      %1630 = vmatpush1.bf16.msra.mxu0 %v1198
      %1631 = vmatprep.subr.bf16.mxu0 0
      %1632 = vmatpush1.bf16.msra.mxu0 %v1199
      %1633 = vmatprep.subr.bf16.mxu0 0
      %1634 = vmatpush1.bf16.msra.mxu0 %v1200
      %1635 = vmatprep.subr.bf16.mxu0 0
      %1636 = vmatpush1.bf16.msra.mxu0 %v1201
      %1637 = vmatprep.subr.bf16.mxu0 0
      %1638 = vmatpush1.bf16.msra.mxu0 %v1202
      %1639 = vmatprep.subr.bf16.mxu0 0
      %1640 = vmatpush1.bf16.msra.mxu0 %v1203
      %1641 = vmatprep.subr.bf16.mxu0 0
      %1642 = vmatpush1.bf16.msra.mxu0 0
      %1643 = vmatprep.subr.bf16.mxu0 0
      %1644 = vmatpush1.bf16.msra.mxu0 0
      %1645 = vmatprep.subr.bf16.mxu0 0
      %1646 = vmatpush1.bf16.msra.mxu0 0
      %1647 = vmatprep.subr.bf16.mxu0 0
      %1648 = vmatpush1.bf16.msra.mxu0 0
      %1649 = vmatprep.subr.bf16.mxu0 0
      %1650 = vmatpush1.bf16.msra.mxu0 0
      %1651 = vmatprep.subr.bf16.mxu0 0
      %1652 = vmatpush1.bf16.msra.mxu0 0
      %1653 = vmatprep.subr.bf16.mxu0 0
      %1654 = vmatpush1.bf16.msra.mxu0 0
      %1655 = vmatprep.subr.bf16.mxu0 0
      %1656 = vmatpush1.bf16.msra.mxu0 0
      %1657 = vmatprep.mubr.bf16.mxu0 0
      %1658 = vmatmul.mubr.bf16.gmra.mrb[0].mxu0 %v1621
      %v1659 = vpop.f32.mrb[0].mxu0
      %v1660 = vadd.f32 0.0, %v1659
      %v1661 = vpop.f32.mrb[0].mxu0
      %v1662 = vpop.f32.mrb[0].mxu0
      %v1663 = vadd.f32 0.0, %v1662
      %v1664 = vpop.f32.mrb[0].mxu0
      %1665 = vmatprep.mubr.bf16.mxu0 0
      %1666 = vmatmul.mubr.bf16.gmra.mrb[0].mxu0 %v1622
      %v1667 = vpop.f32.mrb[0].mxu0
      %v1668 = vadd.f32 0.0, %v1667
      %v1669 = vpop.f32.mrb[0].mxu0
      %v1670 = vpop.f32.mrb[0].mxu0
      %v1671 = vpop.f32.mrb[0].mxu0
      %1672 = vdwg.mxu0
      %v1673 = vpack.c.bf16 %v1663, %v1660
      %v1674 = vpack.c.bf16 %v1668, %v1668
      %s1675 = scalar_lea.vmem %s4, 48
      %v1676 = vld [vmem:[%s1675] sm:$0xf]
      %v1677 = vld [vmem:[%s1675 + $0x4] sm:$0xf]
      %v1678 = vld [vmem:[%s1675 + $0x8] sm:$0xf]
      %v1679 = vld [vmem:[%s1675 + $0xc] sm:$0xf]
      %v1684 = vunpack.c.l.b16 %v1676
      %v1685 = vunpack.c.l.b16 %v1677
      %v1686 = vunpack.c.l.b16 %v1678
      %v1687 = vunpack.c.l.b16 %v1679
      %v1688 = vpack.c.b16 %v1685, %v1684
      %v1689 = vpack.c.b16 %v1687, %v1686
      %v1693 = vsel %vm1352, %v1673, 0
      %v1696 = vsel %vm1352, %v1674, 0
      %1698 = vmatprep.subr.bf16.mxu0 0
      %1699 = vmatpush1.bf16.msra.mxu0 %v1688
      %1700 = vmatprep.subr.bf16.mxu0 0
      %1701 = vmatpush1.bf16.msra.mxu0 %v1689
      %1702 = vmatprep.subr.bf16.mxu0 0
      %1703 = vmatpush1.bf16.msra.mxu0 0
      %1704 = vmatprep.subr.bf16.mxu0 0
      %1705 = vmatpush1.bf16.msra.mxu0 0
      %1706 = vmatprep.subr.bf16.mxu0 0
      %1707 = vmatpush1.bf16.msra.mxu0 0
      %1708 = vmatprep.subr.bf16.mxu0 0
      %1709 = vmatpush1.bf16.msra.mxu0 0
      %1710 = vmatprep.subr.bf16.mxu0 0
      %1711 = vmatpush1.bf16.msra.mxu0 0
      %1712 = vmatprep.subr.bf16.mxu0 0
      %1713 = vmatpush1.bf16.msra.mxu0 0
      %1714 = vmatprep.subr.bf16.mxu0 0
      %1715 = vmatpush1.bf16.msra.mxu0 0
      %1716 = vmatprep.subr.bf16.mxu0 0
      %1717 = vmatpush1.bf16.msra.mxu0 0
      %1718 = vmatprep.subr.bf16.mxu0 0
      %1719 = vmatpush1.bf16.msra.mxu0 0
      %1720 = vmatprep.subr.bf16.mxu0 0
      %1721 = vmatpush1.bf16.msra.mxu0 0
      %1722 = vmatprep.subr.bf16.mxu0 0
      %1723 = vmatpush1.bf16.msra.mxu0 0
      %1724 = vmatprep.subr.bf16.mxu0 0
      %1725 = vmatpush1.bf16.msra.mxu0 0
      %1726 = vmatprep.subr.bf16.mxu0 0
      %1727 = vmatpush1.bf16.msra.mxu0 0
      %1728 = vmatprep.subr.bf16.mxu0 0
      %1729 = vmatpush1.bf16.msra.mxu0 0
      %1730 = vmatprep.mubr.bf16.mxu0 0
      %1731 = vmatmul.mubr.bf16.gmra.mrb[0].mxu0 %v1693
      %v1732 = vpop.f32.mrb[0].mxu0
      %v1733 = vadd.f32 0.0, %v1732
      %v1734 = vpop.f32.mrb[0].mxu0
      %v1735 = vpop.f32.mrb[0].mxu0
      %v1736 = vadd.f32 0.0, %v1735
      %v1737 = vpop.f32.mrb[0].mxu0
      %1738 = vmatprep.mubr.bf16.mxu0 0
      %1739 = vmatmul.mubr.bf16.gmra.mrb[0].mxu0 %v1696
      %v1740 = vpop.f32.mrb[0].mxu0
      %v1741 = vadd.f32 0.0, %v1740
      %v1742 = vpop.f32.mrb[0].mxu0
      %v1743 = vpop.f32.mrb[0].mxu0
      %v1744 = vpop.f32.mrb[0].mxu0
      %1745 = vdwg.mxu0
      %v1746 = vadd.f32 %v1608, %v1733
      %v1747 = vadd.f32 %v1609, %v1736
      %v1748 = vadd.f32 %v1610, %v1741
      %s1749 = scalar_lea.vmem %s3, 48
      %v1750 = vld [vmem:[%s1749] sm:$0xf]
      %v1751 = vld [vmem:[%s1749 + $0x4] sm:$0xf]
      %v1752 = vld [vmem:[%s1749 + $0x8] sm:$0x1]
      %v1756 = vunpack.c.l.b16 %v1750
      %v1757 = vunpack.c.l.b16 %v1751
      %v1758 = vunpack.c.l.b16 %v1752
      %v1759 = vpack.c.b16 %v1757, %v1756
      %v1760 = vpack.c.b16 %v1758, %v1758
      %1763 = vmatprep.subr.bf16.mxu0 0
      %1764 = vmatpush1.bf16.msra.mxu0 %v1196
      %1765 = vmatprep.subr.bf16.mxu0 0
      %1766 = vmatpush1.bf16.msra.mxu0 %v1197
      %1767 = vmatprep.subr.bf16.mxu0 0
      %1768 = vmatpush1.bf16.msra.mxu0 %v1198
      %1769 = vmatprep.subr.bf16.mxu0 0
      %1770 = vmatpush1.bf16.msra.mxu0 %v1199
      %1771 = vmatprep.subr.bf16.mxu0 0
      %1772 = vmatpush1.bf16.msra.mxu0 %v1200
      %1773 = vmatprep.subr.bf16.mxu0 0
      %1774 = vmatpush1.bf16.msra.mxu0 %v1201
      %1775 = vmatprep.subr.bf16.mxu0 0
      %1776 = vmatpush1.bf16.msra.mxu0 %v1202
      %1777 = vmatprep.subr.bf16.mxu0 0
      %1778 = vmatpush1.bf16.msra.mxu0 %v1203
      %1779 = vmatprep.subr.bf16.mxu0 0
      %1780 = vmatpush1.bf16.msra.mxu0 0
      %1781 = vmatprep.subr.bf16.mxu0 0
      %1782 = vmatpush1.bf16.msra.mxu0 0
      %1783 = vmatprep.subr.bf16.mxu0 0
      %1784 = vmatpush1.bf16.msra.mxu0 0
      %1785 = vmatprep.subr.bf16.mxu0 0
      %1786 = vmatpush1.bf16.msra.mxu0 0
      %1787 = vmatprep.subr.bf16.mxu0 0
      %1788 = vmatpush1.bf16.msra.mxu0 0
      %1789 = vmatprep.subr.bf16.mxu0 0
      %1790 = vmatpush1.bf16.msra.mxu0 0
      %1791 = vmatprep.subr.bf16.mxu0 0
      %1792 = vmatpush1.bf16.msra.mxu0 0
      %1793 = vmatprep.subr.bf16.mxu0 0
      %1794 = vmatpush1.bf16.msra.mxu0 0
      %1795 = vmatprep.mubr.bf16.mxu0 0
      %1796 = vmatmul.mubr.bf16.gmra.mrb[0].mxu0 %v1759
      %v1797 = vpop.f32.mrb[0].mxu0
      %v1798 = vadd.f32 0.0, %v1797
      %v1799 = vpop.f32.mrb[0].mxu0
      %v1800 = vpop.f32.mrb[0].mxu0
      %v1801 = vadd.f32 0.0, %v1800
      %v1802 = vpop.f32.mrb[0].mxu0
      %1803 = vmatprep.mubr.bf16.mxu0 0
      %1804 = vmatmul.mubr.bf16.gmra.mrb[0].mxu0 %v1760
      %v1805 = vpop.f32.mrb[0].mxu0
      %v1806 = vadd.f32 0.0, %v1805
      %v1807 = vpop.f32.mrb[0].mxu0
      %v1808 = vpop.f32.mrb[0].mxu0
      %v1809 = vpop.f32.mrb[0].mxu0
      %1810 = vdwg.mxu0
      %v1811 = vpack.c.bf16 %v1801, %v1798
      %v1812 = vpack.c.bf16 %v1806, %v1806
      %s1813 = scalar_lea.vmem %s4, 64
      %v1814 = vld [vmem:[%s1813] sm:$0xf]
      %v1815 = vld [vmem:[%s1813 + $0x4] sm:$0xf]
      %v1816 = vld [vmem:[%s1813 + $0x8] sm:$0xf]
      %v1817 = vld [vmem:[%s1813 + $0xc] sm:$0xf]
      %v1822 = vunpack.c.l.b16 %v1814
      %v1823 = vunpack.c.l.b16 %v1815
      %v1824 = vunpack.c.l.b16 %v1816
      %v1825 = vunpack.c.l.b16 %v1817
      %v1826 = vpack.c.b16 %v1823, %v1822
      %v1827 = vpack.c.b16 %v1825, %v1824
      %v1831 = vsel %vm1352, %v1811, 0
      %v1834 = vsel %vm1352, %v1812, 0
      %1836 = vmatprep.subr.bf16.mxu0 0
      %1837 = vmatpush1.bf16.msra.mxu0 %v1826
      %1838 = vmatprep.subr.bf16.mxu0 0
      %1839 = vmatpush1.bf16.msra.mxu0 %v1827
      %1840 = vmatprep.subr.bf16.mxu0 0
      %1841 = vmatpush1.bf16.msra.mxu0 0
      %1842 = vmatprep.subr.bf16.mxu0 0
      %1843 = vmatpush1.bf16.msra.mxu0 0
      %1844 = vmatprep.subr.bf16.mxu0 0
      %1845 = vmatpush1.bf16.msra.mxu0 0
      %1846 = vmatprep.subr.bf16.mxu0 0
      %1847 = vmatpush1.bf16.msra.mxu0 0
      %1848 = vmatprep.subr.bf16.mxu0 0
      %1849 = vmatpush1.bf16.msra.mxu0 0
      %1850 = vmatprep.subr.bf16.mxu0 0
      %1851 = vmatpush1.bf16.msra.mxu0 0
      %1852 = vmatprep.subr.bf16.mxu0 0
      %1853 = vmatpush1.bf16.msra.mxu0 0
      %1854 = vmatprep.subr.bf16.mxu0 0
      %1855 = vmatpush1.bf16.msra.mxu0 0
      %1856 = vmatprep.subr.bf16.mxu0 0
      %1857 = vmatpush1.bf16.msra.mxu0 0
      %1858 = vmatprep.subr.bf16.mxu0 0
      %1859 = vmatpush1.bf16.msra.mxu0 0
      %1860 = vmatprep.subr.bf16.mxu0 0
      %1861 = vmatpush1.bf16.msra.mxu0 0
      %1862 = vmatprep.subr.bf16.mxu0 0
      %1863 = vmatpush1.bf16.msra.mxu0 0
      %1864 = vmatprep.subr.bf16.mxu0 0
      %1865 = vmatpush1.bf16.msra.mxu0 0
      %1866 = vmatprep.subr.bf16.mxu0 0
      %1867 = vmatpush1.bf16.msra.mxu0 0
      %1868 = vmatprep.mubr.bf16.mxu0 0
      %1869 = vmatmul.mubr.bf16.gmra.mrb[0].mxu0 %v1831
      %v1870 = vpop.f32.mrb[0].mxu0
      %v1871 = vadd.f32 0.0, %v1870
      %v1872 = vpop.f32.mrb[0].mxu0
      %v1873 = vpop.f32.mrb[0].mxu0
      %v1874 = vadd.f32 0.0, %v1873
      %v1875 = vpop.f32.mrb[0].mxu0
      %1876 = vmatprep.mubr.bf16.mxu0 0
      %1877 = vmatmul.mubr.bf16.gmra.mrb[0].mxu0 %v1834
      %v1878 = vpop.f32.mrb[0].mxu0
      %v1879 = vadd.f32 0.0, %v1878
      %v1880 = vpop.f32.mrb[0].mxu0
      %v1881 = vpop.f32.mrb[0].mxu0
      %v1882 = vpop.f32.mrb[0].mxu0
      %1883 = vdwg.mxu0
      %v1884 = vadd.f32 %v1746, %v1871
      %v1885 = vadd.f32 %v1747, %v1874
      %v1886 = vadd.f32 %v1748, %v1879
      %s1887 = scalar_lea.vmem %s3, 60
      %v1888 = vld [vmem:[%s1887] sm:$0xf]
      %v1889 = vld [vmem:[%s1887 + $0x4] sm:$0xf]
      %v1890 = vld [vmem:[%s1887 + $0x8] sm:$0x1]
      %v1894 = vunpack.c.l.b16 %v1888
      %v1895 = vunpack.c.l.b16 %v1889
      %v1896 = vunpack.c.l.b16 %v1890
      %v1897 = vpack.c.b16 %v1895, %v1894
      %v1898 = vpack.c.b16 %v1896, %v1896
      %1901 = vmatprep.subr.bf16.mxu0 0
      %1902 = vmatpush1.bf16.msra.mxu0 %v1196
      %1903 = vmatprep.subr.bf16.mxu0 0
      %1904 = vmatpush1.bf16.msra.mxu0 %v1197
      %1905 = vmatprep.subr.bf16.mxu0 0
      %1906 = vmatpush1.bf16.msra.mxu0 %v1198
      %1907 = vmatprep.subr.bf16.mxu0 0
      %1908 = vmatpush1.bf16.msra.mxu0 %v1199
      %1909 = vmatprep.subr.bf16.mxu0 0
      %1910 = vmatpush1.bf16.msra.mxu0 %v1200
      %1911 = vmatprep.subr.bf16.mxu0 0
      %1912 = vmatpush1.bf16.msra.mxu0 %v1201
      %1913 = vmatprep.subr.bf16.mxu0 0
      %1914 = vmatpush1.bf16.msra.mxu0 %v1202
      %1915 = vmatprep.subr.bf16.mxu0 0
      %1916 = vmatpush1.bf16.msra.mxu0 %v1203
      %1917 = vmatprep.subr.bf16.mxu0 0
      %1918 = vmatpush1.bf16.msra.mxu0 0
      %1919 = vmatprep.subr.bf16.mxu0 0
      %1920 = vmatpush1.bf16.msra.mxu0 0
      %1921 = vmatprep.subr.bf16.mxu0 0
      %1922 = vmatpush1.bf16.msra.mxu0 0
      %1923 = vmatprep.subr.bf16.mxu0 0
      %1924 = vmatpush1.bf16.msra.mxu0 0
      %1925 = vmatprep.subr.bf16.mxu0 0
      %1926 = vmatpush1.bf16.msra.mxu0 0
      %1927 = vmatprep.subr.bf16.mxu0 0
      %1928 = vmatpush1.bf16.msra.mxu0 0
      %1929 = vmatprep.subr.bf16.mxu0 0
      %1930 = vmatpush1.bf16.msra.mxu0 0
      %1931 = vmatprep.subr.bf16.mxu0 0
      %1932 = vmatpush1.bf16.msra.mxu0 0
      %1933 = vmatprep.mubr.bf16.mxu0 0
      %1934 = vmatmul.mubr.bf16.gmra.mrb[0].mxu0 %v1897
      %v1935 = vpop.f32.mrb[0].mxu0
      %v1936 = vadd.f32 0.0, %v1935
      %v1937 = vpop.f32.mrb[0].mxu0
      %v1938 = vpop.f32.mrb[0].mxu0
      %v1939 = vadd.f32 0.0, %v1938
      %v1940 = vpop.f32.mrb[0].mxu0
      %1941 = vmatprep.mubr.bf16.mxu0 0
      %1942 = vmatmul.mubr.bf16.gmra.mrb[0].mxu0 %v1898
      %v1943 = vpop.f32.mrb[0].mxu0
      %v1944 = vadd.f32 0.0, %v1943
      %v1945 = vpop.f32.mrb[0].mxu0
      %v1946 = vpop.f32.mrb[0].mxu0
      %v1947 = vpop.f32.mrb[0].mxu0
      %1948 = vdwg.mxu0
      %v1949 = vpack.c.bf16 %v1939, %v1936
      %v1950 = vpack.c.bf16 %v1944, %v1944
      %s1951 = scalar_lea.vmem %s4, 80
      %v1952 = vld [vmem:[%s1951] sm:$0xf]
      %v1953 = vld [vmem:[%s1951 + $0x4] sm:$0xf]
      %v1954 = vld [vmem:[%s1951 + $0x8] sm:$0xf]
      %v1955 = vld [vmem:[%s1951 + $0xc] sm:$0xf]
      %v1960 = vunpack.c.l.b16 %v1952
      %v1961 = vunpack.c.l.b16 %v1953
      %v1962 = vunpack.c.l.b16 %v1954
      %v1963 = vunpack.c.l.b16 %v1955
      %v1964 = vpack.c.b16 %v1961, %v1960
      %v1965 = vpack.c.b16 %v1963, %v1962
      %v1969 = vsel %vm1352, %v1949, 0
      %v1972 = vsel %vm1352, %v1950, 0
      %1974 = vmatprep.subr.bf16.mxu0 0
      %1975 = vmatpush1.bf16.msra.mxu0 %v1964
      %1976 = vmatprep.subr.bf16.mxu0 0
      %1977 = vmatpush1.bf16.msra.mxu0 %v1965
      %1978 = vmatprep.subr.bf16.mxu0 0
      %1979 = vmatpush1.bf16.msra.mxu0 0
      %1980 = vmatprep.subr.bf16.mxu0 0
      %1981 = vmatpush1.bf16.msra.mxu0 0
      %1982 = vmatprep.subr.bf16.mxu0 0
      %1983 = vmatpush1.bf16.msra.mxu0 0
      %1984 = vmatprep.subr.bf16.mxu0 0
      %1985 = vmatpush1.bf16.msra.mxu0 0
      %1986 = vmatprep.subr.bf16.mxu0 0
      %1987 = vmatpush1.bf16.msra.mxu0 0
      %1988 = vmatprep.subr.bf16.mxu0 0
      %1989 = vmatpush1.bf16.msra.mxu0 0
      %1990 = vmatprep.subr.bf16.mxu0 0
      %1991 = vmatpush1.bf16.msra.mxu0 0
      %1992 = vmatprep.subr.bf16.mxu0 0
      %1993 = vmatpush1.bf16.msra.mxu0 0
      %1994 = vmatprep.subr.bf16.mxu0 0
      %1995 = vmatpush1.bf16.msra.mxu0 0
      %1996 = vmatprep.subr.bf16.mxu0 0
      %1997 = vmatpush1.bf16.msra.mxu0 0
      %1998 = vmatprep.subr.bf16.mxu0 0
      %1999 = vmatpush1.bf16.msra.mxu0 0
      %2000 = vmatprep.subr.bf16.mxu0 0
      %2001 = vmatpush1.bf16.msra.mxu0 0
      %2002 = vmatprep.subr.bf16.mxu0 0
      %2003 = vmatpush1.bf16.msra.mxu0 0
      %2004 = vmatprep.subr.bf16.mxu0 0
      %2005 = vmatpush1.bf16.msra.mxu0 0
      %2006 = vmatprep.mubr.bf16.mxu0 0
      %2007 = vmatmul.mubr.bf16.gmra.mrb[0].mxu0 %v1969
      %v2008 = vpop.f32.mrb[0].mxu0
      %v2009 = vadd.f32 0.0, %v2008
      %v2010 = vpop.f32.mrb[0].mxu0
      %v2011 = vpop.f32.mrb[0].mxu0
      %v2012 = vadd.f32 0.0, %v2011
      %v2013 = vpop.f32.mrb[0].mxu0
      %2014 = vmatprep.mubr.bf16.mxu0 0
      %2015 = vmatmul.mubr.bf16.gmra.mrb[0].mxu0 %v1972
      %v2016 = vpop.f32.mrb[0].mxu0
      %v2017 = vadd.f32 0.0, %v2016
      %v2018 = vpop.f32.mrb[0].mxu0
      %v2019 = vpop.f32.mrb[0].mxu0
      %v2020 = vpop.f32.mrb[0].mxu0
      %2021 = vdwg.mxu0
      %v2022 = vadd.f32 %v1884, %v2009
      %v2023 = vadd.f32 %v1885, %v2012
      %v2024 = vadd.f32 %v1886, %v2017
      %s2025 = scalar_lea.vmem %s3, 72
      %v2026 = vld [vmem:[%s2025] sm:$0xf]
      %v2027 = vld [vmem:[%s2025 + $0x4] sm:$0xf]
      %v2028 = vld [vmem:[%s2025 + $0x8] sm:$0x1]
      %v2032 = vunpack.c.l.b16 %v2026
      %v2033 = vunpack.c.l.b16 %v2027
      %v2034 = vunpack.c.l.b16 %v2028
      %v2035 = vpack.c.b16 %v2033, %v2032
      %v2036 = vpack.c.b16 %v2034, %v2034
      %2039 = vmatprep.subr.bf16.mxu0 0
      %2040 = vmatpush1.bf16.msra.mxu0 %v1196
      %2041 = vmatprep.subr.bf16.mxu0 0
      %2042 = vmatpush1.bf16.msra.mxu0 %v1197
      %2043 = vmatprep.subr.bf16.mxu0 0
      %2044 = vmatpush1.bf16.msra.mxu0 %v1198
      %2045 = vmatprep.subr.bf16.mxu0 0
      %2046 = vmatpush1.bf16.msra.mxu0 %v1199
      %2047 = vmatprep.subr.bf16.mxu0 0
      %2048 = vmatpush1.bf16.msra.mxu0 %v1200
      %2049 = vmatprep.subr.bf16.mxu0 0
      %2050 = vmatpush1.bf16.msra.mxu0 %v1201
      %2051 = vmatprep.subr.bf16.mxu0 0
      %2052 = vmatpush1.bf16.msra.mxu0 %v1202
      %2053 = vmatprep.subr.bf16.mxu0 0
      %2054 = vmatpush1.bf16.msra.mxu0 %v1203
      %2055 = vmatprep.subr.bf16.mxu0 0
      %2056 = vmatpush1.bf16.msra.mxu0 0
      %2057 = vmatprep.subr.bf16.mxu0 0
      %2058 = vmatpush1.bf16.msra.mxu0 0
      %2059 = vmatprep.subr.bf16.mxu0 0
      %2060 = vmatpush1.bf16.msra.mxu0 0
      %2061 = vmatprep.subr.bf16.mxu0 0
      %2062 = vmatpush1.bf16.msra.mxu0 0
      %2063 = vmatprep.subr.bf16.mxu0 0
      %2064 = vmatpush1.bf16.msra.mxu0 0
      %2065 = vmatprep.subr.bf16.mxu0 0
      %2066 = vmatpush1.bf16.msra.mxu0 0
      %2067 = vmatprep.subr.bf16.mxu0 0
      %2068 = vmatpush1.bf16.msra.mxu0 0
      %2069 = vmatprep.subr.bf16.mxu0 0
      %2070 = vmatpush1.bf16.msra.mxu0 0
      %2071 = vmatprep.mubr.bf16.mxu0 0
      %2072 = vmatmul.mubr.bf16.gmra.mrb[0].mxu0 %v2035
      %v2073 = vpop.f32.mrb[0].mxu0
      %v2074 = vadd.f32 0.0, %v2073
      %v2075 = vpop.f32.mrb[0].mxu0
      %v2076 = vpop.f32.mrb[0].mxu0
      %v2077 = vadd.f32 0.0, %v2076
      %v2078 = vpop.f32.mrb[0].mxu0
      %2079 = vmatprep.mubr.bf16.mxu0 0
      %2080 = vmatmul.mubr.bf16.gmra.mrb[0].mxu0 %v2036
      %v2081 = vpop.f32.mrb[0].mxu0
      %v2082 = vadd.f32 0.0, %v2081
      %v2083 = vpop.f32.mrb[0].mxu0
      %v2084 = vpop.f32.mrb[0].mxu0
      %v2085 = vpop.f32.mrb[0].mxu0
      %2086 = vdwg.mxu0
      %v2087 = vpack.c.bf16 %v2077, %v2074
      %v2088 = vpack.c.bf16 %v2082, %v2082
      %s2089 = scalar_lea.vmem %s4, 96
      %v2090 = vld [vmem:[%s2089] sm:$0xf]
      %v2091 = vld [vmem:[%s2089 + $0x4] sm:$0xf]
      %v2092 = vld [vmem:[%s2089 + $0x8] sm:$0xf]
      %v2093 = vld [vmem:[%s2089 + $0xc] sm:$0xf]
      %v2098 = vunpack.c.l.b16 %v2090
      %v2099 = vunpack.c.l.b16 %v2091
      %v2100 = vunpack.c.l.b16 %v2092
      %v2101 = vunpack.c.l.b16 %v2093
      %v2102 = vpack.c.b16 %v2099, %v2098
      %v2103 = vpack.c.b16 %v2101, %v2100
      %v2107 = vsel %vm1352, %v2087, 0
      %v2110 = vsel %vm1352, %v2088, 0
      %2112 = vmatprep.subr.bf16.mxu0 0
      %2113 = vmatpush1.bf16.msra.mxu0 %v2102
      %2114 = vmatprep.subr.bf16.mxu0 0
      %2115 = vmatpush1.bf16.msra.mxu0 %v2103
      %2116 = vmatprep.subr.bf16.mxu0 0
      %2117 = vmatpush1.bf16.msra.mxu0 0
      %2118 = vmatprep.subr.bf16.mxu0 0
      %2119 = vmatpush1.bf16.msra.mxu0 0
      %2120 = vmatprep.subr.bf16.mxu0 0
      %2121 = vmatpush1.bf16.msra.mxu0 0
      %2122 = vmatprep.subr.bf16.mxu0 0
      %2123 = vmatpush1.bf16.msra.mxu0 0
      %2124 = vmatprep.subr.bf16.mxu0 0
      %2125 = vmatpush1.bf16.msra.mxu0 0
      %2126 = vmatprep.subr.bf16.mxu0 0
      %2127 = vmatpush1.bf16.msra.mxu0 0
      %2128 = vmatprep.subr.bf16.mxu0 0
      %2129 = vmatpush1.bf16.msra.mxu0 0
      %2130 = vmatprep.subr.bf16.mxu0 0
      %2131 = vmatpush1.bf16.msra.mxu0 0
      %2132 = vmatprep.subr.bf16.mxu0 0
      %2133 = vmatpush1.bf16.msra.mxu0 0
      %2134 = vmatprep.subr.bf16.mxu0 0
      %2135 = vmatpush1.bf16.msra.mxu0 0
      %2136 = vmatprep.subr.bf16.mxu0 0
      %2137 = vmatpush1.bf16.msra.mxu0 0
      %2138 = vmatprep.subr.bf16.mxu0 0
      %2139 = vmatpush1.bf16.msra.mxu0 0
      %2140 = vmatprep.subr.bf16.mxu0 0
      %2141 = vmatpush1.bf16.msra.mxu0 0
      %2142 = vmatprep.subr.bf16.mxu0 0
      %2143 = vmatpush1.bf16.msra.mxu0 0
      %2144 = vmatprep.mubr.bf16.mxu0 0
      %2145 = vmatmul.mubr.bf16.gmra.mrb[0].mxu0 %v2107
      %v2146 = vpop.f32.mrb[0].mxu0
      %v2147 = vadd.f32 0.0, %v2146
      %v2148 = vpop.f32.mrb[0].mxu0
      %v2149 = vpop.f32.mrb[0].mxu0
      %v2150 = vadd.f32 0.0, %v2149
      %v2151 = vpop.f32.mrb[0].mxu0
      %2152 = vmatprep.mubr.bf16.mxu0 0
      %2153 = vmatmul.mubr.bf16.gmra.mrb[0].mxu0 %v2110
      %v2154 = vpop.f32.mrb[0].mxu0
      %v2155 = vadd.f32 0.0, %v2154
      %v2156 = vpop.f32.mrb[0].mxu0
      %v2157 = vpop.f32.mrb[0].mxu0
      %v2158 = vpop.f32.mrb[0].mxu0
      %2159 = vdwg.mxu0
      %v2160 = vadd.f32 %v2022, %v2147
      %v2161 = vadd.f32 %v2023, %v2150
      %v2162 = vadd.f32 %v2024, %v2155
      %s2163 = scalar_lea.vmem %s3, 84
      %v2164 = vld [vmem:[%s2163] sm:$0xf]
      %v2165 = vld [vmem:[%s2163 + $0x4] sm:$0xf]
      %v2166 = vld [vmem:[%s2163 + $0x8] sm:$0x1]
      %v2170 = vunpack.c.l.b16 %v2164
      %v2171 = vunpack.c.l.b16 %v2165
      %v2172 = vunpack.c.l.b16 %v2166
      %v2173 = vpack.c.b16 %v2171, %v2170
      %v2174 = vpack.c.b16 %v2172, %v2172
      %2177 = vmatprep.subr.bf16.mxu0 0
      %2178 = vmatpush1.bf16.msra.mxu0 %v1196
      %2179 = vmatprep.subr.bf16.mxu0 0
      %2180 = vmatpush1.bf16.msra.mxu0 %v1197
      %2181 = vmatprep.subr.bf16.mxu0 0
      %2182 = vmatpush1.bf16.msra.mxu0 %v1198
      %2183 = vmatprep.subr.bf16.mxu0 0
      %2184 = vmatpush1.bf16.msra.mxu0 %v1199
      %2185 = vmatprep.subr.bf16.mxu0 0
      %2186 = vmatpush1.bf16.msra.mxu0 %v1200
      %2187 = vmatprep.subr.bf16.mxu0 0
      %2188 = vmatpush1.bf16.msra.mxu0 %v1201
      %2189 = vmatprep.subr.bf16.mxu0 0
      %2190 = vmatpush1.bf16.msra.mxu0 %v1202
      %2191 = vmatprep.subr.bf16.mxu0 0
      %2192 = vmatpush1.bf16.msra.mxu0 %v1203
      %2193 = vmatprep.subr.bf16.mxu0 0
      %2194 = vmatpush1.bf16.msra.mxu0 0
      %2195 = vmatprep.subr.bf16.mxu0 0
      %2196 = vmatpush1.bf16.msra.mxu0 0
      %2197 = vmatprep.subr.bf16.mxu0 0
      %2198 = vmatpush1.bf16.msra.mxu0 0
      %2199 = vmatprep.subr.bf16.mxu0 0
      %2200 = vmatpush1.bf16.msra.mxu0 0
      %2201 = vmatprep.subr.bf16.mxu0 0
      %2202 = vmatpush1.bf16.msra.mxu0 0
      %2203 = vmatprep.subr.bf16.mxu0 0
      %2204 = vmatpush1.bf16.msra.mxu0 0
      %2205 = vmatprep.subr.bf16.mxu0 0
      %2206 = vmatpush1.bf16.msra.mxu0 0
      %2207 = vmatprep.subr.bf16.mxu0 0
      %2208 = vmatpush1.bf16.msra.mxu0 0
      %2209 = vmatprep.mubr.bf16.mxu0 0
      %2210 = vmatmul.mubr.bf16.gmra.mrb[0].mxu0 %v2173
      %v2211 = vpop.f32.mrb[0].mxu0
      %v2212 = vadd.f32 0.0, %v2211
      %v2213 = vpop.f32.mrb[0].mxu0
      %v2214 = vpop.f32.mrb[0].mxu0
      %v2215 = vadd.f32 0.0, %v2214
      %v2216 = vpop.f32.mrb[0].mxu0
      %2217 = vmatprep.mubr.bf16.mxu0 0
      %2218 = vmatmul.mubr.bf16.gmra.mrb[0].mxu0 %v2174
      %v2219 = vpop.f32.mrb[0].mxu0
      %v2220 = vadd.f32 0.0, %v2219
      %v2221 = vpop.f32.mrb[0].mxu0
      %v2222 = vpop.f32.mrb[0].mxu0
      %v2223 = vpop.f32.mrb[0].mxu0
      %2224 = vdwg.mxu0
      %v2225 = vpack.c.bf16 %v2215, %v2212
      %v2226 = vpack.c.bf16 %v2220, %v2220
      %s2227 = scalar_lea.vmem %s4, 112
      %v2228 = vld [vmem:[%s2227] sm:$0xf]
      %v2229 = vld [vmem:[%s2227 + $0x4] sm:$0xf]
      %v2230 = vld [vmem:[%s2227 + $0x8] sm:$0xf]
      %v2231 = vld [vmem:[%s2227 + $0xc] sm:$0xf]
      %v2236 = vunpack.c.l.b16 %v2228
      %v2237 = vunpack.c.l.b16 %v2229
      %v2238 = vunpack.c.l.b16 %v2230
      %v2239 = vunpack.c.l.b16 %v2231
      %v2240 = vpack.c.b16 %v2237, %v2236
      %v2241 = vpack.c.b16 %v2239, %v2238
      %v2245 = vsel %vm1352, %v2225, 0
      %v2248 = vsel %vm1352, %v2226, 0
      %2250 = vmatprep.subr.bf16.mxu0 0
      %2251 = vmatpush1.bf16.msra.mxu0 %v2240
      %2252 = vmatprep.subr.bf16.mxu0 0
      %2253 = vmatpush1.bf16.msra.mxu0 %v2241
      %2254 = vmatprep.subr.bf16.mxu0 0
      %2255 = vmatpush1.bf16.msra.mxu0 0
      %2256 = vmatprep.subr.bf16.mxu0 0
      %2257 = vmatpush1.bf16.msra.mxu0 0
      %2258 = vmatprep.subr.bf16.mxu0 0
      %2259 = vmatpush1.bf16.msra.mxu0 0
      %2260 = vmatprep.subr.bf16.mxu0 0
      %2261 = vmatpush1.bf16.msra.mxu0 0
      %2262 = vmatprep.subr.bf16.mxu0 0
      %2263 = vmatpush1.bf16.msra.mxu0 0
      %2264 = vmatprep.subr.bf16.mxu0 0
      %2265 = vmatpush1.bf16.msra.mxu0 0
      %2266 = vmatprep.subr.bf16.mxu0 0
      %2267 = vmatpush1.bf16.msra.mxu0 0
      %2268 = vmatprep.subr.bf16.mxu0 0
      %2269 = vmatpush1.bf16.msra.mxu0 0
      %2270 = vmatprep.subr.bf16.mxu0 0
      %2271 = vmatpush1.bf16.msra.mxu0 0
      %2272 = vmatprep.subr.bf16.mxu0 0
      %2273 = vmatpush1.bf16.msra.mxu0 0
      %2274 = vmatprep.subr.bf16.mxu0 0
      %2275 = vmatpush1.bf16.msra.mxu0 0
      %2276 = vmatprep.subr.bf16.mxu0 0
      %2277 = vmatpush1.bf16.msra.mxu0 0
      %2278 = vmatprep.subr.bf16.mxu0 0
      %2279 = vmatpush1.bf16.msra.mxu0 0
      %2280 = vmatprep.subr.bf16.mxu0 0
      %2281 = vmatpush1.bf16.msra.mxu0 0
      %2282 = vmatprep.mubr.bf16.mxu0 0
      %2283 = vmatmul.mubr.bf16.gmra.mrb[0].mxu0 %v2245
      %v2284 = vpop.f32.mrb[0].mxu0
      %v2285 = vadd.f32 0.0, %v2284
      %v2286 = vpop.f32.mrb[0].mxu0
      %v2287 = vpop.f32.mrb[0].mxu0
      %v2288 = vadd.f32 0.0, %v2287
      %v2289 = vpop.f32.mrb[0].mxu0
      %2290 = vmatprep.mubr.bf16.mxu0 0
      %2291 = vmatmul.mubr.bf16.gmra.mrb[0].mxu0 %v2248
      %v2292 = vpop.f32.mrb[0].mxu0
      %v2293 = vadd.f32 0.0, %v2292
      %v2294 = vpop.f32.mrb[0].mxu0
      %v2295 = vpop.f32.mrb[0].mxu0
      %v2296 = vpop.f32.mrb[0].mxu0
      %2297 = vdwg.mxu0
      %v2298 = vadd.f32 %v2160, %v2285
      %v2299 = vadd.f32 %v2161, %v2288
      %v2300 = vadd.f32 %v2162, %v2293
      %s2301 = scalar_lea.vmem %s3, 96
      %v2302 = vld [vmem:[%s2301] sm:$0xf]
      %v2303 = vld [vmem:[%s2301 + $0x4] sm:$0xf]
      %v2304 = vld [vmem:[%s2301 + $0x8] sm:$0x1]
      %v2308 = vunpack.c.l.b16 %v2302
      %v2309 = vunpack.c.l.b16 %v2303
      %v2310 = vunpack.c.l.b16 %v2304
      %v2311 = vpack.c.b16 %v2309, %v2308
      %v2312 = vpack.c.b16 %v2310, %v2310
      %2315 = vmatprep.subr.bf16.mxu0 0
      %2316 = vmatpush1.bf16.msra.mxu0 %v1196
      %2317 = vmatprep.subr.bf16.mxu0 0
      %2318 = vmatpush1.bf16.msra.mxu0 %v1197
      %2319 = vmatprep.subr.bf16.mxu0 0
      %2320 = vmatpush1.bf16.msra.mxu0 %v1198
      %2321 = vmatprep.subr.bf16.mxu0 0
      %2322 = vmatpush1.bf16.msra.mxu0 %v1199
      %2323 = vmatprep.subr.bf16.mxu0 0
      %2324 = vmatpush1.bf16.msra.mxu0 %v1200
      %2325 = vmatprep.subr.bf16.mxu0 0
      %2326 = vmatpush1.bf16.msra.mxu0 %v1201
      %2327 = vmatprep.subr.bf16.mxu0 0
      %2328 = vmatpush1.bf16.msra.mxu0 %v1202
      %2329 = vmatprep.subr.bf16.mxu0 0
      %2330 = vmatpush1.bf16.msra.mxu0 %v1203
      %2331 = vmatprep.subr.bf16.mxu0 0
      %2332 = vmatpush1.bf16.msra.mxu0 0
      %2333 = vmatprep.subr.bf16.mxu0 0
      %2334 = vmatpush1.bf16.msra.mxu0 0
      %2335 = vmatprep.subr.bf16.mxu0 0
      %2336 = vmatpush1.bf16.msra.mxu0 0
      %2337 = vmatprep.subr.bf16.mxu0 0
      %2338 = vmatpush1.bf16.msra.mxu0 0
      %2339 = vmatprep.subr.bf16.mxu0 0
      %2340 = vmatpush1.bf16.msra.mxu0 0
      %2341 = vmatprep.subr.bf16.mxu0 0
      %2342 = vmatpush1.bf16.msra.mxu0 0
      %2343 = vmatprep.subr.bf16.mxu0 0
      %2344 = vmatpush1.bf16.msra.mxu0 0
      %2345 = vmatprep.subr.bf16.mxu0 0
      %2346 = vmatpush1.bf16.msra.mxu0 0
      %2347 = vmatprep.mubr.bf16.mxu0 0
      %2348 = vmatmul.mubr.bf16.gmra.mrb[0].mxu0 %v2311
      %v2349 = vpop.f32.mrb[0].mxu0
      %v2350 = vadd.f32 0.0, %v2349
      %v2351 = vpop.f32.mrb[0].mxu0
      %v2352 = vpop.f32.mrb[0].mxu0
      %v2353 = vadd.f32 0.0, %v2352
      %v2354 = vpop.f32.mrb[0].mxu0
      %2355 = vmatprep.mubr.bf16.mxu0 0
      %2356 = vmatmul.mubr.bf16.gmra.mrb[0].mxu0 %v2312
      %v2357 = vpop.f32.mrb[0].mxu0
      %v2358 = vadd.f32 0.0, %v2357
      %v2359 = vpop.f32.mrb[0].mxu0
      %v2360 = vpop.f32.mrb[0].mxu0
      %v2361 = vpop.f32.mrb[0].mxu0
      %2362 = vdwg.mxu0
      %v2363 = vpack.c.bf16 %v2353, %v2350
      %v2364 = vpack.c.bf16 %v2358, %v2358
      %s2365 = scalar_lea.vmem %s4, 128
      %v2366 = vld [vmem:[%s2365] sm:$0xf]
      %v2367 = vld [vmem:[%s2365 + $0x4] sm:$0xf]
      %v2368 = vld [vmem:[%s2365 + $0x8] sm:$0xf]
      %v2369 = vld [vmem:[%s2365 + $0xc] sm:$0xf]
      %v2374 = vunpack.c.l.b16 %v2366
      %v2375 = vunpack.c.l.b16 %v2367
      %v2376 = vunpack.c.l.b16 %v2368
      %v2377 = vunpack.c.l.b16 %v2369
      %v2378 = vpack.c.b16 %v2375, %v2374
      %v2379 = vpack.c.b16 %v2377, %v2376
      %v2383 = vsel %vm1352, %v2363, 0
      %v2386 = vsel %vm1352, %v2364, 0
      %2388 = vmatprep.subr.bf16.mxu0 0
      %2389 = vmatpush1.bf16.msra.mxu0 %v2378
      %2390 = vmatprep.subr.bf16.mxu0 0
      %2391 = vmatpush1.bf16.msra.mxu0 %v2379
      %2392 = vmatprep.subr.bf16.mxu0 0
      %2393 = vmatpush1.bf16.msra.mxu0 0
      %2394 = vmatprep.subr.bf16.mxu0 0
      %2395 = vmatpush1.bf16.msra.mxu0 0
      %2396 = vmatprep.subr.bf16.mxu0 0
      %2397 = vmatpush1.bf16.msra.mxu0 0
      %2398 = vmatprep.subr.bf16.mxu0 0
      %2399 = vmatpush1.bf16.msra.mxu0 0
      %2400 = vmatprep.subr.bf16.mxu0 0
      %2401 = vmatpush1.bf16.msra.mxu0 0
      %2402 = vmatprep.subr.bf16.mxu0 0
      %2403 = vmatpush1.bf16.msra.mxu0 0
      %2404 = vmatprep.subr.bf16.mxu0 0
      %2405 = vmatpush1.bf16.msra.mxu0 0
      %2406 = vmatprep.subr.bf16.mxu0 0
      %2407 = vmatpush1.bf16.msra.mxu0 0
      %2408 = vmatprep.subr.bf16.mxu0 0
      %2409 = vmatpush1.bf16.msra.mxu0 0
      %2410 = vmatprep.subr.bf16.mxu0 0
      %2411 = vmatpush1.bf16.msra.mxu0 0
      %2412 = vmatprep.subr.bf16.mxu0 0
      %2413 = vmatpush1.bf16.msra.mxu0 0
      %2414 = vmatprep.subr.bf16.mxu0 0
      %2415 = vmatpush1.bf16.msra.mxu0 0
      %2416 = vmatprep.subr.bf16.mxu0 0
      %2417 = vmatpush1.bf16.msra.mxu0 0
      %2418 = vmatprep.subr.bf16.mxu0 0
      %2419 = vmatpush1.bf16.msra.mxu0 0
      %2420 = vmatprep.mubr.bf16.mxu0 0
      %2421 = vmatmul.mubr.bf16.gmra.mrb[0].mxu0 %v2383
      %v2422 = vpop.f32.mrb[0].mxu0
      %v2423 = vadd.f32 0.0, %v2422
      %v2424 = vpop.f32.mrb[0].mxu0
      %v2425 = vpop.f32.mrb[0].mxu0
      %v2426 = vadd.f32 0.0, %v2425
      %v2427 = vpop.f32.mrb[0].mxu0
      %2428 = vmatprep.mubr.bf16.mxu0 0
      %2429 = vmatmul.mubr.bf16.gmra.mrb[0].mxu0 %v2386
      %v2430 = vpop.f32.mrb[0].mxu0
      %v2431 = vadd.f32 0.0, %v2430
      %v2432 = vpop.f32.mrb[0].mxu0
      %v2433 = vpop.f32.mrb[0].mxu0
      %v2434 = vpop.f32.mrb[0].mxu0
      %2435 = vdwg.mxu0
      %v2436 = vadd.f32 %v2298, %v2423
      %v2437 = vadd.f32 %v2299, %v2426
      %v2438 = vadd.f32 %v2300, %v2431
      %s2439 = scalar_lea.vmem %s3, 108
      %v2440 = vld [vmem:[%s2439] sm:$0xf]
      %v2441 = vld [vmem:[%s2439 + $0x4] sm:$0xf]
      %v2442 = vld [vmem:[%s2439 + $0x8] sm:$0x1]
      %v2446 = vunpack.c.l.b16 %v2440
      %v2447 = vunpack.c.l.b16 %v2441
      %v2448 = vunpack.c.l.b16 %v2442
      %v2449 = vpack.c.b16 %v2447, %v2446
      %v2450 = vpack.c.b16 %v2448, %v2448
      %2453 = vmatprep.subr.bf16.mxu0 0
      %2454 = vmatpush1.bf16.msra.mxu0 %v1196
      %2455 = vmatprep.subr.bf16.mxu0 0
      %2456 = vmatpush1.bf16.msra.mxu0 %v1197
      %2457 = vmatprep.subr.bf16.mxu0 0
      %2458 = vmatpush1.bf16.msra.mxu0 %v1198
      %2459 = vmatprep.subr.bf16.mxu0 0
      %2460 = vmatpush1.bf16.msra.mxu0 %v1199
      %2461 = vmatprep.subr.bf16.mxu0 0
      %2462 = vmatpush1.bf16.msra.mxu0 %v1200
      %2463 = vmatprep.subr.bf16.mxu0 0
      %2464 = vmatpush1.bf16.msra.mxu0 %v1201
      %2465 = vmatprep.subr.bf16.mxu0 0
      %2466 = vmatpush1.bf16.msra.mxu0 %v1202
      %2467 = vmatprep.subr.bf16.mxu0 0
      %2468 = vmatpush1.bf16.msra.mxu0 %v1203
      %2469 = vmatprep.subr.bf16.mxu0 0
      %2470 = vmatpush1.bf16.msra.mxu0 0
      %2471 = vmatprep.subr.bf16.mxu0 0
      %2472 = vmatpush1.bf16.msra.mxu0 0
      %2473 = vmatprep.subr.bf16.mxu0 0
      %2474 = vmatpush1.bf16.msra.mxu0 0
      %2475 = vmatprep.subr.bf16.mxu0 0
      %2476 = vmatpush1.bf16.msra.mxu0 0
      %2477 = vmatprep.subr.bf16.mxu0 0
      %2478 = vmatpush1.bf16.msra.mxu0 0
      %2479 = vmatprep.subr.bf16.mxu0 0
      %2480 = vmatpush1.bf16.msra.mxu0 0
      %2481 = vmatprep.subr.bf16.mxu0 0
      %2482 = vmatpush1.bf16.msra.mxu0 0
      %2483 = vmatprep.subr.bf16.mxu0 0
      %2484 = vmatpush1.bf16.msra.mxu0 0
      %2485 = vmatprep.mubr.bf16.mxu0 0
      %2486 = vmatmul.mubr.bf16.gmra.mrb[0].mxu0 %v2449
      %v2487 = vpop.f32.mrb[0].mxu0
      %v2488 = vadd.f32 0.0, %v2487
      %v2489 = vpop.f32.mrb[0].mxu0
      %v2490 = vpop.f32.mrb[0].mxu0
      %v2491 = vadd.f32 0.0, %v2490
      %v2492 = vpop.f32.mrb[0].mxu0
      %2493 = vmatprep.mubr.bf16.mxu0 0
      %2494 = vmatmul.mubr.bf16.gmra.mrb[0].mxu0 %v2450
      %v2495 = vpop.f32.mrb[0].mxu0
      %v2496 = vadd.f32 0.0, %v2495
      %v2497 = vpop.f32.mrb[0].mxu0
      %v2498 = vpop.f32.mrb[0].mxu0
      %v2499 = vpop.f32.mrb[0].mxu0
      %2500 = vdwg.mxu0
      %v2501 = vpack.c.bf16 %v2491, %v2488
      %v2502 = vpack.c.bf16 %v2496, %v2496
      %s2503 = scalar_lea.vmem %s4, 144
      %v2504 = vld [vmem:[%s2503] sm:$0xf]
      %v2505 = vld [vmem:[%s2503 + $0x4] sm:$0xf]
      %v2506 = vld [vmem:[%s2503 + $0x8] sm:$0xf]
      %v2507 = vld [vmem:[%s2503 + $0xc] sm:$0xf]
      %v2512 = vunpack.c.l.b16 %v2504
      %v2513 = vunpack.c.l.b16 %v2505
      %v2514 = vunpack.c.l.b16 %v2506
      %v2515 = vunpack.c.l.b16 %v2507
      %v2516 = vpack.c.b16 %v2513, %v2512
      %v2517 = vpack.c.b16 %v2515, %v2514
      %v2521 = vsel %vm1352, %v2501, 0
      %v2524 = vsel %vm1352, %v2502, 0
      %2526 = vmatprep.subr.bf16.mxu0 0
      %2527 = vmatpush1.bf16.msra.mxu0 %v2516
      %2528 = vmatprep.subr.bf16.mxu0 0
      %2529 = vmatpush1.bf16.msra.mxu0 %v2517
      %2530 = vmatprep.subr.bf16.mxu0 0
      %2531 = vmatpush1.bf16.msra.mxu0 0
      %2532 = vmatprep.subr.bf16.mxu0 0
      %2533 = vmatpush1.bf16.msra.mxu0 0
      %2534 = vmatprep.subr.bf16.mxu0 0
      %2535 = vmatpush1.bf16.msra.mxu0 0
      %2536 = vmatprep.subr.bf16.mxu0 0
      %2537 = vmatpush1.bf16.msra.mxu0 0
      %2538 = vmatprep.subr.bf16.mxu0 0
      %2539 = vmatpush1.bf16.msra.mxu0 0
      %2540 = vmatprep.subr.bf16.mxu0 0
      %2541 = vmatpush1.bf16.msra.mxu0 0
      %2542 = vmatprep.subr.bf16.mxu0 0
      %2543 = vmatpush1.bf16.msra.mxu0 0
      %2544 = vmatprep.subr.bf16.mxu0 0
      %2545 = vmatpush1.bf16.msra.mxu0 0
      %2546 = vmatprep.subr.bf16.mxu0 0
      %2547 = vmatpush1.bf16.msra.mxu0 0
      %2548 = vmatprep.subr.bf16.mxu0 0
      %2549 = vmatpush1.bf16.msra.mxu0 0
      %2550 = vmatprep.subr.bf16.mxu0 0
      %2551 = vmatpush1.bf16.msra.mxu0 0
      %2552 = vmatprep.subr.bf16.mxu0 0
      %2553 = vmatpush1.bf16.msra.mxu0 0
      %2554 = vmatprep.subr.bf16.mxu0 0
      %2555 = vmatpush1.bf16.msra.mxu0 0
      %2556 = vmatprep.subr.bf16.mxu0 0
      %2557 = vmatpush1.bf16.msra.mxu0 0
      %2558 = vmatprep.mubr.bf16.mxu0 0
      %2559 = vmatmul.mubr.bf16.gmra.mrb[0].mxu0 %v2521
      %v2560 = vpop.f32.mrb[0].mxu0
      %v2561 = vadd.f32 0.0, %v2560
      %v2562 = vpop.f32.mrb[0].mxu0
      %v2563 = vpop.f32.mrb[0].mxu0
      %v2564 = vadd.f32 0.0, %v2563
      %v2565 = vpop.f32.mrb[0].mxu0
      %2566 = vmatprep.mubr.bf16.mxu0 0
      %2567 = vmatmul.mubr.bf16.gmra.mrb[0].mxu0 %v2524
      %v2568 = vpop.f32.mrb[0].mxu0
      %v2569 = vadd.f32 0.0, %v2568
      %v2570 = vpop.f32.mrb[0].mxu0
      %v2571 = vpop.f32.mrb[0].mxu0
      %v2572 = vpop.f32.mrb[0].mxu0
      %2573 = vdwg.mxu0
      %v2574 = vadd.f32 %v2436, %v2561
      %v2575 = vadd.f32 %v2437, %v2564
      %v2576 = vadd.f32 %v2438, %v2569
      %s2577 = scalar_lea.vmem %s3, 120
      %v2578 = vld [vmem:[%s2577] sm:$0xf]
      %v2579 = vld [vmem:[%s2577 + $0x4] sm:$0xf]
      %v2580 = vld [vmem:[%s2577 + $0x8] sm:$0x1]
      %v2584 = vunpack.c.l.b16 %v2578
      %v2585 = vunpack.c.l.b16 %v2579
      %v2586 = vunpack.c.l.b16 %v2580
      %v2587 = vpack.c.b16 %v2585, %v2584
      %v2588 = vpack.c.b16 %v2586, %v2586
      %2591 = vmatprep.subr.bf16.mxu0 0
      %2592 = vmatpush1.bf16.msra.mxu0 %v1196
      %2593 = vmatprep.subr.bf16.mxu0 0
      %2594 = vmatpush1.bf16.msra.mxu0 %v1197
      %2595 = vmatprep.subr.bf16.mxu0 0
      %2596 = vmatpush1.bf16.msra.mxu0 %v1198
      %2597 = vmatprep.subr.bf16.mxu0 0
      %2598 = vmatpush1.bf16.msra.mxu0 %v1199
      %2599 = vmatprep.subr.bf16.mxu0 0
      %2600 = vmatpush1.bf16.msra.mxu0 %v1200
      %2601 = vmatprep.subr.bf16.mxu0 0
      %2602 = vmatpush1.bf16.msra.mxu0 %v1201
      %2603 = vmatprep.subr.bf16.mxu0 0
      %2604 = vmatpush1.bf16.msra.mxu0 %v1202
      %2605 = vmatprep.subr.bf16.mxu0 0
      %2606 = vmatpush1.bf16.msra.mxu0 %v1203
      %2607 = vmatprep.subr.bf16.mxu0 0
      %2608 = vmatpush1.bf16.msra.mxu0 0
      %2609 = vmatprep.subr.bf16.mxu0 0
      %2610 = vmatpush1.bf16.msra.mxu0 0
      %2611 = vmatprep.subr.bf16.mxu0 0
      %2612 = vmatpush1.bf16.msra.mxu0 0
      %2613 = vmatprep.subr.bf16.mxu0 0
      %2614 = vmatpush1.bf16.msra.mxu0 0
      %2615 = vmatprep.subr.bf16.mxu0 0
      %2616 = vmatpush1.bf16.msra.mxu0 0
      %2617 = vmatprep.subr.bf16.mxu0 0
      %2618 = vmatpush1.bf16.msra.mxu0 0
      %2619 = vmatprep.subr.bf16.mxu0 0
      %2620 = vmatpush1.bf16.msra.mxu0 0
      %2621 = vmatprep.subr.bf16.mxu0 0
      %2622 = vmatpush1.bf16.msra.mxu0 0
      %2623 = vmatprep.mubr.bf16.mxu0 0
      %2624 = vmatmul.mubr.bf16.gmra.mrb[0].mxu0 %v2587
      %v2625 = vpop.f32.mrb[0].mxu0
      %v2626 = vadd.f32 0.0, %v2625
      %v2627 = vpop.f32.mrb[0].mxu0
      %v2628 = vpop.f32.mrb[0].mxu0
      %v2629 = vadd.f32 0.0, %v2628
      %v2630 = vpop.f32.mrb[0].mxu0
      %2631 = vmatprep.mubr.bf16.mxu0 0
      %2632 = vmatmul.mubr.bf16.gmra.mrb[0].mxu0 %v2588
      %v2633 = vpop.f32.mrb[0].mxu0
      %v2634 = vadd.f32 0.0, %v2633
      %v2635 = vpop.f32.mrb[0].mxu0
      %v2636 = vpop.f32.mrb[0].mxu0
      %v2637 = vpop.f32.mrb[0].mxu0
      %2638 = vdwg.mxu0
      %v2639 = vpack.c.bf16 %v2629, %v2626
      %v2640 = vpack.c.bf16 %v2634, %v2634
      %s2641 = scalar_lea.vmem %s4, 160
      %v2642 = vld [vmem:[%s2641] sm:$0xf]
      %v2643 = vld [vmem:[%s2641 + $0x4] sm:$0xf]
      %v2644 = vld [vmem:[%s2641 + $0x8] sm:$0xf]
      %v2645 = vld [vmem:[%s2641 + $0xc] sm:$0xf]
      %v2650 = vunpack.c.l.b16 %v2642
      %v2651 = vunpack.c.l.b16 %v2643
      %v2652 = vunpack.c.l.b16 %v2644
      %v2653 = vunpack.c.l.b16 %v2645
      %v2654 = vpack.c.b16 %v2651, %v2650
      %v2655 = vpack.c.b16 %v2653, %v2652
      %v2659 = vsel %vm1352, %v2639, 0
      %v2662 = vsel %vm1352, %v2640, 0
      %2664 = vmatprep.subr.bf16.mxu0 0
      %2665 = vmatpush1.bf16.msra.mxu0 %v2654
      %2666 = vmatprep.subr.bf16.mxu0 0
      %2667 = vmatpush1.bf16.msra.mxu0 %v2655
      %2668 = vmatprep.subr.bf16.mxu0 0
      %2669 = vmatpush1.bf16.msra.mxu0 0
      %2670 = vmatprep.subr.bf16.mxu0 0
      %2671 = vmatpush1.bf16.msra.mxu0 0
      %2672 = vmatprep.subr.bf16.mxu0 0
      %2673 = vmatpush1.bf16.msra.mxu0 0
      %2674 = vmatprep.subr.bf16.mxu0 0
      %2675 = vmatpush1.bf16.msra.mxu0 0
      %2676 = vmatprep.subr.bf16.mxu0 0
      %2677 = vmatpush1.bf16.msra.mxu0 0
      %2678 = vmatprep.subr.bf16.mxu0 0
      %2679 = vmatpush1.bf16.msra.mxu0 0
      %2680 = vmatprep.subr.bf16.mxu0 0
      %2681 = vmatpush1.bf16.msra.mxu0 0
      %2682 = vmatprep.subr.bf16.mxu0 0
      %2683 = vmatpush1.bf16.msra.mxu0 0
      %2684 = vmatprep.subr.bf16.mxu0 0
      %2685 = vmatpush1.bf16.msra.mxu0 0
      %2686 = vmatprep.subr.bf16.mxu0 0
      %2687 = vmatpush1.bf16.msra.mxu0 0
      %2688 = vmatprep.subr.bf16.mxu0 0
      %2689 = vmatpush1.bf16.msra.mxu0 0
      %2690 = vmatprep.subr.bf16.mxu0 0
      %2691 = vmatpush1.bf16.msra.mxu0 0
      %2692 = vmatprep.subr.bf16.mxu0 0
      %2693 = vmatpush1.bf16.msra.mxu0 0
      %2694 = vmatprep.subr.bf16.mxu0 0
      %2695 = vmatpush1.bf16.msra.mxu0 0
      %2696 = vmatprep.mubr.bf16.mxu0 0
      %2697 = vmatmul.mubr.bf16.gmra.mrb[0].mxu0 %v2659
      %v2698 = vpop.f32.mrb[0].mxu0
      %v2699 = vadd.f32 0.0, %v2698
      %v2700 = vpop.f32.mrb[0].mxu0
      %v2701 = vpop.f32.mrb[0].mxu0
      %v2702 = vadd.f32 0.0, %v2701
      %v2703 = vpop.f32.mrb[0].mxu0
      %2704 = vmatprep.mubr.bf16.mxu0 0
      %2705 = vmatmul.mubr.bf16.gmra.mrb[0].mxu0 %v2662
      %v2706 = vpop.f32.mrb[0].mxu0
      %v2707 = vadd.f32 0.0, %v2706
      %v2708 = vpop.f32.mrb[0].mxu0
      %v2709 = vpop.f32.mrb[0].mxu0
      %v2710 = vpop.f32.mrb[0].mxu0
      %2711 = vdwg.mxu0
      %v2712 = vadd.f32 %v2574, %v2699
      %v2713 = vadd.f32 %v2575, %v2702
      %v2714 = vadd.f32 %v2576, %v2707
      %s2715 = scalar_lea.vmem %s3, 132
      %v2716 = vld [vmem:[%s2715] sm:$0xf]
      %v2717 = vld [vmem:[%s2715 + $0x4] sm:$0xf]
      %v2718 = vld [vmem:[%s2715 + $0x8] sm:$0x1]
      %v2722 = vunpack.c.l.b16 %v2716
      %v2723 = vunpack.c.l.b16 %v2717
      %v2724 = vunpack.c.l.b16 %v2718
      %v2725 = vpack.c.b16 %v2723, %v2722
      %v2726 = vpack.c.b16 %v2724, %v2724
      %2729 = vmatprep.subr.bf16.mxu0 0
      %2730 = vmatpush1.bf16.msra.mxu0 %v1196
      %2731 = vmatprep.subr.bf16.mxu0 0
      %2732 = vmatpush1.bf16.msra.mxu0 %v1197
      %2733 = vmatprep.subr.bf16.mxu0 0
      %2734 = vmatpush1.bf16.msra.mxu0 %v1198
      %2735 = vmatprep.subr.bf16.mxu0 0
      %2736 = vmatpush1.bf16.msra.mxu0 %v1199
      %2737 = vmatprep.subr.bf16.mxu0 0
      %2738 = vmatpush1.bf16.msra.mxu0 %v1200
      %2739 = vmatprep.subr.bf16.mxu0 0
      %2740 = vmatpush1.bf16.msra.mxu0 %v1201
      %2741 = vmatprep.subr.bf16.mxu0 0
      %2742 = vmatpush1.bf16.msra.mxu0 %v1202
      %2743 = vmatprep.subr.bf16.mxu0 0
      %2744 = vmatpush1.bf16.msra.mxu0 %v1203
      %2745 = vmatprep.subr.bf16.mxu0 0
      %2746 = vmatpush1.bf16.msra.mxu0 0
      %2747 = vmatprep.subr.bf16.mxu0 0
      %2748 = vmatpush1.bf16.msra.mxu0 0
      %2749 = vmatprep.subr.bf16.mxu0 0
      %2750 = vmatpush1.bf16.msra.mxu0 0
      %2751 = vmatprep.subr.bf16.mxu0 0
      %2752 = vmatpush1.bf16.msra.mxu0 0
      %2753 = vmatprep.subr.bf16.mxu0 0
      %2754 = vmatpush1.bf16.msra.mxu0 0
      %2755 = vmatprep.subr.bf16.mxu0 0
      %2756 = vmatpush1.bf16.msra.mxu0 0
      %2757 = vmatprep.subr.bf16.mxu0 0
      %2758 = vmatpush1.bf16.msra.mxu0 0
      %2759 = vmatprep.subr.bf16.mxu0 0
      %2760 = vmatpush1.bf16.msra.mxu0 0
      %2761 = vmatprep.mubr.bf16.mxu0 0
      %2762 = vmatmul.mubr.bf16.gmra.mrb[0].mxu0 %v2725
      %v2763 = vpop.f32.mrb[0].mxu0
      %v2764 = vadd.f32 0.0, %v2763
      %v2765 = vpop.f32.mrb[0].mxu0
      %v2766 = vpop.f32.mrb[0].mxu0
      %v2767 = vadd.f32 0.0, %v2766
      %v2768 = vpop.f32.mrb[0].mxu0
      %2769 = vmatprep.mubr.bf16.mxu0 0
      %2770 = vmatmul.mubr.bf16.gmra.mrb[0].mxu0 %v2726
      %v2771 = vpop.f32.mrb[0].mxu0
      %v2772 = vadd.f32 0.0, %v2771
      %v2773 = vpop.f32.mrb[0].mxu0
      %v2774 = vpop.f32.mrb[0].mxu0
      %v2775 = vpop.f32.mrb[0].mxu0
      %2776 = vdwg.mxu0
      %v2777 = vpack.c.bf16 %v2767, %v2764
      %v2778 = vpack.c.bf16 %v2772, %v2772
      %s2779 = scalar_lea.vmem %s4, 176
      %v2780 = vld [vmem:[%s2779] sm:$0xf]
      %v2781 = vld [vmem:[%s2779 + $0x4] sm:$0xf]
      %v2782 = vld [vmem:[%s2779 + $0x8] sm:$0xf]
      %v2783 = vld [vmem:[%s2779 + $0xc] sm:$0xf]
      %v2788 = vunpack.c.l.b16 %v2780
      %v2789 = vunpack.c.l.b16 %v2781
      %v2790 = vunpack.c.l.b16 %v2782
      %v2791 = vunpack.c.l.b16 %v2783
      %v2792 = vpack.c.b16 %v2789, %v2788
      %v2793 = vpack.c.b16 %v2791, %v2790
      %v2797 = vsel %vm1352, %v2777, 0
      %v2800 = vsel %vm1352, %v2778, 0
      %2802 = vmatprep.subr.bf16.mxu0 0
      %2803 = vmatpush1.bf16.msra.mxu0 %v2792
      %2804 = vmatprep.subr.bf16.mxu0 0
      %2805 = vmatpush1.bf16.msra.mxu0 %v2793
      %2806 = vmatprep.subr.bf16.mxu0 0
      %2807 = vmatpush1.bf16.msra.mxu0 0
      %2808 = vmatprep.subr.bf16.mxu0 0
      %2809 = vmatpush1.bf16.msra.mxu0 0
      %2810 = vmatprep.subr.bf16.mxu0 0
      %2811 = vmatpush1.bf16.msra.mxu0 0
      %2812 = vmatprep.subr.bf16.mxu0 0
      %2813 = vmatpush1.bf16.msra.mxu0 0
      %2814 = vmatprep.subr.bf16.mxu0 0
      %2815 = vmatpush1.bf16.msra.mxu0 0
      %2816 = vmatprep.subr.bf16.mxu0 0
      %2817 = vmatpush1.bf16.msra.mxu0 0
      %2818 = vmatprep.subr.bf16.mxu0 0
      %2819 = vmatpush1.bf16.msra.mxu0 0
      %2820 = vmatprep.subr.bf16.mxu0 0
      %2821 = vmatpush1.bf16.msra.mxu0 0
      %2822 = vmatprep.subr.bf16.mxu0 0
      %2823 = vmatpush1.bf16.msra.mxu0 0
      %2824 = vmatprep.subr.bf16.mxu0 0
      %2825 = vmatpush1.bf16.msra.mxu0 0
      %2826 = vmatprep.subr.bf16.mxu0 0
      %2827 = vmatpush1.bf16.msra.mxu0 0
      %2828 = vmatprep.subr.bf16.mxu0 0
      %2829 = vmatpush1.bf16.msra.mxu0 0
      %2830 = vmatprep.subr.bf16.mxu0 0
      %2831 = vmatpush1.bf16.msra.mxu0 0
      %2832 = vmatprep.subr.bf16.mxu0 0
      %2833 = vmatpush1.bf16.msra.mxu0 0
      %2834 = vmatprep.mubr.bf16.mxu0 0
      %2835 = vmatmul.mubr.bf16.gmra.mrb[0].mxu0 %v2797
      %v2836 = vpop.f32.mrb[0].mxu0
      %v2837 = vadd.f32 0.0, %v2836
      %v2838 = vpop.f32.mrb[0].mxu0
      %v2839 = vpop.f32.mrb[0].mxu0
      %v2840 = vadd.f32 0.0, %v2839
      %v2841 = vpop.f32.mrb[0].mxu0
      %2842 = vmatprep.mubr.bf16.mxu0 0
      %2843 = vmatmul.mubr.bf16.gmra.mrb[0].mxu0 %v2800
      %v2844 = vpop.f32.mrb[0].mxu0
      %v2845 = vadd.f32 0.0, %v2844
      %v2846 = vpop.f32.mrb[0].mxu0
      %v2847 = vpop.f32.mrb[0].mxu0
      %v2848 = vpop.f32.mrb[0].mxu0
      %2849 = vdwg.mxu0
      %v2850 = vadd.f32 %v2712, %v2837
      %v2851 = vadd.f32 %v2713, %v2840
      %v2852 = vadd.f32 %v2714, %v2845
      %s2853 = scalar_lea.vmem %s3, 144
      %v2854 = vld [vmem:[%s2853] sm:$0xf]
      %v2855 = vld [vmem:[%s2853 + $0x4] sm:$0xf]
      %v2856 = vld [vmem:[%s2853 + $0x8] sm:$0x1]
      %v2860 = vunpack.c.l.b16 %v2854
      %v2861 = vunpack.c.l.b16 %v2855
      %v2862 = vunpack.c.l.b16 %v2856
      %v2863 = vpack.c.b16 %v2861, %v2860
      %v2864 = vpack.c.b16 %v2862, %v2862
      %2867 = vmatprep.subr.bf16.mxu0 0
      %2868 = vmatpush1.bf16.msra.mxu0 %v1196
      %2869 = vmatprep.subr.bf16.mxu0 0
      %2870 = vmatpush1.bf16.msra.mxu0 %v1197
      %2871 = vmatprep.subr.bf16.mxu0 0
      %2872 = vmatpush1.bf16.msra.mxu0 %v1198
      %2873 = vmatprep.subr.bf16.mxu0 0
      %2874 = vmatpush1.bf16.msra.mxu0 %v1199
      %2875 = vmatprep.subr.bf16.mxu0 0
      %2876 = vmatpush1.bf16.msra.mxu0 %v1200
      %2877 = vmatprep.subr.bf16.mxu0 0
      %2878 = vmatpush1.bf16.msra.mxu0 %v1201
      %2879 = vmatprep.subr.bf16.mxu0 0
      %2880 = vmatpush1.bf16.msra.mxu0 %v1202
      %2881 = vmatprep.subr.bf16.mxu0 0
      %2882 = vmatpush1.bf16.msra.mxu0 %v1203
      %2883 = vmatprep.subr.bf16.mxu0 0
      %2884 = vmatpush1.bf16.msra.mxu0 0
      %2885 = vmatprep.subr.bf16.mxu0 0
      %2886 = vmatpush1.bf16.msra.mxu0 0
      %2887 = vmatprep.subr.bf16.mxu0 0
      %2888 = vmatpush1.bf16.msra.mxu0 0
      %2889 = vmatprep.subr.bf16.mxu0 0
      %2890 = vmatpush1.bf16.msra.mxu0 0
      %2891 = vmatprep.subr.bf16.mxu0 0
      %2892 = vmatpush1.bf16.msra.mxu0 0
      %2893 = vmatprep.subr.bf16.mxu0 0
      %2894 = vmatpush1.bf16.msra.mxu0 0
      %2895 = vmatprep.subr.bf16.mxu0 0
      %2896 = vmatpush1.bf16.msra.mxu0 0
      %2897 = vmatprep.subr.bf16.mxu0 0
      %2898 = vmatpush1.bf16.msra.mxu0 0
      %2899 = vmatprep.mubr.bf16.mxu0 0
      %2900 = vmatmul.mubr.bf16.gmra.mrb[0].mxu0 %v2863
      %v2901 = vpop.f32.mrb[0].mxu0
      %v2902 = vadd.f32 0.0, %v2901
      %v2903 = vpop.f32.mrb[0].mxu0
      %v2904 = vpop.f32.mrb[0].mxu0
      %v2905 = vadd.f32 0.0, %v2904
      %v2906 = vpop.f32.mrb[0].mxu0
      %2907 = vmatprep.mubr.bf16.mxu0 0
      %2908 = vmatmul.mubr.bf16.gmra.mrb[0].mxu0 %v2864
      %v2909 = vpop.f32.mrb[0].mxu0
      %v2910 = vadd.f32 0.0, %v2909
      %v2911 = vpop.f32.mrb[0].mxu0
      %v2912 = vpop.f32.mrb[0].mxu0
      %v2913 = vpop.f32.mrb[0].mxu0
      %2914 = vdwg.mxu0
      %v2915 = vpack.c.bf16 %v2905, %v2902
      %v2916 = vpack.c.bf16 %v2910, %v2910
      %s2917 = scalar_lea.vmem %s4, 192
      %v2918 = vld [vmem:[%s2917] sm:$0xf]
      %v2919 = vld [vmem:[%s2917 + $0x4] sm:$0xf]
      %v2920 = vld [vmem:[%s2917 + $0x8] sm:$0xf]
      %v2921 = vld [vmem:[%s2917 + $0xc] sm:$0xf]
      %v2926 = vunpack.c.l.b16 %v2918
      %v2927 = vunpack.c.l.b16 %v2919
      %v2928 = vunpack.c.l.b16 %v2920
      %v2929 = vunpack.c.l.b16 %v2921
      %v2930 = vpack.c.b16 %v2927, %v2926
      %v2931 = vpack.c.b16 %v2929, %v2928
      %v2935 = vsel %vm1352, %v2915, 0
      %v2938 = vsel %vm1352, %v2916, 0
      %2940 = vmatprep.subr.bf16.mxu0 0
      %2941 = vmatpush1.bf16.msra.mxu0 %v2930
      %2942 = vmatprep.subr.bf16.mxu0 0
      %2943 = vmatpush1.bf16.msra.mxu0 %v2931
      %2944 = vmatprep.subr.bf16.mxu0 0
      %2945 = vmatpush1.bf16.msra.mxu0 0
      %2946 = vmatprep.subr.bf16.mxu0 0
      %2947 = vmatpush1.bf16.msra.mxu0 0
      %2948 = vmatprep.subr.bf16.mxu0 0
      %2949 = vmatpush1.bf16.msra.mxu0 0
      %2950 = vmatprep.subr.bf16.mxu0 0
      %2951 = vmatpush1.bf16.msra.mxu0 0
      %2952 = vmatprep.subr.bf16.mxu0 0
      %2953 = vmatpush1.bf16.msra.mxu0 0
      %2954 = vmatprep.subr.bf16.mxu0 0
      %2955 = vmatpush1.bf16.msra.mxu0 0
      %2956 = vmatprep.subr.bf16.mxu0 0
      %2957 = vmatpush1.bf16.msra.mxu0 0
      %2958 = vmatprep.subr.bf16.mxu0 0
      %2959 = vmatpush1.bf16.msra.mxu0 0
      %2960 = vmatprep.subr.bf16.mxu0 0
      %2961 = vmatpush1.bf16.msra.mxu0 0
      %2962 = vmatprep.subr.bf16.mxu0 0
      %2963 = vmatpush1.bf16.msra.mxu0 0
      %2964 = vmatprep.subr.bf16.mxu0 0
      %2965 = vmatpush1.bf16.msra.mxu0 0
      %2966 = vmatprep.subr.bf16.mxu0 0
      %2967 = vmatpush1.bf16.msra.mxu0 0
      %2968 = vmatprep.subr.bf16.mxu0 0
      %2969 = vmatpush1.bf16.msra.mxu0 0
      %2970 = vmatprep.subr.bf16.mxu0 0
      %2971 = vmatpush1.bf16.msra.mxu0 0
      %2972 = vmatprep.mubr.bf16.mxu0 0
      %2973 = vmatmul.mubr.bf16.gmra.mrb[0].mxu0 %v2935
      %v2974 = vpop.f32.mrb[0].mxu0
      %v2975 = vadd.f32 0.0, %v2974
      %v2976 = vpop.f32.mrb[0].mxu0
      %v2977 = vpop.f32.mrb[0].mxu0
      %v2978 = vadd.f32 0.0, %v2977
      %v2979 = vpop.f32.mrb[0].mxu0
      %2980 = vmatprep.mubr.bf16.mxu0 0
      %2981 = vmatmul.mubr.bf16.gmra.mrb[0].mxu0 %v2938
      %v2982 = vpop.f32.mrb[0].mxu0
      %v2983 = vadd.f32 0.0, %v2982
      %v2984 = vpop.f32.mrb[0].mxu0
      %v2985 = vpop.f32.mrb[0].mxu0
      %v2986 = vpop.f32.mrb[0].mxu0
      %2987 = vdwg.mxu0
      %v2988 = vadd.f32 %v2850, %v2975
      %v2989 = vadd.f32 %v2851, %v2978
      %v2990 = vadd.f32 %v2852, %v2983
      %s2991 = scalar_lea.vmem %s3, 156
      %v2992 = vld [vmem:[%s2991] sm:$0xf]
      %v2993 = vld [vmem:[%s2991 + $0x4] sm:$0xf]
      %v2994 = vld [vmem:[%s2991 + $0x8] sm:$0x1]
      %v2998 = vunpack.c.l.b16 %v2992
      %v2999 = vunpack.c.l.b16 %v2993
      %v3000 = vunpack.c.l.b16 %v2994
      %v3001 = vpack.c.b16 %v2999, %v2998
      %v3002 = vpack.c.b16 %v3000, %v3000
      %3005 = vmatprep.subr.bf16.mxu0 0
      %3006 = vmatpush1.bf16.msra.mxu0 %v1196
      %3007 = vmatprep.subr.bf16.mxu0 0
      %3008 = vmatpush1.bf16.msra.mxu0 %v1197
      %3009 = vmatprep.subr.bf16.mxu0 0
      %3010 = vmatpush1.bf16.msra.mxu0 %v1198
      %3011 = vmatprep.subr.bf16.mxu0 0
      %3012 = vmatpush1.bf16.msra.mxu0 %v1199
      %3013 = vmatprep.subr.bf16.mxu0 0
      %3014 = vmatpush1.bf16.msra.mxu0 %v1200
      %3015 = vmatprep.subr.bf16.mxu0 0
      %3016 = vmatpush1.bf16.msra.mxu0 %v1201
      %3017 = vmatprep.subr.bf16.mxu0 0
      %3018 = vmatpush1.bf16.msra.mxu0 %v1202
      %3019 = vmatprep.subr.bf16.mxu0 0
      %3020 = vmatpush1.bf16.msra.mxu0 %v1203
      %3021 = vmatprep.subr.bf16.mxu0 0
      %3022 = vmatpush1.bf16.msra.mxu0 0
      %3023 = vmatprep.subr.bf16.mxu0 0
      %3024 = vmatpush1.bf16.msra.mxu0 0
      %3025 = vmatprep.subr.bf16.mxu0 0
      %3026 = vmatpush1.bf16.msra.mxu0 0
      %3027 = vmatprep.subr.bf16.mxu0 0
      %3028 = vmatpush1.bf16.msra.mxu0 0
      %3029 = vmatprep.subr.bf16.mxu0 0
      %3030 = vmatpush1.bf16.msra.mxu0 0
      %3031 = vmatprep.subr.bf16.mxu0 0
      %3032 = vmatpush1.bf16.msra.mxu0 0
      %3033 = vmatprep.subr.bf16.mxu0 0
      %3034 = vmatpush1.bf16.msra.mxu0 0
      %3035 = vmatprep.subr.bf16.mxu0 0
      %3036 = vmatpush1.bf16.msra.mxu0 0
      %3037 = vmatprep.mubr.bf16.mxu0 0
      %3038 = vmatmul.mubr.bf16.gmra.mrb[0].mxu0 %v3001
      %v3039 = vpop.f32.mrb[0].mxu0
      %v3040 = vadd.f32 0.0, %v3039
      %v3041 = vpop.f32.mrb[0].mxu0
      %v3042 = vpop.f32.mrb[0].mxu0
      %v3043 = vadd.f32 0.0, %v3042
      %v3044 = vpop.f32.mrb[0].mxu0
      %3045 = vmatprep.mubr.bf16.mxu0 0
      %3046 = vmatmul.mubr.bf16.gmra.mrb[0].mxu0 %v3002
      %v3047 = vpop.f32.mrb[0].mxu0
      %v3048 = vadd.f32 0.0, %v3047
      %v3049 = vpop.f32.mrb[0].mxu0
      %v3050 = vpop.f32.mrb[0].mxu0
      %v3051 = vpop.f32.mrb[0].mxu0
      %3052 = vdwg.mxu0
      %v3053 = vpack.c.bf16 %v3043, %v3040
      %v3054 = vpack.c.bf16 %v3048, %v3048
      %s3055 = scalar_lea.vmem %s4, 208
      %v3056 = vld [vmem:[%s3055] sm:$0xf]
      %v3057 = vld [vmem:[%s3055 + $0x4] sm:$0xf]
      %v3058 = vld [vmem:[%s3055 + $0x8] sm:$0xf]
      %v3059 = vld [vmem:[%s3055 + $0xc] sm:$0xf]
      %v3064 = vunpack.c.l.b16 %v3056
      %v3065 = vunpack.c.l.b16 %v3057
      %v3066 = vunpack.c.l.b16 %v3058
      %v3067 = vunpack.c.l.b16 %v3059
      %v3068 = vpack.c.b16 %v3065, %v3064
      %v3069 = vpack.c.b16 %v3067, %v3066
      %v3073 = vsel %vm1352, %v3053, 0
      %v3076 = vsel %vm1352, %v3054, 0
      %3078 = vmatprep.subr.bf16.mxu0 0
      %3079 = vmatpush1.bf16.msra.mxu0 %v3068
      %3080 = vmatprep.subr.bf16.mxu0 0
      %3081 = vmatpush1.bf16.msra.mxu0 %v3069
      %3082 = vmatprep.subr.bf16.mxu0 0
      %3083 = vmatpush1.bf16.msra.mxu0 0
      %3084 = vmatprep.subr.bf16.mxu0 0
      %3085 = vmatpush1.bf16.msra.mxu0 0
      %3086 = vmatprep.subr.bf16.mxu0 0
      %3087 = vmatpush1.bf16.msra.mxu0 0
      %3088 = vmatprep.subr.bf16.mxu0 0
      %3089 = vmatpush1.bf16.msra.mxu0 0
      %3090 = vmatprep.subr.bf16.mxu0 0
      %3091 = vmatpush1.bf16.msra.mxu0 0
      %3092 = vmatprep.subr.bf16.mxu0 0
      %3093 = vmatpush1.bf16.msra.mxu0 0
      %3094 = vmatprep.subr.bf16.mxu0 0
      %3095 = vmatpush1.bf16.msra.mxu0 0
      %3096 = vmatprep.subr.bf16.mxu0 0
      %3097 = vmatpush1.bf16.msra.mxu0 0
      %3098 = vmatprep.subr.bf16.mxu0 0
      %3099 = vmatpush1.bf16.msra.mxu0 0
      %3100 = vmatprep.subr.bf16.mxu0 0
      %3101 = vmatpush1.bf16.msra.mxu0 0
      %3102 = vmatprep.subr.bf16.mxu0 0
      %3103 = vmatpush1.bf16.msra.mxu0 0
      %3104 = vmatprep.subr.bf16.mxu0 0
      %3105 = vmatpush1.bf16.msra.mxu0 0
      %3106 = vmatprep.subr.bf16.mxu0 0
      %3107 = vmatpush1.bf16.msra.mxu0 0
      %3108 = vmatprep.subr.bf16.mxu0 0
      %3109 = vmatpush1.bf16.msra.mxu0 0
      %3110 = vmatprep.mubr.bf16.mxu0 0
      %3111 = vmatmul.mubr.bf16.gmra.mrb[0].mxu0 %v3073
      %v3112 = vpop.f32.mrb[0].mxu0
      %v3113 = vadd.f32 0.0, %v3112
      %v3114 = vpop.f32.mrb[0].mxu0
      %v3115 = vpop.f32.mrb[0].mxu0
      %v3116 = vadd.f32 0.0, %v3115
      %v3117 = vpop.f32.mrb[0].mxu0
      %3118 = vmatprep.mubr.bf16.mxu0 0
      %3119 = vmatmul.mubr.bf16.gmra.mrb[0].mxu0 %v3076
      %v3120 = vpop.f32.mrb[0].mxu0
      %v3121 = vadd.f32 0.0, %v3120
      %v3122 = vpop.f32.mrb[0].mxu0
      %v3123 = vpop.f32.mrb[0].mxu0
      %v3124 = vpop.f32.mrb[0].mxu0
      %3125 = vdwg.mxu0
      %v3126 = vadd.f32 %v2988, %v3113
      %v3127 = vadd.f32 %v2989, %v3116
      %v3128 = vadd.f32 %v2990, %v3121
      %s3129 = scalar_lea.vmem %s3, 168
      %v3130 = vld [vmem:[%s3129] sm:$0xf]
      %v3131 = vld [vmem:[%s3129 + $0x4] sm:$0xf]
      %v3132 = vld [vmem:[%s3129 + $0x8] sm:$0x1]
      %v3136 = vunpack.c.l.b16 %v3130
      %v3137 = vunpack.c.l.b16 %v3131
      %v3138 = vunpack.c.l.b16 %v3132
      %v3139 = vpack.c.b16 %v3137, %v3136
      %v3140 = vpack.c.b16 %v3138, %v3138
      %3143 = vmatprep.subr.bf16.mxu0 0
      %3144 = vmatpush1.bf16.msra.mxu0 %v1196
      %3145 = vmatprep.subr.bf16.mxu0 0
      %3146 = vmatpush1.bf16.msra.mxu0 %v1197
      %3147 = vmatprep.subr.bf16.mxu0 0
      %3148 = vmatpush1.bf16.msra.mxu0 %v1198
      %3149 = vmatprep.subr.bf16.mxu0 0
      %3150 = vmatpush1.bf16.msra.mxu0 %v1199
      %3151 = vmatprep.subr.bf16.mxu0 0
      %3152 = vmatpush1.bf16.msra.mxu0 %v1200
      %3153 = vmatprep.subr.bf16.mxu0 0
      %3154 = vmatpush1.bf16.msra.mxu0 %v1201
      %3155 = vmatprep.subr.bf16.mxu0 0
      %3156 = vmatpush1.bf16.msra.mxu0 %v1202
      %3157 = vmatprep.subr.bf16.mxu0 0
      %3158 = vmatpush1.bf16.msra.mxu0 %v1203
      %3159 = vmatprep.subr.bf16.mxu0 0
      %3160 = vmatpush1.bf16.msra.mxu0 0
      %3161 = vmatprep.subr.bf16.mxu0 0
      %3162 = vmatpush1.bf16.msra.mxu0 0
      %3163 = vmatprep.subr.bf16.mxu0 0
      %3164 = vmatpush1.bf16.msra.mxu0 0
      %3165 = vmatprep.subr.bf16.mxu0 0
      %3166 = vmatpush1.bf16.msra.mxu0 0
      %3167 = vmatprep.subr.bf16.mxu0 0
      %3168 = vmatpush1.bf16.msra.mxu0 0
      %3169 = vmatprep.subr.bf16.mxu0 0
      %3170 = vmatpush1.bf16.msra.mxu0 0
      %3171 = vmatprep.subr.bf16.mxu0 0
      %3172 = vmatpush1.bf16.msra.mxu0 0
      %3173 = vmatprep.subr.bf16.mxu0 0
      %3174 = vmatpush1.bf16.msra.mxu0 0
      %3175 = vmatprep.mubr.bf16.mxu0 0
      %3176 = vmatmul.mubr.bf16.gmra.mrb[0].mxu0 %v3139
      %v3177 = vpop.f32.mrb[0].mxu0
      %v3178 = vadd.f32 0.0, %v3177
      %v3179 = vpop.f32.mrb[0].mxu0
      %v3180 = vpop.f32.mrb[0].mxu0
      %v3181 = vadd.f32 0.0, %v3180
      %v3182 = vpop.f32.mrb[0].mxu0
      %3183 = vmatprep.mubr.bf16.mxu0 0
      %3184 = vmatmul.mubr.bf16.gmra.mrb[0].mxu0 %v3140
      %v3185 = vpop.f32.mrb[0].mxu0
      %v3186 = vadd.f32 0.0, %v3185
      %v3187 = vpop.f32.mrb[0].mxu0
      %v3188 = vpop.f32.mrb[0].mxu0
      %v3189 = vpop.f32.mrb[0].mxu0
      %3190 = vdwg.mxu0
      %v3191 = vpack.c.bf16 %v3181, %v3178
      %v3192 = vpack.c.bf16 %v3186, %v3186
      %s3193 = scalar_lea.vmem %s4, 224
      %v3194 = vld [vmem:[%s3193] sm:$0xf]
      %v3195 = vld [vmem:[%s3193 + $0x4] sm:$0xf]
      %v3196 = vld [vmem:[%s3193 + $0x8] sm:$0xf]
      %v3197 = vld [vmem:[%s3193 + $0xc] sm:$0xf]
      %v3202 = vunpack.c.l.b16 %v3194
      %v3203 = vunpack.c.l.b16 %v3195
      %v3204 = vunpack.c.l.b16 %v3196
      %v3205 = vunpack.c.l.b16 %v3197
      %v3206 = vpack.c.b16 %v3203, %v3202
      %v3207 = vpack.c.b16 %v3205, %v3204
      %v3211 = vsel %vm1352, %v3191, 0
      %v3214 = vsel %vm1352, %v3192, 0
      %3216 = vmatprep.subr.bf16.mxu0 0
      %3217 = vmatpush1.bf16.msra.mxu0 %v3206
      %3218 = vmatprep.subr.bf16.mxu0 0
      %3219 = vmatpush1.bf16.msra.mxu0 %v3207
      %3220 = vmatprep.subr.bf16.mxu0 0
      %3221 = vmatpush1.bf16.msra.mxu0 0
      %3222 = vmatprep.subr.bf16.mxu0 0
      %3223 = vmatpush1.bf16.msra.mxu0 0
      %3224 = vmatprep.subr.bf16.mxu0 0
      %3225 = vmatpush1.bf16.msra.mxu0 0
      %3226 = vmatprep.subr.bf16.mxu0 0
      %3227 = vmatpush1.bf16.msra.mxu0 0
      %3228 = vmatprep.subr.bf16.mxu0 0
      %3229 = vmatpush1.bf16.msra.mxu0 0
      %3230 = vmatprep.subr.bf16.mxu0 0
      %3231 = vmatpush1.bf16.msra.mxu0 0
      %3232 = vmatprep.subr.bf16.mxu0 0
      %3233 = vmatpush1.bf16.msra.mxu0 0
      %3234 = vmatprep.subr.bf16.mxu0 0
      %3235 = vmatpush1.bf16.msra.mxu0 0
      %3236 = vmatprep.subr.bf16.mxu0 0
      %3237 = vmatpush1.bf16.msra.mxu0 0
      %3238 = vmatprep.subr.bf16.mxu0 0
      %3239 = vmatpush1.bf16.msra.mxu0 0
      %3240 = vmatprep.subr.bf16.mxu0 0
      %3241 = vmatpush1.bf16.msra.mxu0 0
      %3242 = vmatprep.subr.bf16.mxu0 0
      %3243 = vmatpush1.bf16.msra.mxu0 0
      %3244 = vmatprep.subr.bf16.mxu0 0
      %3245 = vmatpush1.bf16.msra.mxu0 0
      %3246 = vmatprep.subr.bf16.mxu0 0
      %3247 = vmatpush1.bf16.msra.mxu0 0
      %3248 = vmatprep.mubr.bf16.mxu0 0
      %3249 = vmatmul.mubr.bf16.gmra.mrb[0].mxu0 %v3211
      %v3250 = vpop.f32.mrb[0].mxu0
      %v3251 = vadd.f32 0.0, %v3250
      %v3252 = vpop.f32.mrb[0].mxu0
      %v3253 = vpop.f32.mrb[0].mxu0
      %v3254 = vadd.f32 0.0, %v3253
      %v3255 = vpop.f32.mrb[0].mxu0
      %3256 = vmatprep.mubr.bf16.mxu0 0
      %3257 = vmatmul.mubr.bf16.gmra.mrb[0].mxu0 %v3214
      %v3258 = vpop.f32.mrb[0].mxu0
      %v3259 = vadd.f32 0.0, %v3258
      %v3260 = vpop.f32.mrb[0].mxu0
      %v3261 = vpop.f32.mrb[0].mxu0
      %v3262 = vpop.f32.mrb[0].mxu0
      %3263 = vdwg.mxu0
      %v3264 = vadd.f32 %v3126, %v3251
      %v3265 = vadd.f32 %v3127, %v3254
      %v3266 = vadd.f32 %v3128, %v3259
      %s3267 = scalar_lea.vmem %s3, 180
      %v3268 = vld [vmem:[%s3267] sm:$0xf]
      %v3269 = vld [vmem:[%s3267 + $0x4] sm:$0xf]
      %v3270 = vld [vmem:[%s3267 + $0x8] sm:$0x1]
      %v3274 = vunpack.c.l.b16 %v3268
      %v3275 = vunpack.c.l.b16 %v3269
      %v3276 = vunpack.c.l.b16 %v3270
      %v3277 = vpack.c.b16 %v3275, %v3274
      %v3278 = vpack.c.b16 %v3276, %v3276
      %3281 = vmatprep.subr.bf16.mxu0 0
      %3282 = vmatpush1.bf16.msra.mxu0 %v1196
      %3283 = vmatprep.subr.bf16.mxu0 0
      %3284 = vmatpush1.bf16.msra.mxu0 %v1197
      %3285 = vmatprep.subr.bf16.mxu0 0
      %3286 = vmatpush1.bf16.msra.mxu0 %v1198
      %3287 = vmatprep.subr.bf16.mxu0 0
      %3288 = vmatpush1.bf16.msra.mxu0 %v1199
      %3289 = vmatprep.subr.bf16.mxu0 0
      %3290 = vmatpush1.bf16.msra.mxu0 %v1200
      %3291 = vmatprep.subr.bf16.mxu0 0
      %3292 = vmatpush1.bf16.msra.mxu0 %v1201
      %3293 = vmatprep.subr.bf16.mxu0 0
      %3294 = vmatpush1.bf16.msra.mxu0 %v1202
      %3295 = vmatprep.subr.bf16.mxu0 0
      %3296 = vmatpush1.bf16.msra.mxu0 %v1203
      %3297 = vmatprep.subr.bf16.mxu0 0
      %3298 = vmatpush1.bf16.msra.mxu0 0
      %3299 = vmatprep.subr.bf16.mxu0 0
      %3300 = vmatpush1.bf16.msra.mxu0 0
      %3301 = vmatprep.subr.bf16.mxu0 0
      %3302 = vmatpush1.bf16.msra.mxu0 0
      %3303 = vmatprep.subr.bf16.mxu0 0
      %3304 = vmatpush1.bf16.msra.mxu0 0
      %3305 = vmatprep.subr.bf16.mxu0 0
      %3306 = vmatpush1.bf16.msra.mxu0 0
      %3307 = vmatprep.subr.bf16.mxu0 0
      %3308 = vmatpush1.bf16.msra.mxu0 0
      %3309 = vmatprep.subr.bf16.mxu0 0
      %3310 = vmatpush1.bf16.msra.mxu0 0
      %3311 = vmatprep.subr.bf16.mxu0 0
      %3312 = vmatpush1.bf16.msra.mxu0 0
      %3313 = vmatprep.mubr.bf16.mxu0 0
      %3314 = vmatmul.mubr.bf16.gmra.mrb[0].mxu0 %v3277
      %v3315 = vpop.f32.mrb[0].mxu0
      %v3316 = vadd.f32 0.0, %v3315
      %v3317 = vpop.f32.mrb[0].mxu0
      %v3318 = vpop.f32.mrb[0].mxu0
      %v3319 = vadd.f32 0.0, %v3318
      %v3320 = vpop.f32.mrb[0].mxu0
      %3321 = vmatprep.mubr.bf16.mxu0 0
      %3322 = vmatmul.mubr.bf16.gmra.mrb[0].mxu0 %v3278
      %v3323 = vpop.f32.mrb[0].mxu0
      %v3324 = vadd.f32 0.0, %v3323
      %v3325 = vpop.f32.mrb[0].mxu0
      %v3326 = vpop.f32.mrb[0].mxu0
      %v3327 = vpop.f32.mrb[0].mxu0
      %3328 = vdwg.mxu0
      %v3329 = vpack.c.bf16 %v3319, %v3316
      %v3330 = vpack.c.bf16 %v3324, %v3324
      %s3331 = scalar_lea.vmem %s4, 240
      %v3332 = vld [vmem:[%s3331] sm:$0xf]
      %v3333 = vld [vmem:[%s3331 + $0x4] sm:$0xf]
      %v3334 = vld [vmem:[%s3331 + $0x8] sm:$0xf]
      %v3335 = vld [vmem:[%s3331 + $0xc] sm:$0xf]
      %v3340 = vunpack.c.l.b16 %v3332
      %v3341 = vunpack.c.l.b16 %v3333
      %v3342 = vunpack.c.l.b16 %v3334
      %v3343 = vunpack.c.l.b16 %v3335
      %v3344 = vpack.c.b16 %v3341, %v3340
      %v3345 = vpack.c.b16 %v3343, %v3342
      %v3349 = vsel %vm1352, %v3329, 0
      %v3352 = vsel %vm1352, %v3330, 0
      %3354 = vmatprep.subr.bf16.mxu0 0
      %3355 = vmatpush1.bf16.msra.mxu0 %v3344
      %3356 = vmatprep.subr.bf16.mxu0 0
      %3357 = vmatpush1.bf16.msra.mxu0 %v3345
      %3358 = vmatprep.subr.bf16.mxu0 0
      %3359 = vmatpush1.bf16.msra.mxu0 0
      %3360 = vmatprep.subr.bf16.mxu0 0
      %3361 = vmatpush1.bf16.msra.mxu0 0
      %3362 = vmatprep.subr.bf16.mxu0 0
      %3363 = vmatpush1.bf16.msra.mxu0 0
      %3364 = vmatprep.subr.bf16.mxu0 0
      %3365 = vmatpush1.bf16.msra.mxu0 0
      %3366 = vmatprep.subr.bf16.mxu0 0
      %3367 = vmatpush1.bf16.msra.mxu0 0
      %3368 = vmatprep.subr.bf16.mxu0 0
      %3369 = vmatpush1.bf16.msra.mxu0 0
      %3370 = vmatprep.subr.bf16.mxu0 0
      %3371 = vmatpush1.bf16.msra.mxu0 0
      %3372 = vmatprep.subr.bf16.mxu0 0
      %3373 = vmatpush1.bf16.msra.mxu0 0
      %3374 = vmatprep.subr.bf16.mxu0 0
      %3375 = vmatpush1.bf16.msra.mxu0 0
      %3376 = vmatprep.subr.bf16.mxu0 0
      %3377 = vmatpush1.bf16.msra.mxu0 0
      %3378 = vmatprep.subr.bf16.mxu0 0
      %3379 = vmatpush1.bf16.msra.mxu0 0
      %3380 = vmatprep.subr.bf16.mxu0 0
      %3381 = vmatpush1.bf16.msra.mxu0 0
      %3382 = vmatprep.subr.bf16.mxu0 0
      %3383 = vmatpush1.bf16.msra.mxu0 0
      %3384 = vmatprep.subr.bf16.mxu0 0
      %3385 = vmatpush1.bf16.msra.mxu0 0
      %3386 = vmatprep.mubr.bf16.mxu0 0
      %3387 = vmatmul.mubr.bf16.gmra.mrb[0].mxu0 %v3349
      %v3388 = vpop.f32.mrb[0].mxu0
      %v3389 = vadd.f32 0.0, %v3388
      %v3390 = vpop.f32.mrb[0].mxu0
      %v3391 = vpop.f32.mrb[0].mxu0
      %v3392 = vadd.f32 0.0, %v3391
      %v3393 = vpop.f32.mrb[0].mxu0
      %3394 = vmatprep.mubr.bf16.mxu0 0
      %3395 = vmatmul.mubr.bf16.gmra.mrb[0].mxu0 %v3352
      %v3396 = vpop.f32.mrb[0].mxu0
      %v3397 = vadd.f32 0.0, %v3396
      %v3398 = vpop.f32.mrb[0].mxu0
      %v3399 = vpop.f32.mrb[0].mxu0
      %v3400 = vpop.f32.mrb[0].mxu0
      %3401 = vdwg.mxu0
      %v3402 = vadd.f32 %v3264, %v3389
      %v3403 = vadd.f32 %v3265, %v3392
      %v3404 = vadd.f32 %v3266, %v3397
      %v3405 = vld [vmem:[%s5] sm:$0x1]
      %v3407 = vlaneseq
      %v3408 = vshrl.u32 %v3407, 7
      %v3409 = vsub.s32 0, %v3408
      %v3410 = vrot.slane %v3405, %v3409
      %v3412 = vadd.f32 %v3402, %v3410
      %v3413 = vadd.f32 %v3403, %v3410
      %v3414 = vadd.f32 %v3404, %v3410
      %v3415 = vmax.f32 %v3412, 0.0
      %v3416 = vmax.f32 %v3413, 0.0
      %v3417 = vmax.f32 %v3414, 0.0
      %v3418 = vpack.c.bf16 %v3416, %v3415
      %v3419 = vpack.c.bf16 %v3417, %v3417
      %v3420 = vld [vmem:[%s6] sm:$0x1]
      %vm3421 = vcmask 146432
      %v3423 = vsel %vm3421, %v3420, 0
      %vm3425 = vcmask 1040384
      %v3427 = vsel %vm3425, %v3419, 0
      %3429 = vmatprep.subr.bf16.mxu0 0
      %3430 = vmatpush1.bf16.msra.mxu0 %v3418
      %3431 = vmatprep.subr.bf16.mxu0 0
      %3432 = vmatpush1.bf16.msra.mxu0 %v3427
      %3433 = vmatprep.subr.bf16.mxu0 0
      %3434 = vmatpush1.bf16.msra.mxu0 0
      %3435 = vmatprep.subr.bf16.mxu0 0
      %3436 = vmatpush1.bf16.msra.mxu0 0
      %3437 = vmatprep.subr.bf16.mxu0 0
      %3438 = vmatpush1.bf16.msra.mxu0 0
      %3439 = vmatprep.subr.bf16.mxu0 0
      %3440 = vmatpush1.bf16.msra.mxu0 0
      %3441 = vmatprep.subr.bf16.mxu0 0
      %3442 = vmatpush1.bf16.msra.mxu0 0
      %3443 = vmatprep.subr.bf16.mxu0 0
      %3444 = vmatpush1.bf16.msra.mxu0 0
      %3445 = vmatprep.subr.bf16.mxu0 0
      %3446 = vmatpush1.bf16.msra.mxu0 0
      %3447 = vmatprep.subr.bf16.mxu0 0
      %3448 = vmatpush1.bf16.msra.mxu0 0
      %3449 = vmatprep.subr.bf16.mxu0 0
      %3450 = vmatpush1.bf16.msra.mxu0 0
      %3451 = vmatprep.subr.bf16.mxu0 0
      %3452 = vmatpush1.bf16.msra.mxu0 0
      %3453 = vmatprep.subr.bf16.mxu0 0
      %3454 = vmatpush1.bf16.msra.mxu0 0
      %3455 = vmatprep.subr.bf16.mxu0 0
      %3456 = vmatpush1.bf16.msra.mxu0 0
      %3457 = vmatprep.subr.bf16.mxu0 0
      %3458 = vmatpush1.bf16.msra.mxu0 0
      %3459 = vmatprep.subr.bf16.mxu0 0
      %3460 = vmatpush1.bf16.msra.mxu0 0
      %3461 = vmatprep.mubr.bf16.mxu0 0
      %3462 = vmatmul.mubr.bf16.gmra.mrb[0].mxu0 %v3423
      %v3463 = vpop.f32.mrb[0].mxu0
      %v3464 = vadd.f32 0.0, %v3463
      %v3465 = vpop.f32.mrb[0].mxu0
      %v3466 = vpop.f32.mrb[0].mxu0
      %v3467 = vpop.f32.mrb[0].mxu0
      %3468 = vdwg.mxu0
      %v3469 = vpack.c.bf16 %v3464, %v3464
      %v3470 = vld [vmem:[%s7] sm:$0xf]
      %v3471 = vld [vmem:[%s7 + $0x4] sm:$0xf]
      %v3472 = vld [vmem:[%s7 + $0x8] sm:$0xf]
      %v3473 = vld [vmem:[%s7 + $0xc] sm:$0xf]
      %v3474 = vld [vmem:[%s7 + $0x10] sm:$0xf]
      %v3475 = vld [vmem:[%s7 + $0x14] sm:$0xf]
      %v3476 = vld [vmem:[%s7 + $0x18] sm:$0xf]
      %v3477 = vld [vmem:[%s7 + $0x1c] sm:$0xf]
      %s3478 = scalar_lea.vmem %s6, 1
      %v3479 = vld [vmem:[%s3478] sm:$0x1]
      %v3481 = vsel %vm3421, %v3479, 0
      %3483 = vmatprep.subr.bf16.mxu0 0
      %3484 = vmatpush1.bf16.msra.mxu0 %v3418
      %3485 = vmatprep.subr.bf16.mxu0 0
      %3486 = vmatpush1.bf16.msra.mxu0 %v3427
      %3487 = vmatprep.subr.bf16.mxu0 0
      %3488 = vmatpush1.bf16.msra.mxu0 0
      %3489 = vmatprep.subr.bf16.mxu0 0
      %3490 = vmatpush1.bf16.msra.mxu0 0
      %3491 = vmatprep.subr.bf16.mxu0 0
      %3492 = vmatpush1.bf16.msra.mxu0 0
      %3493 = vmatprep.subr.bf16.mxu0 0
      %3494 = vmatpush1.bf16.msra.mxu0 0
      %3495 = vmatprep.subr.bf16.mxu0 0
      %3496 = vmatpush1.bf16.msra.mxu0 0
      %3497 = vmatprep.subr.bf16.mxu0 0
      %3498 = vmatpush1.bf16.msra.mxu0 0
      %3499 = vmatprep.subr.bf16.mxu0 0
      %3500 = vmatpush1.bf16.msra.mxu0 0
      %3501 = vmatprep.subr.bf16.mxu0 0
      %3502 = vmatpush1.bf16.msra.mxu0 0
      %3503 = vmatprep.subr.bf16.mxu0 0
      %3504 = vmatpush1.bf16.msra.mxu0 0
      %3505 = vmatprep.subr.bf16.mxu0 0
      %3506 = vmatpush1.bf16.msra.mxu0 0
      %3507 = vmatprep.subr.bf16.mxu0 0
      %3508 = vmatpush1.bf16.msra.mxu0 0
      %3509 = vmatprep.subr.bf16.mxu0 0
      %3510 = vmatpush1.bf16.msra.mxu0 0
      %3511 = vmatprep.subr.bf16.mxu0 0
      %3512 = vmatpush1.bf16.msra.mxu0 0
      %3513 = vmatprep.subr.bf16.mxu0 0
      %3514 = vmatpush1.bf16.msra.mxu0 0
      %3515 = vmatprep.mubr.bf16.mxu0 0
      %3516 = vmatmul.mubr.bf16.gmra.mrb[0].mxu0 %v3481
      %v3517 = vpop.f32.mrb[0].mxu0
      %v3518 = vadd.f32 0.0, %v3517
      %v3519 = vpop.f32.mrb[0].mxu0
      %v3520 = vpop.f32.mrb[0].mxu0
      %v3521 = vpop.f32.mrb[0].mxu0
      %3522 = vdwg.mxu0
      %v3523 = vpack.c.bf16 %v3518, %v3518
      %s3524 = scalar_lea.vmem %s7, 32
      %v3525 = vld [vmem:[%s3524] sm:$0xf]
      %v3526 = vld [vmem:[%s3524 + $0x4] sm:$0xf]
      %v3527 = vld [vmem:[%s3524 + $0x8] sm:$0xf]
      %v3528 = vld [vmem:[%s3524 + $0xc] sm:$0xf]
      %v3529 = vld [vmem:[%s3524 + $0x10] sm:$0xf]
      %v3530 = vld [vmem:[%s3524 + $0x14] sm:$0xf]
      %v3531 = vld [vmem:[%s3524 + $0x18] sm:$0xf]
      %v3532 = vld [vmem:[%s3524 + $0x1c] sm:$0xf]
      %v3541 = vunpack.c.l.b16 %v3525
      %v3542 = vunpack.c.l.b16 %v3526
      %v3543 = vunpack.c.l.b16 %v3527
      %v3544 = vunpack.c.l.b16 %v3528
      %v3545 = vunpack.c.l.b16 %v3529
      %v3546 = vunpack.c.l.b16 %v3530
      %v3547 = vunpack.c.l.b16 %v3531
      %v3548 = vunpack.c.l.b16 %v3532
      %v3549 = vpack.c.b16 %v3542, %v3541
      %v3550 = vpack.c.b16 %v3544, %v3543
      %v3551 = vpack.c.b16 %v3546, %v3545
      %v3552 = vpack.c.b16 %v3548, %v3547
      %vm3557 = vcmask 523264
      %v3559 = vsel %vm3557, %v3523, 0
      %3561 = vmatprep.subr.bf16.mxu0 0
      %3562 = vmatpush1.bf16.msra.mxu0 %v3549
      %3563 = vmatprep.subr.bf16.mxu0 0
      %3564 = vmatpush1.bf16.msra.mxu0 %v3550
      %3565 = vmatprep.subr.bf16.mxu0 0
      %3566 = vmatpush1.bf16.msra.mxu0 %v3551
      %3567 = vmatprep.subr.bf16.mxu0 0
      %3568 = vmatpush1.bf16.msra.mxu0 %v3552
      %3569 = vmatprep.subr.bf16.mxu0 0
      %3570 = vmatpush1.bf16.msra.mxu0 0
      %3571 = vmatprep.subr.bf16.mxu0 0
      %3572 = vmatpush1.bf16.msra.mxu0 0
      %3573 = vmatprep.subr.bf16.mxu0 0
      %3574 = vmatpush1.bf16.msra.mxu0 0
      %3575 = vmatprep.subr.bf16.mxu0 0
      %3576 = vmatpush1.bf16.msra.mxu0 0
      %3577 = vmatprep.subr.bf16.mxu0 0
      %3578 = vmatpush1.bf16.msra.mxu0 0
      %3579 = vmatprep.subr.bf16.mxu0 0
      %3580 = vmatpush1.bf16.msra.mxu0 0
      %3581 = vmatprep.subr.bf16.mxu0 0
      %3582 = vmatpush1.bf16.msra.mxu0 0
      %3583 = vmatprep.subr.bf16.mxu0 0
      %3584 = vmatpush1.bf16.msra.mxu0 0
      %3585 = vmatprep.subr.bf16.mxu0 0
      %3586 = vmatpush1.bf16.msra.mxu0 0
      %3587 = vmatprep.subr.bf16.mxu0 0
      %3588 = vmatpush1.bf16.msra.mxu0 0
      %3589 = vmatprep.subr.bf16.mxu0 0
      %3590 = vmatpush1.bf16.msra.mxu0 0
      %3591 = vmatprep.subr.bf16.mxu0 0
      %3592 = vmatpush1.bf16.msra.mxu0 0
      %3593 = vmatprep.mubr.bf16.mxu0 0
      %3594 = vmatmul.mubr.bf16.gmra.mrb[0].mxu0 %v3559
      %v3595 = vpop.f32.mrb[0].mxu0
      %v3596 = vadd.f32 0.0, %v3595
      %v3597 = vpop.f32.mrb[0].mxu0
      %v3598 = vpop.f32.mrb[0].mxu0
      %v3599 = vpop.f32.mrb[0].mxu0
      %3600 = vdwg.mxu0
      %v3609 = vunpack.c.l.b16 %v3470
      %v3610 = vunpack.c.l.b16 %v3471
      %v3611 = vunpack.c.l.b16 %v3472
      %v3612 = vunpack.c.l.b16 %v3473
      %v3613 = vunpack.c.l.b16 %v3474
      %v3614 = vunpack.c.l.b16 %v3475
      %v3615 = vunpack.c.l.b16 %v3476
      %v3616 = vunpack.c.l.b16 %v3477
      %v3617 = vpack.c.b16 %v3610, %v3609
      %v3618 = vpack.c.b16 %v3612, %v3611
      %v3619 = vpack.c.b16 %v3614, %v3613
      %v3620 = vpack.c.b16 %v3616, %v3615
      %v3626 = vsel %vm3557, %v3469, 0
      %3628 = vmatprep.subr.bf16.mxu0 0
      %3629 = vmatpush1.bf16.msra.mxu0 %v3617
      %3630 = vmatprep.subr.bf16.mxu0 0
      %3631 = vmatpush1.bf16.msra.mxu0 %v3618
      %3632 = vmatprep.subr.bf16.mxu0 0
      %3633 = vmatpush1.bf16.msra.mxu0 %v3619
      %3634 = vmatprep.subr.bf16.mxu0 0
      %3635 = vmatpush1.bf16.msra.mxu0 %v3620
      %3636 = vmatprep.subr.bf16.mxu0 0
      %3637 = vmatpush1.bf16.msra.mxu0 0
      %3638 = vmatprep.subr.bf16.mxu0 0
      %3639 = vmatpush1.bf16.msra.mxu0 0
      %3640 = vmatprep.subr.bf16.mxu0 0
      %3641 = vmatpush1.bf16.msra.mxu0 0
      %3642 = vmatprep.subr.bf16.mxu0 0
      %3643 = vmatpush1.bf16.msra.mxu0 0
      %3644 = vmatprep.subr.bf16.mxu0 0
      %3645 = vmatpush1.bf16.msra.mxu0 0
      %3646 = vmatprep.subr.bf16.mxu0 0
      %3647 = vmatpush1.bf16.msra.mxu0 0
      %3648 = vmatprep.subr.bf16.mxu0 0
      %3649 = vmatpush1.bf16.msra.mxu0 0
      %3650 = vmatprep.subr.bf16.mxu0 0
      %3651 = vmatpush1.bf16.msra.mxu0 0
      %3652 = vmatprep.subr.bf16.mxu0 0
      %3653 = vmatpush1.bf16.msra.mxu0 0
      %3654 = vmatprep.subr.bf16.mxu0 0
      %3655 = vmatpush1.bf16.msra.mxu0 0
      %3656 = vmatprep.subr.bf16.mxu0 0
      %3657 = vmatpush1.bf16.msra.mxu0 0
      %3658 = vmatprep.subr.bf16.mxu0 0
      %3659 = vmatpush1.bf16.msra.mxu0 0
      %3660 = vmatprep.mubr.bf16.mxu0 0
      %3661 = vmatmul.mubr.bf16.gmra.mrb[0].mxu0 %v3626
      %v3662 = vpop.f32.mrb[0].mxu0
      %v3663 = vadd.f32 %v3596, %v3662
      %v3664 = vpop.f32.mrb[0].mxu0
      %v3665 = vpop.f32.mrb[0].mxu0
      %v3666 = vpop.f32.mrb[0].mxu0
      %3667 = vdwg.mxu0
      %s3668 = scalar_lea.vmem %s6, 2
      %v3669 = vld [vmem:[%s3668] sm:$0x1]
      %v3671 = vsel %vm3421, %v3669, 0
      %3673 = vmatprep.subr.bf16.mxu0 0
      %3674 = vmatpush1.bf16.msra.mxu0 %v3418
      %3675 = vmatprep.subr.bf16.mxu0 0
      %3676 = vmatpush1.bf16.msra.mxu0 %v3427
      %3677 = vmatprep.subr.bf16.mxu0 0
      %3678 = vmatpush1.bf16.msra.mxu0 0
      %3679 = vmatprep.subr.bf16.mxu0 0
      %3680 = vmatpush1.bf16.msra.mxu0 0
      %3681 = vmatprep.subr.bf16.mxu0 0
      %3682 = vmatpush1.bf16.msra.mxu0 0
      %3683 = vmatprep.subr.bf16.mxu0 0
      %3684 = vmatpush1.bf16.msra.mxu0 0
      %3685 = vmatprep.subr.bf16.mxu0 0
      %3686 = vmatpush1.bf16.msra.mxu0 0
      %3687 = vmatprep.subr.bf16.mxu0 0
      %3688 = vmatpush1.bf16.msra.mxu0 0
      %3689 = vmatprep.subr.bf16.mxu0 0
      %3690 = vmatpush1.bf16.msra.mxu0 0
      %3691 = vmatprep.subr.bf16.mxu0 0
      %3692 = vmatpush1.bf16.msra.mxu0 0
      %3693 = vmatprep.subr.bf16.mxu0 0
      %3694 = vmatpush1.bf16.msra.mxu0 0
      %3695 = vmatprep.subr.bf16.mxu0 0
      %3696 = vmatpush1.bf16.msra.mxu0 0
      %3697 = vmatprep.subr.bf16.mxu0 0
      %3698 = vmatpush1.bf16.msra.mxu0 0
      %3699 = vmatprep.subr.bf16.mxu0 0
      %3700 = vmatpush1.bf16.msra.mxu0 0
      %3701 = vmatprep.subr.bf16.mxu0 0
      %3702 = vmatpush1.bf16.msra.mxu0 0
      %3703 = vmatprep.subr.bf16.mxu0 0
      %3704 = vmatpush1.bf16.msra.mxu0 0
      %3705 = vmatprep.mubr.bf16.mxu0 0
      %3706 = vmatmul.mubr.bf16.gmra.mrb[0].mxu0 %v3671
      %v3707 = vpop.f32.mrb[0].mxu0
      %v3708 = vadd.f32 0.0, %v3707
      %v3709 = vpop.f32.mrb[0].mxu0
      %v3710 = vpop.f32.mrb[0].mxu0
      %v3711 = vpop.f32.mrb[0].mxu0
      %3712 = vdwg.mxu0
      %v3713 = vpack.c.bf16 %v3708, %v3708
      %s3714 = scalar_lea.vmem %s7, 64
      %v3715 = vld [vmem:[%s3714] sm:$0xf]
      %v3716 = vld [vmem:[%s3714 + $0x4] sm:$0xf]
      %v3717 = vld [vmem:[%s3714 + $0x8] sm:$0xf]
      %v3718 = vld [vmem:[%s3714 + $0xc] sm:$0xf]
      %v3719 = vld [vmem:[%s3714 + $0x10] sm:$0xf]
      %v3720 = vld [vmem:[%s3714 + $0x14] sm:$0xf]
      %v3721 = vld [vmem:[%s3714 + $0x18] sm:$0xf]
      %v3722 = vld [vmem:[%s3714 + $0x1c] sm:$0xf]
      %v3731 = vunpack.c.l.b16 %v3715
      %v3732 = vunpack.c.l.b16 %v3716
      %v3733 = vunpack.c.l.b16 %v3717
      %v3734 = vunpack.c.l.b16 %v3718
      %v3735 = vunpack.c.l.b16 %v3719
      %v3736 = vunpack.c.l.b16 %v3720
      %v3737 = vunpack.c.l.b16 %v3721
      %v3738 = vunpack.c.l.b16 %v3722
      %v3739 = vpack.c.b16 %v3732, %v3731
      %v3740 = vpack.c.b16 %v3734, %v3733
      %v3741 = vpack.c.b16 %v3736, %v3735
      %v3742 = vpack.c.b16 %v3738, %v3737
      %v3748 = vsel %vm3557, %v3713, 0
      %3750 = vmatprep.subr.bf16.mxu0 0
      %3751 = vmatpush1.bf16.msra.mxu0 %v3739
      %3752 = vmatprep.subr.bf16.mxu0 0
      %3753 = vmatpush1.bf16.msra.mxu0 %v3740
      %3754 = vmatprep.subr.bf16.mxu0 0
      %3755 = vmatpush1.bf16.msra.mxu0 %v3741
      %3756 = vmatprep.subr.bf16.mxu0 0
      %3757 = vmatpush1.bf16.msra.mxu0 %v3742
      %3758 = vmatprep.subr.bf16.mxu0 0
      %3759 = vmatpush1.bf16.msra.mxu0 0
      %3760 = vmatprep.subr.bf16.mxu0 0
      %3761 = vmatpush1.bf16.msra.mxu0 0
      %3762 = vmatprep.subr.bf16.mxu0 0
      %3763 = vmatpush1.bf16.msra.mxu0 0
      %3764 = vmatprep.subr.bf16.mxu0 0
      %3765 = vmatpush1.bf16.msra.mxu0 0
      %3766 = vmatprep.subr.bf16.mxu0 0
      %3767 = vmatpush1.bf16.msra.mxu0 0
      %3768 = vmatprep.subr.bf16.mxu0 0
      %3769 = vmatpush1.bf16.msra.mxu0 0
      %3770 = vmatprep.subr.bf16.mxu0 0
      %3771 = vmatpush1.bf16.msra.mxu0 0
      %3772 = vmatprep.subr.bf16.mxu0 0
      %3773 = vmatpush1.bf16.msra.mxu0 0
      %3774 = vmatprep.subr.bf16.mxu0 0
      %3775 = vmatpush1.bf16.msra.mxu0 0
      %3776 = vmatprep.subr.bf16.mxu0 0
      %3777 = vmatpush1.bf16.msra.mxu0 0
      %3778 = vmatprep.subr.bf16.mxu0 0
      %3779 = vmatpush1.bf16.msra.mxu0 0
      %3780 = vmatprep.subr.bf16.mxu0 0
      %3781 = vmatpush1.bf16.msra.mxu0 0
      %3782 = vmatprep.mubr.bf16.mxu0 0
      %3783 = vmatmul.mubr.bf16.gmra.mrb[0].mxu0 %v3748
      %v3784 = vpop.f32.mrb[0].mxu0
      %v3785 = vadd.f32 0.0, %v3784
      %v3786 = vpop.f32.mrb[0].mxu0
      %v3787 = vpop.f32.mrb[0].mxu0
      %v3788 = vpop.f32.mrb[0].mxu0
      %3789 = vdwg.mxu0
      %v3790 = vadd.f32 %v3663, %v3785
      %s3791 = scalar_lea.vmem %s6, 3
      %v3792 = vld [vmem:[%s3791] sm:$0x1]
      %v3794 = vsel %vm3421, %v3792, 0
      %3796 = vmatprep.subr.bf16.mxu0 0
      %3797 = vmatpush1.bf16.msra.mxu0 %v3418
      %3798 = vmatprep.subr.bf16.mxu0 0
      %3799 = vmatpush1.bf16.msra.mxu0 %v3427
      %3800 = vmatprep.subr.bf16.mxu0 0
      %3801 = vmatpush1.bf16.msra.mxu0 0
      %3802 = vmatprep.subr.bf16.mxu0 0
      %3803 = vmatpush1.bf16.msra.mxu0 0
      %3804 = vmatprep.subr.bf16.mxu0 0
      %3805 = vmatpush1.bf16.msra.mxu0 0
      %3806 = vmatprep.subr.bf16.mxu0 0
      %3807 = vmatpush1.bf16.msra.mxu0 0
      %3808 = vmatprep.subr.bf16.mxu0 0
      %3809 = vmatpush1.bf16.msra.mxu0 0
      %3810 = vmatprep.subr.bf16.mxu0 0
      %3811 = vmatpush1.bf16.msra.mxu0 0
      %3812 = vmatprep.subr.bf16.mxu0 0
      %3813 = vmatpush1.bf16.msra.mxu0 0
      %3814 = vmatprep.subr.bf16.mxu0 0
      %3815 = vmatpush1.bf16.msra.mxu0 0
      %3816 = vmatprep.subr.bf16.mxu0 0
      %3817 = vmatpush1.bf16.msra.mxu0 0
      %3818 = vmatprep.subr.bf16.mxu0 0
      %3819 = vmatpush1.bf16.msra.mxu0 0
      %3820 = vmatprep.subr.bf16.mxu0 0
      %3821 = vmatpush1.bf16.msra.mxu0 0
      %3822 = vmatprep.subr.bf16.mxu0 0
      %3823 = vmatpush1.bf16.msra.mxu0 0
      %3824 = vmatprep.subr.bf16.mxu0 0
      %3825 = vmatpush1.bf16.msra.mxu0 0
      %3826 = vmatprep.subr.bf16.mxu0 0
      %3827 = vmatpush1.bf16.msra.mxu0 0
      %3828 = vmatprep.mubr.bf16.mxu0 0
      %3829 = vmatmul.mubr.bf16.gmra.mrb[0].mxu0 %v3794
      %v3830 = vpop.f32.mrb[0].mxu0
      %v3831 = vadd.f32 0.0, %v3830
      %v3832 = vpop.f32.mrb[0].mxu0
      %v3833 = vpop.f32.mrb[0].mxu0
      %v3834 = vpop.f32.mrb[0].mxu0
      %3835 = vdwg.mxu0
      %v3836 = vpack.c.bf16 %v3831, %v3831
      %s3837 = scalar_lea.vmem %s7, 96
      %v3838 = vld [vmem:[%s3837] sm:$0xf]
      %v3839 = vld [vmem:[%s3837 + $0x4] sm:$0xf]
      %v3840 = vld [vmem:[%s3837 + $0x8] sm:$0xf]
      %v3841 = vld [vmem:[%s3837 + $0xc] sm:$0xf]
      %v3842 = vld [vmem:[%s3837 + $0x10] sm:$0xf]
      %v3843 = vld [vmem:[%s3837 + $0x14] sm:$0xf]
      %v3844 = vld [vmem:[%s3837 + $0x18] sm:$0xf]
      %v3845 = vld [vmem:[%s3837 + $0x1c] sm:$0xf]
      %v3854 = vunpack.c.l.b16 %v3838
      %v3855 = vunpack.c.l.b16 %v3839
      %v3856 = vunpack.c.l.b16 %v3840
      %v3857 = vunpack.c.l.b16 %v3841
      %v3858 = vunpack.c.l.b16 %v3842
      %v3859 = vunpack.c.l.b16 %v3843
      %v3860 = vunpack.c.l.b16 %v3844
      %v3861 = vunpack.c.l.b16 %v3845
      %v3862 = vpack.c.b16 %v3855, %v3854
      %v3863 = vpack.c.b16 %v3857, %v3856
      %v3864 = vpack.c.b16 %v3859, %v3858
      %v3865 = vpack.c.b16 %v3861, %v3860
      %v3871 = vsel %vm3557, %v3836, 0
      %3873 = vmatprep.subr.bf16.mxu0 0
      %3874 = vmatpush1.bf16.msra.mxu0 %v3862
      %3875 = vmatprep.subr.bf16.mxu0 0
      %3876 = vmatpush1.bf16.msra.mxu0 %v3863
      %3877 = vmatprep.subr.bf16.mxu0 0
      %3878 = vmatpush1.bf16.msra.mxu0 %v3864
      %3879 = vmatprep.subr.bf16.mxu0 0
      %3880 = vmatpush1.bf16.msra.mxu0 %v3865
      %3881 = vmatprep.subr.bf16.mxu0 0
      %3882 = vmatpush1.bf16.msra.mxu0 0
      %3883 = vmatprep.subr.bf16.mxu0 0
      %3884 = vmatpush1.bf16.msra.mxu0 0
      %3885 = vmatprep.subr.bf16.mxu0 0
      %3886 = vmatpush1.bf16.msra.mxu0 0
      %3887 = vmatprep.subr.bf16.mxu0 0
      %3888 = vmatpush1.bf16.msra.mxu0 0
      %3889 = vmatprep.subr.bf16.mxu0 0
      %3890 = vmatpush1.bf16.msra.mxu0 0
      %3891 = vmatprep.subr.bf16.mxu0 0
      %3892 = vmatpush1.bf16.msra.mxu0 0
      %3893 = vmatprep.subr.bf16.mxu0 0
      %3894 = vmatpush1.bf16.msra.mxu0 0
      %3895 = vmatprep.subr.bf16.mxu0 0
      %3896 = vmatpush1.bf16.msra.mxu0 0
      %3897 = vmatprep.subr.bf16.mxu0 0
      %3898 = vmatpush1.bf16.msra.mxu0 0
      %3899 = vmatprep.subr.bf16.mxu0 0
      %3900 = vmatpush1.bf16.msra.mxu0 0
      %3901 = vmatprep.subr.bf16.mxu0 0
      %3902 = vmatpush1.bf16.msra.mxu0 0
      %3903 = vmatprep.subr.bf16.mxu0 0
      %3904 = vmatpush1.bf16.msra.mxu0 0
      %3905 = vmatprep.mubr.bf16.mxu0 0
      %3906 = vmatmul.mubr.bf16.gmra.mrb[0].mxu0 %v3871
      %v3907 = vpop.f32.mrb[0].mxu0
      %v3908 = vadd.f32 0.0, %v3907
      %v3909 = vpop.f32.mrb[0].mxu0
      %v3910 = vpop.f32.mrb[0].mxu0
      %v3911 = vpop.f32.mrb[0].mxu0
      %3912 = vdwg.mxu0
      %v3913 = vadd.f32 %v3790, %v3908
      %s3914 = scalar_lea.vmem %s6, 4
      %v3915 = vld [vmem:[%s3914] sm:$0x1]
      %v3917 = vsel %vm3421, %v3915, 0
      %3919 = vmatprep.subr.bf16.mxu0 0
      %3920 = vmatpush1.bf16.msra.mxu0 %v3418
      %3921 = vmatprep.subr.bf16.mxu0 0
      %3922 = vmatpush1.bf16.msra.mxu0 %v3427
      %3923 = vmatprep.subr.bf16.mxu0 0
      %3924 = vmatpush1.bf16.msra.mxu0 0
      %3925 = vmatprep.subr.bf16.mxu0 0
      %3926 = vmatpush1.bf16.msra.mxu0 0
      %3927 = vmatprep.subr.bf16.mxu0 0
      %3928 = vmatpush1.bf16.msra.mxu0 0
      %3929 = vmatprep.subr.bf16.mxu0 0
      %3930 = vmatpush1.bf16.msra.mxu0 0
      %3931 = vmatprep.subr.bf16.mxu0 0
      %3932 = vmatpush1.bf16.msra.mxu0 0
      %3933 = vmatprep.subr.bf16.mxu0 0
      %3934 = vmatpush1.bf16.msra.mxu0 0
      %3935 = vmatprep.subr.bf16.mxu0 0
      %3936 = vmatpush1.bf16.msra.mxu0 0
      %3937 = vmatprep.subr.bf16.mxu0 0
      %3938 = vmatpush1.bf16.msra.mxu0 0
      %3939 = vmatprep.subr.bf16.mxu0 0
      %3940 = vmatpush1.bf16.msra.mxu0 0
      %3941 = vmatprep.subr.bf16.mxu0 0
      %3942 = vmatpush1.bf16.msra.mxu0 0
      %3943 = vmatprep.subr.bf16.mxu0 0
      %3944 = vmatpush1.bf16.msra.mxu0 0
      %3945 = vmatprep.subr.bf16.mxu0 0
      %3946 = vmatpush1.bf16.msra.mxu0 0
      %3947 = vmatprep.subr.bf16.mxu0 0
      %3948 = vmatpush1.bf16.msra.mxu0 0
      %3949 = vmatprep.subr.bf16.mxu0 0
      %3950 = vmatpush1.bf16.msra.mxu0 0
      %3951 = vmatprep.mubr.bf16.mxu0 0
      %3952 = vmatmul.mubr.bf16.gmra.mrb[0].mxu0 %v3917
      %v3953 = vpop.f32.mrb[0].mxu0
      %v3954 = vadd.f32 0.0, %v3953
      %v3955 = vpop.f32.mrb[0].mxu0
      %v3956 = vpop.f32.mrb[0].mxu0
      %v3957 = vpop.f32.mrb[0].mxu0
      %3958 = vdwg.mxu0
      %v3959 = vpack.c.bf16 %v3954, %v3954
      %s3960 = scalar_lea.vmem %s7, 128
      %v3961 = vld [vmem:[%s3960] sm:$0xf]
      %v3962 = vld [vmem:[%s3960 + $0x4] sm:$0xf]
      %v3963 = vld [vmem:[%s3960 + $0x8] sm:$0xf]
      %v3964 = vld [vmem:[%s3960 + $0xc] sm:$0xf]
      %v3965 = vld [vmem:[%s3960 + $0x10] sm:$0xf]
      %v3966 = vld [vmem:[%s3960 + $0x14] sm:$0xf]
      %v3967 = vld [vmem:[%s3960 + $0x18] sm:$0xf]
      %v3968 = vld [vmem:[%s3960 + $0x1c] sm:$0xf]
      %v3977 = vunpack.c.l.b16 %v3961
      %v3978 = vunpack.c.l.b16 %v3962
      %v3979 = vunpack.c.l.b16 %v3963
      %v3980 = vunpack.c.l.b16 %v3964
      %v3981 = vunpack.c.l.b16 %v3965
      %v3982 = vunpack.c.l.b16 %v3966
      %v3983 = vunpack.c.l.b16 %v3967
      %v3984 = vunpack.c.l.b16 %v3968
      %v3985 = vpack.c.b16 %v3978, %v3977
      %v3986 = vpack.c.b16 %v3980, %v3979
      %v3987 = vpack.c.b16 %v3982, %v3981
      %v3988 = vpack.c.b16 %v3984, %v3983
      %v3994 = vsel %vm3557, %v3959, 0
      %3996 = vmatprep.subr.bf16.mxu0 0
      %3997 = vmatpush1.bf16.msra.mxu0 %v3985
      %3998 = vmatprep.subr.bf16.mxu0 0
      %3999 = vmatpush1.bf16.msra.mxu0 %v3986
      %4000 = vmatprep.subr.bf16.mxu0 0
      %4001 = vmatpush1.bf16.msra.mxu0 %v3987
      %4002 = vmatprep.subr.bf16.mxu0 0
      %4003 = vmatpush1.bf16.msra.mxu0 %v3988
      %4004 = vmatprep.subr.bf16.mxu0 0
      %4005 = vmatpush1.bf16.msra.mxu0 0
      %4006 = vmatprep.subr.bf16.mxu0 0
      %4007 = vmatpush1.bf16.msra.mxu0 0
      %4008 = vmatprep.subr.bf16.mxu0 0
      %4009 = vmatpush1.bf16.msra.mxu0 0
      %4010 = vmatprep.subr.bf16.mxu0 0
      %4011 = vmatpush1.bf16.msra.mxu0 0
      %4012 = vmatprep.subr.bf16.mxu0 0
      %4013 = vmatpush1.bf16.msra.mxu0 0
      %4014 = vmatprep.subr.bf16.mxu0 0
      %4015 = vmatpush1.bf16.msra.mxu0 0
      %4016 = vmatprep.subr.bf16.mxu0 0
      %4017 = vmatpush1.bf16.msra.mxu0 0
      %4018 = vmatprep.subr.bf16.mxu0 0
      %4019 = vmatpush1.bf16.msra.mxu0 0
      %4020 = vmatprep.subr.bf16.mxu0 0
      %4021 = vmatpush1.bf16.msra.mxu0 0
      %4022 = vmatprep.subr.bf16.mxu0 0
      %4023 = vmatpush1.bf16.msra.mxu0 0
      %4024 = vmatprep.subr.bf16.mxu0 0
      %4025 = vmatpush1.bf16.msra.mxu0 0
      %4026 = vmatprep.subr.bf16.mxu0 0
      %4027 = vmatpush1.bf16.msra.mxu0 0
      %4028 = vmatprep.mubr.bf16.mxu0 0
      %4029 = vmatmul.mubr.bf16.gmra.mrb[0].mxu0 %v3994
      %v4030 = vpop.f32.mrb[0].mxu0
      %v4031 = vadd.f32 0.0, %v4030
      %v4032 = vpop.f32.mrb[0].mxu0
      %v4033 = vpop.f32.mrb[0].mxu0
      %v4034 = vpop.f32.mrb[0].mxu0
      %4035 = vdwg.mxu0
      %v4036 = vadd.f32 %v3913, %v4031
      %s4037 = scalar_lea.vmem %s6, 5
      %v4038 = vld [vmem:[%s4037] sm:$0x1]
      %v4040 = vsel %vm3421, %v4038, 0
      %4042 = vmatprep.subr.bf16.mxu0 0
      %4043 = vmatpush1.bf16.msra.mxu0 %v3418
      %4044 = vmatprep.subr.bf16.mxu0 0
      %4045 = vmatpush1.bf16.msra.mxu0 %v3427
      %4046 = vmatprep.subr.bf16.mxu0 0
      %4047 = vmatpush1.bf16.msra.mxu0 0
      %4048 = vmatprep.subr.bf16.mxu0 0
      %4049 = vmatpush1.bf16.msra.mxu0 0
      %4050 = vmatprep.subr.bf16.mxu0 0
      %4051 = vmatpush1.bf16.msra.mxu0 0
      %4052 = vmatprep.subr.bf16.mxu0 0
      %4053 = vmatpush1.bf16.msra.mxu0 0
      %4054 = vmatprep.subr.bf16.mxu0 0
      %4055 = vmatpush1.bf16.msra.mxu0 0
      %4056 = vmatprep.subr.bf16.mxu0 0
      %4057 = vmatpush1.bf16.msra.mxu0 0
      %4058 = vmatprep.subr.bf16.mxu0 0
      %4059 = vmatpush1.bf16.msra.mxu0 0
      %4060 = vmatprep.subr.bf16.mxu0 0
      %4061 = vmatpush1.bf16.msra.mxu0 0
      %4062 = vmatprep.subr.bf16.mxu0 0
      %4063 = vmatpush1.bf16.msra.mxu0 0
      %4064 = vmatprep.subr.bf16.mxu0 0
      %4065 = vmatpush1.bf16.msra.mxu0 0
      %4066 = vmatprep.subr.bf16.mxu0 0
      %4067 = vmatpush1.bf16.msra.mxu0 0
      %4068 = vmatprep.subr.bf16.mxu0 0
      %4069 = vmatpush1.bf16.msra.mxu0 0
      %4070 = vmatprep.subr.bf16.mxu0 0
      %4071 = vmatpush1.bf16.msra.mxu0 0
      %4072 = vmatprep.subr.bf16.mxu0 0
      %4073 = vmatpush1.bf16.msra.mxu0 0
      %4074 = vmatprep.mubr.bf16.mxu0 0
      %4075 = vmatmul.mubr.bf16.gmra.mrb[0].mxu0 %v4040
      %v4076 = vpop.f32.mrb[0].mxu0
      %v4077 = vadd.f32 0.0, %v4076
      %v4078 = vpop.f32.mrb[0].mxu0
      %v4079 = vpop.f32.mrb[0].mxu0
      %v4080 = vpop.f32.mrb[0].mxu0
      %4081 = vdwg.mxu0
      %v4082 = vpack.c.bf16 %v4077, %v4077
      %s4083 = scalar_lea.vmem %s7, 160
      %v4084 = vld [vmem:[%s4083] sm:$0xf]
      %v4085 = vld [vmem:[%s4083 + $0x4] sm:$0xf]
      %v4086 = vld [vmem:[%s4083 + $0x8] sm:$0xf]
      %v4087 = vld [vmem:[%s4083 + $0xc] sm:$0xf]
      %v4088 = vld [vmem:[%s4083 + $0x10] sm:$0xf]
      %v4089 = vld [vmem:[%s4083 + $0x14] sm:$0xf]
      %v4090 = vld [vmem:[%s4083 + $0x18] sm:$0xf]
      %v4091 = vld [vmem:[%s4083 + $0x1c] sm:$0xf]
      %v4100 = vunpack.c.l.b16 %v4084
      %v4101 = vunpack.c.l.b16 %v4085
      %v4102 = vunpack.c.l.b16 %v4086
      %v4103 = vunpack.c.l.b16 %v4087
      %v4104 = vunpack.c.l.b16 %v4088
      %v4105 = vunpack.c.l.b16 %v4089
      %v4106 = vunpack.c.l.b16 %v4090
      %v4107 = vunpack.c.l.b16 %v4091
      %v4108 = vpack.c.b16 %v4101, %v4100
      %v4109 = vpack.c.b16 %v4103, %v4102
      %v4110 = vpack.c.b16 %v4105, %v4104
      %v4111 = vpack.c.b16 %v4107, %v4106
      %v4117 = vsel %vm3557, %v4082, 0
      %4119 = vmatprep.subr.bf16.mxu0 0
      %4120 = vmatpush1.bf16.msra.mxu0 %v4108
      %4121 = vmatprep.subr.bf16.mxu0 0
      %4122 = vmatpush1.bf16.msra.mxu0 %v4109
      %4123 = vmatprep.subr.bf16.mxu0 0
      %4124 = vmatpush1.bf16.msra.mxu0 %v4110
      %4125 = vmatprep.subr.bf16.mxu0 0
      %4126 = vmatpush1.bf16.msra.mxu0 %v4111
      %4127 = vmatprep.subr.bf16.mxu0 0
      %4128 = vmatpush1.bf16.msra.mxu0 0
      %4129 = vmatprep.subr.bf16.mxu0 0
      %4130 = vmatpush1.bf16.msra.mxu0 0
      %4131 = vmatprep.subr.bf16.mxu0 0
      %4132 = vmatpush1.bf16.msra.mxu0 0
      %4133 = vmatprep.subr.bf16.mxu0 0
      %4134 = vmatpush1.bf16.msra.mxu0 0
      %4135 = vmatprep.subr.bf16.mxu0 0
      %4136 = vmatpush1.bf16.msra.mxu0 0
      %4137 = vmatprep.subr.bf16.mxu0 0
      %4138 = vmatpush1.bf16.msra.mxu0 0
      %4139 = vmatprep.subr.bf16.mxu0 0
      %4140 = vmatpush1.bf16.msra.mxu0 0
      %4141 = vmatprep.subr.bf16.mxu0 0
      %4142 = vmatpush1.bf16.msra.mxu0 0
      %4143 = vmatprep.subr.bf16.mxu0 0
      %4144 = vmatpush1.bf16.msra.mxu0 0
      %4145 = vmatprep.subr.bf16.mxu0 0
      %4146 = vmatpush1.bf16.msra.mxu0 0
      %4147 = vmatprep.subr.bf16.mxu0 0
      %4148 = vmatpush1.bf16.msra.mxu0 0
      %4149 = vmatprep.subr.bf16.mxu0 0
      %4150 = vmatpush1.bf16.msra.mxu0 0
      %4151 = vmatprep.mubr.bf16.mxu0 0
      %4152 = vmatmul.mubr.bf16.gmra.mrb[0].mxu0 %v4117
      %v4153 = vpop.f32.mrb[0].mxu0
      %v4154 = vadd.f32 0.0, %v4153
      %v4155 = vpop.f32.mrb[0].mxu0
      %v4156 = vpop.f32.mrb[0].mxu0
      %v4157 = vpop.f32.mrb[0].mxu0
      %4158 = vdwg.mxu0
      %v4159 = vadd.f32 %v4036, %v4154
      %s4160 = scalar_lea.vmem %s6, 6
      %v4161 = vld [vmem:[%s4160] sm:$0x1]
      %v4163 = vsel %vm3421, %v4161, 0
      %4165 = vmatprep.subr.bf16.mxu0 0
      %4166 = vmatpush1.bf16.msra.mxu0 %v3418
      %4167 = vmatprep.subr.bf16.mxu0 0
      %4168 = vmatpush1.bf16.msra.mxu0 %v3427
      %4169 = vmatprep.subr.bf16.mxu0 0
      %4170 = vmatpush1.bf16.msra.mxu0 0
      %4171 = vmatprep.subr.bf16.mxu0 0
      %4172 = vmatpush1.bf16.msra.mxu0 0
      %4173 = vmatprep.subr.bf16.mxu0 0
      %4174 = vmatpush1.bf16.msra.mxu0 0
      %4175 = vmatprep.subr.bf16.mxu0 0
      %4176 = vmatpush1.bf16.msra.mxu0 0
      %4177 = vmatprep.subr.bf16.mxu0 0
      %4178 = vmatpush1.bf16.msra.mxu0 0
      %4179 = vmatprep.subr.bf16.mxu0 0
      %4180 = vmatpush1.bf16.msra.mxu0 0
      %4181 = vmatprep.subr.bf16.mxu0 0
      %4182 = vmatpush1.bf16.msra.mxu0 0
      %4183 = vmatprep.subr.bf16.mxu0 0
      %4184 = vmatpush1.bf16.msra.mxu0 0
      %4185 = vmatprep.subr.bf16.mxu0 0
      %4186 = vmatpush1.bf16.msra.mxu0 0
      %4187 = vmatprep.subr.bf16.mxu0 0
      %4188 = vmatpush1.bf16.msra.mxu0 0
      %4189 = vmatprep.subr.bf16.mxu0 0
      %4190 = vmatpush1.bf16.msra.mxu0 0
      %4191 = vmatprep.subr.bf16.mxu0 0
      %4192 = vmatpush1.bf16.msra.mxu0 0
      %4193 = vmatprep.subr.bf16.mxu0 0
      %4194 = vmatpush1.bf16.msra.mxu0 0
      %4195 = vmatprep.subr.bf16.mxu0 0
      %4196 = vmatpush1.bf16.msra.mxu0 0
      %4197 = vmatprep.mubr.bf16.mxu0 0
      %4198 = vmatmul.mubr.bf16.gmra.mrb[0].mxu0 %v4163
      %v4199 = vpop.f32.mrb[0].mxu0
      %v4200 = vadd.f32 0.0, %v4199
      %v4201 = vpop.f32.mrb[0].mxu0
      %v4202 = vpop.f32.mrb[0].mxu0
      %v4203 = vpop.f32.mrb[0].mxu0
      %4204 = vdwg.mxu0
      %v4205 = vpack.c.bf16 %v4200, %v4200
      %s4206 = scalar_lea.vmem %s7, 192
      %v4207 = vld [vmem:[%s4206] sm:$0xf]
      %v4208 = vld [vmem:[%s4206 + $0x4] sm:$0xf]
      %v4209 = vld [vmem:[%s4206 + $0x8] sm:$0xf]
      %v4210 = vld [vmem:[%s4206 + $0xc] sm:$0xf]
      %v4211 = vld [vmem:[%s4206 + $0x10] sm:$0xf]
      %v4212 = vld [vmem:[%s4206 + $0x14] sm:$0xf]
      %v4213 = vld [vmem:[%s4206 + $0x18] sm:$0xf]
      %v4214 = vld [vmem:[%s4206 + $0x1c] sm:$0xf]
      %v4223 = vunpack.c.l.b16 %v4207
      %v4224 = vunpack.c.l.b16 %v4208
      %v4225 = vunpack.c.l.b16 %v4209
      %v4226 = vunpack.c.l.b16 %v4210
      %v4227 = vunpack.c.l.b16 %v4211
      %v4228 = vunpack.c.l.b16 %v4212
      %v4229 = vunpack.c.l.b16 %v4213
      %v4230 = vunpack.c.l.b16 %v4214
      %v4231 = vpack.c.b16 %v4224, %v4223
      %v4232 = vpack.c.b16 %v4226, %v4225
      %v4233 = vpack.c.b16 %v4228, %v4227
      %v4234 = vpack.c.b16 %v4230, %v4229
      %v4240 = vsel %vm3557, %v4205, 0
      %4242 = vmatprep.subr.bf16.mxu0 0
      %4243 = vmatpush1.bf16.msra.mxu0 %v4231
      %4244 = vmatprep.subr.bf16.mxu0 0
      %4245 = vmatpush1.bf16.msra.mxu0 %v4232
      %4246 = vmatprep.subr.bf16.mxu0 0
      %4247 = vmatpush1.bf16.msra.mxu0 %v4233
      %4248 = vmatprep.subr.bf16.mxu0 0
      %4249 = vmatpush1.bf16.msra.mxu0 %v4234
      %4250 = vmatprep.subr.bf16.mxu0 0
      %4251 = vmatpush1.bf16.msra.mxu0 0
      %4252 = vmatprep.subr.bf16.mxu0 0
      %4253 = vmatpush1.bf16.msra.mxu0 0
      %4254 = vmatprep.subr.bf16.mxu0 0
      %4255 = vmatpush1.bf16.msra.mxu0 0
      %4256 = vmatprep.subr.bf16.mxu0 0
      %4257 = vmatpush1.bf16.msra.mxu0 0
      %4258 = vmatprep.subr.bf16.mxu0 0
      %4259 = vmatpush1.bf16.msra.mxu0 0
      %4260 = vmatprep.subr.bf16.mxu0 0
      %4261 = vmatpush1.bf16.msra.mxu0 0
      %4262 = vmatprep.subr.bf16.mxu0 0
      %4263 = vmatpush1.bf16.msra.mxu0 0
      %4264 = vmatprep.subr.bf16.mxu0 0
      %4265 = vmatpush1.bf16.msra.mxu0 0
      %4266 = vmatprep.subr.bf16.mxu0 0
      %4267 = vmatpush1.bf16.msra.mxu0 0
      %4268 = vmatprep.subr.bf16.mxu0 0
      %4269 = vmatpush1.bf16.msra.mxu0 0
      %4270 = vmatprep.subr.bf16.mxu0 0
      %4271 = vmatpush1.bf16.msra.mxu0 0
      %4272 = vmatprep.subr.bf16.mxu0 0
      %4273 = vmatpush1.bf16.msra.mxu0 0
      %4274 = vmatprep.mubr.bf16.mxu0 0
      %4275 = vmatmul.mubr.bf16.gmra.mrb[0].mxu0 %v4240
      %v4276 = vpop.f32.mrb[0].mxu0
      %v4277 = vadd.f32 0.0, %v4276
      %v4278 = vpop.f32.mrb[0].mxu0
      %v4279 = vpop.f32.mrb[0].mxu0
      %v4280 = vpop.f32.mrb[0].mxu0
      %4281 = vdwg.mxu0
      %v4282 = vadd.f32 %v4159, %v4277
      %s4283 = scalar_lea.vmem %s6, 7
      %v4284 = vld [vmem:[%s4283] sm:$0x1]
      %v4286 = vsel %vm3421, %v4284, 0
      %4288 = vmatprep.subr.bf16.mxu0 0
      %4289 = vmatpush1.bf16.msra.mxu0 %v3418
      %4290 = vmatprep.subr.bf16.mxu0 0
      %4291 = vmatpush1.bf16.msra.mxu0 %v3427
      %4292 = vmatprep.subr.bf16.mxu0 0
      %4293 = vmatpush1.bf16.msra.mxu0 0
      %4294 = vmatprep.subr.bf16.mxu0 0
      %4295 = vmatpush1.bf16.msra.mxu0 0
      %4296 = vmatprep.subr.bf16.mxu0 0
      %4297 = vmatpush1.bf16.msra.mxu0 0
      %4298 = vmatprep.subr.bf16.mxu0 0
      %4299 = vmatpush1.bf16.msra.mxu0 0
      %4300 = vmatprep.subr.bf16.mxu0 0
      %4301 = vmatpush1.bf16.msra.mxu0 0
      %4302 = vmatprep.subr.bf16.mxu0 0
      %4303 = vmatpush1.bf16.msra.mxu0 0
      %4304 = vmatprep.subr.bf16.mxu0 0
      %4305 = vmatpush1.bf16.msra.mxu0 0
      %4306 = vmatprep.subr.bf16.mxu0 0
      %4307 = vmatpush1.bf16.msra.mxu0 0
      %4308 = vmatprep.subr.bf16.mxu0 0
      %4309 = vmatpush1.bf16.msra.mxu0 0
      %4310 = vmatprep.subr.bf16.mxu0 0
      %4311 = vmatpush1.bf16.msra.mxu0 0
      %4312 = vmatprep.subr.bf16.mxu0 0
      %4313 = vmatpush1.bf16.msra.mxu0 0
      %4314 = vmatprep.subr.bf16.mxu0 0
      %4315 = vmatpush1.bf16.msra.mxu0 0
      %4316 = vmatprep.subr.bf16.mxu0 0
      %4317 = vmatpush1.bf16.msra.mxu0 0
      %4318 = vmatprep.subr.bf16.mxu0 0
      %4319 = vmatpush1.bf16.msra.mxu0 0
      %4320 = vmatprep.mubr.bf16.mxu0 0
      %4321 = vmatmul.mubr.bf16.gmra.mrb[0].mxu0 %v4286
      %v4322 = vpop.f32.mrb[0].mxu0
      %v4323 = vadd.f32 0.0, %v4322
      %v4324 = vpop.f32.mrb[0].mxu0
      %v4325 = vpop.f32.mrb[0].mxu0
      %v4326 = vpop.f32.mrb[0].mxu0
      %4327 = vdwg.mxu0
      %v4328 = vpack.c.bf16 %v4323, %v4323
      %s4329 = scalar_lea.vmem %s7, 224
      %v4330 = vld [vmem:[%s4329] sm:$0xf]
      %v4331 = vld [vmem:[%s4329 + $0x4] sm:$0xf]
      %v4332 = vld [vmem:[%s4329 + $0x8] sm:$0xf]
      %v4333 = vld [vmem:[%s4329 + $0xc] sm:$0xf]
      %v4334 = vld [vmem:[%s4329 + $0x10] sm:$0xf]
      %v4335 = vld [vmem:[%s4329 + $0x14] sm:$0xf]
      %v4336 = vld [vmem:[%s4329 + $0x18] sm:$0xf]
      %v4337 = vld [vmem:[%s4329 + $0x1c] sm:$0xf]
      %v4346 = vunpack.c.l.b16 %v4330
      %v4347 = vunpack.c.l.b16 %v4331
      %v4348 = vunpack.c.l.b16 %v4332
      %v4349 = vunpack.c.l.b16 %v4333
      %v4350 = vunpack.c.l.b16 %v4334
      %v4351 = vunpack.c.l.b16 %v4335
      %v4352 = vunpack.c.l.b16 %v4336
      %v4353 = vunpack.c.l.b16 %v4337
      %v4354 = vpack.c.b16 %v4347, %v4346
      %v4355 = vpack.c.b16 %v4349, %v4348
      %v4356 = vpack.c.b16 %v4351, %v4350
      %v4357 = vpack.c.b16 %v4353, %v4352
      %v4363 = vsel %vm3557, %v4328, 0
      %4365 = vmatprep.subr.bf16.mxu0 0
      %4366 = vmatpush1.bf16.msra.mxu0 %v4354
      %4367 = vmatprep.subr.bf16.mxu0 0
      %4368 = vmatpush1.bf16.msra.mxu0 %v4355
      %4369 = vmatprep.subr.bf16.mxu0 0
      %4370 = vmatpush1.bf16.msra.mxu0 %v4356
      %4371 = vmatprep.subr.bf16.mxu0 0
      %4372 = vmatpush1.bf16.msra.mxu0 %v4357
      %4373 = vmatprep.subr.bf16.mxu0 0
      %4374 = vmatpush1.bf16.msra.mxu0 0
      %4375 = vmatprep.subr.bf16.mxu0 0
      %4376 = vmatpush1.bf16.msra.mxu0 0
      %4377 = vmatprep.subr.bf16.mxu0 0
      %4378 = vmatpush1.bf16.msra.mxu0 0
      %4379 = vmatprep.subr.bf16.mxu0 0
      %4380 = vmatpush1.bf16.msra.mxu0 0
      %4381 = vmatprep.subr.bf16.mxu0 0
      %4382 = vmatpush1.bf16.msra.mxu0 0
      %4383 = vmatprep.subr.bf16.mxu0 0
      %4384 = vmatpush1.bf16.msra.mxu0 0
      %4385 = vmatprep.subr.bf16.mxu0 0
      %4386 = vmatpush1.bf16.msra.mxu0 0
      %4387 = vmatprep.subr.bf16.mxu0 0
      %4388 = vmatpush1.bf16.msra.mxu0 0
      %4389 = vmatprep.subr.bf16.mxu0 0
      %4390 = vmatpush1.bf16.msra.mxu0 0
      %4391 = vmatprep.subr.bf16.mxu0 0
      %4392 = vmatpush1.bf16.msra.mxu0 0
      %4393 = vmatprep.subr.bf16.mxu0 0
      %4394 = vmatpush1.bf16.msra.mxu0 0
      %4395 = vmatprep.subr.bf16.mxu0 0
      %4396 = vmatpush1.bf16.msra.mxu0 0
      %4397 = vmatprep.mubr.bf16.mxu0 0
      %4398 = vmatmul.mubr.bf16.gmra.mrb[0].mxu0 %v4363
      %v4399 = vpop.f32.mrb[0].mxu0
      %v4400 = vadd.f32 0.0, %v4399
      %v4401 = vpop.f32.mrb[0].mxu0
      %v4402 = vpop.f32.mrb[0].mxu0
      %v4403 = vpop.f32.mrb[0].mxu0
      %4404 = vdwg.mxu0
      %v4405 = vadd.f32 %v4282, %v4400
      %s4406 = scalar_lea.vmem %s6, 8
      %v4407 = vld [vmem:[%s4406] sm:$0x1]
      %v4409 = vsel %vm3421, %v4407, 0
      %4411 = vmatprep.subr.bf16.mxu0 0
      %4412 = vmatpush1.bf16.msra.mxu0 %v3418
      %4413 = vmatprep.subr.bf16.mxu0 0
      %4414 = vmatpush1.bf16.msra.mxu0 %v3427
      %4415 = vmatprep.subr.bf16.mxu0 0
      %4416 = vmatpush1.bf16.msra.mxu0 0
      %4417 = vmatprep.subr.bf16.mxu0 0
      %4418 = vmatpush1.bf16.msra.mxu0 0
      %4419 = vmatprep.subr.bf16.mxu0 0
      %4420 = vmatpush1.bf16.msra.mxu0 0
      %4421 = vmatprep.subr.bf16.mxu0 0
      %4422 = vmatpush1.bf16.msra.mxu0 0
      %4423 = vmatprep.subr.bf16.mxu0 0
      %4424 = vmatpush1.bf16.msra.mxu0 0
      %4425 = vmatprep.subr.bf16.mxu0 0
      %4426 = vmatpush1.bf16.msra.mxu0 0
      %4427 = vmatprep.subr.bf16.mxu0 0
      %4428 = vmatpush1.bf16.msra.mxu0 0
      %4429 = vmatprep.subr.bf16.mxu0 0
      %4430 = vmatpush1.bf16.msra.mxu0 0
      %4431 = vmatprep.subr.bf16.mxu0 0
      %4432 = vmatpush1.bf16.msra.mxu0 0
      %4433 = vmatprep.subr.bf16.mxu0 0
      %4434 = vmatpush1.bf16.msra.mxu0 0
      %4435 = vmatprep.subr.bf16.mxu0 0
      %4436 = vmatpush1.bf16.msra.mxu0 0
      %4437 = vmatprep.subr.bf16.mxu0 0
      %4438 = vmatpush1.bf16.msra.mxu0 0
      %4439 = vmatprep.subr.bf16.mxu0 0
      %4440 = vmatpush1.bf16.msra.mxu0 0
      %4441 = vmatprep.subr.bf16.mxu0 0
      %4442 = vmatpush1.bf16.msra.mxu0 0
      %4443 = vmatprep.mubr.bf16.mxu0 0
      %4444 = vmatmul.mubr.bf16.gmra.mrb[0].mxu0 %v4409
      %v4445 = vpop.f32.mrb[0].mxu0
      %v4446 = vadd.f32 0.0, %v4445
      %v4447 = vpop.f32.mrb[0].mxu0
      %v4448 = vpop.f32.mrb[0].mxu0
      %v4449 = vpop.f32.mrb[0].mxu0
      %4450 = vdwg.mxu0
      %v4451 = vpack.c.bf16 %v4446, %v4446
      %s4452 = scalar_lea.vmem %s7, 256
      %v4453 = vld [vmem:[%s4452] sm:$0xf]
      %v4454 = vld [vmem:[%s4452 + $0x4] sm:$0xf]
      %v4455 = vld [vmem:[%s4452 + $0x8] sm:$0xf]
      %v4456 = vld [vmem:[%s4452 + $0xc] sm:$0xf]
      %v4457 = vld [vmem:[%s4452 + $0x10] sm:$0xf]
      %v4458 = vld [vmem:[%s4452 + $0x14] sm:$0xf]
      %v4459 = vld [vmem:[%s4452 + $0x18] sm:$0xf]
      %v4460 = vld [vmem:[%s4452 + $0x1c] sm:$0xf]
      %v4469 = vunpack.c.l.b16 %v4453
      %v4470 = vunpack.c.l.b16 %v4454
      %v4471 = vunpack.c.l.b16 %v4455
      %v4472 = vunpack.c.l.b16 %v4456
      %v4473 = vunpack.c.l.b16 %v4457
      %v4474 = vunpack.c.l.b16 %v4458
      %v4475 = vunpack.c.l.b16 %v4459
      %v4476 = vunpack.c.l.b16 %v4460
      %v4477 = vpack.c.b16 %v4470, %v4469
      %v4478 = vpack.c.b16 %v4472, %v4471
      %v4479 = vpack.c.b16 %v4474, %v4473
      %v4480 = vpack.c.b16 %v4476, %v4475
      %v4486 = vsel %vm3557, %v4451, 0
      %4488 = vmatprep.subr.bf16.mxu0 0
      %4489 = vmatpush1.bf16.msra.mxu0 %v4477
      %4490 = vmatprep.subr.bf16.mxu0 0
      %4491 = vmatpush1.bf16.msra.mxu0 %v4478
      %4492 = vmatprep.subr.bf16.mxu0 0
      %4493 = vmatpush1.bf16.msra.mxu0 %v4479
      %4494 = vmatprep.subr.bf16.mxu0 0
      %4495 = vmatpush1.bf16.msra.mxu0 %v4480
      %4496 = vmatprep.subr.bf16.mxu0 0
      %4497 = vmatpush1.bf16.msra.mxu0 0
      %4498 = vmatprep.subr.bf16.mxu0 0
      %4499 = vmatpush1.bf16.msra.mxu0 0
      %4500 = vmatprep.subr.bf16.mxu0 0
      %4501 = vmatpush1.bf16.msra.mxu0 0
      %4502 = vmatprep.subr.bf16.mxu0 0
      %4503 = vmatpush1.bf16.msra.mxu0 0
      %4504 = vmatprep.subr.bf16.mxu0 0
      %4505 = vmatpush1.bf16.msra.mxu0 0
      %4506 = vmatprep.subr.bf16.mxu0 0
      %4507 = vmatpush1.bf16.msra.mxu0 0
      %4508 = vmatprep.subr.bf16.mxu0 0
      %4509 = vmatpush1.bf16.msra.mxu0 0
      %4510 = vmatprep.subr.bf16.mxu0 0
      %4511 = vmatpush1.bf16.msra.mxu0 0
      %4512 = vmatprep.subr.bf16.mxu0 0
      %4513 = vmatpush1.bf16.msra.mxu0 0
      %4514 = vmatprep.subr.bf16.mxu0 0
      %4515 = vmatpush1.bf16.msra.mxu0 0
      %4516 = vmatprep.subr.bf16.mxu0 0
      %4517 = vmatpush1.bf16.msra.mxu0 0
      %4518 = vmatprep.subr.bf16.mxu0 0
      %4519 = vmatpush1.bf16.msra.mxu0 0
      %4520 = vmatprep.mubr.bf16.mxu0 0
      %4521 = vmatmul.mubr.bf16.gmra.mrb[0].mxu0 %v4486
      %v4522 = vpop.f32.mrb[0].mxu0
      %v4523 = vadd.f32 0.0, %v4522
      %v4524 = vpop.f32.mrb[0].mxu0
      %v4525 = vpop.f32.mrb[0].mxu0
      %v4526 = vpop.f32.mrb[0].mxu0
      %4527 = vdwg.mxu0
      %v4528 = vadd.f32 %v4405, %v4523
      %v4529 = vld [vmem:[%s8] sm:$0x1]
      %v4531 = vlaneseq
      %v4532 = vshrl.u32 %v4531, 7
      %v4533 = vsub.s32 0, %v4532
      %v4534 = vrot.slane %v4529, %v4533
      %v4536 = vadd.f32 %v4528, %v4534
      %v4537 = vmax.f32 %v4536, 0.0
      %v4538 = vpack.c.bf16 %v4537, %v4537
      %v4539 = vld [vmem:[%s799] sm:$0xff]
      %v4540 = vld [vmem:[%s799 + $0x8] sm:$0xff]
      %v4541 = vld [vmem:[%s799 + $0x10] sm:$0xff]
      %v4542 = vld [vmem:[%s799 + $0x18] sm:$0xff]
      %v4543 = vld [vmem:[%s799 + $0x20] sm:$0xff]
      %v4544 = vld [vmem:[%s799 + $0x28] sm:$0xff]
      %v4545 = vld [vmem:[%s799 + $0x30] sm:$0xff]
      %v4546 = vld [vmem:[%s799 + $0x38] sm:$0xff]
      %v4547 = vld [vmem:[%s799 + $0x40] sm:$0xff]
      %v4548 = vld [vmem:[%s799 + $0x48] sm:$0xff]
      %v4549 = vld [vmem:[%s799 + $0x50] sm:$0xff]
      %v4550 = vld [vmem:[%s799 + $0x58] sm:$0xff]
      %v4551 = vld [vmem:[%s799 + $0x60] sm:$0xff]
      %v4552 = vld [vmem:[%s799 + $0x68] sm:$0xff]
      %v4553 = vld [vmem:[%s799 + $0x70] sm:$0xff]
      %v4554 = vld [vmem:[%s799 + $0x78] sm:$0xff]
      %v4555 = vld [vmem:[%s828] sm:$0xf]
      %v4557 = vlaneseq
      %v4558 = vshrl.u32 %v4557, 7
      %v4559 = vsub.s32 0, %v4558
      %v4560 = vrot.slane %v4555, %v4559
      %v4561 = vlaneseq
      %v4562 = vshrl.u32 %v4561, 7
      %v4563 = vsub.s32 1, %v4562
      %v4564 = vrot.slane %v4555, %v4563
      %v4565 = vlaneseq
      %v4566 = vshrl.u32 %v4565, 7
      %v4567 = vsub.s32 2, %v4566
      %v4568 = vrot.slane %v4555, %v4567
      %v4569 = vlaneseq
      %v4570 = vshrl.u32 %v4569, 7
      %v4571 = vsub.s32 3, %v4570
      %v4572 = vrot.slane %v4555, %v4571
      %v4593 = vunpack.c.l.b16 %v4539
      %v4594 = vunpack.c.h.b16 %v4539
      %v4595 = vunpack.c.l.b16 %v4540
      %v4596 = vunpack.c.h.b16 %v4540
      %v4597 = vunpack.c.l.b16 %v4541
      %v4598 = vunpack.c.h.b16 %v4541
      %v4599 = vunpack.c.l.b16 %v4542
      %v4600 = vunpack.c.h.b16 %v4542
      %v4601 = vunpack.c.l.b16 %v4543
      %v4602 = vunpack.c.h.b16 %v4543
      %v4603 = vunpack.c.l.b16 %v4544
      %v4604 = vunpack.c.h.b16 %v4544
      %v4605 = vunpack.c.l.b16 %v4545
      %v4606 = vunpack.c.h.b16 %v4545
      %v4607 = vunpack.c.l.b16 %v4546
      %v4608 = vunpack.c.h.b16 %v4546
      %v4609 = vunpack.c.l.b16 %v4547
      %v4610 = vunpack.c.h.b16 %v4547
      %v4611 = vunpack.c.l.b16 %v4548
      %v4612 = vunpack.c.h.b16 %v4548
      %v4613 = vunpack.c.l.b16 %v4549
      %v4614 = vunpack.c.h.b16 %v4549
      %v4615 = vunpack.c.l.b16 %v4550
      %v4616 = vunpack.c.h.b16 %v4550
      %v4617 = vunpack.c.l.b16 %v4551
      %v4618 = vunpack.c.h.b16 %v4551
      %v4619 = vunpack.c.l.b16 %v4552
      %v4620 = vunpack.c.h.b16 %v4552
      %v4621 = vunpack.c.l.b16 %v4553
      %v4622 = vunpack.c.h.b16 %v4553
      %v4623 = vunpack.c.l.b16 %v4554
      %v4624 = vunpack.c.h.b16 %v4554
      %v4625 = vpack.c.b16 %v4597, %v4593
      %v4626 = vpack.c.b16 %v4598, %v4594
      %v4627 = vpack.c.b16 %v4599, %v4595
      %v4628 = vpack.c.b16 %v4600, %v4596
      %v4629 = vpack.c.b16 %v4605, %v4601
      %v4630 = vpack.c.b16 %v4606, %v4602
      %v4631 = vpack.c.b16 %v4607, %v4603
      %v4632 = vpack.c.b16 %v4608, %v4604
      %v4633 = vpack.c.b16 %v4613, %v4609
      %v4634 = vpack.c.b16 %v4614, %v4610
      %v4635 = vpack.c.b16 %v4615, %v4611
      %v4636 = vpack.c.b16 %v4616, %v4612
      %v4637 = vpack.c.b16 %v4621, %v4617
      %v4638 = vpack.c.b16 %v4622, %v4618
      %v4639 = vpack.c.b16 %v4623, %v4619
      %v4640 = vpack.c.b16 %v4624, %v4620
      %v4658 = vsel %vm3557, %v4538, 0
      %4660 = vmatprep.subr.bf16.mxu0 %v4626
      %4661 = vmatpush1.bf16.msra.mxu0 %v4625
      %4662 = vmatprep.subr.bf16.mxu0 %v4630
      %4663 = vmatpush1.bf16.msra.mxu0 %v4629
      %4664 = vmatprep.subr.bf16.mxu0 %v4634
      %4665 = vmatpush1.bf16.msra.mxu0 %v4633
      %4666 = vmatprep.subr.bf16.mxu0 %v4638
      %4667 = vmatpush1.bf16.msra.mxu0 %v4637
      %4668 = vmatprep.subr.bf16.mxu0 0
      %4669 = vmatpush1.bf16.msra.mxu0 0
      %4670 = vmatprep.subr.bf16.mxu0 0
      %4671 = vmatpush1.bf16.msra.mxu0 0
      %4672 = vmatprep.subr.bf16.mxu0 0
      %4673 = vmatpush1.bf16.msra.mxu0 0
      %4674 = vmatprep.subr.bf16.mxu0 0
      %4675 = vmatpush1.bf16.msra.mxu0 0
      %4676 = vmatprep.subr.bf16.mxu0 0
      %4677 = vmatpush1.bf16.msra.mxu0 0
      %4678 = vmatprep.subr.bf16.mxu0 0
      %4679 = vmatpush1.bf16.msra.mxu0 0
      %4680 = vmatprep.subr.bf16.mxu0 0
      %4681 = vmatpush1.bf16.msra.mxu0 0
      %4682 = vmatprep.subr.bf16.mxu0 0
      %4683 = vmatpush1.bf16.msra.mxu0 0
      %4684 = vmatprep.subr.bf16.mxu0 0
      %4685 = vmatpush1.bf16.msra.mxu0 0
      %4686 = vmatprep.subr.bf16.mxu0 0
      %4687 = vmatpush1.bf16.msra.mxu0 0
      %4688 = vmatprep.subr.bf16.mxu0 0
      %4689 = vmatpush1.bf16.msra.mxu0 0
      %4690 = vmatprep.subr.bf16.mxu0 0
      %4691 = vmatpush1.bf16.msra.mxu0 0
      %4692 = vmatprep.mubr.bf16.mxu0 0
      %4693 = vmatmul.mubr.bf16.gmra.mrb[0].mxu0 %v4658
      %v4694 = vpop.f32.mrb[0].mxu0
      %v4695 = vadd.f32 %v4560, %v4694
      %v4696 = vpop.f32.mrb[0].mxu0
      %v4697 = vadd.f32 %v4564, %v4696
      %v4698 = vpop.f32.mrb[0].mxu0
      %v4699 = vpop.f32.mrb[0].mxu0
      %4700 = vdwg.mxu0
      %4701 = vmatprep.subr.bf16.mxu0 %v4628
      %4702 = vmatpush1.bf16.msra.mxu0 %v4627
      %4703 = vmatprep.subr.bf16.mxu0 %v4632
      %4704 = vmatpush1.bf16.msra.mxu0 %v4631
      %4705 = vmatprep.subr.bf16.mxu0 %v4636
      %4706 = vmatpush1.bf16.msra.mxu0 %v4635
      %4707 = vmatprep.subr.bf16.mxu0 %v4640
      %4708 = vmatpush1.bf16.msra.mxu0 %v4639
      %4709 = vmatprep.subr.bf16.mxu0 0
      %4710 = vmatpush1.bf16.msra.mxu0 0
      %4711 = vmatprep.subr.bf16.mxu0 0
      %4712 = vmatpush1.bf16.msra.mxu0 0
      %4713 = vmatprep.subr.bf16.mxu0 0
      %4714 = vmatpush1.bf16.msra.mxu0 0
      %4715 = vmatprep.subr.bf16.mxu0 0
      %4716 = vmatpush1.bf16.msra.mxu0 0
      %4717 = vmatprep.subr.bf16.mxu0 0
      %4718 = vmatpush1.bf16.msra.mxu0 0
      %4719 = vmatprep.subr.bf16.mxu0 0
      %4720 = vmatpush1.bf16.msra.mxu0 0
      %4721 = vmatprep.subr.bf16.mxu0 0
      %4722 = vmatpush1.bf16.msra.mxu0 0
      %4723 = vmatprep.subr.bf16.mxu0 0
      %4724 = vmatpush1.bf16.msra.mxu0 0
      %4725 = vmatprep.subr.bf16.mxu0 0
      %4726 = vmatpush1.bf16.msra.mxu0 0
      %4727 = vmatprep.subr.bf16.mxu0 0
      %4728 = vmatpush1.bf16.msra.mxu0 0
      %4729 = vmatprep.subr.bf16.mxu0 0
      %4730 = vmatpush1.bf16.msra.mxu0 0
      %4731 = vmatprep.subr.bf16.mxu0 0
      %4732 = vmatpush1.bf16.msra.mxu0 0
      %4733 = vmatprep.mubr.bf16.mxu0 0
      %4734 = vmatmul.mubr.bf16.gmra.mrb[0].mxu0 %v4658
      %v4735 = vpop.f32.mrb[0].mxu0
      %v4736 = vadd.f32 %v4568, %v4735
      %v4737 = vpop.f32.mrb[0].mxu0
      %v4738 = vadd.f32 %v4572, %v4737
      %v4739 = vpop.f32.mrb[0].mxu0
      %v4740 = vpop.f32.mrb[0].mxu0
      %4741 = vdwg.mxu0
      %v4742 = vmax.f32 %v4695, 0.0
      %v4743 = vmax.f32 %v4697, 0.0
      %v4744 = vmax.f32 %v4736, 0.0
      %v4745 = vmax.f32 %v4738, 0.0
      %v4746 = vpack.c.bf16 %v4742, %v4742
      %v4747 = vpack.c.bf16 %v4743, %v4743
      %v4748 = vpack.c.bf16 %v4744, %v4744
      %v4749 = vpack.c.bf16 %v4745, %v4745
      %v4750 = vld [vmem:[%s804] sm:$0xff]
      %v4751 = vld [vmem:[%s804 + $0x8] sm:$0xff]
      %v4752 = vld [vmem:[%s804 + $0x10] sm:$0xff]
      %v4753 = vld [vmem:[%s804 + $0x18] sm:$0xff]
      %v4754 = vld [vmem:[%s804 + $0x20] sm:$0xff]
      %v4755 = vld [vmem:[%s804 + $0x28] sm:$0xff]
      %v4756 = vld [vmem:[%s804 + $0x30] sm:$0xff]
      %v4757 = vld [vmem:[%s804 + $0x38] sm:$0xff]
      %v4758 = vld [vmem:[%s804 + $0x40] sm:$0xff]
      %v4759 = vld [vmem:[%s804 + $0x48] sm:$0xff]
      %v4760 = vld [vmem:[%s804 + $0x50] sm:$0xff]
      %v4761 = vld [vmem:[%s804 + $0x58] sm:$0xff]
      %v4762 = vld [vmem:[%s804 + $0x60] sm:$0xff]
      %v4763 = vld [vmem:[%s804 + $0x68] sm:$0xff]
      %v4764 = vld [vmem:[%s804 + $0x70] sm:$0xff]
      %v4765 = vld [vmem:[%s804 + $0x78] sm:$0xff]
      %v4766 = vld [vmem:[%s804 + $0x80] sm:$0xff]
      %v4767 = vld [vmem:[%s804 + $0x88] sm:$0xff]
      %v4768 = vld [vmem:[%s804 + $0x90] sm:$0xff]
      %v4769 = vld [vmem:[%s804 + $0x98] sm:$0xff]
      %v4770 = vld [vmem:[%s804 + $0xa0] sm:$0xff]
      %v4771 = vld [vmem:[%s804 + $0xa8] sm:$0xff]
      %v4772 = vld [vmem:[%s804 + $0xb0] sm:$0xff]
      %v4773 = vld [vmem:[%s804 + $0xb8] sm:$0xff]
      %v4774 = vld [vmem:[%s804 + $0xc0] sm:$0xff]
      %v4775 = vld [vmem:[%s804 + $0xc8] sm:$0xff]
      %v4776 = vld [vmem:[%s804 + $0xd0] sm:$0xff]
      %v4777 = vld [vmem:[%s804 + $0xd8] sm:$0xff]
      %v4778 = vld [vmem:[%s804 + $0xe0] sm:$0xff]
      %v4779 = vld [vmem:[%s804 + $0xe8] sm:$0xff]
      %v4780 = vld [vmem:[%s804 + $0xf0] sm:$0xff]
      %v4781 = vld [vmem:[%s804 + $0xf8] sm:$0xff]
      %v4782 = vld [vmem:[%s804 + $0x100] sm:$0xff]
      %v4783 = vld [vmem:[%s804 + $0x108] sm:$0xff]
      %v4784 = vld [vmem:[%s804 + $0x110] sm:$0xff]
      %v4785 = vld [vmem:[%s804 + $0x118] sm:$0xff]
      %v4786 = vld [vmem:[%s804 + $0x120] sm:$0xff]
      %v4787 = vld [vmem:[%s804 + $0x128] sm:$0xff]
      %v4788 = vld [vmem:[%s804 + $0x130] sm:$0xff]
      %v4789 = vld [vmem:[%s804 + $0x138] sm:$0xff]
      %v4790 = vld [vmem:[%s804 + $0x140] sm:$0xff]
      %v4791 = vld [vmem:[%s804 + $0x148] sm:$0xff]
      %v4792 = vld [vmem:[%s804 + $0x150] sm:$0xff]
      %v4793 = vld [vmem:[%s804 + $0x158] sm:$0xff]
      %v4794 = vld [vmem:[%s804 + $0x160] sm:$0xff]
      %v4795 = vld [vmem:[%s804 + $0x168] sm:$0xff]
      %v4796 = vld [vmem:[%s804 + $0x170] sm:$0xff]
      %v4797 = vld [vmem:[%s804 + $0x178] sm:$0xff]
      %v4798 = vld [vmem:[%s804 + $0x180] sm:$0xff]
      %v4799 = vld [vmem:[%s804 + $0x188] sm:$0xff]
      %v4800 = vld [vmem:[%s804 + $0x190] sm:$0xff]
      %v4801 = vld [vmem:[%s804 + $0x198] sm:$0xff]
      %v4802 = vld [vmem:[%s804 + $0x1a0] sm:$0xff]
      %v4803 = vld [vmem:[%s804 + $0x1a8] sm:$0xff]
      %v4804 = vld [vmem:[%s804 + $0x1b0] sm:$0xff]
      %v4805 = vld [vmem:[%s804 + $0x1b8] sm:$0xff]
      %v4806 = vld [vmem:[%s804 + $0x1c0] sm:$0xff]
      %v4807 = vld [vmem:[%s804 + $0x1c8] sm:$0xff]
      %v4808 = vld [vmem:[%s804 + $0x1d0] sm:$0xff]
      %v4809 = vld [vmem:[%s804 + $0x1d8] sm:$0xff]
      %v4810 = vld [vmem:[%s804 + $0x1e0] sm:$0xff]
      %v4811 = vld [vmem:[%s804 + $0x1e8] sm:$0xff]
      %v4812 = vld [vmem:[%s804 + $0x1f0] sm:$0xff]
      %v4813 = vld [vmem:[%s804 + $0x1f8] sm:$0xff]
      %v4814 = vld [vmem:[%s804 + $0x200] sm:$0xff]
      %v4815 = vld [vmem:[%s804 + $0x208] sm:$0xff]
      %v4816 = vld [vmem:[%s804 + $0x210] sm:$0xff]
      %v4817 = vld [vmem:[%s804 + $0x218] sm:$0xff]
      %v4818 = vld [vmem:[%s804 + $0x220] sm:$0xff]
      %v4819 = vld [vmem:[%s804 + $0x228] sm:$0xff]
      %v4820 = vld [vmem:[%s804 + $0x230] sm:$0xff]
      %v4821 = vld [vmem:[%s804 + $0x238] sm:$0xff]
      %v4822 = vld [vmem:[%s804 + $0x240] sm:$0xff]
      %v4823 = vld [vmem:[%s804 + $0x248] sm:$0xff]
      %v4824 = vld [vmem:[%s804 + $0x250] sm:$0xff]
      %v4825 = vld [vmem:[%s804 + $0x258] sm:$0xff]
      %v4826 = vld [vmem:[%s804 + $0x260] sm:$0xff]
      %v4827 = vld [vmem:[%s804 + $0x268] sm:$0xff]
      %v4828 = vld [vmem:[%s804 + $0x270] sm:$0xff]
      %v4829 = vld [vmem:[%s804 + $0x278] sm:$0xff]
      %v4830 = vld [vmem:[%s804 + $0x280] sm:$0xff]
      %v4831 = vld [vmem:[%s804 + $0x288] sm:$0xff]
      %v4832 = vld [vmem:[%s804 + $0x290] sm:$0xff]
      %v4833 = vld [vmem:[%s804 + $0x298] sm:$0xff]
      %v4834 = vld [vmem:[%s804 + $0x2a0] sm:$0xff]
      %v4835 = vld [vmem:[%s804 + $0x2a8] sm:$0xff]
      %v4836 = vld [vmem:[%s804 + $0x2b0] sm:$0xff]
      %v4837 = vld [vmem:[%s804 + $0x2b8] sm:$0xff]
      %v4838 = vld [vmem:[%s804 + $0x2c0] sm:$0xff]
      %v4839 = vld [vmem:[%s804 + $0x2c8] sm:$0xff]
      %v4840 = vld [vmem:[%s804 + $0x2d0] sm:$0xff]
      %v4841 = vld [vmem:[%s804 + $0x2d8] sm:$0xff]
      %v4842 = vld [vmem:[%s804 + $0x2e0] sm:$0xff]
      %v4843 = vld [vmem:[%s804 + $0x2e8] sm:$0xff]
      %v4844 = vld [vmem:[%s804 + $0x2f0] sm:$0xff]
      %v4845 = vld [vmem:[%s804 + $0x2f8] sm:$0xff]
      %v4846 = vld [vmem:[%s804 + $0x300] sm:$0xff]
      %v4847 = vld [vmem:[%s804 + $0x308] sm:$0xff]
      %v4848 = vld [vmem:[%s804 + $0x310] sm:$0xff]
      %v4849 = vld [vmem:[%s804 + $0x318] sm:$0xff]
      %v4850 = vld [vmem:[%s804 + $0x320] sm:$0xff]
      %v4851 = vld [vmem:[%s804 + $0x328] sm:$0xff]
      %v4852 = vld [vmem:[%s804 + $0x330] sm:$0xff]
      %v4853 = vld [vmem:[%s804 + $0x338] sm:$0xff]
      %v4854 = vld [vmem:[%s804 + $0x340] sm:$0xff]
      %v4855 = vld [vmem:[%s804 + $0x348] sm:$0xff]
      %v4856 = vld [vmem:[%s804 + $0x350] sm:$0xff]
      %v4857 = vld [vmem:[%s804 + $0x358] sm:$0xff]
      %v4858 = vld [vmem:[%s804 + $0x360] sm:$0xff]
      %v4859 = vld [vmem:[%s804 + $0x368] sm:$0xff]
      %v4860 = vld [vmem:[%s804 + $0x370] sm:$0xff]
      %v4861 = vld [vmem:[%s804 + $0x378] sm:$0xff]
      %v4862 = vld [vmem:[%s804 + $0x380] sm:$0xff]
      %v4863 = vld [vmem:[%s804 + $0x388] sm:$0xff]
      %v4864 = vld [vmem:[%s804 + $0x390] sm:$0xff]
      %v4865 = vld [vmem:[%s804 + $0x398] sm:$0xff]
      %v4866 = vld [vmem:[%s804 + $0x3a0] sm:$0xff]
      %v4867 = vld [vmem:[%s804 + $0x3a8] sm:$0xff]
      %v4868 = vld [vmem:[%s804 + $0x3b0] sm:$0xff]
      %v4869 = vld [vmem:[%s804 + $0x3b8] sm:$0xff]
      %v4870 = vld [vmem:[%s804 + $0x3c0] sm:$0xff]
      %v4871 = vld [vmem:[%s804 + $0x3c8] sm:$0xff]
      %v4872 = vld [vmem:[%s804 + $0x3d0] sm:$0xff]
      %v4873 = vld [vmem:[%s804 + $0x3d8] sm:$0xff]
      %v4874 = vld [vmem:[%s804 + $0x3e0] sm:$0xff]
      %v4875 = vld [vmem:[%s804 + $0x3e8] sm:$0xff]
      %v4876 = vld [vmem:[%s804 + $0x3f0] sm:$0xff]
      %v4877 = vld [vmem:[%s804 + $0x3f8] sm:$0xff]
      %v4878 = vld [vmem:[%s832] sm:$0xf]
      %v4880 = vlaneseq
      %v4881 = vshrl.u32 %v4880, 7
      %v4882 = vsub.s32 0, %v4881
      %v4883 = vrot.slane %v4878, %v4882
      %v4884 = vlaneseq
      %v4885 = vshrl.u32 %v4884, 7
      %v4886 = vsub.s32 1, %v4885
      %v4887 = vrot.slane %v4878, %v4886
      %v4888 = vlaneseq
      %v4889 = vshrl.u32 %v4888, 7
      %v4890 = vsub.s32 2, %v4889
      %v4891 = vrot.slane %v4878, %v4890
      %v4892 = vlaneseq
      %v4893 = vshrl.u32 %v4892, 7
      %v4894 = vsub.s32 3, %v4893
      %v4895 = vrot.slane %v4878, %v4894
      %v5028 = vunpack.c.l.b16 %v4750
      %v5029 = vunpack.c.h.b16 %v4750
      %v5030 = vunpack.c.l.b16 %v4751
      %v5031 = vunpack.c.h.b16 %v4751
      %v5032 = vunpack.c.l.b16 %v4752
      %v5033 = vunpack.c.h.b16 %v4752
      %v5034 = vunpack.c.l.b16 %v4753
      %v5035 = vunpack.c.h.b16 %v4753
      %v5036 = vunpack.c.l.b16 %v4754
      %v5037 = vunpack.c.h.b16 %v4754
      %v5038 = vunpack.c.l.b16 %v4755
      %v5039 = vunpack.c.h.b16 %v4755
      %v5040 = vunpack.c.l.b16 %v4756
      %v5041 = vunpack.c.h.b16 %v4756
      %v5042 = vunpack.c.l.b16 %v4757
      %v5043 = vunpack.c.h.b16 %v4757
      %v5044 = vunpack.c.l.b16 %v4758
      %v5045 = vunpack.c.h.b16 %v4758
      %v5046 = vunpack.c.l.b16 %v4759
      %v5047 = vunpack.c.h.b16 %v4759
      %v5048 = vunpack.c.l.b16 %v4760
      %v5049 = vunpack.c.h.b16 %v4760
      %v5050 = vunpack.c.l.b16 %v4761
      %v5051 = vunpack.c.h.b16 %v4761
      %v5052 = vunpack.c.l.b16 %v4762
      %v5053 = vunpack.c.h.b16 %v4762
      %v5054 = vunpack.c.l.b16 %v4763
      %v5055 = vunpack.c.h.b16 %v4763
      %v5056 = vunpack.c.l.b16 %v4764
      %v5057 = vunpack.c.h.b16 %v4764
      %v5058 = vunpack.c.l.b16 %v4765
      %v5059 = vunpack.c.h.b16 %v4765
      %v5060 = vunpack.c.l.b16 %v4766
      %v5061 = vunpack.c.h.b16 %v4766
      %v5062 = vunpack.c.l.b16 %v4767
      %v5063 = vunpack.c.h.b16 %v4767
      %v5064 = vunpack.c.l.b16 %v4768
      %v5065 = vunpack.c.h.b16 %v4768
      %v5066 = vunpack.c.l.b16 %v4769
      %v5067 = vunpack.c.h.b16 %v4769
      %v5068 = vunpack.c.l.b16 %v4770
      %v5069 = vunpack.c.h.b16 %v4770
      %v5070 = vunpack.c.l.b16 %v4771
      %v5071 = vunpack.c.h.b16 %v4771
      %v5072 = vunpack.c.l.b16 %v4772
      %v5073 = vunpack.c.h.b16 %v4772
      %v5074 = vunpack.c.l.b16 %v4773
      %v5075 = vunpack.c.h.b16 %v4773
      %v5076 = vunpack.c.l.b16 %v4774
      %v5077 = vunpack.c.h.b16 %v4774
      %v5078 = vunpack.c.l.b16 %v4775
      %v5079 = vunpack.c.h.b16 %v4775
      %v5080 = vunpack.c.l.b16 %v4776
      %v5081 = vunpack.c.h.b16 %v4776
      %v5082 = vunpack.c.l.b16 %v4777
      %v5083 = vunpack.c.h.b16 %v4777
      %v5084 = vunpack.c.l.b16 %v4778
      %v5085 = vunpack.c.h.b16 %v4778
      %v5086 = vunpack.c.l.b16 %v4779
      %v5087 = vunpack.c.h.b16 %v4779
      %v5088 = vunpack.c.l.b16 %v4780
      %v5089 = vunpack.c.h.b16 %v4780
      %v5090 = vunpack.c.l.b16 %v4781
      %v5091 = vunpack.c.h.b16 %v4781
      %v5092 = vunpack.c.l.b16 %v4782
      %v5093 = vunpack.c.h.b16 %v4782
      %v5094 = vunpack.c.l.b16 %v4783
      %v5095 = vunpack.c.h.b16 %v4783
      %v5096 = vunpack.c.l.b16 %v4784
      %v5097 = vunpack.c.h.b16 %v4784
      %v5098 = vunpack.c.l.b16 %v4785
      %v5099 = vunpack.c.h.b16 %v4785
      %v5100 = vunpack.c.l.b16 %v4786
      %v5101 = vunpack.c.h.b16 %v4786
      %v5102 = vunpack.c.l.b16 %v4787
      %v5103 = vunpack.c.h.b16 %v4787
      %v5104 = vunpack.c.l.b16 %v4788
      %v5105 = vunpack.c.h.b16 %v4788
      %v5106 = vunpack.c.l.b16 %v4789
      %v5107 = vunpack.c.h.b16 %v4789
      %v5108 = vunpack.c.l.b16 %v4790
      %v5109 = vunpack.c.h.b16 %v4790
      %v5110 = vunpack.c.l.b16 %v4791
      %v5111 = vunpack.c.h.b16 %v4791
      %v5112 = vunpack.c.l.b16 %v4792
      %v5113 = vunpack.c.h.b16 %v4792
      %v5114 = vunpack.c.l.b16 %v4793
      %v5115 = vunpack.c.h.b16 %v4793
      %v5116 = vunpack.c.l.b16 %v4794
      %v5117 = vunpack.c.h.b16 %v4794
      %v5118 = vunpack.c.l.b16 %v4795
      %v5119 = vunpack.c.h.b16 %v4795
      %v5120 = vunpack.c.l.b16 %v4796
      %v5121 = vunpack.c.h.b16 %v4796
      %v5122 = vunpack.c.l.b16 %v4797
      %v5123 = vunpack.c.h.b16 %v4797
      %v5124 = vunpack.c.l.b16 %v4798
      %v5125 = vunpack.c.h.b16 %v4798
      %v5126 = vunpack.c.l.b16 %v4799
      %v5127 = vunpack.c.h.b16 %v4799
      %v5128 = vunpack.c.l.b16 %v4800
      %v5129 = vunpack.c.h.b16 %v4800
      %v5130 = vunpack.c.l.b16 %v4801
      %v5131 = vunpack.c.h.b16 %v4801
      %v5132 = vunpack.c.l.b16 %v4802
      %v5133 = vunpack.c.h.b16 %v4802
      %v5134 = vunpack.c.l.b16 %v4803
      %v5135 = vunpack.c.h.b16 %v4803
      %v5136 = vunpack.c.l.b16 %v4804
      %v5137 = vunpack.c.h.b16 %v4804
      %v5138 = vunpack.c.l.b16 %v4805
      %v5139 = vunpack.c.h.b16 %v4805
      %v5140 = vunpack.c.l.b16 %v4806
      %v5141 = vunpack.c.h.b16 %v4806
      %v5142 = vunpack.c.l.b16 %v4807
      %v5143 = vunpack.c.h.b16 %v4807
      %v5144 = vunpack.c.l.b16 %v4808
      %v5145 = vunpack.c.h.b16 %v4808
      %v5146 = vunpack.c.l.b16 %v4809
      %v5147 = vunpack.c.h.b16 %v4809
      %v5148 = vunpack.c.l.b16 %v4810
      %v5149 = vunpack.c.h.b16 %v4810
      %v5150 = vunpack.c.l.b16 %v4811
      %v5151 = vunpack.c.h.b16 %v4811
      %v5152 = vunpack.c.l.b16 %v4812
      %v5153 = vunpack.c.h.b16 %v4812
      %v5154 = vunpack.c.l.b16 %v4813
      %v5155 = vunpack.c.h.b16 %v4813
      %v5156 = vunpack.c.l.b16 %v4814
      %v5157 = vunpack.c.h.b16 %v4814
      %v5158 = vunpack.c.l.b16 %v4815
      %v5159 = vunpack.c.h.b16 %v4815
      %v5160 = vunpack.c.l.b16 %v4816
      %v5161 = vunpack.c.h.b16 %v4816
      %v5162 = vunpack.c.l.b16 %v4817
      %v5163 = vunpack.c.h.b16 %v4817
      %v5164 = vunpack.c.l.b16 %v4818
      %v5165 = vunpack.c.h.b16 %v4818
      %v5166 = vunpack.c.l.b16 %v4819
      %v5167 = vunpack.c.h.b16 %v4819
      %v5168 = vunpack.c.l.b16 %v4820
      %v5169 = vunpack.c.h.b16 %v4820
      %v5170 = vunpack.c.l.b16 %v4821
      %v5171 = vunpack.c.h.b16 %v4821
      %v5172 = vunpack.c.l.b16 %v4822
      %v5173 = vunpack.c.h.b16 %v4822
      %v5174 = vunpack.c.l.b16 %v4823
      %v5175 = vunpack.c.h.b16 %v4823
      %v5176 = vunpack.c.l.b16 %v4824
      %v5177 = vunpack.c.h.b16 %v4824
      %v5178 = vunpack.c.l.b16 %v4825
      %v5179 = vunpack.c.h.b16 %v4825
      %v5180 = vunpack.c.l.b16 %v4826
      %v5181 = vunpack.c.h.b16 %v4826
      %v5182 = vunpack.c.l.b16 %v4827
      %v5183 = vunpack.c.h.b16 %v4827
      %v5184 = vunpack.c.l.b16 %v4828
      %v5185 = vunpack.c.h.b16 %v4828
      %v5186 = vunpack.c.l.b16 %v4829
      %v5187 = vunpack.c.h.b16 %v4829
      %v5188 = vunpack.c.l.b16 %v4830
      %v5189 = vunpack.c.h.b16 %v4830
      %v5190 = vunpack.c.l.b16 %v4831
      %v5191 = vunpack.c.h.b16 %v4831
      %v5192 = vunpack.c.l.b16 %v4832
      %v5193 = vunpack.c.h.b16 %v4832
      %v5194 = vunpack.c.l.b16 %v4833
      %v5195 = vunpack.c.h.b16 %v4833
      %v5196 = vunpack.c.l.b16 %v4834
      %v5197 = vunpack.c.h.b16 %v4834
      %v5198 = vunpack.c.l.b16 %v4835
      %v5199 = vunpack.c.h.b16 %v4835
      %v5200 = vunpack.c.l.b16 %v4836
      %v5201 = vunpack.c.h.b16 %v4836
      %v5202 = vunpack.c.l.b16 %v4837
      %v5203 = vunpack.c.h.b16 %v4837
      %v5204 = vunpack.c.l.b16 %v4838
      %v5205 = vunpack.c.h.b16 %v4838
      %v5206 = vunpack.c.l.b16 %v4839
      %v5207 = vunpack.c.h.b16 %v4839
      %v5208 = vunpack.c.l.b16 %v4840
      %v5209 = vunpack.c.h.b16 %v4840
      %v5210 = vunpack.c.l.b16 %v4841
      %v5211 = vunpack.c.h.b16 %v4841
      %v5212 = vunpack.c.l.b16 %v4842
      %v5213 = vunpack.c.h.b16 %v4842
      %v5214 = vunpack.c.l.b16 %v4843
      %v5215 = vunpack.c.h.b16 %v4843
      %v5216 = vunpack.c.l.b16 %v4844
      %v5217 = vunpack.c.h.b16 %v4844
      %v5218 = vunpack.c.l.b16 %v4845
      %v5219 = vunpack.c.h.b16 %v4845
      %v5220 = vunpack.c.l.b16 %v4846
      %v5221 = vunpack.c.h.b16 %v4846
      %v5222 = vunpack.c.l.b16 %v4847
      %v5223 = vunpack.c.h.b16 %v4847
      %v5224 = vunpack.c.l.b16 %v4848
      %v5225 = vunpack.c.h.b16 %v4848
      %v5226 = vunpack.c.l.b16 %v4849
      %v5227 = vunpack.c.h.b16 %v4849
      %v5228 = vunpack.c.l.b16 %v4850
      %v5229 = vunpack.c.h.b16 %v4850
      %v5230 = vunpack.c.l.b16 %v4851
      %v5231 = vunpack.c.h.b16 %v4851
      %v5232 = vunpack.c.l.b16 %v4852
      %v5233 = vunpack.c.h.b16 %v4852
      %v5234 = vunpack.c.l.b16 %v4853
      %v5235 = vunpack.c.h.b16 %v4853
      %v5236 = vunpack.c.l.b16 %v4854
      %v5237 = vunpack.c.h.b16 %v4854
      %v5238 = vunpack.c.l.b16 %v4855
      %v5239 = vunpack.c.h.b16 %v4855
      %v5240 = vunpack.c.l.b16 %v4856
      %v5241 = vunpack.c.h.b16 %v4856
      %v5242 = vunpack.c.l.b16 %v4857
      %v5243 = vunpack.c.h.b16 %v4857
      %v5244 = vunpack.c.l.b16 %v4858
      %v5245 = vunpack.c.h.b16 %v4858
      %v5246 = vunpack.c.l.b16 %v4859
      %v5247 = vunpack.c.h.b16 %v4859
      %v5248 = vunpack.c.l.b16 %v4860
      %v5249 = vunpack.c.h.b16 %v4860
      %v5250 = vunpack.c.l.b16 %v4861
      %v5251 = vunpack.c.h.b16 %v4861
      %v5252 = vunpack.c.l.b16 %v4862
      %v5253 = vunpack.c.h.b16 %v4862
      %v5254 = vunpack.c.l.b16 %v4863
      %v5255 = vunpack.c.h.b16 %v4863
      %v5256 = vunpack.c.l.b16 %v4864
      %v5257 = vunpack.c.h.b16 %v4864
      %v5258 = vunpack.c.l.b16 %v4865
      %v5259 = vunpack.c.h.b16 %v4865
      %v5260 = vunpack.c.l.b16 %v4866
      %v5261 = vunpack.c.h.b16 %v4866
      %v5262 = vunpack.c.l.b16 %v4867
      %v5263 = vunpack.c.h.b16 %v4867
      %v5264 = vunpack.c.l.b16 %v4868
      %v5265 = vunpack.c.h.b16 %v4868
      %v5266 = vunpack.c.l.b16 %v4869
      %v5267 = vunpack.c.h.b16 %v4869
      %v5268 = vunpack.c.l.b16 %v4870
      %v5269 = vunpack.c.h.b16 %v4870
      %v5270 = vunpack.c.l.b16 %v4871
      %v5271 = vunpack.c.h.b16 %v4871
      %v5272 = vunpack.c.l.b16 %v4872
      %v5273 = vunpack.c.h.b16 %v4872
      %v5274 = vunpack.c.l.b16 %v4873
      %v5275 = vunpack.c.h.b16 %v4873
      %v5276 = vunpack.c.l.b16 %v4874
      %v5277 = vunpack.c.h.b16 %v4874
      %v5278 = vunpack.c.l.b16 %v4875
      %v5279 = vunpack.c.h.b16 %v4875
      %v5280 = vunpack.c.l.b16 %v4876
      %v5281 = vunpack.c.h.b16 %v4876
      %v5282 = vunpack.c.l.b16 %v4877
      %v5283 = vunpack.c.h.b16 %v4877
      %v5284 = vpack.c.b16 %v5032, %v5028
      %v5285 = vpack.c.b16 %v5033, %v5029
      %v5286 = vpack.c.b16 %v5034, %v5030
      %v5287 = vpack.c.b16 %v5035, %v5031
      %v5288 = vpack.c.b16 %v5040, %v5036
      %v5289 = vpack.c.b16 %v5041, %v5037
      %v5290 = vpack.c.b16 %v5042, %v5038
      %v5291 = vpack.c.b16 %v5043, %v5039
      %v5292 = vpack.c.b16 %v5048, %v5044
      %v5293 = vpack.c.b16 %v5049, %v5045
      %v5294 = vpack.c.b16 %v5050, %v5046
      %v5295 = vpack.c.b16 %v5051, %v5047
      %v5296 = vpack.c.b16 %v5056, %v5052
      %v5297 = vpack.c.b16 %v5057, %v5053
      %v5298 = vpack.c.b16 %v5058, %v5054
      %v5299 = vpack.c.b16 %v5059, %v5055
      %v5300 = vpack.c.b16 %v5064, %v5060
      %v5301 = vpack.c.b16 %v5065, %v5061
      %v5302 = vpack.c.b16 %v5066, %v5062
      %v5303 = vpack.c.b16 %v5067, %v5063
      %v5304 = vpack.c.b16 %v5072, %v5068
      %v5305 = vpack.c.b16 %v5073, %v5069
      %v5306 = vpack.c.b16 %v5074, %v5070
      %v5307 = vpack.c.b16 %v5075, %v5071
      %v5308 = vpack.c.b16 %v5080, %v5076
      %v5309 = vpack.c.b16 %v5081, %v5077
      %v5310 = vpack.c.b16 %v5082, %v5078
      %v5311 = vpack.c.b16 %v5083, %v5079
      %v5312 = vpack.c.b16 %v5088, %v5084
      %v5313 = vpack.c.b16 %v5089, %v5085
      %v5314 = vpack.c.b16 %v5090, %v5086
      %v5315 = vpack.c.b16 %v5091, %v5087
      %v5316 = vpack.c.b16 %v5096, %v5092
      %v5317 = vpack.c.b16 %v5097, %v5093
      %v5318 = vpack.c.b16 %v5098, %v5094
      %v5319 = vpack.c.b16 %v5099, %v5095
      %v5320 = vpack.c.b16 %v5104, %v5100
      %v5321 = vpack.c.b16 %v5105, %v5101
      %v5322 = vpack.c.b16 %v5106, %v5102
      %v5323 = vpack.c.b16 %v5107, %v5103
      %v5324 = vpack.c.b16 %v5112, %v5108
      %v5325 = vpack.c.b16 %v5113, %v5109
      %v5326 = vpack.c.b16 %v5114, %v5110
      %v5327 = vpack.c.b16 %v5115, %v5111
      %v5328 = vpack.c.b16 %v5120, %v5116
      %v5329 = vpack.c.b16 %v5121, %v5117
      %v5330 = vpack.c.b16 %v5122, %v5118
      %v5331 = vpack.c.b16 %v5123, %v5119
      %v5332 = vpack.c.b16 %v5128, %v5124
      %v5333 = vpack.c.b16 %v5129, %v5125
      %v5334 = vpack.c.b16 %v5130, %v5126
      %v5335 = vpack.c.b16 %v5131, %v5127
      %v5336 = vpack.c.b16 %v5136, %v5132
      %v5337 = vpack.c.b16 %v5137, %v5133
      %v5338 = vpack.c.b16 %v5138, %v5134
      %v5339 = vpack.c.b16 %v5139, %v5135
      %v5340 = vpack.c.b16 %v5144, %v5140
      %v5341 = vpack.c.b16 %v5145, %v5141
      %v5342 = vpack.c.b16 %v5146, %v5142
      %v5343 = vpack.c.b16 %v5147, %v5143
      %v5344 = vpack.c.b16 %v5152, %v5148
      %v5345 = vpack.c.b16 %v5153, %v5149
      %v5346 = vpack.c.b16 %v5154, %v5150
      %v5347 = vpack.c.b16 %v5155, %v5151
      %v5348 = vpack.c.b16 %v5160, %v5156
      %v5349 = vpack.c.b16 %v5161, %v5157
      %v5350 = vpack.c.b16 %v5162, %v5158
      %v5351 = vpack.c.b16 %v5163, %v5159
      %v5352 = vpack.c.b16 %v5168, %v5164
      %v5353 = vpack.c.b16 %v5169, %v5165
      %v5354 = vpack.c.b16 %v5170, %v5166
      %v5355 = vpack.c.b16 %v5171, %v5167
      %v5356 = vpack.c.b16 %v5176, %v5172
      %v5357 = vpack.c.b16 %v5177, %v5173
      %v5358 = vpack.c.b16 %v5178, %v5174
      %v5359 = vpack.c.b16 %v5179, %v5175
      %v5360 = vpack.c.b16 %v5184, %v5180
      %v5361 = vpack.c.b16 %v5185, %v5181
      %v5362 = vpack.c.b16 %v5186, %v5182
      %v5363 = vpack.c.b16 %v5187, %v5183
      %v5364 = vpack.c.b16 %v5192, %v5188
      %v5365 = vpack.c.b16 %v5193, %v5189
      %v5366 = vpack.c.b16 %v5194, %v5190
      %v5367 = vpack.c.b16 %v5195, %v5191
      %v5368 = vpack.c.b16 %v5200, %v5196
      %v5369 = vpack.c.b16 %v5201, %v5197
      %v5370 = vpack.c.b16 %v5202, %v5198
      %v5371 = vpack.c.b16 %v5203, %v5199
      %v5372 = vpack.c.b16 %v5208, %v5204
      %v5373 = vpack.c.b16 %v5209, %v5205
      %v5374 = vpack.c.b16 %v5210, %v5206
      %v5375 = vpack.c.b16 %v5211, %v5207
      %v5376 = vpack.c.b16 %v5216, %v5212
      %v5377 = vpack.c.b16 %v5217, %v5213
      %v5378 = vpack.c.b16 %v5218, %v5214
      %v5379 = vpack.c.b16 %v5219, %v5215
      %v5380 = vpack.c.b16 %v5224, %v5220
      %v5381 = vpack.c.b16 %v5225, %v5221
      %v5382 = vpack.c.b16 %v5226, %v5222
      %v5383 = vpack.c.b16 %v5227, %v5223
      %v5384 = vpack.c.b16 %v5232, %v5228
      %v5385 = vpack.c.b16 %v5233, %v5229
      %v5386 = vpack.c.b16 %v5234, %v5230
      %v5387 = vpack.c.b16 %v5235, %v5231
      %v5388 = vpack.c.b16 %v5240, %v5236
      %v5389 = vpack.c.b16 %v5241, %v5237
      %v5390 = vpack.c.b16 %v5242, %v5238
      %v5391 = vpack.c.b16 %v5243, %v5239
      %v5392 = vpack.c.b16 %v5248, %v5244
      %v5393 = vpack.c.b16 %v5249, %v5245
      %v5394 = vpack.c.b16 %v5250, %v5246
      %v5395 = vpack.c.b16 %v5251, %v5247
      %v5396 = vpack.c.b16 %v5256, %v5252
      %v5397 = vpack.c.b16 %v5257, %v5253
      %v5398 = vpack.c.b16 %v5258, %v5254
      %v5399 = vpack.c.b16 %v5259, %v5255
      %v5400 = vpack.c.b16 %v5264, %v5260
      %v5401 = vpack.c.b16 %v5265, %v5261
      %v5402 = vpack.c.b16 %v5266, %v5262
      %v5403 = vpack.c.b16 %v5267, %v5263
      %v5404 = vpack.c.b16 %v5272, %v5268
      %v5405 = vpack.c.b16 %v5273, %v5269
      %v5406 = vpack.c.b16 %v5274, %v5270
      %v5407 = vpack.c.b16 %v5275, %v5271
      %v5408 = vpack.c.b16 %v5280, %v5276
      %v5409 = vpack.c.b16 %v5281, %v5277
      %v5410 = vpack.c.b16 %v5282, %v5278
      %v5411 = vpack.c.b16 %v5283, %v5279
      %5540 = vmatprep.subr.bf16.mxu0 %v5285
      %5541 = vmatpush1.bf16.msra.mxu0 %v5284
      %5542 = vmatprep.subr.bf16.mxu0 %v5289
      %5543 = vmatpush1.bf16.msra.mxu0 %v5288
      %5544 = vmatprep.subr.bf16.mxu0 %v5293
      %5545 = vmatpush1.bf16.msra.mxu0 %v5292
      %5546 = vmatprep.subr.bf16.mxu0 %v5297
      %5547 = vmatpush1.bf16.msra.mxu0 %v5296
      %5548 = vmatprep.subr.bf16.mxu0 %v5301
      %5549 = vmatpush1.bf16.msra.mxu0 %v5300
      %5550 = vmatprep.subr.bf16.mxu0 %v5305
      %5551 = vmatpush1.bf16.msra.mxu0 %v5304
      %5552 = vmatprep.subr.bf16.mxu0 %v5309
      %5553 = vmatpush1.bf16.msra.mxu0 %v5308
      %5554 = vmatprep.subr.bf16.mxu0 %v5313
      %5555 = vmatpush1.bf16.msra.mxu0 %v5312
      %5556 = vmatprep.subr.bf16.mxu0 %v5317
      %5557 = vmatpush1.bf16.msra.mxu0 %v5316
      %5558 = vmatprep.subr.bf16.mxu0 %v5321
      %5559 = vmatpush1.bf16.msra.mxu0 %v5320
      %5560 = vmatprep.subr.bf16.mxu0 %v5325
      %5561 = vmatpush1.bf16.msra.mxu0 %v5324
      %5562 = vmatprep.subr.bf16.mxu0 %v5329
      %5563 = vmatpush1.bf16.msra.mxu0 %v5328
      %5564 = vmatprep.subr.bf16.mxu0 %v5333
      %5565 = vmatpush1.bf16.msra.mxu0 %v5332
      %5566 = vmatprep.subr.bf16.mxu0 %v5337
      %5567 = vmatpush1.bf16.msra.mxu0 %v5336
      %5568 = vmatprep.subr.bf16.mxu0 %v5341
      %5569 = vmatpush1.bf16.msra.mxu0 %v5340
      %5570 = vmatprep.subr.bf16.mxu0 %v5345
      %5571 = vmatpush1.bf16.msra.mxu0 %v5344
      %5572 = vmatprep.mubr.bf16.mxu0 %v4747
      %5573 = vmatmul.mubr.bf16.gmra.mrb[0].mxu0 %v4746
      %v5574 = vpop.f32.mrb[0].mxu0
      %v5575 = vadd.f32 %v4883, %v5574
      %v5576 = vpop.f32.mrb[0].mxu0
      %v5577 = vadd.f32 %v4887, %v5576
      %v5578 = vpop.f32.mrb[0].mxu0
      %v5579 = vpop.f32.mrb[0].mxu0
      %5580 = vdwg.mxu0
      %5581 = vmatprep.subr.bf16.mxu0 %v5349
      %5582 = vmatpush1.bf16.msra.mxu0 %v5348
      %5583 = vmatprep.subr.bf16.mxu0 %v5353
      %5584 = vmatpush1.bf16.msra.mxu0 %v5352
      %5585 = vmatprep.subr.bf16.mxu0 %v5357
      %5586 = vmatpush1.bf16.msra.mxu0 %v5356
      %5587 = vmatprep.subr.bf16.mxu0 %v5361
      %5588 = vmatpush1.bf16.msra.mxu0 %v5360
      %5589 = vmatprep.subr.bf16.mxu0 %v5365
      %5590 = vmatpush1.bf16.msra.mxu0 %v5364
      %5591 = vmatprep.subr.bf16.mxu0 %v5369
      %5592 = vmatpush1.bf16.msra.mxu0 %v5368
      %5593 = vmatprep.subr.bf16.mxu0 %v5373
      %5594 = vmatpush1.bf16.msra.mxu0 %v5372
      %5595 = vmatprep.subr.bf16.mxu0 %v5377
      %5596 = vmatpush1.bf16.msra.mxu0 %v5376
      %5597 = vmatprep.subr.bf16.mxu0 %v5381
      %5598 = vmatpush1.bf16.msra.mxu0 %v5380
      %5599 = vmatprep.subr.bf16.mxu0 %v5385
      %5600 = vmatpush1.bf16.msra.mxu0 %v5384
      %5601 = vmatprep.subr.bf16.mxu0 %v5389
      %5602 = vmatpush1.bf16.msra.mxu0 %v5388
      %5603 = vmatprep.subr.bf16.mxu0 %v5393
      %5604 = vmatpush1.bf16.msra.mxu0 %v5392
      %5605 = vmatprep.subr.bf16.mxu0 %v5397
      %5606 = vmatpush1.bf16.msra.mxu0 %v5396
      %5607 = vmatprep.subr.bf16.mxu0 %v5401
      %5608 = vmatpush1.bf16.msra.mxu0 %v5400
      %5609 = vmatprep.subr.bf16.mxu0 %v5405
      %5610 = vmatpush1.bf16.msra.mxu0 %v5404
      %5611 = vmatprep.subr.bf16.mxu0 %v5409
      %5612 = vmatpush1.bf16.msra.mxu0 %v5408
      %5613 = vmatprep.mubr.bf16.mxu0 %v4749
      %5614 = vmatmul.mubr.bf16.gmra.mrb[0].mxu0 %v4748
      %v5615 = vpop.f32.mrb[0].mxu0
      %v5616 = vadd.f32 %v5575, %v5615
      %v5617 = vpop.f32.mrb[0].mxu0
      %v5618 = vadd.f32 %v5577, %v5617
      %v5619 = vpop.f32.mrb[0].mxu0
      %v5620 = vpop.f32.mrb[0].mxu0
      %5621 = vdwg.mxu0
      %5622 = vmatprep.subr.bf16.mxu0 %v5287
      %5623 = vmatpush1.bf16.msra.mxu0 %v5286
      %5624 = vmatprep.subr.bf16.mxu0 %v5291
      %5625 = vmatpush1.bf16.msra.mxu0 %v5290
      %5626 = vmatprep.subr.bf16.mxu0 %v5295
      %5627 = vmatpush1.bf16.msra.mxu0 %v5294
      %5628 = vmatprep.subr.bf16.mxu0 %v5299
      %5629 = vmatpush1.bf16.msra.mxu0 %v5298
      %5630 = vmatprep.subr.bf16.mxu0 %v5303
      %5631 = vmatpush1.bf16.msra.mxu0 %v5302
      %5632 = vmatprep.subr.bf16.mxu0 %v5307
      %5633 = vmatpush1.bf16.msra.mxu0 %v5306
      %5634 = vmatprep.subr.bf16.mxu0 %v5311
      %5635 = vmatpush1.bf16.msra.mxu0 %v5310
      %5636 = vmatprep.subr.bf16.mxu0 %v5315
      %5637 = vmatpush1.bf16.msra.mxu0 %v5314
      %5638 = vmatprep.subr.bf16.mxu0 %v5319
      %5639 = vmatpush1.bf16.msra.mxu0 %v5318
      %5640 = vmatprep.subr.bf16.mxu0 %v5323
      %5641 = vmatpush1.bf16.msra.mxu0 %v5322
      %5642 = vmatprep.subr.bf16.mxu0 %v5327
      %5643 = vmatpush1.bf16.msra.mxu0 %v5326
      %5644 = vmatprep.subr.bf16.mxu0 %v5331
      %5645 = vmatpush1.bf16.msra.mxu0 %v5330
      %5646 = vmatprep.subr.bf16.mxu0 %v5335
      %5647 = vmatpush1.bf16.msra.mxu0 %v5334
      %5648 = vmatprep.subr.bf16.mxu0 %v5339
      %5649 = vmatpush1.bf16.msra.mxu0 %v5338
      %5650 = vmatprep.subr.bf16.mxu0 %v5343
      %5651 = vmatpush1.bf16.msra.mxu0 %v5342
      %5652 = vmatprep.subr.bf16.mxu0 %v5347
      %5653 = vmatpush1.bf16.msra.mxu0 %v5346
      %5654 = vmatprep.mubr.bf16.mxu0 %v4747
      %5655 = vmatmul.mubr.bf16.gmra.mrb[0].mxu0 %v4746
      %v5656 = vpop.f32.mrb[0].mxu0
      %v5657 = vadd.f32 %v4891, %v5656
      %v5658 = vpop.f32.mrb[0].mxu0
      %v5659 = vadd.f32 %v4895, %v5658
      %v5660 = vpop.f32.mrb[0].mxu0
      %v5661 = vpop.f32.mrb[0].mxu0
      %5662 = vdwg.mxu0
      %5663 = vmatprep.subr.bf16.mxu0 %v5351
      %5664 = vmatpush1.bf16.msra.mxu0 %v5350
      %5665 = vmatprep.subr.bf16.mxu0 %v5355
      %5666 = vmatpush1.bf16.msra.mxu0 %v5354
      %5667 = vmatprep.subr.bf16.mxu0 %v5359
      %5668 = vmatpush1.bf16.msra.mxu0 %v5358
      %5669 = vmatprep.subr.bf16.mxu0 %v5363
      %5670 = vmatpush1.bf16.msra.mxu0 %v5362
      %5671 = vmatprep.subr.bf16.mxu0 %v5367
      %5672 = vmatpush1.bf16.msra.mxu0 %v5366
      %5673 = vmatprep.subr.bf16.mxu0 %v5371
      %5674 = vmatpush1.bf16.msra.mxu0 %v5370
      %5675 = vmatprep.subr.bf16.mxu0 %v5375
      %5676 = vmatpush1.bf16.msra.mxu0 %v5374
      %5677 = vmatprep.subr.bf16.mxu0 %v5379
      %5678 = vmatpush1.bf16.msra.mxu0 %v5378
      %5679 = vmatprep.subr.bf16.mxu0 %v5383
      %5680 = vmatpush1.bf16.msra.mxu0 %v5382
      %5681 = vmatprep.subr.bf16.mxu0 %v5387
      %5682 = vmatpush1.bf16.msra.mxu0 %v5386
      %5683 = vmatprep.subr.bf16.mxu0 %v5391
      %5684 = vmatpush1.bf16.msra.mxu0 %v5390
      %5685 = vmatprep.subr.bf16.mxu0 %v5395
      %5686 = vmatpush1.bf16.msra.mxu0 %v5394
      %5687 = vmatprep.subr.bf16.mxu0 %v5399
      %5688 = vmatpush1.bf16.msra.mxu0 %v5398
      %5689 = vmatprep.subr.bf16.mxu0 %v5403
      %5690 = vmatpush1.bf16.msra.mxu0 %v5402
      %5691 = vmatprep.subr.bf16.mxu0 %v5407
      %5692 = vmatpush1.bf16.msra.mxu0 %v5406
      %5693 = vmatprep.subr.bf16.mxu0 %v5411
      %5694 = vmatpush1.bf16.msra.mxu0 %v5410
      %5695 = vmatprep.mubr.bf16.mxu0 %v4749
      %5696 = vmatmul.mubr.bf16.gmra.mrb[0].mxu0 %v4748
      %v5697 = vpop.f32.mrb[0].mxu0
      %v5698 = vadd.f32 %v5657, %v5697
      %v5699 = vpop.f32.mrb[0].mxu0
      %v5700 = vadd.f32 %v5659, %v5699
      %v5701 = vpop.f32.mrb[0].mxu0
      %v5702 = vpop.f32.mrb[0].mxu0
      %5703 = vdwg.mxu0
      %v5704 = vmax.f32 %v5616, 0.0
      %v5705 = vmax.f32 %v5618, 0.0
      %v5706 = vmax.f32 %v5698, 0.0
      %v5707 = vmax.f32 %v5700, 0.0
      %v5708 = vpack.c.bf16 %v5704, %v5704
      %v5709 = vpack.c.bf16 %v5705, %v5705
      %v5710 = vpack.c.bf16 %v5706, %v5706
      %v5711 = vpack.c.bf16 %v5707, %v5707
      %v5712 = vld [vmem:[%s809] sm:$0xff]
      %v5713 = vld [vmem:[%s809 + $0x8] sm:$0xff]
      %v5714 = vld [vmem:[%s809 + $0x10] sm:$0xff]
      %v5715 = vld [vmem:[%s809 + $0x18] sm:$0xff]
      %v5716 = vld [vmem:[%s809 + $0x20] sm:$0xff]
      %v5717 = vld [vmem:[%s809 + $0x28] sm:$0xff]
      %v5718 = vld [vmem:[%s809 + $0x30] sm:$0xff]
      %v5719 = vld [vmem:[%s809 + $0x38] sm:$0xff]
      %v5720 = vld [vmem:[%s809 + $0x40] sm:$0xff]
      %v5721 = vld [vmem:[%s809 + $0x48] sm:$0xff]
      %v5722 = vld [vmem:[%s809 + $0x50] sm:$0xff]
      %v5723 = vld [vmem:[%s809 + $0x58] sm:$0xff]
      %v5724 = vld [vmem:[%s809 + $0x60] sm:$0xff]
      %v5725 = vld [vmem:[%s809 + $0x68] sm:$0xff]
      %v5726 = vld [vmem:[%s809 + $0x70] sm:$0xff]
      %v5727 = vld [vmem:[%s809 + $0x78] sm:$0xff]
      %v5728 = vld [vmem:[%s809 + $0x80] sm:$0xff]
      %v5729 = vld [vmem:[%s809 + $0x88] sm:$0xff]
      %v5730 = vld [vmem:[%s809 + $0x90] sm:$0xff]
      %v5731 = vld [vmem:[%s809 + $0x98] sm:$0xff]
      %v5732 = vld [vmem:[%s809 + $0xa0] sm:$0xff]
      %v5733 = vld [vmem:[%s809 + $0xa8] sm:$0xff]
      %v5734 = vld [vmem:[%s809 + $0xb0] sm:$0xff]
      %v5735 = vld [vmem:[%s809 + $0xb8] sm:$0xff]
      %v5736 = vld [vmem:[%s809 + $0xc0] sm:$0xff]
      %v5737 = vld [vmem:[%s809 + $0xc8] sm:$0xff]
      %v5738 = vld [vmem:[%s809 + $0xd0] sm:$0xff]
      %v5739 = vld [vmem:[%s809 + $0xd8] sm:$0xff]
      %v5740 = vld [vmem:[%s809 + $0xe0] sm:$0xff]
      %v5741 = vld [vmem:[%s809 + $0xe8] sm:$0xff]
      %v5742 = vld [vmem:[%s809 + $0xf0] sm:$0xff]
      %v5743 = vld [vmem:[%s809 + $0xf8] sm:$0xff]
      %v5744 = vld [vmem:[%s809 + $0x100] sm:$0xff]
      %v5745 = vld [vmem:[%s809 + $0x108] sm:$0xff]
      %v5746 = vld [vmem:[%s809 + $0x110] sm:$0xff]
      %v5747 = vld [vmem:[%s809 + $0x118] sm:$0xff]
      %v5748 = vld [vmem:[%s809 + $0x120] sm:$0xff]
      %v5749 = vld [vmem:[%s809 + $0x128] sm:$0xff]
      %v5750 = vld [vmem:[%s809 + $0x130] sm:$0xff]
      %v5751 = vld [vmem:[%s809 + $0x138] sm:$0xff]
      %v5752 = vld [vmem:[%s809 + $0x140] sm:$0xff]
      %v5753 = vld [vmem:[%s809 + $0x148] sm:$0xff]
      %v5754 = vld [vmem:[%s809 + $0x150] sm:$0xff]
      %v5755 = vld [vmem:[%s809 + $0x158] sm:$0xff]
      %v5756 = vld [vmem:[%s809 + $0x160] sm:$0xff]
      %v5757 = vld [vmem:[%s809 + $0x168] sm:$0xff]
      %v5758 = vld [vmem:[%s809 + $0x170] sm:$0xff]
      %v5759 = vld [vmem:[%s809 + $0x178] sm:$0xff]
      %v5760 = vld [vmem:[%s809 + $0x180] sm:$0xff]
      %v5761 = vld [vmem:[%s809 + $0x188] sm:$0xff]
      %v5762 = vld [vmem:[%s809 + $0x190] sm:$0xff]
      %v5763 = vld [vmem:[%s809 + $0x198] sm:$0xff]
      %v5764 = vld [vmem:[%s809 + $0x1a0] sm:$0xff]
      %v5765 = vld [vmem:[%s809 + $0x1a8] sm:$0xff]
      %v5766 = vld [vmem:[%s809 + $0x1b0] sm:$0xff]
      %v5767 = vld [vmem:[%s809 + $0x1b8] sm:$0xff]
      %v5768 = vld [vmem:[%s809 + $0x1c0] sm:$0xff]
      %v5769 = vld [vmem:[%s809 + $0x1c8] sm:$0xff]
      %v5770 = vld [vmem:[%s809 + $0x1d0] sm:$0xff]
      %v5771 = vld [vmem:[%s809 + $0x1d8] sm:$0xff]
      %v5772 = vld [vmem:[%s809 + $0x1e0] sm:$0xff]
      %v5773 = vld [vmem:[%s809 + $0x1e8] sm:$0xff]
      %v5774 = vld [vmem:[%s809 + $0x1f0] sm:$0xff]
      %v5775 = vld [vmem:[%s809 + $0x1f8] sm:$0xff]
      %v5776 = vld [vmem:[%s809 + $0x200] sm:$0xff]
      %v5777 = vld [vmem:[%s809 + $0x208] sm:$0xff]
      %v5778 = vld [vmem:[%s809 + $0x210] sm:$0xff]
      %v5779 = vld [vmem:[%s809 + $0x218] sm:$0xff]
      %v5780 = vld [vmem:[%s809 + $0x220] sm:$0xff]
      %v5781 = vld [vmem:[%s809 + $0x228] sm:$0xff]
      %v5782 = vld [vmem:[%s809 + $0x230] sm:$0xff]
      %v5783 = vld [vmem:[%s809 + $0x238] sm:$0xff]
      %v5784 = vld [vmem:[%s809 + $0x240] sm:$0xff]
      %v5785 = vld [vmem:[%s809 + $0x248] sm:$0xff]
      %v5786 = vld [vmem:[%s809 + $0x250] sm:$0xff]
      %v5787 = vld [vmem:[%s809 + $0x258] sm:$0xff]
      %v5788 = vld [vmem:[%s809 + $0x260] sm:$0xff]
      %v5789 = vld [vmem:[%s809 + $0x268] sm:$0xff]
      %v5790 = vld [vmem:[%s809 + $0x270] sm:$0xff]
      %v5791 = vld [vmem:[%s809 + $0x278] sm:$0xff]
      %v5792 = vld [vmem:[%s809 + $0x280] sm:$0xff]
      %v5793 = vld [vmem:[%s809 + $0x288] sm:$0xff]
      %v5794 = vld [vmem:[%s809 + $0x290] sm:$0xff]
      %v5795 = vld [vmem:[%s809 + $0x298] sm:$0xff]
      %v5796 = vld [vmem:[%s809 + $0x2a0] sm:$0xff]
      %v5797 = vld [vmem:[%s809 + $0x2a8] sm:$0xff]
      %v5798 = vld [vmem:[%s809 + $0x2b0] sm:$0xff]
      %v5799 = vld [vmem:[%s809 + $0x2b8] sm:$0xff]
      %v5800 = vld [vmem:[%s809 + $0x2c0] sm:$0xff]
      %v5801 = vld [vmem:[%s809 + $0x2c8] sm:$0xff]
      %v5802 = vld [vmem:[%s809 + $0x2d0] sm:$0xff]
      %v5803 = vld [vmem:[%s809 + $0x2d8] sm:$0xff]
      %v5804 = vld [vmem:[%s809 + $0x2e0] sm:$0xff]
      %v5805 = vld [vmem:[%s809 + $0x2e8] sm:$0xff]
      %v5806 = vld [vmem:[%s809 + $0x2f0] sm:$0xff]
      %v5807 = vld [vmem:[%s809 + $0x2f8] sm:$0xff]
      %v5808 = vld [vmem:[%s809 + $0x300] sm:$0xff]
      %v5809 = vld [vmem:[%s809 + $0x308] sm:$0xff]
      %v5810 = vld [vmem:[%s809 + $0x310] sm:$0xff]
      %v5811 = vld [vmem:[%s809 + $0x318] sm:$0xff]
      %v5812 = vld [vmem:[%s809 + $0x320] sm:$0xff]
      %v5813 = vld [vmem:[%s809 + $0x328] sm:$0xff]
      %v5814 = vld [vmem:[%s809 + $0x330] sm:$0xff]
      %v5815 = vld [vmem:[%s809 + $0x338] sm:$0xff]
      %v5816 = vld [vmem:[%s809 + $0x340] sm:$0xff]
      %v5817 = vld [vmem:[%s809 + $0x348] sm:$0xff]
      %v5818 = vld [vmem:[%s809 + $0x350] sm:$0xff]
      %v5819 = vld [vmem:[%s809 + $0x358] sm:$0xff]
      %v5820 = vld [vmem:[%s809 + $0x360] sm:$0xff]
      %v5821 = vld [vmem:[%s809 + $0x368] sm:$0xff]
      %v5822 = vld [vmem:[%s809 + $0x370] sm:$0xff]
      %v5823 = vld [vmem:[%s809 + $0x378] sm:$0xff]
      %v5824 = vld [vmem:[%s809 + $0x380] sm:$0xff]
      %v5825 = vld [vmem:[%s809 + $0x388] sm:$0xff]
      %v5826 = vld [vmem:[%s809 + $0x390] sm:$0xff]
      %v5827 = vld [vmem:[%s809 + $0x398] sm:$0xff]
      %v5828 = vld [vmem:[%s809 + $0x3a0] sm:$0xff]
      %v5829 = vld [vmem:[%s809 + $0x3a8] sm:$0xff]
      %v5830 = vld [vmem:[%s809 + $0x3b0] sm:$0xff]
      %v5831 = vld [vmem:[%s809 + $0x3b8] sm:$0xff]
      %v5832 = vld [vmem:[%s809 + $0x3c0] sm:$0xff]
      %v5833 = vld [vmem:[%s809 + $0x3c8] sm:$0xff]
      %v5834 = vld [vmem:[%s809 + $0x3d0] sm:$0xff]
      %v5835 = vld [vmem:[%s809 + $0x3d8] sm:$0xff]
      %v5836 = vld [vmem:[%s809 + $0x3e0] sm:$0xff]
      %v5837 = vld [vmem:[%s809 + $0x3e8] sm:$0xff]
      %v5838 = vld [vmem:[%s809 + $0x3f0] sm:$0xff]
      %v5839 = vld [vmem:[%s809 + $0x3f8] sm:$0xff]
      %v5840 = vld [vmem:[%s809 + $0x400] sm:$0xff]
      %v5841 = vld [vmem:[%s809 + $0x408] sm:$0xff]
      %v5842 = vld [vmem:[%s809 + $0x410] sm:$0xff]
      %v5843 = vld [vmem:[%s809 + $0x418] sm:$0xff]
      %v5844 = vld [vmem:[%s809 + $0x420] sm:$0xff]
      %v5845 = vld [vmem:[%s809 + $0x428] sm:$0xff]
      %v5846 = vld [vmem:[%s809 + $0x430] sm:$0xff]
      %v5847 = vld [vmem:[%s809 + $0x438] sm:$0xff]
      %v5848 = vld [vmem:[%s809 + $0x440] sm:$0xff]
      %v5849 = vld [vmem:[%s809 + $0x448] sm:$0xff]
      %v5850 = vld [vmem:[%s809 + $0x450] sm:$0xff]
      %v5851 = vld [vmem:[%s809 + $0x458] sm:$0xff]
      %v5852 = vld [vmem:[%s809 + $0x460] sm:$0xff]
      %v5853 = vld [vmem:[%s809 + $0x468] sm:$0xff]
      %v5854 = vld [vmem:[%s809 + $0x470] sm:$0xff]
      %v5855 = vld [vmem:[%s809 + $0x478] sm:$0xff]
      %v5856 = vld [vmem:[%s809 + $0x480] sm:$0xff]
      %v5857 = vld [vmem:[%s809 + $0x488] sm:$0xff]
      %v5858 = vld [vmem:[%s809 + $0x490] sm:$0xff]
      %v5859 = vld [vmem:[%s809 + $0x498] sm:$0xff]
      %v5860 = vld [vmem:[%s809 + $0x4a0] sm:$0xff]
      %v5861 = vld [vmem:[%s809 + $0x4a8] sm:$0xff]
      %v5862 = vld [vmem:[%s809 + $0x4b0] sm:$0xff]
      %v5863 = vld [vmem:[%s809 + $0x4b8] sm:$0xff]
      %v5864 = vld [vmem:[%s809 + $0x4c0] sm:$0xff]
      %v5865 = vld [vmem:[%s809 + $0x4c8] sm:$0xff]
      %v5866 = vld [vmem:[%s809 + $0x4d0] sm:$0xff]
      %v5867 = vld [vmem:[%s809 + $0x4d8] sm:$0xff]
      %v5868 = vld [vmem:[%s809 + $0x4e0] sm:$0xff]
      %v5869 = vld [vmem:[%s809 + $0x4e8] sm:$0xff]
      %v5870 = vld [vmem:[%s809 + $0x4f0] sm:$0xff]
      %v5871 = vld [vmem:[%s809 + $0x4f8] sm:$0xff]
      %v5872 = vld [vmem:[%s809 + $0x500] sm:$0xff]
      %v5873 = vld [vmem:[%s809 + $0x508] sm:$0xff]
      %v5874 = vld [vmem:[%s809 + $0x510] sm:$0xff]
      %v5875 = vld [vmem:[%s809 + $0x518] sm:$0xff]
      %v5876 = vld [vmem:[%s809 + $0x520] sm:$0xff]
      %v5877 = vld [vmem:[%s809 + $0x528] sm:$0xff]
      %v5878 = vld [vmem:[%s809 + $0x530] sm:$0xff]
      %v5879 = vld [vmem:[%s809 + $0x538] sm:$0xff]
      %v5880 = vld [vmem:[%s809 + $0x540] sm:$0xff]
      %v5881 = vld [vmem:[%s809 + $0x548] sm:$0xff]
      %v5882 = vld [vmem:[%s809 + $0x550] sm:$0xff]
      %v5883 = vld [vmem:[%s809 + $0x558] sm:$0xff]
      %v5884 = vld [vmem:[%s809 + $0x560] sm:$0xff]
      %v5885 = vld [vmem:[%s809 + $0x568] sm:$0xff]
      %v5886 = vld [vmem:[%s809 + $0x570] sm:$0xff]
      %v5887 = vld [vmem:[%s809 + $0x578] sm:$0xff]
      %v5888 = vld [vmem:[%s809 + $0x580] sm:$0xff]
      %v5889 = vld [vmem:[%s809 + $0x588] sm:$0xff]
      %v5890 = vld [vmem:[%s809 + $0x590] sm:$0xff]
      %v5891 = vld [vmem:[%s809 + $0x598] sm:$0xff]
      %v5892 = vld [vmem:[%s809 + $0x5a0] sm:$0xff]
      %v5893 = vld [vmem:[%s809 + $0x5a8] sm:$0xff]
      %v5894 = vld [vmem:[%s809 + $0x5b0] sm:$0xff]
      %v5895 = vld [vmem:[%s809 + $0x5b8] sm:$0xff]
      %v5896 = vld [vmem:[%s809 + $0x5c0] sm:$0xff]
      %v5897 = vld [vmem:[%s809 + $0x5c8] sm:$0xff]
      %v5898 = vld [vmem:[%s809 + $0x5d0] sm:$0xff]
      %v5899 = vld [vmem:[%s809 + $0x5d8] sm:$0xff]
      %v5900 = vld [vmem:[%s809 + $0x5e0] sm:$0xff]
      %v5901 = vld [vmem:[%s809 + $0x5e8] sm:$0xff]
      %v5902 = vld [vmem:[%s809 + $0x5f0] sm:$0xff]
      %v5903 = vld [vmem:[%s809 + $0x5f8] sm:$0xff]
      %v5904 = vld [vmem:[%s809 + $0x600] sm:$0xff]
      %v5905 = vld [vmem:[%s809 + $0x608] sm:$0xff]
      %v5906 = vld [vmem:[%s809 + $0x610] sm:$0xff]
      %v5907 = vld [vmem:[%s809 + $0x618] sm:$0xff]
      %v5908 = vld [vmem:[%s809 + $0x620] sm:$0xff]
      %v5909 = vld [vmem:[%s809 + $0x628] sm:$0xff]
      %v5910 = vld [vmem:[%s809 + $0x630] sm:$0xff]
      %v5911 = vld [vmem:[%s809 + $0x638] sm:$0xff]
      %v5912 = vld [vmem:[%s809 + $0x640] sm:$0xff]
      %v5913 = vld [vmem:[%s809 + $0x648] sm:$0xff]
      %v5914 = vld [vmem:[%s809 + $0x650] sm:$0xff]
      %v5915 = vld [vmem:[%s809 + $0x658] sm:$0xff]
      %v5916 = vld [vmem:[%s809 + $0x660] sm:$0xff]
      %v5917 = vld [vmem:[%s809 + $0x668] sm:$0xff]
      %v5918 = vld [vmem:[%s809 + $0x670] sm:$0xff]
      %v5919 = vld [vmem:[%s809 + $0x678] sm:$0xff]
      %v5920 = vld [vmem:[%s809 + $0x680] sm:$0xff]
      %v5921 = vld [vmem:[%s809 + $0x688] sm:$0xff]
      %v5922 = vld [vmem:[%s809 + $0x690] sm:$0xff]
      %v5923 = vld [vmem:[%s809 + $0x698] sm:$0xff]
      %v5924 = vld [vmem:[%s809 + $0x6a0] sm:$0xff]
      %v5925 = vld [vmem:[%s809 + $0x6a8] sm:$0xff]
      %v5926 = vld [vmem:[%s809 + $0x6b0] sm:$0xff]
      %v5927 = vld [vmem:[%s809 + $0x6b8] sm:$0xff]
      %v5928 = vld [vmem:[%s809 + $0x6c0] sm:$0xff]
      %v5929 = vld [vmem:[%s809 + $0x6c8] sm:$0xff]
      %v5930 = vld [vmem:[%s809 + $0x6d0] sm:$0xff]
      %v5931 = vld [vmem:[%s809 + $0x6d8] sm:$0xff]
      %v5932 = vld [vmem:[%s809 + $0x6e0] sm:$0xff]
      %v5933 = vld [vmem:[%s809 + $0x6e8] sm:$0xff]
      %v5934 = vld [vmem:[%s809 + $0x6f0] sm:$0xff]
      %v5935 = vld [vmem:[%s809 + $0x6f8] sm:$0xff]
      %v5936 = vld [vmem:[%s809 + $0x700] sm:$0xff]
      %v5937 = vld [vmem:[%s809 + $0x708] sm:$0xff]
      %v5938 = vld [vmem:[%s809 + $0x710] sm:$0xff]
      %v5939 = vld [vmem:[%s809 + $0x718] sm:$0xff]
      %v5940 = vld [vmem:[%s809 + $0x720] sm:$0xff]
      %v5941 = vld [vmem:[%s809 + $0x728] sm:$0xff]
      %v5942 = vld [vmem:[%s809 + $0x730] sm:$0xff]
      %v5943 = vld [vmem:[%s809 + $0x738] sm:$0xff]
      %v5944 = vld [vmem:[%s809 + $0x740] sm:$0xff]
      %v5945 = vld [vmem:[%s809 + $0x748] sm:$0xff]
      %v5946 = vld [vmem:[%s809 + $0x750] sm:$0xff]
      %v5947 = vld [vmem:[%s809 + $0x758] sm:$0xff]
      %v5948 = vld [vmem:[%s809 + $0x760] sm:$0xff]
      %v5949 = vld [vmem:[%s809 + $0x768] sm:$0xff]
      %v5950 = vld [vmem:[%s809 + $0x770] sm:$0xff]
      %v5951 = vld [vmem:[%s809 + $0x778] sm:$0xff]
      %v5952 = vld [vmem:[%s809 + $0x780] sm:$0xff]
      %v5953 = vld [vmem:[%s809 + $0x788] sm:$0xff]
      %v5954 = vld [vmem:[%s809 + $0x790] sm:$0xff]
      %v5955 = vld [vmem:[%s809 + $0x798] sm:$0xff]
      %v5956 = vld [vmem:[%s809 + $0x7a0] sm:$0xff]
      %v5957 = vld [vmem:[%s809 + $0x7a8] sm:$0xff]
      %v5958 = vld [vmem:[%s809 + $0x7b0] sm:$0xff]
      %v5959 = vld [vmem:[%s809 + $0x7b8] sm:$0xff]
      %v5960 = vld [vmem:[%s809 + $0x7c0] sm:$0xff]
      %v5961 = vld [vmem:[%s809 + $0x7c8] sm:$0xff]
      %v5962 = vld [vmem:[%s809 + $0x7d0] sm:$0xff]
      %v5963 = vld [vmem:[%s809 + $0x7d8] sm:$0xff]
      %v5964 = vld [vmem:[%s809 + $0x7e0] sm:$0xff]
      %v5965 = vld [vmem:[%s809 + $0x7e8] sm:$0xff]
      %v5966 = vld [vmem:[%s809 + $0x7f0] sm:$0xff]
      %v5967 = vld [vmem:[%s809 + $0x7f8] sm:$0xff]
      %v5968 = vld [vmem:[%s836] sm:$0xff]
      %v5970 = vlaneseq
      %v5971 = vshrl.u32 %v5970, 7
      %v5972 = vsub.s32 0, %v5971
      %v5973 = vrot.slane %v5968, %v5972
      %v5974 = vlaneseq
      %v5975 = vshrl.u32 %v5974, 7
      %v5976 = vsub.s32 1, %v5975
      %v5977 = vrot.slane %v5968, %v5976
      %v5978 = vlaneseq
      %v5979 = vshrl.u32 %v5978, 7
      %v5980 = vsub.s32 2, %v5979
      %v5981 = vrot.slane %v5968, %v5980
      %v5982 = vlaneseq
      %v5983 = vshrl.u32 %v5982, 7
      %v5984 = vsub.s32 3, %v5983
      %v5985 = vrot.slane %v5968, %v5984
      %v5986 = vlaneseq
      %v5987 = vshrl.u32 %v5986, 7
      %v5988 = vsub.s32 4, %v5987
      %v5989 = vrot.slane %v5968, %v5988
      %v5990 = vlaneseq
      %v5991 = vshrl.u32 %v5990, 7
      %v5992 = vsub.s32 5, %v5991
      %v5993 = vrot.slane %v5968, %v5992
      %v5994 = vlaneseq
      %v5995 = vshrl.u32 %v5994, 7
      %v5996 = vsub.s32 6, %v5995
      %v5997 = vrot.slane %v5968, %v5996
      %v5998 = vlaneseq
      %v5999 = vshrl.u32 %v5998, 7
      %v6000 = vsub.s32 7, %v5999
      %v6001 = vrot.slane %v5968, %v6000
      %v6266 = vunpack.c.l.b16 %v5712
      %v6267 = vunpack.c.h.b16 %v5712
      %v6268 = vunpack.c.l.b16 %v5713
      %v6269 = vunpack.c.h.b16 %v5713
      %v6270 = vunpack.c.l.b16 %v5714
      %v6271 = vunpack.c.h.b16 %v5714
      %v6272 = vunpack.c.l.b16 %v5715
      %v6273 = vunpack.c.h.b16 %v5715
      %v6274 = vunpack.c.l.b16 %v5716
      %v6275 = vunpack.c.h.b16 %v5716
      %v6276 = vunpack.c.l.b16 %v5717
      %v6277 = vunpack.c.h.b16 %v5717
      %v6278 = vunpack.c.l.b16 %v5718
      %v6279 = vunpack.c.h.b16 %v5718
      %v6280 = vunpack.c.l.b16 %v5719
      %v6281 = vunpack.c.h.b16 %v5719
      %v6282 = vunpack.c.l.b16 %v5720
      %v6283 = vunpack.c.h.b16 %v5720
      %v6284 = vunpack.c.l.b16 %v5721
      %v6285 = vunpack.c.h.b16 %v5721
      %v6286 = vunpack.c.l.b16 %v5722
      %v6287 = vunpack.c.h.b16 %v5722
      %v6288 = vunpack.c.l.b16 %v5723
      %v6289 = vunpack.c.h.b16 %v5723
      %v6290 = vunpack.c.l.b16 %v5724
      %v6291 = vunpack.c.h.b16 %v5724
      %v6292 = vunpack.c.l.b16 %v5725
      %v6293 = vunpack.c.h.b16 %v5725
      %v6294 = vunpack.c.l.b16 %v5726
      %v6295 = vunpack.c.h.b16 %v5726
      %v6296 = vunpack.c.l.b16 %v5727
      %v6297 = vunpack.c.h.b16 %v5727
      %v6298 = vunpack.c.l.b16 %v5728
      %v6299 = vunpack.c.h.b16 %v5728
      %v6300 = vunpack.c.l.b16 %v5729
      %v6301 = vunpack.c.h.b16 %v5729
      %v6302 = vunpack.c.l.b16 %v5730
      %v6303 = vunpack.c.h.b16 %v5730
      %v6304 = vunpack.c.l.b16 %v5731
      %v6305 = vunpack.c.h.b16 %v5731
      %v6306 = vunpack.c.l.b16 %v5732
      %v6307 = vunpack.c.h.b16 %v5732
      %v6308 = vunpack.c.l.b16 %v5733
      %v6309 = vunpack.c.h.b16 %v5733
      %v6310 = vunpack.c.l.b16 %v5734
      %v6311 = vunpack.c.h.b16 %v5734
      %v6312 = vunpack.c.l.b16 %v5735
      %v6313 = vunpack.c.h.b16 %v5735
      %v6314 = vunpack.c.l.b16 %v5736
      %v6315 = vunpack.c.h.b16 %v5736
      %v6316 = vunpack.c.l.b16 %v5737
      %v6317 = vunpack.c.h.b16 %v5737
      %v6318 = vunpack.c.l.b16 %v5738
      %v6319 = vunpack.c.h.b16 %v5738
      %v6320 = vunpack.c.l.b16 %v5739
      %v6321 = vunpack.c.h.b16 %v5739
      %v6322 = vunpack.c.l.b16 %v5740
      %v6323 = vunpack.c.h.b16 %v5740
      %v6324 = vunpack.c.l.b16 %v5741
      %v6325 = vunpack.c.h.b16 %v5741
      %v6326 = vunpack.c.l.b16 %v5742
      %v6327 = vunpack.c.h.b16 %v5742
      %v6328 = vunpack.c.l.b16 %v5743
      %v6329 = vunpack.c.h.b16 %v5743
      %v6330 = vunpack.c.l.b16 %v5744
      %v6331 = vunpack.c.h.b16 %v5744
      %v6332 = vunpack.c.l.b16 %v5745
      %v6333 = vunpack.c.h.b16 %v5745
      %v6334 = vunpack.c.l.b16 %v5746
      %v6335 = vunpack.c.h.b16 %v5746
      %v6336 = vunpack.c.l.b16 %v5747
      %v6337 = vunpack.c.h.b16 %v5747
      %v6338 = vunpack.c.l.b16 %v5748
      %v6339 = vunpack.c.h.b16 %v5748
      %v6340 = vunpack.c.l.b16 %v5749
      %v6341 = vunpack.c.h.b16 %v5749
      %v6342 = vunpack.c.l.b16 %v5750
      %v6343 = vunpack.c.h.b16 %v5750
      %v6344 = vunpack.c.l.b16 %v5751
      %v6345 = vunpack.c.h.b16 %v5751
      %v6346 = vunpack.c.l.b16 %v5752
      %v6347 = vunpack.c.h.b16 %v5752
      %v6348 = vunpack.c.l.b16 %v5753
      %v6349 = vunpack.c.h.b16 %v5753
      %v6350 = vunpack.c.l.b16 %v5754
      %v6351 = vunpack.c.h.b16 %v5754
      %v6352 = vunpack.c.l.b16 %v5755
      %v6353 = vunpack.c.h.b16 %v5755
      %v6354 = vunpack.c.l.b16 %v5756
      %v6355 = vunpack.c.h.b16 %v5756
      %v6356 = vunpack.c.l.b16 %v5757
      %v6357 = vunpack.c.h.b16 %v5757
      %v6358 = vunpack.c.l.b16 %v5758
      %v6359 = vunpack.c.h.b16 %v5758
      %v6360 = vunpack.c.l.b16 %v5759
      %v6361 = vunpack.c.h.b16 %v5759
      %v6362 = vunpack.c.l.b16 %v5760
      %v6363 = vunpack.c.h.b16 %v5760
      %v6364 = vunpack.c.l.b16 %v5761
      %v6365 = vunpack.c.h.b16 %v5761
      %v6366 = vunpack.c.l.b16 %v5762
      %v6367 = vunpack.c.h.b16 %v5762
      %v6368 = vunpack.c.l.b16 %v5763
      %v6369 = vunpack.c.h.b16 %v5763
      %v6370 = vunpack.c.l.b16 %v5764
      %v6371 = vunpack.c.h.b16 %v5764
      %v6372 = vunpack.c.l.b16 %v5765
      %v6373 = vunpack.c.h.b16 %v5765
      %v6374 = vunpack.c.l.b16 %v5766
      %v6375 = vunpack.c.h.b16 %v5766
      %v6376 = vunpack.c.l.b16 %v5767
      %v6377 = vunpack.c.h.b16 %v5767
      %v6378 = vunpack.c.l.b16 %v5768
      %v6379 = vunpack.c.h.b16 %v5768
      %v6380 = vunpack.c.l.b16 %v5769
      %v6381 = vunpack.c.h.b16 %v5769
      %v6382 = vunpack.c.l.b16 %v5770
      %v6383 = vunpack.c.h.b16 %v5770
      %v6384 = vunpack.c.l.b16 %v5771
      %v6385 = vunpack.c.h.b16 %v5771
      %v6386 = vunpack.c.l.b16 %v5772
      %v6387 = vunpack.c.h.b16 %v5772
      %v6388 = vunpack.c.l.b16 %v5773
      %v6389 = vunpack.c.h.b16 %v5773
      %v6390 = vunpack.c.l.b16 %v5774
      %v6391 = vunpack.c.h.b16 %v5774
      %v6392 = vunpack.c.l.b16 %v5775
      %v6393 = vunpack.c.h.b16 %v5775
      %v6394 = vunpack.c.l.b16 %v5776
      %v6395 = vunpack.c.h.b16 %v5776
      %v6396 = vunpack.c.l.b16 %v5777
      %v6397 = vunpack.c.h.b16 %v5777
      %v6398 = vunpack.c.l.b16 %v5778
      %v6399 = vunpack.c.h.b16 %v5778
      %v6400 = vunpack.c.l.b16 %v5779
      %v6401 = vunpack.c.h.b16 %v5779
      %v6402 = vunpack.c.l.b16 %v5780
      %v6403 = vunpack.c.h.b16 %v5780
      %v6404 = vunpack.c.l.b16 %v5781
      %v6405 = vunpack.c.h.b16 %v5781
      %v6406 = vunpack.c.l.b16 %v5782
      %v6407 = vunpack.c.h.b16 %v5782
      %v6408 = vunpack.c.l.b16 %v5783
      %v6409 = vunpack.c.h.b16 %v5783
      %v6410 = vunpack.c.l.b16 %v5784
      %v6411 = vunpack.c.h.b16 %v5784
      %v6412 = vunpack.c.l.b16 %v5785
      %v6413 = vunpack.c.h.b16 %v5785
      %v6414 = vunpack.c.l.b16 %v5786
      %v6415 = vunpack.c.h.b16 %v5786
      %v6416 = vunpack.c.l.b16 %v5787
      %v6417 = vunpack.c.h.b16 %v5787
      %v6418 = vunpack.c.l.b16 %v5788
      %v6419 = vunpack.c.h.b16 %v5788
      %v6420 = vunpack.c.l.b16 %v5789
      %v6421 = vunpack.c.h.b16 %v5789
      %v6422 = vunpack.c.l.b16 %v5790
      %v6423 = vunpack.c.h.b16 %v5790
      %v6424 = vunpack.c.l.b16 %v5791
      %v6425 = vunpack.c.h.b16 %v5791
      %v6426 = vunpack.c.l.b16 %v5792
      %v6427 = vunpack.c.h.b16 %v5792
      %v6428 = vunpack.c.l.b16 %v5793
      %v6429 = vunpack.c.h.b16 %v5793
      %v6430 = vunpack.c.l.b16 %v5794
      %v6431 = vunpack.c.h.b16 %v5794
      %v6432 = vunpack.c.l.b16 %v5795
      %v6433 = vunpack.c.h.b16 %v5795
      %v6434 = vunpack.c.l.b16 %v5796
      %v6435 = vunpack.c.h.b16 %v5796
      %v6436 = vunpack.c.l.b16 %v5797
      %v6437 = vunpack.c.h.b16 %v5797
      %v6438 = vunpack.c.l.b16 %v5798
      %v6439 = vunpack.c.h.b16 %v5798
      %v6440 = vunpack.c.l.b16 %v5799
      %v6441 = vunpack.c.h.b16 %v5799
      %v6442 = vunpack.c.l.b16 %v5800
      %v6443 = vunpack.c.h.b16 %v5800
      %v6444 = vunpack.c.l.b16 %v5801
      %v6445 = vunpack.c.h.b16 %v5801
      %v6446 = vunpack.c.l.b16 %v5802
      %v6447 = vunpack.c.h.b16 %v5802
      %v6448 = vunpack.c.l.b16 %v5803
      %v6449 = vunpack.c.h.b16 %v5803
      %v6450 = vunpack.c.l.b16 %v5804
      %v6451 = vunpack.c.h.b16 %v5804
      %v6452 = vunpack.c.l.b16 %v5805
      %v6453 = vunpack.c.h.b16 %v5805
      %v6454 = vunpack.c.l.b16 %v5806
      %v6455 = vunpack.c.h.b16 %v5806
      %v6456 = vunpack.c.l.b16 %v5807
      %v6457 = vunpack.c.h.b16 %v5807
      %v6458 = vunpack.c.l.b16 %v5808
      %v6459 = vunpack.c.h.b16 %v5808
      %v6460 = vunpack.c.l.b16 %v5809
      %v6461 = vunpack.c.h.b16 %v5809
      %v6462 = vunpack.c.l.b16 %v5810
      %v6463 = vunpack.c.h.b16 %v5810
      %v6464 = vunpack.c.l.b16 %v5811
      %v6465 = vunpack.c.h.b16 %v5811
      %v6466 = vunpack.c.l.b16 %v5812
      %v6467 = vunpack.c.h.b16 %v5812
      %v6468 = vunpack.c.l.b16 %v5813
      %v6469 = vunpack.c.h.b16 %v5813
      %v6470 = vunpack.c.l.b16 %v5814
      %v6471 = vunpack.c.h.b16 %v5814
      %v6472 = vunpack.c.l.b16 %v5815
      %v6473 = vunpack.c.h.b16 %v5815
      %v6474 = vunpack.c.l.b16 %v5816
      %v6475 = vunpack.c.h.b16 %v5816
      %v6476 = vunpack.c.l.b16 %v5817
      %v6477 = vunpack.c.h.b16 %v5817
      %v6478 = vunpack.c.l.b16 %v5818
      %v6479 = vunpack.c.h.b16 %v5818
      %v6480 = vunpack.c.l.b16 %v5819
      %v6481 = vunpack.c.h.b16 %v5819
      %v6482 = vunpack.c.l.b16 %v5820
      %v6483 = vunpack.c.h.b16 %v5820
      %v6484 = vunpack.c.l.b16 %v5821
      %v6485 = vunpack.c.h.b16 %v5821
      %v6486 = vunpack.c.l.b16 %v5822
      %v6487 = vunpack.c.h.b16 %v5822
      %v6488 = vunpack.c.l.b16 %v5823
      %v6489 = vunpack.c.h.b16 %v5823
      %v6490 = vunpack.c.l.b16 %v5824
      %v6491 = vunpack.c.h.b16 %v5824
      %v6492 = vunpack.c.l.b16 %v5825
      %v6493 = vunpack.c.h.b16 %v5825
      %v6494 = vunpack.c.l.b16 %v5826
      %v6495 = vunpack.c.h.b16 %v5826
      %v6496 = vunpack.c.l.b16 %v5827
      %v6497 = vunpack.c.h.b16 %v5827
      %v6498 = vunpack.c.l.b16 %v5828
      %v6499 = vunpack.c.h.b16 %v5828
      %v6500 = vunpack.c.l.b16 %v5829
      %v6501 = vunpack.c.h.b16 %v5829
      %v6502 = vunpack.c.l.b16 %v5830
      %v6503 = vunpack.c.h.b16 %v5830
      %v6504 = vunpack.c.l.b16 %v5831
      %v6505 = vunpack.c.h.b16 %v5831
      %v6506 = vunpack.c.l.b16 %v5832
      %v6507 = vunpack.c.h.b16 %v5832
      %v6508 = vunpack.c.l.b16 %v5833
      %v6509 = vunpack.c.h.b16 %v5833
      %v6510 = vunpack.c.l.b16 %v5834
      %v6511 = vunpack.c.h.b16 %v5834
      %v6512 = vunpack.c.l.b16 %v5835
      %v6513 = vunpack.c.h.b16 %v5835
      %v6514 = vunpack.c.l.b16 %v5836
      %v6515 = vunpack.c.h.b16 %v5836
      %v6516 = vunpack.c.l.b16 %v5837
      %v6517 = vunpack.c.h.b16 %v5837
      %v6518 = vunpack.c.l.b16 %v5838
      %v6519 = vunpack.c.h.b16 %v5838
      %v6520 = vunpack.c.l.b16 %v5839
      %v6521 = vunpack.c.h.b16 %v5839
      %v6522 = vunpack.c.l.b16 %v5840
      %v6523 = vunpack.c.h.b16 %v5840
      %v6524 = vunpack.c.l.b16 %v5841
      %v6525 = vunpack.c.h.b16 %v5841
      %v6526 = vunpack.c.l.b16 %v5842
      %v6527 = vunpack.c.h.b16 %v5842
      %v6528 = vunpack.c.l.b16 %v5843
      %v6529 = vunpack.c.h.b16 %v5843
      %v6530 = vunpack.c.l.b16 %v5844
      %v6531 = vunpack.c.h.b16 %v5844
      %v6532 = vunpack.c.l.b16 %v5845
      %v6533 = vunpack.c.h.b16 %v5845
      %v6534 = vunpack.c.l.b16 %v5846
      %v6535 = vunpack.c.h.b16 %v5846
      %v6536 = vunpack.c.l.b16 %v5847
      %v6537 = vunpack.c.h.b16 %v5847
      %v6538 = vunpack.c.l.b16 %v5848
      %v6539 = vunpack.c.h.b16 %v5848
      %v6540 = vunpack.c.l.b16 %v5849
      %v6541 = vunpack.c.h.b16 %v5849
      %v6542 = vunpack.c.l.b16 %v5850
      %v6543 = vunpack.c.h.b16 %v5850
      %v6544 = vunpack.c.l.b16 %v5851
      %v6545 = vunpack.c.h.b16 %v5851
      %v6546 = vunpack.c.l.b16 %v5852
      %v6547 = vunpack.c.h.b16 %v5852
      %v6548 = vunpack.c.l.b16 %v5853
      %v6549 = vunpack.c.h.b16 %v5853
      %v6550 = vunpack.c.l.b16 %v5854
      %v6551 = vunpack.c.h.b16 %v5854
      %v6552 = vunpack.c.l.b16 %v5855
      %v6553 = vunpack.c.h.b16 %v5855
      %v6554 = vunpack.c.l.b16 %v5856
      %v6555 = vunpack.c.h.b16 %v5856
      %v6556 = vunpack.c.l.b16 %v5857
      %v6557 = vunpack.c.h.b16 %v5857
      %v6558 = vunpack.c.l.b16 %v5858
      %v6559 = vunpack.c.h.b16 %v5858
      %v6560 = vunpack.c.l.b16 %v5859
      %v6561 = vunpack.c.h.b16 %v5859
      %v6562 = vunpack.c.l.b16 %v5860
      %v6563 = vunpack.c.h.b16 %v5860
      %v6564 = vunpack.c.l.b16 %v5861
      %v6565 = vunpack.c.h.b16 %v5861
      %v6566 = vunpack.c.l.b16 %v5862
      %v6567 = vunpack.c.h.b16 %v5862
      %v6568 = vunpack.c.l.b16 %v5863
      %v6569 = vunpack.c.h.b16 %v5863
      %v6570 = vunpack.c.l.b16 %v5864
      %v6571 = vunpack.c.h.b16 %v5864
      %v6572 = vunpack.c.l.b16 %v5865
      %v6573 = vunpack.c.h.b16 %v5865
      %v6574 = vunpack.c.l.b16 %v5866
      %v6575 = vunpack.c.h.b16 %v5866
      %v6576 = vunpack.c.l.b16 %v5867
      %v6577 = vunpack.c.h.b16 %v5867
      %v6578 = vunpack.c.l.b16 %v5868
      %v6579 = vunpack.c.h.b16 %v5868
      %v6580 = vunpack.c.l.b16 %v5869
      %v6581 = vunpack.c.h.b16 %v5869
      %v6582 = vunpack.c.l.b16 %v5870
      %v6583 = vunpack.c.h.b16 %v5870
      %v6584 = vunpack.c.l.b16 %v5871
      %v6585 = vunpack.c.h.b16 %v5871
      %v6586 = vunpack.c.l.b16 %v5872
      %v6587 = vunpack.c.h.b16 %v5872
      %v6588 = vunpack.c.l.b16 %v5873
      %v6589 = vunpack.c.h.b16 %v5873
      %v6590 = vunpack.c.l.b16 %v5874
      %v6591 = vunpack.c.h.b16 %v5874
      %v6592 = vunpack.c.l.b16 %v5875
      %v6593 = vunpack.c.h.b16 %v5875
      %v6594 = vunpack.c.l.b16 %v5876
      %v6595 = vunpack.c.h.b16 %v5876
      %v6596 = vunpack.c.l.b16 %v5877
      %v6597 = vunpack.c.h.b16 %v5877
      %v6598 = vunpack.c.l.b16 %v5878
      %v6599 = vunpack.c.h.b16 %v5878
      %v6600 = vunpack.c.l.b16 %v5879
      %v6601 = vunpack.c.h.b16 %v5879
      %v6602 = vunpack.c.l.b16 %v5880
      %v6603 = vunpack.c.h.b16 %v5880
      %v6604 = vunpack.c.l.b16 %v5881
      %v6605 = vunpack.c.h.b16 %v5881
      %v6606 = vunpack.c.l.b16 %v5882
      %v6607 = vunpack.c.h.b16 %v5882
      %v6608 = vunpack.c.l.b16 %v5883
      %v6609 = vunpack.c.h.b16 %v5883
      %v6610 = vunpack.c.l.b16 %v5884
      %v6611 = vunpack.c.h.b16 %v5884
      %v6612 = vunpack.c.l.b16 %v5885
      %v6613 = vunpack.c.h.b16 %v5885
      %v6614 = vunpack.c.l.b16 %v5886
      %v6615 = vunpack.c.h.b16 %v5886
      %v6616 = vunpack.c.l.b16 %v5887
      %v6617 = vunpack.c.h.b16 %v5887
      %v6618 = vunpack.c.l.b16 %v5888
      %v6619 = vunpack.c.h.b16 %v5888
      %v6620 = vunpack.c.l.b16 %v5889
      %v6621 = vunpack.c.h.b16 %v5889
      %v6622 = vunpack.c.l.b16 %v5890
      %v6623 = vunpack.c.h.b16 %v5890
      %v6624 = vunpack.c.l.b16 %v5891
      %v6625 = vunpack.c.h.b16 %v5891
      %v6626 = vunpack.c.l.b16 %v5892
      %v6627 = vunpack.c.h.b16 %v5892
      %v6628 = vunpack.c.l.b16 %v5893
      %v6629 = vunpack.c.h.b16 %v5893
      %v6630 = vunpack.c.l.b16 %v5894
      %v6631 = vunpack.c.h.b16 %v5894
      %v6632 = vunpack.c.l.b16 %v5895
      %v6633 = vunpack.c.h.b16 %v5895
      %v6634 = vunpack.c.l.b16 %v5896
      %v6635 = vunpack.c.h.b16 %v5896
      %v6636 = vunpack.c.l.b16 %v5897
      %v6637 = vunpack.c.h.b16 %v5897
      %v6638 = vunpack.c.l.b16 %v5898
      %v6639 = vunpack.c.h.b16 %v5898
      %v6640 = vunpack.c.l.b16 %v5899
      %v6641 = vunpack.c.h.b16 %v5899
      %v6642 = vunpack.c.l.b16 %v5900
      %v6643 = vunpack.c.h.b16 %v5900
      %v6644 = vunpack.c.l.b16 %v5901
      %v6645 = vunpack.c.h.b16 %v5901
      %v6646 = vunpack.c.l.b16 %v5902
      %v6647 = vunpack.c.h.b16 %v5902
      %v6648 = vunpack.c.l.b16 %v5903
      %v6649 = vunpack.c.h.b16 %v5903
      %v6650 = vunpack.c.l.b16 %v5904
      %v6651 = vunpack.c.h.b16 %v5904
      %v6652 = vunpack.c.l.b16 %v5905
      %v6653 = vunpack.c.h.b16 %v5905
      %v6654 = vunpack.c.l.b16 %v5906
      %v6655 = vunpack.c.h.b16 %v5906
      %v6656 = vunpack.c.l.b16 %v5907
      %v6657 = vunpack.c.h.b16 %v5907
      %v6658 = vunpack.c.l.b16 %v5908
      %v6659 = vunpack.c.h.b16 %v5908
      %v6660 = vunpack.c.l.b16 %v5909
      %v6661 = vunpack.c.h.b16 %v5909
      %v6662 = vunpack.c.l.b16 %v5910
      %v6663 = vunpack.c.h.b16 %v5910
      %v6664 = vunpack.c.l.b16 %v5911
      %v6665 = vunpack.c.h.b16 %v5911
      %v6666 = vunpack.c.l.b16 %v5912
      %v6667 = vunpack.c.h.b16 %v5912
      %v6668 = vunpack.c.l.b16 %v5913
      %v6669 = vunpack.c.h.b16 %v5913
      %v6670 = vunpack.c.l.b16 %v5914
      %v6671 = vunpack.c.h.b16 %v5914
      %v6672 = vunpack.c.l.b16 %v5915
      %v6673 = vunpack.c.h.b16 %v5915
      %v6674 = vunpack.c.l.b16 %v5916
      %v6675 = vunpack.c.h.b16 %v5916
      %v6676 = vunpack.c.l.b16 %v5917
      %v6677 = vunpack.c.h.b16 %v5917
      %v6678 = vunpack.c.l.b16 %v5918
      %v6679 = vunpack.c.h.b16 %v5918
      %v6680 = vunpack.c.l.b16 %v5919
      %v6681 = vunpack.c.h.b16 %v5919
      %v6682 = vunpack.c.l.b16 %v5920
      %v6683 = vunpack.c.h.b16 %v5920
      %v6684 = vunpack.c.l.b16 %v5921
      %v6685 = vunpack.c.h.b16 %v5921
      %v6686 = vunpack.c.l.b16 %v5922
      %v6687 = vunpack.c.h.b16 %v5922
      %v6688 = vunpack.c.l.b16 %v5923
      %v6689 = vunpack.c.h.b16 %v5923
      %v6690 = vunpack.c.l.b16 %v5924
      %v6691 = vunpack.c.h.b16 %v5924
      %v6692 = vunpack.c.l.b16 %v5925
      %v6693 = vunpack.c.h.b16 %v5925
      %v6694 = vunpack.c.l.b16 %v5926
      %v6695 = vunpack.c.h.b16 %v5926
      %v6696 = vunpack.c.l.b16 %v5927
      %v6697 = vunpack.c.h.b16 %v5927
      %v6698 = vunpack.c.l.b16 %v5928
      %v6699 = vunpack.c.h.b16 %v5928
      %v6700 = vunpack.c.l.b16 %v5929
      %v6701 = vunpack.c.h.b16 %v5929
      %v6702 = vunpack.c.l.b16 %v5930
      %v6703 = vunpack.c.h.b16 %v5930
      %v6704 = vunpack.c.l.b16 %v5931
      %v6705 = vunpack.c.h.b16 %v5931
      %v6706 = vunpack.c.l.b16 %v5932
      %v6707 = vunpack.c.h.b16 %v5932
      %v6708 = vunpack.c.l.b16 %v5933
      %v6709 = vunpack.c.h.b16 %v5933
      %v6710 = vunpack.c.l.b16 %v5934
      %v6711 = vunpack.c.h.b16 %v5934
      %v6712 = vunpack.c.l.b16 %v5935
      %v6713 = vunpack.c.h.b16 %v5935
      %v6714 = vunpack.c.l.b16 %v5936
      %v6715 = vunpack.c.h.b16 %v5936
      %v6716 = vunpack.c.l.b16 %v5937
      %v6717 = vunpack.c.h.b16 %v5937
      %v6718 = vunpack.c.l.b16 %v5938
      %v6719 = vunpack.c.h.b16 %v5938
      %v6720 = vunpack.c.l.b16 %v5939
      %v6721 = vunpack.c.h.b16 %v5939
      %v6722 = vunpack.c.l.b16 %v5940
      %v6723 = vunpack.c.h.b16 %v5940
      %v6724 = vunpack.c.l.b16 %v5941
      %v6725 = vunpack.c.h.b16 %v5941
      %v6726 = vunpack.c.l.b16 %v5942
      %v6727 = vunpack.c.h.b16 %v5942
      %v6728 = vunpack.c.l.b16 %v5943
      %v6729 = vunpack.c.h.b16 %v5943
      %v6730 = vunpack.c.l.b16 %v5944
      %v6731 = vunpack.c.h.b16 %v5944
      %v6732 = vunpack.c.l.b16 %v5945
      %v6733 = vunpack.c.h.b16 %v5945
      %v6734 = vunpack.c.l.b16 %v5946
      %v6735 = vunpack.c.h.b16 %v5946
      %v6736 = vunpack.c.l.b16 %v5947
      %v6737 = vunpack.c.h.b16 %v5947
      %v6738 = vunpack.c.l.b16 %v5948
      %v6739 = vunpack.c.h.b16 %v5948
      %v6740 = vunpack.c.l.b16 %v5949
      %v6741 = vunpack.c.h.b16 %v5949
      %v6742 = vunpack.c.l.b16 %v5950
      %v6743 = vunpack.c.h.b16 %v5950
      %v6744 = vunpack.c.l.b16 %v5951
      %v6745 = vunpack.c.h.b16 %v5951
      %v6746 = vunpack.c.l.b16 %v5952
      %v6747 = vunpack.c.h.b16 %v5952
      %v6748 = vunpack.c.l.b16 %v5953
      %v6749 = vunpack.c.h.b16 %v5953
      %v6750 = vunpack.c.l.b16 %v5954
      %v6751 = vunpack.c.h.b16 %v5954
      %v6752 = vunpack.c.l.b16 %v5955
      %v6753 = vunpack.c.h.b16 %v5955
      %v6754 = vunpack.c.l.b16 %v5956
      %v6755 = vunpack.c.h.b16 %v5956
      %v6756 = vunpack.c.l.b16 %v5957
      %v6757 = vunpack.c.h.b16 %v5957
      %v6758 = vunpack.c.l.b16 %v5958
      %v6759 = vunpack.c.h.b16 %v5958
      %v6760 = vunpack.c.l.b16 %v5959
      %v6761 = vunpack.c.h.b16 %v5959
      %v6762 = vunpack.c.l.b16 %v5960
      %v6763 = vunpack.c.h.b16 %v5960
      %v6764 = vunpack.c.l.b16 %v5961
      %v6765 = vunpack.c.h.b16 %v5961
      %v6766 = vunpack.c.l.b16 %v5962
      %v6767 = vunpack.c.h.b16 %v5962
      %v6768 = vunpack.c.l.b16 %v5963
      %v6769 = vunpack.c.h.b16 %v5963
      %v6770 = vunpack.c.l.b16 %v5964
      %v6771 = vunpack.c.h.b16 %v5964
      %v6772 = vunpack.c.l.b16 %v5965
      %v6773 = vunpack.c.h.b16 %v5965
      %v6774 = vunpack.c.l.b16 %v5966
      %v6775 = vunpack.c.h.b16 %v5966
      %v6776 = vunpack.c.l.b16 %v5967
      %v6777 = vunpack.c.h.b16 %v5967
      %v6778 = vpack.c.b16 %v6274, %v6266
      %v6779 = vpack.c.b16 %v6275, %v6267
      %v6780 = vpack.c.b16 %v6276, %v6268
      %v6781 = vpack.c.b16 %v6277, %v6269
      %v6782 = vpack.c.b16 %v6278, %v6270
      %v6783 = vpack.c.b16 %v6279, %v6271
      %v6784 = vpack.c.b16 %v6280, %v6272
      %v6785 = vpack.c.b16 %v6281, %v6273
      %v6786 = vpack.c.b16 %v6290, %v6282
      %v6787 = vpack.c.b16 %v6291, %v6283
      %v6788 = vpack.c.b16 %v6292, %v6284
      %v6789 = vpack.c.b16 %v6293, %v6285
      %v6790 = vpack.c.b16 %v6294, %v6286
      %v6791 = vpack.c.b16 %v6295, %v6287
      %v6792 = vpack.c.b16 %v6296, %v6288
      %v6793 = vpack.c.b16 %v6297, %v6289
      %v6794 = vpack.c.b16 %v6306, %v6298
      %v6795 = vpack.c.b16 %v6307, %v6299
      %v6796 = vpack.c.b16 %v6308, %v6300
      %v6797 = vpack.c.b16 %v6309, %v6301
      %v6798 = vpack.c.b16 %v6310, %v6302
      %v6799 = vpack.c.b16 %v6311, %v6303
      %v6800 = vpack.c.b16 %v6312, %v6304
      %v6801 = vpack.c.b16 %v6313, %v6305
      %v6802 = vpack.c.b16 %v6322, %v6314
      %v6803 = vpack.c.b16 %v6323, %v6315
      %v6804 = vpack.c.b16 %v6324, %v6316
      %v6805 = vpack.c.b16 %v6325, %v6317
      %v6806 = vpack.c.b16 %v6326, %v6318
      %v6807 = vpack.c.b16 %v6327, %v6319
      %v6808 = vpack.c.b16 %v6328, %v6320
      %v6809 = vpack.c.b16 %v6329, %v6321
      %v6810 = vpack.c.b16 %v6338, %v6330
      %v6811 = vpack.c.b16 %v6339, %v6331
      %v6812 = vpack.c.b16 %v6340, %v6332
      %v6813 = vpack.c.b16 %v6341, %v6333
      %v6814 = vpack.c.b16 %v6342, %v6334
      %v6815 = vpack.c.b16 %v6343, %v6335
      %v6816 = vpack.c.b16 %v6344, %v6336
      %v6817 = vpack.c.b16 %v6345, %v6337
      %v6818 = vpack.c.b16 %v6354, %v6346
      %v6819 = vpack.c.b16 %v6355, %v6347
      %v6820 = vpack.c.b16 %v6356, %v6348
      %v6821 = vpack.c.b16 %v6357, %v6349
      %v6822 = vpack.c.b16 %v6358, %v6350
      %v6823 = vpack.c.b16 %v6359, %v6351
      %v6824 = vpack.c.b16 %v6360, %v6352
      %v6825 = vpack.c.b16 %v6361, %v6353
      %v6826 = vpack.c.b16 %v6370, %v6362
      %v6827 = vpack.c.b16 %v6371, %v6363
      %v6828 = vpack.c.b16 %v6372, %v6364
      %v6829 = vpack.c.b16 %v6373, %v6365
      %v6830 = vpack.c.b16 %v6374, %v6366
      %v6831 = vpack.c.b16 %v6375, %v6367
      %v6832 = vpack.c.b16 %v6376, %v6368
      %v6833 = vpack.c.b16 %v6377, %v6369
      %v6834 = vpack.c.b16 %v6386, %v6378
      %v6835 = vpack.c.b16 %v6387, %v6379
      %v6836 = vpack.c.b16 %v6388, %v6380
      %v6837 = vpack.c.b16 %v6389, %v6381
      %v6838 = vpack.c.b16 %v6390, %v6382
      %v6839 = vpack.c.b16 %v6391, %v6383
      %v6840 = vpack.c.b16 %v6392, %v6384
      %v6841 = vpack.c.b16 %v6393, %v6385
      %v6842 = vpack.c.b16 %v6402, %v6394
      %v6843 = vpack.c.b16 %v6403, %v6395
      %v6844 = vpack.c.b16 %v6404, %v6396
      %v6845 = vpack.c.b16 %v6405, %v6397
      %v6846 = vpack.c.b16 %v6406, %v6398
      %v6847 = vpack.c.b16 %v6407, %v6399
      %v6848 = vpack.c.b16 %v6408, %v6400
      %v6849 = vpack.c.b16 %v6409, %v6401
      %v6850 = vpack.c.b16 %v6418, %v6410
      %v6851 = vpack.c.b16 %v6419, %v6411
      %v6852 = vpack.c.b16 %v6420, %v6412
      %v6853 = vpack.c.b16 %v6421, %v6413
      %v6854 = vpack.c.b16 %v6422, %v6414
      %v6855 = vpack.c.b16 %v6423, %v6415
      %v6856 = vpack.c.b16 %v6424, %v6416
      %v6857 = vpack.c.b16 %v6425, %v6417
      %v6858 = vpack.c.b16 %v6434, %v6426
      %v6859 = vpack.c.b16 %v6435, %v6427
      %v6860 = vpack.c.b16 %v6436, %v6428
      %v6861 = vpack.c.b16 %v6437, %v6429
      %v6862 = vpack.c.b16 %v6438, %v6430
      %v6863 = vpack.c.b16 %v6439, %v6431
      %v6864 = vpack.c.b16 %v6440, %v6432
      %v6865 = vpack.c.b16 %v6441, %v6433
      %v6866 = vpack.c.b16 %v6450, %v6442
      %v6867 = vpack.c.b16 %v6451, %v6443
      %v6868 = vpack.c.b16 %v6452, %v6444
      %v6869 = vpack.c.b16 %v6453, %v6445
      %v6870 = vpack.c.b16 %v6454, %v6446
      %v6871 = vpack.c.b16 %v6455, %v6447
      %v6872 = vpack.c.b16 %v6456, %v6448
      %v6873 = vpack.c.b16 %v6457, %v6449
      %v6874 = vpack.c.b16 %v6466, %v6458
      %v6875 = vpack.c.b16 %v6467, %v6459
      %v6876 = vpack.c.b16 %v6468, %v6460
      %v6877 = vpack.c.b16 %v6469, %v6461
      %v6878 = vpack.c.b16 %v6470, %v6462
      %v6879 = vpack.c.b16 %v6471, %v6463
      %v6880 = vpack.c.b16 %v6472, %v6464
      %v6881 = vpack.c.b16 %v6473, %v6465
      %v6882 = vpack.c.b16 %v6482, %v6474
      %v6883 = vpack.c.b16 %v6483, %v6475
      %v6884 = vpack.c.b16 %v6484, %v6476
      %v6885 = vpack.c.b16 %v6485, %v6477
      %v6886 = vpack.c.b16 %v6486, %v6478
      %v6887 = vpack.c.b16 %v6487, %v6479
      %v6888 = vpack.c.b16 %v6488, %v6480
      %v6889 = vpack.c.b16 %v6489, %v6481
      %v6890 = vpack.c.b16 %v6498, %v6490
      %v6891 = vpack.c.b16 %v6499, %v6491
      %v6892 = vpack.c.b16 %v6500, %v6492
      %v6893 = vpack.c.b16 %v6501, %v6493
      %v6894 = vpack.c.b16 %v6502, %v6494
      %v6895 = vpack.c.b16 %v6503, %v6495
      %v6896 = vpack.c.b16 %v6504, %v6496
      %v6897 = vpack.c.b16 %v6505, %v6497
      %v6898 = vpack.c.b16 %v6514, %v6506
      %v6899 = vpack.c.b16 %v6515, %v6507
      %v6900 = vpack.c.b16 %v6516, %v6508
      %v6901 = vpack.c.b16 %v6517, %v6509
      %v6902 = vpack.c.b16 %v6518, %v6510
      %v6903 = vpack.c.b16 %v6519, %v6511
      %v6904 = vpack.c.b16 %v6520, %v6512
      %v6905 = vpack.c.b16 %v6521, %v6513
      %v6906 = vpack.c.b16 %v6530, %v6522
      %v6907 = vpack.c.b16 %v6531, %v6523
      %v6908 = vpack.c.b16 %v6532, %v6524
      %v6909 = vpack.c.b16 %v6533, %v6525
      %v6910 = vpack.c.b16 %v6534, %v6526
      %v6911 = vpack.c.b16 %v6535, %v6527
      %v6912 = vpack.c.b16 %v6536, %v6528
      %v6913 = vpack.c.b16 %v6537, %v6529
      %v6914 = vpack.c.b16 %v6546, %v6538
      %v6915 = vpack.c.b16 %v6547, %v6539
      %v6916 = vpack.c.b16 %v6548, %v6540
      %v6917 = vpack.c.b16 %v6549, %v6541
      %v6918 = vpack.c.b16 %v6550, %v6542
      %v6919 = vpack.c.b16 %v6551, %v6543
      %v6920 = vpack.c.b16 %v6552, %v6544
      %v6921 = vpack.c.b16 %v6553, %v6545
      %v6922 = vpack.c.b16 %v6562, %v6554
      %v6923 = vpack.c.b16 %v6563, %v6555
      %v6924 = vpack.c.b16 %v6564, %v6556
      %v6925 = vpack.c.b16 %v6565, %v6557
      %v6926 = vpack.c.b16 %v6566, %v6558
      %v6927 = vpack.c.b16 %v6567, %v6559
      %v6928 = vpack.c.b16 %v6568, %v6560
      %v6929 = vpack.c.b16 %v6569, %v6561
      %v6930 = vpack.c.b16 %v6578, %v6570
      %v6931 = vpack.c.b16 %v6579, %v6571
      %v6932 = vpack.c.b16 %v6580, %v6572
      %v6933 = vpack.c.b16 %v6581, %v6573
      %v6934 = vpack.c.b16 %v6582, %v6574
      %v6935 = vpack.c.b16 %v6583, %v6575
      %v6936 = vpack.c.b16 %v6584, %v6576
      %v6937 = vpack.c.b16 %v6585, %v6577
      %v6938 = vpack.c.b16 %v6594, %v6586
      %v6939 = vpack.c.b16 %v6595, %v6587
      %v6940 = vpack.c.b16 %v6596, %v6588
      %v6941 = vpack.c.b16 %v6597, %v6589
      %v6942 = vpack.c.b16 %v6598, %v6590
      %v6943 = vpack.c.b16 %v6599, %v6591
      %v6944 = vpack.c.b16 %v6600, %v6592
      %v6945 = vpack.c.b16 %v6601, %v6593
      %v6946 = vpack.c.b16 %v6610, %v6602
      %v6947 = vpack.c.b16 %v6611, %v6603
      %v6948 = vpack.c.b16 %v6612, %v6604
      %v6949 = vpack.c.b16 %v6613, %v6605
      %v6950 = vpack.c.b16 %v6614, %v6606
      %v6951 = vpack.c.b16 %v6615, %v6607
      %v6952 = vpack.c.b16 %v6616, %v6608
      %v6953 = vpack.c.b16 %v6617, %v6609
      %v6954 = vpack.c.b16 %v6626, %v6618
      %v6955 = vpack.c.b16 %v6627, %v6619
      %v6956 = vpack.c.b16 %v6628, %v6620
      %v6957 = vpack.c.b16 %v6629, %v6621
      %v6958 = vpack.c.b16 %v6630, %v6622
      %v6959 = vpack.c.b16 %v6631, %v6623
      %v6960 = vpack.c.b16 %v6632, %v6624
      %v6961 = vpack.c.b16 %v6633, %v6625
      %v6962 = vpack.c.b16 %v6642, %v6634
      %v6963 = vpack.c.b16 %v6643, %v6635
      %v6964 = vpack.c.b16 %v6644, %v6636
      %v6965 = vpack.c.b16 %v6645, %v6637
      %v6966 = vpack.c.b16 %v6646, %v6638
      %v6967 = vpack.c.b16 %v6647, %v6639
      %v6968 = vpack.c.b16 %v6648, %v6640
      %v6969 = vpack.c.b16 %v6649, %v6641
      %v6970 = vpack.c.b16 %v6658, %v6650
      %v6971 = vpack.c.b16 %v6659, %v6651
      %v6972 = vpack.c.b16 %v6660, %v6652
      %v6973 = vpack.c.b16 %v6661, %v6653
      %v6974 = vpack.c.b16 %v6662, %v6654
      %v6975 = vpack.c.b16 %v6663, %v6655
      %v6976 = vpack.c.b16 %v6664, %v6656
      %v6977 = vpack.c.b16 %v6665, %v6657
      %v6978 = vpack.c.b16 %v6674, %v6666
      %v6979 = vpack.c.b16 %v6675, %v6667
      %v6980 = vpack.c.b16 %v6676, %v6668
      %v6981 = vpack.c.b16 %v6677, %v6669
      %v6982 = vpack.c.b16 %v6678, %v6670
      %v6983 = vpack.c.b16 %v6679, %v6671
      %v6984 = vpack.c.b16 %v6680, %v6672
      %v6985 = vpack.c.b16 %v6681, %v6673
      %v6986 = vpack.c.b16 %v6690, %v6682
      %v6987 = vpack.c.b16 %v6691, %v6683
      %v6988 = vpack.c.b16 %v6692, %v6684
      %v6989 = vpack.c.b16 %v6693, %v6685
      %v6990 = vpack.c.b16 %v6694, %v6686
      %v6991 = vpack.c.b16 %v6695, %v6687
      %v6992 = vpack.c.b16 %v6696, %v6688
      %v6993 = vpack.c.b16 %v6697, %v6689
      %v6994 = vpack.c.b16 %v6706, %v6698
      %v6995 = vpack.c.b16 %v6707, %v6699
      %v6996 = vpack.c.b16 %v6708, %v6700
      %v6997 = vpack.c.b16 %v6709, %v6701
      %v6998 = vpack.c.b16 %v6710, %v6702
      %v6999 = vpack.c.b16 %v6711, %v6703
      %v7000 = vpack.c.b16 %v6712, %v6704
      %v7001 = vpack.c.b16 %v6713, %v6705
      %v7002 = vpack.c.b16 %v6722, %v6714
      %v7003 = vpack.c.b16 %v6723, %v6715
      %v7004 = vpack.c.b16 %v6724, %v6716
      %v7005 = vpack.c.b16 %v6725, %v6717
      %v7006 = vpack.c.b16 %v6726, %v6718
      %v7007 = vpack.c.b16 %v6727, %v6719
      %v7008 = vpack.c.b16 %v6728, %v6720
      %v7009 = vpack.c.b16 %v6729, %v6721
      %v7010 = vpack.c.b16 %v6738, %v6730
      %v7011 = vpack.c.b16 %v6739, %v6731
      %v7012 = vpack.c.b16 %v6740, %v6732
      %v7013 = vpack.c.b16 %v6741, %v6733
      %v7014 = vpack.c.b16 %v6742, %v6734
      %v7015 = vpack.c.b16 %v6743, %v6735
      %v7016 = vpack.c.b16 %v6744, %v6736
      %v7017 = vpack.c.b16 %v6745, %v6737
      %v7018 = vpack.c.b16 %v6754, %v6746
      %v7019 = vpack.c.b16 %v6755, %v6747
      %v7020 = vpack.c.b16 %v6756, %v6748
      %v7021 = vpack.c.b16 %v6757, %v6749
      %v7022 = vpack.c.b16 %v6758, %v6750
      %v7023 = vpack.c.b16 %v6759, %v6751
      %v7024 = vpack.c.b16 %v6760, %v6752
      %v7025 = vpack.c.b16 %v6761, %v6753
      %v7026 = vpack.c.b16 %v6770, %v6762
      %v7027 = vpack.c.b16 %v6771, %v6763
      %v7028 = vpack.c.b16 %v6772, %v6764
      %v7029 = vpack.c.b16 %v6773, %v6765
      %v7030 = vpack.c.b16 %v6774, %v6766
      %v7031 = vpack.c.b16 %v6775, %v6767
      %v7032 = vpack.c.b16 %v6776, %v6768
      %v7033 = vpack.c.b16 %v6777, %v6769
      %7290 = vmatprep.subr.bf16.mxu0 %v6779
      %7291 = vmatpush1.bf16.msra.mxu0 %v6778
      %7292 = vmatprep.subr.bf16.mxu0 %v6787
      %7293 = vmatpush1.bf16.msra.mxu0 %v6786
      %7294 = vmatprep.subr.bf16.mxu0 %v6795
      %7295 = vmatpush1.bf16.msra.mxu0 %v6794
      %7296 = vmatprep.subr.bf16.mxu0 %v6803
      %7297 = vmatpush1.bf16.msra.mxu0 %v6802
      %7298 = vmatprep.subr.bf16.mxu0 %v6811
      %7299 = vmatpush1.bf16.msra.mxu0 %v6810
      %7300 = vmatprep.subr.bf16.mxu0 %v6819
      %7301 = vmatpush1.bf16.msra.mxu0 %v6818
      %7302 = vmatprep.subr.bf16.mxu0 %v6827
      %7303 = vmatpush1.bf16.msra.mxu0 %v6826
      %7304 = vmatprep.subr.bf16.mxu0 %v6835
      %7305 = vmatpush1.bf16.msra.mxu0 %v6834
      %7306 = vmatprep.subr.bf16.mxu0 %v6843
      %7307 = vmatpush1.bf16.msra.mxu0 %v6842
      %7308 = vmatprep.subr.bf16.mxu0 %v6851
      %7309 = vmatpush1.bf16.msra.mxu0 %v6850
      %7310 = vmatprep.subr.bf16.mxu0 %v6859
      %7311 = vmatpush1.bf16.msra.mxu0 %v6858
      %7312 = vmatprep.subr.bf16.mxu0 %v6867
      %7313 = vmatpush1.bf16.msra.mxu0 %v6866
      %7314 = vmatprep.subr.bf16.mxu0 %v6875
      %7315 = vmatpush1.bf16.msra.mxu0 %v6874
      %7316 = vmatprep.subr.bf16.mxu0 %v6883
      %7317 = vmatpush1.bf16.msra.mxu0 %v6882
      %7318 = vmatprep.subr.bf16.mxu0 %v6891
      %7319 = vmatpush1.bf16.msra.mxu0 %v6890
      %7320 = vmatprep.subr.bf16.mxu0 %v6899
      %7321 = vmatpush1.bf16.msra.mxu0 %v6898
      %7322 = vmatprep.mubr.bf16.mxu0 %v5709
      %7323 = vmatmul.mubr.bf16.gmra.mrb[0].mxu0 %v5708
      %v7324 = vpop.f32.mrb[0].mxu0
      %v7325 = vadd.f32 %v5973, %v7324
      %v7326 = vpop.f32.mrb[0].mxu0
      %v7327 = vadd.f32 %v5977, %v7326
      %v7328 = vpop.f32.mrb[0].mxu0
      %v7329 = vpop.f32.mrb[0].mxu0
      %7330 = vdwg.mxu0
      %7331 = vmatprep.subr.bf16.mxu0 %v6907
      %7332 = vmatpush1.bf16.msra.mxu0 %v6906
      %7333 = vmatprep.subr.bf16.mxu0 %v6915
      %7334 = vmatpush1.bf16.msra.mxu0 %v6914
      %7335 = vmatprep.subr.bf16.mxu0 %v6923
      %7336 = vmatpush1.bf16.msra.mxu0 %v6922
      %7337 = vmatprep.subr.bf16.mxu0 %v6931
      %7338 = vmatpush1.bf16.msra.mxu0 %v6930
      %7339 = vmatprep.subr.bf16.mxu0 %v6939
      %7340 = vmatpush1.bf16.msra.mxu0 %v6938
      %7341 = vmatprep.subr.bf16.mxu0 %v6947
      %7342 = vmatpush1.bf16.msra.mxu0 %v6946
      %7343 = vmatprep.subr.bf16.mxu0 %v6955
      %7344 = vmatpush1.bf16.msra.mxu0 %v6954
      %7345 = vmatprep.subr.bf16.mxu0 %v6963
      %7346 = vmatpush1.bf16.msra.mxu0 %v6962
      %7347 = vmatprep.subr.bf16.mxu0 %v6971
      %7348 = vmatpush1.bf16.msra.mxu0 %v6970
      %7349 = vmatprep.subr.bf16.mxu0 %v6979
      %7350 = vmatpush1.bf16.msra.mxu0 %v6978
      %7351 = vmatprep.subr.bf16.mxu0 %v6987
      %7352 = vmatpush1.bf16.msra.mxu0 %v6986
      %7353 = vmatprep.subr.bf16.mxu0 %v6995
      %7354 = vmatpush1.bf16.msra.mxu0 %v6994
      %7355 = vmatprep.subr.bf16.mxu0 %v7003
      %7356 = vmatpush1.bf16.msra.mxu0 %v7002
      %7357 = vmatprep.subr.bf16.mxu0 %v7011
      %7358 = vmatpush1.bf16.msra.mxu0 %v7010
      %7359 = vmatprep.subr.bf16.mxu0 %v7019
      %7360 = vmatpush1.bf16.msra.mxu0 %v7018
      %7361 = vmatprep.subr.bf16.mxu0 %v7027
      %7362 = vmatpush1.bf16.msra.mxu0 %v7026
      %7363 = vmatprep.mubr.bf16.mxu0 %v5711
      %7364 = vmatmul.mubr.bf16.gmra.mrb[0].mxu0 %v5710
      %v7365 = vpop.f32.mrb[0].mxu0
      %v7366 = vadd.f32 %v7325, %v7365
      %v7367 = vpop.f32.mrb[0].mxu0
      %v7368 = vadd.f32 %v7327, %v7367
      %v7369 = vpop.f32.mrb[0].mxu0
      %v7370 = vpop.f32.mrb[0].mxu0
      %7371 = vdwg.mxu0
      %7372 = vmatprep.subr.bf16.mxu0 %v6781
      %7373 = vmatpush1.bf16.msra.mxu0 %v6780
      %7374 = vmatprep.subr.bf16.mxu0 %v6789
      %7375 = vmatpush1.bf16.msra.mxu0 %v6788
      %7376 = vmatprep.subr.bf16.mxu0 %v6797
      %7377 = vmatpush1.bf16.msra.mxu0 %v6796
      %7378 = vmatprep.subr.bf16.mxu0 %v6805
      %7379 = vmatpush1.bf16.msra.mxu0 %v6804
      %7380 = vmatprep.subr.bf16.mxu0 %v6813
      %7381 = vmatpush1.bf16.msra.mxu0 %v6812
      %7382 = vmatprep.subr.bf16.mxu0 %v6821
      %7383 = vmatpush1.bf16.msra.mxu0 %v6820
      %7384 = vmatprep.subr.bf16.mxu0 %v6829
      %7385 = vmatpush1.bf16.msra.mxu0 %v6828
      %7386 = vmatprep.subr.bf16.mxu0 %v6837
      %7387 = vmatpush1.bf16.msra.mxu0 %v6836
      %7388 = vmatprep.subr.bf16.mxu0 %v6845
      %7389 = vmatpush1.bf16.msra.mxu0 %v6844
      %7390 = vmatprep.subr.bf16.mxu0 %v6853
      %7391 = vmatpush1.bf16.msra.mxu0 %v6852
      %7392 = vmatprep.subr.bf16.mxu0 %v6861
      %7393 = vmatpush1.bf16.msra.mxu0 %v6860
      %7394 = vmatprep.subr.bf16.mxu0 %v6869
      %7395 = vmatpush1.bf16.msra.mxu0 %v6868
      %7396 = vmatprep.subr.bf16.mxu0 %v6877
      %7397 = vmatpush1.bf16.msra.mxu0 %v6876
      %7398 = vmatprep.subr.bf16.mxu0 %v6885
      %7399 = vmatpush1.bf16.msra.mxu0 %v6884
      %7400 = vmatprep.subr.bf16.mxu0 %v6893
      %7401 = vmatpush1.bf16.msra.mxu0 %v6892
      %7402 = vmatprep.subr.bf16.mxu0 %v6901
      %7403 = vmatpush1.bf16.msra.mxu0 %v6900
      %7404 = vmatprep.mubr.bf16.mxu0 %v5709
      %7405 = vmatmul.mubr.bf16.gmra.mrb[0].mxu0 %v5708
      %v7406 = vpop.f32.mrb[0].mxu0
      %v7407 = vadd.f32 %v5981, %v7406
      %v7408 = vpop.f32.mrb[0].mxu0
      %v7409 = vadd.f32 %v5985, %v7408
      %v7410 = vpop.f32.mrb[0].mxu0
      %v7411 = vpop.f32.mrb[0].mxu0
      %7412 = vdwg.mxu0
      %7413 = vmatprep.subr.bf16.mxu0 %v6909
      %7414 = vmatpush1.bf16.msra.mxu0 %v6908
      %7415 = vmatprep.subr.bf16.mxu0 %v6917
      %7416 = vmatpush1.bf16.msra.mxu0 %v6916
      %7417 = vmatprep.subr.bf16.mxu0 %v6925
      %7418 = vmatpush1.bf16.msra.mxu0 %v6924
      %7419 = vmatprep.subr.bf16.mxu0 %v6933
      %7420 = vmatpush1.bf16.msra.mxu0 %v6932
      %7421 = vmatprep.subr.bf16.mxu0 %v6941
      %7422 = vmatpush1.bf16.msra.mxu0 %v6940
      %7423 = vmatprep.subr.bf16.mxu0 %v6949
      %7424 = vmatpush1.bf16.msra.mxu0 %v6948
      %7425 = vmatprep.subr.bf16.mxu0 %v6957
      %7426 = vmatpush1.bf16.msra.mxu0 %v6956
      %7427 = vmatprep.subr.bf16.mxu0 %v6965
      %7428 = vmatpush1.bf16.msra.mxu0 %v6964
      %7429 = vmatprep.subr.bf16.mxu0 %v6973
      %7430 = vmatpush1.bf16.msra.mxu0 %v6972
      %7431 = vmatprep.subr.bf16.mxu0 %v6981
      %7432 = vmatpush1.bf16.msra.mxu0 %v6980
      %7433 = vmatprep.subr.bf16.mxu0 %v6989
      %7434 = vmatpush1.bf16.msra.mxu0 %v6988
      %7435 = vmatprep.subr.bf16.mxu0 %v6997
      %7436 = vmatpush1.bf16.msra.mxu0 %v6996
      %7437 = vmatprep.subr.bf16.mxu0 %v7005
      %7438 = vmatpush1.bf16.msra.mxu0 %v7004
      %7439 = vmatprep.subr.bf16.mxu0 %v7013
      %7440 = vmatpush1.bf16.msra.mxu0 %v7012
      %7441 = vmatprep.subr.bf16.mxu0 %v7021
      %7442 = vmatpush1.bf16.msra.mxu0 %v7020
      %7443 = vmatprep.subr.bf16.mxu0 %v7029
      %7444 = vmatpush1.bf16.msra.mxu0 %v7028
      %7445 = vmatprep.mubr.bf16.mxu0 %v5711
      %7446 = vmatmul.mubr.bf16.gmra.mrb[0].mxu0 %v5710
      %v7447 = vpop.f32.mrb[0].mxu0
      %v7448 = vadd.f32 %v7407, %v7447
      %v7449 = vpop.f32.mrb[0].mxu0
      %v7450 = vadd.f32 %v7409, %v7449
      %v7451 = vpop.f32.mrb[0].mxu0
      %v7452 = vpop.f32.mrb[0].mxu0
      %7453 = vdwg.mxu0
      %7454 = vmatprep.subr.bf16.mxu0 %v6783
      %7455 = vmatpush1.bf16.msra.mxu0 %v6782
      %7456 = vmatprep.subr.bf16.mxu0 %v6791
      %7457 = vmatpush1.bf16.msra.mxu0 %v6790
      %7458 = vmatprep.subr.bf16.mxu0 %v6799
      %7459 = vmatpush1.bf16.msra.mxu0 %v6798
      %7460 = vmatprep.subr.bf16.mxu0 %v6807
      %7461 = vmatpush1.bf16.msra.mxu0 %v6806
      %7462 = vmatprep.subr.bf16.mxu0 %v6815
      %7463 = vmatpush1.bf16.msra.mxu0 %v6814
      %7464 = vmatprep.subr.bf16.mxu0 %v6823
      %7465 = vmatpush1.bf16.msra.mxu0 %v6822
      %7466 = vmatprep.subr.bf16.mxu0 %v6831
      %7467 = vmatpush1.bf16.msra.mxu0 %v6830
      %7468 = vmatprep.subr.bf16.mxu0 %v6839
      %7469 = vmatpush1.bf16.msra.mxu0 %v6838
      %7470 = vmatprep.subr.bf16.mxu0 %v6847
      %7471 = vmatpush1.bf16.msra.mxu0 %v6846
      %7472 = vmatprep.subr.bf16.mxu0 %v6855
      %7473 = vmatpush1.bf16.msra.mxu0 %v6854
      %7474 = vmatprep.subr.bf16.mxu0 %v6863
      %7475 = vmatpush1.bf16.msra.mxu0 %v6862
      %7476 = vmatprep.subr.bf16.mxu0 %v6871
      %7477 = vmatpush1.bf16.msra.mxu0 %v6870
      %7478 = vmatprep.subr.bf16.mxu0 %v6879
      %7479 = vmatpush1.bf16.msra.mxu0 %v6878
      %7480 = vmatprep.subr.bf16.mxu0 %v6887
      %7481 = vmatpush1.bf16.msra.mxu0 %v6886
      %7482 = vmatprep.subr.bf16.mxu0 %v6895
      %7483 = vmatpush1.bf16.msra.mxu0 %v6894
      %7484 = vmatprep.subr.bf16.mxu0 %v6903
      %7485 = vmatpush1.bf16.msra.mxu0 %v6902
      %7486 = vmatprep.mubr.bf16.mxu0 %v5709
      %7487 = vmatmul.mubr.bf16.gmra.mrb[0].mxu0 %v5708
      %v7488 = vpop.f32.mrb[0].mxu0
      %v7489 = vadd.f32 %v5989, %v7488
      %v7490 = vpop.f32.mrb[0].mxu0
      %v7491 = vadd.f32 %v5993, %v7490
      %v7492 = vpop.f32.mrb[0].mxu0
      %v7493 = vpop.f32.mrb[0].mxu0
      %7494 = vdwg.mxu0
      %7495 = vmatprep.subr.bf16.mxu0 %v6911
      %7496 = vmatpush1.bf16.msra.mxu0 %v6910
      %7497 = vmatprep.subr.bf16.mxu0 %v6919
      %7498 = vmatpush1.bf16.msra.mxu0 %v6918
      %7499 = vmatprep.subr.bf16.mxu0 %v6927
      %7500 = vmatpush1.bf16.msra.mxu0 %v6926
      %7501 = vmatprep.subr.bf16.mxu0 %v6935
      %7502 = vmatpush1.bf16.msra.mxu0 %v6934
      %7503 = vmatprep.subr.bf16.mxu0 %v6943
      %7504 = vmatpush1.bf16.msra.mxu0 %v6942
      %7505 = vmatprep.subr.bf16.mxu0 %v6951
      %7506 = vmatpush1.bf16.msra.mxu0 %v6950
      %7507 = vmatprep.subr.bf16.mxu0 %v6959
      %7508 = vmatpush1.bf16.msra.mxu0 %v6958
      %7509 = vmatprep.subr.bf16.mxu0 %v6967
      %7510 = vmatpush1.bf16.msra.mxu0 %v6966
      %7511 = vmatprep.subr.bf16.mxu0 %v6975
      %7512 = vmatpush1.bf16.msra.mxu0 %v6974
      %7513 = vmatprep.subr.bf16.mxu0 %v6983
      %7514 = vmatpush1.bf16.msra.mxu0 %v6982
      %7515 = vmatprep.subr.bf16.mxu0 %v6991
      %7516 = vmatpush1.bf16.msra.mxu0 %v6990
      %7517 = vmatprep.subr.bf16.mxu0 %v6999
      %7518 = vmatpush1.bf16.msra.mxu0 %v6998
      %7519 = vmatprep.subr.bf16.mxu0 %v7007
      %7520 = vmatpush1.bf16.msra.mxu0 %v7006
      %7521 = vmatprep.subr.bf16.mxu0 %v7015
      %7522 = vmatpush1.bf16.msra.mxu0 %v7014
      %7523 = vmatprep.subr.bf16.mxu0 %v7023
      %7524 = vmatpush1.bf16.msra.mxu0 %v7022
      %7525 = vmatprep.subr.bf16.mxu0 %v7031
      %7526 = vmatpush1.bf16.msra.mxu0 %v7030
      %7527 = vmatprep.mubr.bf16.mxu0 %v5711
      %7528 = vmatmul.mubr.bf16.gmra.mrb[0].mxu0 %v5710
      %v7529 = vpop.f32.mrb[0].mxu0
      %v7530 = vadd.f32 %v7489, %v7529
      %v7531 = vpop.f32.mrb[0].mxu0
      %v7532 = vadd.f32 %v7491, %v7531
      %v7533 = vpop.f32.mrb[0].mxu0
      %v7534 = vpop.f32.mrb[0].mxu0
      %7535 = vdwg.mxu0
      %7536 = vmatprep.subr.bf16.mxu0 %v6785
      %7537 = vmatpush1.bf16.msra.mxu0 %v6784
      %7538 = vmatprep.subr.bf16.mxu0 %v6793
      %7539 = vmatpush1.bf16.msra.mxu0 %v6792
      %7540 = vmatprep.subr.bf16.mxu0 %v6801
      %7541 = vmatpush1.bf16.msra.mxu0 %v6800
      %7542 = vmatprep.subr.bf16.mxu0 %v6809
      %7543 = vmatpush1.bf16.msra.mxu0 %v6808
      %7544 = vmatprep.subr.bf16.mxu0 %v6817
      %7545 = vmatpush1.bf16.msra.mxu0 %v6816
      %7546 = vmatprep.subr.bf16.mxu0 %v6825
      %7547 = vmatpush1.bf16.msra.mxu0 %v6824
      %7548 = vmatprep.subr.bf16.mxu0 %v6833
      %7549 = vmatpush1.bf16.msra.mxu0 %v6832
      %7550 = vmatprep.subr.bf16.mxu0 %v6841
      %7551 = vmatpush1.bf16.msra.mxu0 %v6840
      %7552 = vmatprep.subr.bf16.mxu0 %v6849
      %7553 = vmatpush1.bf16.msra.mxu0 %v6848
      %7554 = vmatprep.subr.bf16.mxu0 %v6857
      %7555 = vmatpush1.bf16.msra.mxu0 %v6856
      %7556 = vmatprep.subr.bf16.mxu0 %v6865
      %7557 = vmatpush1.bf16.msra.mxu0 %v6864
      %7558 = vmatprep.subr.bf16.mxu0 %v6873
      %7559 = vmatpush1.bf16.msra.mxu0 %v6872
      %7560 = vmatprep.subr.bf16.mxu0 %v6881
      %7561 = vmatpush1.bf16.msra.mxu0 %v6880
      %7562 = vmatprep.subr.bf16.mxu0 %v6889
      %7563 = vmatpush1.bf16.msra.mxu0 %v6888
      %7564 = vmatprep.subr.bf16.mxu0 %v6897
      %7565 = vmatpush1.bf16.msra.mxu0 %v6896
      %7566 = vmatprep.subr.bf16.mxu0 %v6905
      %7567 = vmatpush1.bf16.msra.mxu0 %v6904
      %7568 = vmatprep.mubr.bf16.mxu0 %v5709
      %7569 = vmatmul.mubr.bf16.gmra.mrb[0].mxu0 %v5708
      %v7570 = vpop.f32.mrb[0].mxu0
      %v7571 = vadd.f32 %v5997, %v7570
      %v7572 = vpop.f32.mrb[0].mxu0
      %v7573 = vadd.f32 %v6001, %v7572
      %v7574 = vpop.f32.mrb[0].mxu0
      %v7575 = vpop.f32.mrb[0].mxu0
      %7576 = vdwg.mxu0
      %7577 = vmatprep.subr.bf16.mxu0 %v6913
      %7578 = vmatpush1.bf16.msra.mxu0 %v6912
      %7579 = vmatprep.subr.bf16.mxu0 %v6921
      %7580 = vmatpush1.bf16.msra.mxu0 %v6920
      %7581 = vmatprep.subr.bf16.mxu0 %v6929
      %7582 = vmatpush1.bf16.msra.mxu0 %v6928
      %7583 = vmatprep.subr.bf16.mxu0 %v6937
      %7584 = vmatpush1.bf16.msra.mxu0 %v6936
      %7585 = vmatprep.subr.bf16.mxu0 %v6945
      %7586 = vmatpush1.bf16.msra.mxu0 %v6944
      %7587 = vmatprep.subr.bf16.mxu0 %v6953
      %7588 = vmatpush1.bf16.msra.mxu0 %v6952
      %7589 = vmatprep.subr.bf16.mxu0 %v6961
      %7590 = vmatpush1.bf16.msra.mxu0 %v6960
      %7591 = vmatprep.subr.bf16.mxu0 %v6969
      %7592 = vmatpush1.bf16.msra.mxu0 %v6968
      %7593 = vmatprep.subr.bf16.mxu0 %v6977
      %7594 = vmatpush1.bf16.msra.mxu0 %v6976
      %7595 = vmatprep.subr.bf16.mxu0 %v6985
      %7596 = vmatpush1.bf16.msra.mxu0 %v6984
      %7597 = vmatprep.subr.bf16.mxu0 %v6993
      %7598 = vmatpush1.bf16.msra.mxu0 %v6992
      %7599 = vmatprep.subr.bf16.mxu0 %v7001
      %7600 = vmatpush1.bf16.msra.mxu0 %v7000
      %7601 = vmatprep.subr.bf16.mxu0 %v7009
      %7602 = vmatpush1.bf16.msra.mxu0 %v7008
      %7603 = vmatprep.subr.bf16.mxu0 %v7017
      %7604 = vmatpush1.bf16.msra.mxu0 %v7016
      %7605 = vmatprep.subr.bf16.mxu0 %v7025
      %7606 = vmatpush1.bf16.msra.mxu0 %v7024
      %7607 = vmatprep.subr.bf16.mxu0 %v7033
      %7608 = vmatpush1.bf16.msra.mxu0 %v7032
      %7609 = vmatprep.mubr.bf16.mxu0 %v5711
      %7610 = vmatmul.mubr.bf16.gmra.mrb[0].mxu0 %v5710
      %v7611 = vpop.f32.mrb[0].mxu0
      %v7612 = vadd.f32 %v7571, %v7611
      %v7613 = vpop.f32.mrb[0].mxu0
      %v7614 = vadd.f32 %v7573, %v7613
      %v7615 = vpop.f32.mrb[0].mxu0
      %v7616 = vpop.f32.mrb[0].mxu0
      %7617 = vdwg.mxu0
      %v7618 = vmax.f32 %v7366, 0.0
      %v7619 = vmax.f32 %v7368, 0.0
      %v7620 = vmax.f32 %v7448, 0.0
      %v7621 = vmax.f32 %v7450, 0.0
      %v7622 = vmax.f32 %v7530, 0.0
      %v7623 = vmax.f32 %v7532, 0.0
      %v7624 = vmax.f32 %v7612, 0.0
      %v7625 = vmax.f32 %v7614, 0.0
      %v7626 = vpack.c.bf16 %v7618, %v7618
      %v7627 = vpack.c.bf16 %v7619, %v7619
      %v7628 = vpack.c.bf16 %v7620, %v7620
      %v7629 = vpack.c.bf16 %v7621, %v7621
      %v7630 = vpack.c.bf16 %v7622, %v7622
      %v7631 = vpack.c.bf16 %v7623, %v7623
      %v7632 = vpack.c.bf16 %v7624, %v7624
      %v7633 = vpack.c.bf16 %v7625, %v7625
      %v7634 = vld [vmem:[%s814] sm:$0xff]
      %v7635 = vld [vmem:[%s814 + $0x8] sm:$0xff]
      %v7636 = vld [vmem:[%s814 + $0x10] sm:$0xff]
      %v7637 = vld [vmem:[%s814 + $0x18] sm:$0xff]
      %v7638 = vld [vmem:[%s814 + $0x20] sm:$0xff]
      %v7639 = vld [vmem:[%s814 + $0x28] sm:$0xff]
      %v7640 = vld [vmem:[%s814 + $0x30] sm:$0xff]
      %v7641 = vld [vmem:[%s814 + $0x38] sm:$0xff]
      %v7642 = vld [vmem:[%s814 + $0x40] sm:$0xff]
      %v7643 = vld [vmem:[%s814 + $0x48] sm:$0xff]
      %v7644 = vld [vmem:[%s814 + $0x50] sm:$0xff]
      %v7645 = vld [vmem:[%s814 + $0x58] sm:$0xff]
      %v7646 = vld [vmem:[%s814 + $0x60] sm:$0xff]
      %v7647 = vld [vmem:[%s814 + $0x68] sm:$0xff]
      %v7648 = vld [vmem:[%s814 + $0x70] sm:$0xff]
      %v7649 = vld [vmem:[%s814 + $0x78] sm:$0xff]
      %v7650 = vld [vmem:[%s814 + $0x80] sm:$0xff]
      %v7651 = vld [vmem:[%s814 + $0x88] sm:$0xff]
      %v7652 = vld [vmem:[%s814 + $0x90] sm:$0xff]
      %v7653 = vld [vmem:[%s814 + $0x98] sm:$0xff]
      %v7654 = vld [vmem:[%s814 + $0xa0] sm:$0xff]
      %v7655 = vld [vmem:[%s814 + $0xa8] sm:$0xff]
      %v7656 = vld [vmem:[%s814 + $0xb0] sm:$0xff]
      %v7657 = vld [vmem:[%s814 + $0xb8] sm:$0xff]
      %v7658 = vld [vmem:[%s814 + $0xc0] sm:$0xff]
      %v7659 = vld [vmem:[%s814 + $0xc8] sm:$0xff]
      %v7660 = vld [vmem:[%s814 + $0xd0] sm:$0xff]
      %v7661 = vld [vmem:[%s814 + $0xd8] sm:$0xff]
      %v7662 = vld [vmem:[%s814 + $0xe0] sm:$0xff]
      %v7663 = vld [vmem:[%s814 + $0xe8] sm:$0xff]
      %v7664 = vld [vmem:[%s814 + $0xf0] sm:$0xff]
      %v7665 = vld [vmem:[%s814 + $0xf8] sm:$0xff]
      %v7666 = vld [vmem:[%s814 + $0x100] sm:$0xff]
      %v7667 = vld [vmem:[%s814 + $0x108] sm:$0xff]
      %v7668 = vld [vmem:[%s814 + $0x110] sm:$0xff]
      %v7669 = vld [vmem:[%s814 + $0x118] sm:$0xff]
      %v7670 = vld [vmem:[%s814 + $0x120] sm:$0xff]
      %v7671 = vld [vmem:[%s814 + $0x128] sm:$0xff]
      %v7672 = vld [vmem:[%s814 + $0x130] sm:$0xff]
      %v7673 = vld [vmem:[%s814 + $0x138] sm:$0xff]
      %v7674 = vld [vmem:[%s814 + $0x140] sm:$0xff]
      %v7675 = vld [vmem:[%s814 + $0x148] sm:$0xff]
      %v7676 = vld [vmem:[%s814 + $0x150] sm:$0xff]
      %v7677 = vld [vmem:[%s814 + $0x158] sm:$0xff]
      %v7678 = vld [vmem:[%s814 + $0x160] sm:$0xff]
      %v7679 = vld [vmem:[%s814 + $0x168] sm:$0xff]
      %v7680 = vld [vmem:[%s814 + $0x170] sm:$0xff]
      %v7681 = vld [vmem:[%s814 + $0x178] sm:$0xff]
      %v7682 = vld [vmem:[%s814 + $0x180] sm:$0xff]
      %v7683 = vld [vmem:[%s814 + $0x188] sm:$0xff]
      %v7684 = vld [vmem:[%s814 + $0x190] sm:$0xff]
      %v7685 = vld [vmem:[%s814 + $0x198] sm:$0xff]
      %v7686 = vld [vmem:[%s814 + $0x1a0] sm:$0xff]
      %v7687 = vld [vmem:[%s814 + $0x1a8] sm:$0xff]
      %v7688 = vld [vmem:[%s814 + $0x1b0] sm:$0xff]
      %v7689 = vld [vmem:[%s814 + $0x1b8] sm:$0xff]
      %v7690 = vld [vmem:[%s814 + $0x1c0] sm:$0xff]
      %v7691 = vld [vmem:[%s814 + $0x1c8] sm:$0xff]
      %v7692 = vld [vmem:[%s814 + $0x1d0] sm:$0xff]
      %v7693 = vld [vmem:[%s814 + $0x1d8] sm:$0xff]
      %v7694 = vld [vmem:[%s814 + $0x1e0] sm:$0xff]
      %v7695 = vld [vmem:[%s814 + $0x1e8] sm:$0xff]
      %v7696 = vld [vmem:[%s814 + $0x1f0] sm:$0xff]
      %v7697 = vld [vmem:[%s814 + $0x1f8] sm:$0xff]
      %v7698 = vld [vmem:[%s814 + $0x200] sm:$0xff]
      %v7699 = vld [vmem:[%s814 + $0x208] sm:$0xff]
      %v7700 = vld [vmem:[%s814 + $0x210] sm:$0xff]
      %v7701 = vld [vmem:[%s814 + $0x218] sm:$0xff]
      %v7702 = vld [vmem:[%s814 + $0x220] sm:$0xff]
      %v7703 = vld [vmem:[%s814 + $0x228] sm:$0xff]
      %v7704 = vld [vmem:[%s814 + $0x230] sm:$0xff]
      %v7705 = vld [vmem:[%s814 + $0x238] sm:$0xff]
      %v7706 = vld [vmem:[%s814 + $0x240] sm:$0xff]
      %v7707 = vld [vmem:[%s814 + $0x248] sm:$0xff]
      %v7708 = vld [vmem:[%s814 + $0x250] sm:$0xff]
      %v7709 = vld [vmem:[%s814 + $0x258] sm:$0xff]
      %v7710 = vld [vmem:[%s814 + $0x260] sm:$0xff]
      %v7711 = vld [vmem:[%s814 + $0x268] sm:$0xff]
      %v7712 = vld [vmem:[%s814 + $0x270] sm:$0xff]
      %v7713 = vld [vmem:[%s814 + $0x278] sm:$0xff]
      %v7714 = vld [vmem:[%s814 + $0x280] sm:$0xff]
      %v7715 = vld [vmem:[%s814 + $0x288] sm:$0xff]
      %v7716 = vld [vmem:[%s814 + $0x290] sm:$0xff]
      %v7717 = vld [vmem:[%s814 + $0x298] sm:$0xff]
      %v7718 = vld [vmem:[%s814 + $0x2a0] sm:$0xff]
      %v7719 = vld [vmem:[%s814 + $0x2a8] sm:$0xff]
      %v7720 = vld [vmem:[%s814 + $0x2b0] sm:$0xff]
      %v7721 = vld [vmem:[%s814 + $0x2b8] sm:$0xff]
      %v7722 = vld [vmem:[%s814 + $0x2c0] sm:$0xff]
      %v7723 = vld [vmem:[%s814 + $0x2c8] sm:$0xff]
      %v7724 = vld [vmem:[%s814 + $0x2d0] sm:$0xff]
      %v7725 = vld [vmem:[%s814 + $0x2d8] sm:$0xff]
      %v7726 = vld [vmem:[%s814 + $0x2e0] sm:$0xff]
      %v7727 = vld [vmem:[%s814 + $0x2e8] sm:$0xff]
      %v7728 = vld [vmem:[%s814 + $0x2f0] sm:$0xff]
      %v7729 = vld [vmem:[%s814 + $0x2f8] sm:$0xff]
      %v7730 = vld [vmem:[%s814 + $0x300] sm:$0xff]
      %v7731 = vld [vmem:[%s814 + $0x308] sm:$0xff]
      %v7732 = vld [vmem:[%s814 + $0x310] sm:$0xff]
      %v7733 = vld [vmem:[%s814 + $0x318] sm:$0xff]
      %v7734 = vld [vmem:[%s814 + $0x320] sm:$0xff]
      %v7735 = vld [vmem:[%s814 + $0x328] sm:$0xff]
      %v7736 = vld [vmem:[%s814 + $0x330] sm:$0xff]
      %v7737 = vld [vmem:[%s814 + $0x338] sm:$0xff]
      %v7738 = vld [vmem:[%s814 + $0x340] sm:$0xff]
      %v7739 = vld [vmem:[%s814 + $0x348] sm:$0xff]
      %v7740 = vld [vmem:[%s814 + $0x350] sm:$0xff]
      %v7741 = vld [vmem:[%s814 + $0x358] sm:$0xff]
      %v7742 = vld [vmem:[%s814 + $0x360] sm:$0xff]
      %v7743 = vld [vmem:[%s814 + $0x368] sm:$0xff]
      %v7744 = vld [vmem:[%s814 + $0x370] sm:$0xff]
      %v7745 = vld [vmem:[%s814 + $0x378] sm:$0xff]
      %v7746 = vld [vmem:[%s814 + $0x380] sm:$0xff]
      %v7747 = vld [vmem:[%s814 + $0x388] sm:$0xff]
      %v7748 = vld [vmem:[%s814 + $0x390] sm:$0xff]
      %v7749 = vld [vmem:[%s814 + $0x398] sm:$0xff]
      %v7750 = vld [vmem:[%s814 + $0x3a0] sm:$0xff]
      %v7751 = vld [vmem:[%s814 + $0x3a8] sm:$0xff]
      %v7752 = vld [vmem:[%s814 + $0x3b0] sm:$0xff]
      %v7753 = vld [vmem:[%s814 + $0x3b8] sm:$0xff]
      %v7754 = vld [vmem:[%s814 + $0x3c0] sm:$0xff]
      %v7755 = vld [vmem:[%s814 + $0x3c8] sm:$0xff]
      %v7756 = vld [vmem:[%s814 + $0x3d0] sm:$0xff]
      %v7757 = vld [vmem:[%s814 + $0x3d8] sm:$0xff]
      %v7758 = vld [vmem:[%s814 + $0x3e0] sm:$0xff]
      %v7759 = vld [vmem:[%s814 + $0x3e8] sm:$0xff]
      %v7760 = vld [vmem:[%s814 + $0x3f0] sm:$0xff]
      %v7761 = vld [vmem:[%s814 + $0x3f8] sm:$0xff]
      %v7762 = vld [vmem:[%s814 + $0x400] sm:$0xff]
      %v7763 = vld [vmem:[%s814 + $0x408] sm:$0xff]
      %v7764 = vld [vmem:[%s814 + $0x410] sm:$0xff]
      %v7765 = vld [vmem:[%s814 + $0x418] sm:$0xff]
      %v7766 = vld [vmem:[%s814 + $0x420] sm:$0xff]
      %v7767 = vld [vmem:[%s814 + $0x428] sm:$0xff]
      %v7768 = vld [vmem:[%s814 + $0x430] sm:$0xff]
      %v7769 = vld [vmem:[%s814 + $0x438] sm:$0xff]
      %v7770 = vld [vmem:[%s814 + $0x440] sm:$0xff]
      %v7771 = vld [vmem:[%s814 + $0x448] sm:$0xff]
      %v7772 = vld [vmem:[%s814 + $0x450] sm:$0xff]
      %v7773 = vld [vmem:[%s814 + $0x458] sm:$0xff]
      %v7774 = vld [vmem:[%s814 + $0x460] sm:$0xff]
      %v7775 = vld [vmem:[%s814 + $0x468] sm:$0xff]
      %v7776 = vld [vmem:[%s814 + $0x470] sm:$0xff]
      %v7777 = vld [vmem:[%s814 + $0x478] sm:$0xff]
      %v7778 = vld [vmem:[%s814 + $0x480] sm:$0xff]
      %v7779 = vld [vmem:[%s814 + $0x488] sm:$0xff]
      %v7780 = vld [vmem:[%s814 + $0x490] sm:$0xff]
      %v7781 = vld [vmem:[%s814 + $0x498] sm:$0xff]
      %v7782 = vld [vmem:[%s814 + $0x4a0] sm:$0xff]
      %v7783 = vld [vmem:[%s814 + $0x4a8] sm:$0xff]
      %v7784 = vld [vmem:[%s814 + $0x4b0] sm:$0xff]
      %v7785 = vld [vmem:[%s814 + $0x4b8] sm:$0xff]
      %v7786 = vld [vmem:[%s814 + $0x4c0] sm:$0xff]
      %v7787 = vld [vmem:[%s814 + $0x4c8] sm:$0xff]
      %v7788 = vld [vmem:[%s814 + $0x4d0] sm:$0xff]
      %v7789 = vld [vmem:[%s814 + $0x4d8] sm:$0xff]
      %v7790 = vld [vmem:[%s814 + $0x4e0] sm:$0xff]
      %v7791 = vld [vmem:[%s814 + $0x4e8] sm:$0xff]
      %v7792 = vld [vmem:[%s814 + $0x4f0] sm:$0xff]
      %v7793 = vld [vmem:[%s814 + $0x4f8] sm:$0xff]
      %v7794 = vld [vmem:[%s814 + $0x500] sm:$0xff]
      %v7795 = vld [vmem:[%s814 + $0x508] sm:$0xff]
      %v7796 = vld [vmem:[%s814 + $0x510] sm:$0xff]
      %v7797 = vld [vmem:[%s814 + $0x518] sm:$0xff]
      %v7798 = vld [vmem:[%s814 + $0x520] sm:$0xff]
      %v7799 = vld [vmem:[%s814 + $0x528] sm:$0xff]
      %v7800 = vld [vmem:[%s814 + $0x530] sm:$0xff]
      %v7801 = vld [vmem:[%s814 + $0x538] sm:$0xff]
      %v7802 = vld [vmem:[%s814 + $0x540] sm:$0xff]
      %v7803 = vld [vmem:[%s814 + $0x548] sm:$0xff]
      %v7804 = vld [vmem:[%s814 + $0x550] sm:$0xff]
      %v7805 = vld [vmem:[%s814 + $0x558] sm:$0xff]
      %v7806 = vld [vmem:[%s814 + $0x560] sm:$0xff]
      %v7807 = vld [vmem:[%s814 + $0x568] sm:$0xff]
      %v7808 = vld [vmem:[%s814 + $0x570] sm:$0xff]
      %v7809 = vld [vmem:[%s814 + $0x578] sm:$0xff]
      %v7810 = vld [vmem:[%s814 + $0x580] sm:$0xff]
      %v7811 = vld [vmem:[%s814 + $0x588] sm:$0xff]
      %v7812 = vld [vmem:[%s814 + $0x590] sm:$0xff]
      %v7813 = vld [vmem:[%s814 + $0x598] sm:$0xff]
      %v7814 = vld [vmem:[%s814 + $0x5a0] sm:$0xff]
      %v7815 = vld [vmem:[%s814 + $0x5a8] sm:$0xff]
      %v7816 = vld [vmem:[%s814 + $0x5b0] sm:$0xff]
      %v7817 = vld [vmem:[%s814 + $0x5b8] sm:$0xff]
      %v7818 = vld [vmem:[%s814 + $0x5c0] sm:$0xff]
      %v7819 = vld [vmem:[%s814 + $0x5c8] sm:$0xff]
      %v7820 = vld [vmem:[%s814 + $0x5d0] sm:$0xff]
      %v7821 = vld [vmem:[%s814 + $0x5d8] sm:$0xff]
      %v7822 = vld [vmem:[%s814 + $0x5e0] sm:$0xff]
      %v7823 = vld [vmem:[%s814 + $0x5e8] sm:$0xff]
      %v7824 = vld [vmem:[%s814 + $0x5f0] sm:$0xff]
      %v7825 = vld [vmem:[%s814 + $0x5f8] sm:$0xff]
      %v7826 = vld [vmem:[%s814 + $0x600] sm:$0xff]
      %v7827 = vld [vmem:[%s814 + $0x608] sm:$0xff]
      %v7828 = vld [vmem:[%s814 + $0x610] sm:$0xff]
      %v7829 = vld [vmem:[%s814 + $0x618] sm:$0xff]
      %v7830 = vld [vmem:[%s814 + $0x620] sm:$0xff]
      %v7831 = vld [vmem:[%s814 + $0x628] sm:$0xff]
      %v7832 = vld [vmem:[%s814 + $0x630] sm:$0xff]
      %v7833 = vld [vmem:[%s814 + $0x638] sm:$0xff]
      %v7834 = vld [vmem:[%s814 + $0x640] sm:$0xff]
      %v7835 = vld [vmem:[%s814 + $0x648] sm:$0xff]
      %v7836 = vld [vmem:[%s814 + $0x650] sm:$0xff]
      %v7837 = vld [vmem:[%s814 + $0x658] sm:$0xff]
      %v7838 = vld [vmem:[%s814 + $0x660] sm:$0xff]
      %v7839 = vld [vmem:[%s814 + $0x668] sm:$0xff]
      %v7840 = vld [vmem:[%s814 + $0x670] sm:$0xff]
      %v7841 = vld [vmem:[%s814 + $0x678] sm:$0xff]
      %v7842 = vld [vmem:[%s814 + $0x680] sm:$0xff]
      %v7843 = vld [vmem:[%s814 + $0x688] sm:$0xff]
      %v7844 = vld [vmem:[%s814 + $0x690] sm:$0xff]
      %v7845 = vld [vmem:[%s814 + $0x698] sm:$0xff]
      %v7846 = vld [vmem:[%s814 + $0x6a0] sm:$0xff]
      %v7847 = vld [vmem:[%s814 + $0x6a8] sm:$0xff]
      %v7848 = vld [vmem:[%s814 + $0x6b0] sm:$0xff]
      %v7849 = vld [vmem:[%s814 + $0x6b8] sm:$0xff]
      %v7850 = vld [vmem:[%s814 + $0x6c0] sm:$0xff]
      %v7851 = vld [vmem:[%s814 + $0x6c8] sm:$0xff]
      %v7852 = vld [vmem:[%s814 + $0x6d0] sm:$0xff]
      %v7853 = vld [vmem:[%s814 + $0x6d8] sm:$0xff]
      %v7854 = vld [vmem:[%s814 + $0x6e0] sm:$0xff]
      %v7855 = vld [vmem:[%s814 + $0x6e8] sm:$0xff]
      %v7856 = vld [vmem:[%s814 + $0x6f0] sm:$0xff]
      %v7857 = vld [vmem:[%s814 + $0x6f8] sm:$0xff]
      %v7858 = vld [vmem:[%s814 + $0x700] sm:$0xff]
      %v7859 = vld [vmem:[%s814 + $0x708] sm:$0xff]
      %v7860 = vld [vmem:[%s814 + $0x710] sm:$0xff]
      %v7861 = vld [vmem:[%s814 + $0x718] sm:$0xff]
      %v7862 = vld [vmem:[%s814 + $0x720] sm:$0xff]
      %v7863 = vld [vmem:[%s814 + $0x728] sm:$0xff]
      %v7864 = vld [vmem:[%s814 + $0x730] sm:$0xff]
      %v7865 = vld [vmem:[%s814 + $0x738] sm:$0xff]
      %v7866 = vld [vmem:[%s814 + $0x740] sm:$0xff]
      %v7867 = vld [vmem:[%s814 + $0x748] sm:$0xff]
      %v7868 = vld [vmem:[%s814 + $0x750] sm:$0xff]
      %v7869 = vld [vmem:[%s814 + $0x758] sm:$0xff]
      %v7870 = vld [vmem:[%s814 + $0x760] sm:$0xff]
      %v7871 = vld [vmem:[%s814 + $0x768] sm:$0xff]
      %v7872 = vld [vmem:[%s814 + $0x770] sm:$0xff]
      %v7873 = vld [vmem:[%s814 + $0x778] sm:$0xff]
      %v7874 = vld [vmem:[%s814 + $0x780] sm:$0xff]
      %v7875 = vld [vmem:[%s814 + $0x788] sm:$0xff]
      %v7876 = vld [vmem:[%s814 + $0x790] sm:$0xff]
      %v7877 = vld [vmem:[%s814 + $0x798] sm:$0xff]
      %v7878 = vld [vmem:[%s814 + $0x7a0] sm:$0xff]
      %v7879 = vld [vmem:[%s814 + $0x7a8] sm:$0xff]
      %v7880 = vld [vmem:[%s814 + $0x7b0] sm:$0xff]
      %v7881 = vld [vmem:[%s814 + $0x7b8] sm:$0xff]
      %v7882 = vld [vmem:[%s814 + $0x7c0] sm:$0xff]
      %v7883 = vld [vmem:[%s814 + $0x7c8] sm:$0xff]
      %v7884 = vld [vmem:[%s814 + $0x7d0] sm:$0xff]
      %v7885 = vld [vmem:[%s814 + $0x7d8] sm:$0xff]
      %v7886 = vld [vmem:[%s814 + $0x7e0] sm:$0xff]
      %v7887 = vld [vmem:[%s814 + $0x7e8] sm:$0xff]
      %v7888 = vld [vmem:[%s814 + $0x7f0] sm:$0xff]
      %v7889 = vld [vmem:[%s814 + $0x7f8] sm:$0xff]
      %v7890 = vld [vmem:[%s840] sm:$0xf]
      %v7892 = vlaneseq
      %v7893 = vshrl.u32 %v7892, 7
      %v7894 = vsub.s32 0, %v7893
      %v7895 = vrot.slane %v7890, %v7894
      %v7896 = vlaneseq
      %v7897 = vshrl.u32 %v7896, 7
      %v7898 = vsub.s32 1, %v7897
      %v7899 = vrot.slane %v7890, %v7898
      %v7900 = vlaneseq
      %v7901 = vshrl.u32 %v7900, 7
      %v7902 = vsub.s32 2, %v7901
      %v7903 = vrot.slane %v7890, %v7902
      %v7904 = vlaneseq
      %v7905 = vshrl.u32 %v7904, 7
      %v7906 = vsub.s32 3, %v7905
      %v7907 = vrot.slane %v7890, %v7906
      %v8168 = vunpack.c.l.b16 %v7634
      %v8169 = vunpack.c.h.b16 %v7634
      %v8170 = vunpack.c.l.b16 %v7635
      %v8171 = vunpack.c.h.b16 %v7635
      %v8172 = vunpack.c.l.b16 %v7636
      %v8173 = vunpack.c.h.b16 %v7636
      %v8174 = vunpack.c.l.b16 %v7637
      %v8175 = vunpack.c.h.b16 %v7637
      %v8176 = vunpack.c.l.b16 %v7638
      %v8177 = vunpack.c.h.b16 %v7638
      %v8178 = vunpack.c.l.b16 %v7639
      %v8179 = vunpack.c.h.b16 %v7639
      %v8180 = vunpack.c.l.b16 %v7640
      %v8181 = vunpack.c.h.b16 %v7640
      %v8182 = vunpack.c.l.b16 %v7641
      %v8183 = vunpack.c.h.b16 %v7641
      %v8184 = vunpack.c.l.b16 %v7642
      %v8185 = vunpack.c.h.b16 %v7642
      %v8186 = vunpack.c.l.b16 %v7643
      %v8187 = vunpack.c.h.b16 %v7643
      %v8188 = vunpack.c.l.b16 %v7644
      %v8189 = vunpack.c.h.b16 %v7644
      %v8190 = vunpack.c.l.b16 %v7645
      %v8191 = vunpack.c.h.b16 %v7645
      %v8192 = vunpack.c.l.b16 %v7646
      %v8193 = vunpack.c.h.b16 %v7646
      %v8194 = vunpack.c.l.b16 %v7647
      %v8195 = vunpack.c.h.b16 %v7647
      %v8196 = vunpack.c.l.b16 %v7648
      %v8197 = vunpack.c.h.b16 %v7648
      %v8198 = vunpack.c.l.b16 %v7649
      %v8199 = vunpack.c.h.b16 %v7649
      %v8200 = vunpack.c.l.b16 %v7650
      %v8201 = vunpack.c.h.b16 %v7650
      %v8202 = vunpack.c.l.b16 %v7651
      %v8203 = vunpack.c.h.b16 %v7651
      %v8204 = vunpack.c.l.b16 %v7652
      %v8205 = vunpack.c.h.b16 %v7652
      %v8206 = vunpack.c.l.b16 %v7653
      %v8207 = vunpack.c.h.b16 %v7653
      %v8208 = vunpack.c.l.b16 %v7654
      %v8209 = vunpack.c.h.b16 %v7654
      %v8210 = vunpack.c.l.b16 %v7655
      %v8211 = vunpack.c.h.b16 %v7655
      %v8212 = vunpack.c.l.b16 %v7656
      %v8213 = vunpack.c.h.b16 %v7656
      %v8214 = vunpack.c.l.b16 %v7657
      %v8215 = vunpack.c.h.b16 %v7657
      %v8216 = vunpack.c.l.b16 %v7658
      %v8217 = vunpack.c.h.b16 %v7658
      %v8218 = vunpack.c.l.b16 %v7659
      %v8219 = vunpack.c.h.b16 %v7659
      %v8220 = vunpack.c.l.b16 %v7660
      %v8221 = vunpack.c.h.b16 %v7660
      %v8222 = vunpack.c.l.b16 %v7661
      %v8223 = vunpack.c.h.b16 %v7661
      %v8224 = vunpack.c.l.b16 %v7662
      %v8225 = vunpack.c.h.b16 %v7662
      %v8226 = vunpack.c.l.b16 %v7663
      %v8227 = vunpack.c.h.b16 %v7663
      %v8228 = vunpack.c.l.b16 %v7664
      %v8229 = vunpack.c.h.b16 %v7664
      %v8230 = vunpack.c.l.b16 %v7665
      %v8231 = vunpack.c.h.b16 %v7665
      %v8232 = vunpack.c.l.b16 %v7666
      %v8233 = vunpack.c.h.b16 %v7666
      %v8234 = vunpack.c.l.b16 %v7667
      %v8235 = vunpack.c.h.b16 %v7667
      %v8236 = vunpack.c.l.b16 %v7668
      %v8237 = vunpack.c.h.b16 %v7668
      %v8238 = vunpack.c.l.b16 %v7669
      %v8239 = vunpack.c.h.b16 %v7669
      %v8240 = vunpack.c.l.b16 %v7670
      %v8241 = vunpack.c.h.b16 %v7670
      %v8242 = vunpack.c.l.b16 %v7671
      %v8243 = vunpack.c.h.b16 %v7671
      %v8244 = vunpack.c.l.b16 %v7672
      %v8245 = vunpack.c.h.b16 %v7672
      %v8246 = vunpack.c.l.b16 %v7673
      %v8247 = vunpack.c.h.b16 %v7673
      %v8248 = vunpack.c.l.b16 %v7674
      %v8249 = vunpack.c.h.b16 %v7674
      %v8250 = vunpack.c.l.b16 %v7675
      %v8251 = vunpack.c.h.b16 %v7675
      %v8252 = vunpack.c.l.b16 %v7676
      %v8253 = vunpack.c.h.b16 %v7676
      %v8254 = vunpack.c.l.b16 %v7677
      %v8255 = vunpack.c.h.b16 %v7677
      %v8256 = vunpack.c.l.b16 %v7678
      %v8257 = vunpack.c.h.b16 %v7678
      %v8258 = vunpack.c.l.b16 %v7679
      %v8259 = vunpack.c.h.b16 %v7679
      %v8260 = vunpack.c.l.b16 %v7680
      %v8261 = vunpack.c.h.b16 %v7680
      %v8262 = vunpack.c.l.b16 %v7681
      %v8263 = vunpack.c.h.b16 %v7681
      %v8264 = vunpack.c.l.b16 %v7682
      %v8265 = vunpack.c.h.b16 %v7682
      %v8266 = vunpack.c.l.b16 %v7683
      %v8267 = vunpack.c.h.b16 %v7683
      %v8268 = vunpack.c.l.b16 %v7684
      %v8269 = vunpack.c.h.b16 %v7684
      %v8270 = vunpack.c.l.b16 %v7685
      %v8271 = vunpack.c.h.b16 %v7685
      %v8272 = vunpack.c.l.b16 %v7686
      %v8273 = vunpack.c.h.b16 %v7686
      %v8274 = vunpack.c.l.b16 %v7687
      %v8275 = vunpack.c.h.b16 %v7687
      %v8276 = vunpack.c.l.b16 %v7688
      %v8277 = vunpack.c.h.b16 %v7688
      %v8278 = vunpack.c.l.b16 %v7689
      %v8279 = vunpack.c.h.b16 %v7689
      %v8280 = vunpack.c.l.b16 %v7690
      %v8281 = vunpack.c.h.b16 %v7690
      %v8282 = vunpack.c.l.b16 %v7691
      %v8283 = vunpack.c.h.b16 %v7691
      %v8284 = vunpack.c.l.b16 %v7692
      %v8285 = vunpack.c.h.b16 %v7692
      %v8286 = vunpack.c.l.b16 %v7693
      %v8287 = vunpack.c.h.b16 %v7693
      %v8288 = vunpack.c.l.b16 %v7694
      %v8289 = vunpack.c.h.b16 %v7694
      %v8290 = vunpack.c.l.b16 %v7695
      %v8291 = vunpack.c.h.b16 %v7695
      %v8292 = vunpack.c.l.b16 %v7696
      %v8293 = vunpack.c.h.b16 %v7696
      %v8294 = vunpack.c.l.b16 %v7697
      %v8295 = vunpack.c.h.b16 %v7697
      %v8296 = vunpack.c.l.b16 %v7698
      %v8297 = vunpack.c.h.b16 %v7698
      %v8298 = vunpack.c.l.b16 %v7699
      %v8299 = vunpack.c.h.b16 %v7699
      %v8300 = vunpack.c.l.b16 %v7700
      %v8301 = vunpack.c.h.b16 %v7700
      %v8302 = vunpack.c.l.b16 %v7701
      %v8303 = vunpack.c.h.b16 %v7701
      %v8304 = vunpack.c.l.b16 %v7702
      %v8305 = vunpack.c.h.b16 %v7702
      %v8306 = vunpack.c.l.b16 %v7703
      %v8307 = vunpack.c.h.b16 %v7703
      %v8308 = vunpack.c.l.b16 %v7704
      %v8309 = vunpack.c.h.b16 %v7704
      %v8310 = vunpack.c.l.b16 %v7705
      %v8311 = vunpack.c.h.b16 %v7705
      %v8312 = vunpack.c.l.b16 %v7706
      %v8313 = vunpack.c.h.b16 %v7706
      %v8314 = vunpack.c.l.b16 %v7707
      %v8315 = vunpack.c.h.b16 %v7707
      %v8316 = vunpack.c.l.b16 %v7708
      %v8317 = vunpack.c.h.b16 %v7708
      %v8318 = vunpack.c.l.b16 %v7709
      %v8319 = vunpack.c.h.b16 %v7709
      %v8320 = vunpack.c.l.b16 %v7710
      %v8321 = vunpack.c.h.b16 %v7710
      %v8322 = vunpack.c.l.b16 %v7711
      %v8323 = vunpack.c.h.b16 %v7711
      %v8324 = vunpack.c.l.b16 %v7712
      %v8325 = vunpack.c.h.b16 %v7712
      %v8326 = vunpack.c.l.b16 %v7713
      %v8327 = vunpack.c.h.b16 %v7713
      %v8328 = vunpack.c.l.b16 %v7714
      %v8329 = vunpack.c.h.b16 %v7714
      %v8330 = vunpack.c.l.b16 %v7715
      %v8331 = vunpack.c.h.b16 %v7715
      %v8332 = vunpack.c.l.b16 %v7716
      %v8333 = vunpack.c.h.b16 %v7716
      %v8334 = vunpack.c.l.b16 %v7717
      %v8335 = vunpack.c.h.b16 %v7717
      %v8336 = vunpack.c.l.b16 %v7718
      %v8337 = vunpack.c.h.b16 %v7718
      %v8338 = vunpack.c.l.b16 %v7719
      %v8339 = vunpack.c.h.b16 %v7719
      %v8340 = vunpack.c.l.b16 %v7720
      %v8341 = vunpack.c.h.b16 %v7720
      %v8342 = vunpack.c.l.b16 %v7721
      %v8343 = vunpack.c.h.b16 %v7721
      %v8344 = vunpack.c.l.b16 %v7722
      %v8345 = vunpack.c.h.b16 %v7722
      %v8346 = vunpack.c.l.b16 %v7723
      %v8347 = vunpack.c.h.b16 %v7723
      %v8348 = vunpack.c.l.b16 %v7724
      %v8349 = vunpack.c.h.b16 %v7724
      %v8350 = vunpack.c.l.b16 %v7725
      %v8351 = vunpack.c.h.b16 %v7725
      %v8352 = vunpack.c.l.b16 %v7726
      %v8353 = vunpack.c.h.b16 %v7726
      %v8354 = vunpack.c.l.b16 %v7727
      %v8355 = vunpack.c.h.b16 %v7727
      %v8356 = vunpack.c.l.b16 %v7728
      %v8357 = vunpack.c.h.b16 %v7728
      %v8358 = vunpack.c.l.b16 %v7729
      %v8359 = vunpack.c.h.b16 %v7729
      %v8360 = vunpack.c.l.b16 %v7730
      %v8361 = vunpack.c.h.b16 %v7730
      %v8362 = vunpack.c.l.b16 %v7731
      %v8363 = vunpack.c.h.b16 %v7731
      %v8364 = vunpack.c.l.b16 %v7732
      %v8365 = vunpack.c.h.b16 %v7732
      %v8366 = vunpack.c.l.b16 %v7733
      %v8367 = vunpack.c.h.b16 %v7733
      %v8368 = vunpack.c.l.b16 %v7734
      %v8369 = vunpack.c.h.b16 %v7734
      %v8370 = vunpack.c.l.b16 %v7735
      %v8371 = vunpack.c.h.b16 %v7735
      %v8372 = vunpack.c.l.b16 %v7736
      %v8373 = vunpack.c.h.b16 %v7736
      %v8374 = vunpack.c.l.b16 %v7737
      %v8375 = vunpack.c.h.b16 %v7737
      %v8376 = vunpack.c.l.b16 %v7738
      %v8377 = vunpack.c.h.b16 %v7738
      %v8378 = vunpack.c.l.b16 %v7739
      %v8379 = vunpack.c.h.b16 %v7739
      %v8380 = vunpack.c.l.b16 %v7740
      %v8381 = vunpack.c.h.b16 %v7740
      %v8382 = vunpack.c.l.b16 %v7741
      %v8383 = vunpack.c.h.b16 %v7741
      %v8384 = vunpack.c.l.b16 %v7742
      %v8385 = vunpack.c.h.b16 %v7742
      %v8386 = vunpack.c.l.b16 %v7743
      %v8387 = vunpack.c.h.b16 %v7743
      %v8388 = vunpack.c.l.b16 %v7744
      %v8389 = vunpack.c.h.b16 %v7744
      %v8390 = vunpack.c.l.b16 %v7745
      %v8391 = vunpack.c.h.b16 %v7745
      %v8392 = vunpack.c.l.b16 %v7746
      %v8393 = vunpack.c.h.b16 %v7746
      %v8394 = vunpack.c.l.b16 %v7747
      %v8395 = vunpack.c.h.b16 %v7747
      %v8396 = vunpack.c.l.b16 %v7748
      %v8397 = vunpack.c.h.b16 %v7748
      %v8398 = vunpack.c.l.b16 %v7749
      %v8399 = vunpack.c.h.b16 %v7749
      %v8400 = vunpack.c.l.b16 %v7750
      %v8401 = vunpack.c.h.b16 %v7750
      %v8402 = vunpack.c.l.b16 %v7751
      %v8403 = vunpack.c.h.b16 %v7751
      %v8404 = vunpack.c.l.b16 %v7752
      %v8405 = vunpack.c.h.b16 %v7752
      %v8406 = vunpack.c.l.b16 %v7753
      %v8407 = vunpack.c.h.b16 %v7753
      %v8408 = vunpack.c.l.b16 %v7754
      %v8409 = vunpack.c.h.b16 %v7754
      %v8410 = vunpack.c.l.b16 %v7755
      %v8411 = vunpack.c.h.b16 %v7755
      %v8412 = vunpack.c.l.b16 %v7756
      %v8413 = vunpack.c.h.b16 %v7756
      %v8414 = vunpack.c.l.b16 %v7757
      %v8415 = vunpack.c.h.b16 %v7757
      %v8416 = vunpack.c.l.b16 %v7758
      %v8417 = vunpack.c.h.b16 %v7758
      %v8418 = vunpack.c.l.b16 %v7759
      %v8419 = vunpack.c.h.b16 %v7759
      %v8420 = vunpack.c.l.b16 %v7760
      %v8421 = vunpack.c.h.b16 %v7760
      %v8422 = vunpack.c.l.b16 %v7761
      %v8423 = vunpack.c.h.b16 %v7761
      %v8424 = vunpack.c.l.b16 %v7762
      %v8425 = vunpack.c.h.b16 %v7762
      %v8426 = vunpack.c.l.b16 %v7763
      %v8427 = vunpack.c.h.b16 %v7763
      %v8428 = vunpack.c.l.b16 %v7764
      %v8429 = vunpack.c.h.b16 %v7764
      %v8430 = vunpack.c.l.b16 %v7765
      %v8431 = vunpack.c.h.b16 %v7765
      %v8432 = vunpack.c.l.b16 %v7766
      %v8433 = vunpack.c.h.b16 %v7766
      %v8434 = vunpack.c.l.b16 %v7767
      %v8435 = vunpack.c.h.b16 %v7767
      %v8436 = vunpack.c.l.b16 %v7768
      %v8437 = vunpack.c.h.b16 %v7768
      %v8438 = vunpack.c.l.b16 %v7769
      %v8439 = vunpack.c.h.b16 %v7769
      %v8440 = vunpack.c.l.b16 %v7770
      %v8441 = vunpack.c.h.b16 %v7770
      %v8442 = vunpack.c.l.b16 %v7771
      %v8443 = vunpack.c.h.b16 %v7771
      %v8444 = vunpack.c.l.b16 %v7772
      %v8445 = vunpack.c.h.b16 %v7772
      %v8446 = vunpack.c.l.b16 %v7773
      %v8447 = vunpack.c.h.b16 %v7773
      %v8448 = vunpack.c.l.b16 %v7774
      %v8449 = vunpack.c.h.b16 %v7774
      %v8450 = vunpack.c.l.b16 %v7775
      %v8451 = vunpack.c.h.b16 %v7775
      %v8452 = vunpack.c.l.b16 %v7776
      %v8453 = vunpack.c.h.b16 %v7776
      %v8454 = vunpack.c.l.b16 %v7777
      %v8455 = vunpack.c.h.b16 %v7777
      %v8456 = vunpack.c.l.b16 %v7778
      %v8457 = vunpack.c.h.b16 %v7778
      %v8458 = vunpack.c.l.b16 %v7779
      %v8459 = vunpack.c.h.b16 %v7779
      %v8460 = vunpack.c.l.b16 %v7780
      %v8461 = vunpack.c.h.b16 %v7780
      %v8462 = vunpack.c.l.b16 %v7781
      %v8463 = vunpack.c.h.b16 %v7781
      %v8464 = vunpack.c.l.b16 %v7782
      %v8465 = vunpack.c.h.b16 %v7782
      %v8466 = vunpack.c.l.b16 %v7783
      %v8467 = vunpack.c.h.b16 %v7783
      %v8468 = vunpack.c.l.b16 %v7784
      %v8469 = vunpack.c.h.b16 %v7784
      %v8470 = vunpack.c.l.b16 %v7785
      %v8471 = vunpack.c.h.b16 %v7785
      %v8472 = vunpack.c.l.b16 %v7786
      %v8473 = vunpack.c.h.b16 %v7786
      %v8474 = vunpack.c.l.b16 %v7787
      %v8475 = vunpack.c.h.b16 %v7787
      %v8476 = vunpack.c.l.b16 %v7788
      %v8477 = vunpack.c.h.b16 %v7788
      %v8478 = vunpack.c.l.b16 %v7789
      %v8479 = vunpack.c.h.b16 %v7789
      %v8480 = vunpack.c.l.b16 %v7790
      %v8481 = vunpack.c.h.b16 %v7790
      %v8482 = vunpack.c.l.b16 %v7791
      %v8483 = vunpack.c.h.b16 %v7791
      %v8484 = vunpack.c.l.b16 %v7792
      %v8485 = vunpack.c.h.b16 %v7792
      %v8486 = vunpack.c.l.b16 %v7793
      %v8487 = vunpack.c.h.b16 %v7793
      %v8488 = vunpack.c.l.b16 %v7794
      %v8489 = vunpack.c.h.b16 %v7794
      %v8490 = vunpack.c.l.b16 %v7795
      %v8491 = vunpack.c.h.b16 %v7795
      %v8492 = vunpack.c.l.b16 %v7796
      %v8493 = vunpack.c.h.b16 %v7796
      %v8494 = vunpack.c.l.b16 %v7797
      %v8495 = vunpack.c.h.b16 %v7797
      %v8496 = vunpack.c.l.b16 %v7798
      %v8497 = vunpack.c.h.b16 %v7798
      %v8498 = vunpack.c.l.b16 %v7799
      %v8499 = vunpack.c.h.b16 %v7799
      %v8500 = vunpack.c.l.b16 %v7800
      %v8501 = vunpack.c.h.b16 %v7800
      %v8502 = vunpack.c.l.b16 %v7801
      %v8503 = vunpack.c.h.b16 %v7801
      %v8504 = vunpack.c.l.b16 %v7802
      %v8505 = vunpack.c.h.b16 %v7802
      %v8506 = vunpack.c.l.b16 %v7803
      %v8507 = vunpack.c.h.b16 %v7803
      %v8508 = vunpack.c.l.b16 %v7804
      %v8509 = vunpack.c.h.b16 %v7804
      %v8510 = vunpack.c.l.b16 %v7805
      %v8511 = vunpack.c.h.b16 %v7805
      %v8512 = vunpack.c.l.b16 %v7806
      %v8513 = vunpack.c.h.b16 %v7806
      %v8514 = vunpack.c.l.b16 %v7807
      %v8515 = vunpack.c.h.b16 %v7807
      %v8516 = vunpack.c.l.b16 %v7808
      %v8517 = vunpack.c.h.b16 %v7808
      %v8518 = vunpack.c.l.b16 %v7809
      %v8519 = vunpack.c.h.b16 %v7809
      %v8520 = vunpack.c.l.b16 %v7810
      %v8521 = vunpack.c.h.b16 %v7810
      %v8522 = vunpack.c.l.b16 %v7811
      %v8523 = vunpack.c.h.b16 %v7811
      %v8524 = vunpack.c.l.b16 %v7812
      %v8525 = vunpack.c.h.b16 %v7812
      %v8526 = vunpack.c.l.b16 %v7813
      %v8527 = vunpack.c.h.b16 %v7813
      %v8528 = vunpack.c.l.b16 %v7814
      %v8529 = vunpack.c.h.b16 %v7814
      %v8530 = vunpack.c.l.b16 %v7815
      %v8531 = vunpack.c.h.b16 %v7815
      %v8532 = vunpack.c.l.b16 %v7816
      %v8533 = vunpack.c.h.b16 %v7816
      %v8534 = vunpack.c.l.b16 %v7817
      %v8535 = vunpack.c.h.b16 %v7817
      %v8536 = vunpack.c.l.b16 %v7818
      %v8537 = vunpack.c.h.b16 %v7818
      %v8538 = vunpack.c.l.b16 %v7819
      %v8539 = vunpack.c.h.b16 %v7819
      %v8540 = vunpack.c.l.b16 %v7820
      %v8541 = vunpack.c.h.b16 %v7820
      %v8542 = vunpack.c.l.b16 %v7821
      %v8543 = vunpack.c.h.b16 %v7821
      %v8544 = vunpack.c.l.b16 %v7822
      %v8545 = vunpack.c.h.b16 %v7822
      %v8546 = vunpack.c.l.b16 %v7823
      %v8547 = vunpack.c.h.b16 %v7823
      %v8548 = vunpack.c.l.b16 %v7824
      %v8549 = vunpack.c.h.b16 %v7824
      %v8550 = vunpack.c.l.b16 %v7825
      %v8551 = vunpack.c.h.b16 %v7825
      %v8552 = vunpack.c.l.b16 %v7826
      %v8553 = vunpack.c.h.b16 %v7826
      %v8554 = vunpack.c.l.b16 %v7827
      %v8555 = vunpack.c.h.b16 %v7827
      %v8556 = vunpack.c.l.b16 %v7828
      %v8557 = vunpack.c.h.b16 %v7828
      %v8558 = vunpack.c.l.b16 %v7829
      %v8559 = vunpack.c.h.b16 %v7829
      %v8560 = vunpack.c.l.b16 %v7830
      %v8561 = vunpack.c.h.b16 %v7830
      %v8562 = vunpack.c.l.b16 %v7831
      %v8563 = vunpack.c.h.b16 %v7831
      %v8564 = vunpack.c.l.b16 %v7832
      %v8565 = vunpack.c.h.b16 %v7832
      %v8566 = vunpack.c.l.b16 %v7833
      %v8567 = vunpack.c.h.b16 %v7833
      %v8568 = vunpack.c.l.b16 %v7834
      %v8569 = vunpack.c.h.b16 %v7834
      %v8570 = vunpack.c.l.b16 %v7835
      %v8571 = vunpack.c.h.b16 %v7835
      %v8572 = vunpack.c.l.b16 %v7836
      %v8573 = vunpack.c.h.b16 %v7836
      %v8574 = vunpack.c.l.b16 %v7837
      %v8575 = vunpack.c.h.b16 %v7837
      %v8576 = vunpack.c.l.b16 %v7838
      %v8577 = vunpack.c.h.b16 %v7838
      %v8578 = vunpack.c.l.b16 %v7839
      %v8579 = vunpack.c.h.b16 %v7839
      %v8580 = vunpack.c.l.b16 %v7840
      %v8581 = vunpack.c.h.b16 %v7840
      %v8582 = vunpack.c.l.b16 %v7841
      %v8583 = vunpack.c.h.b16 %v7841
      %v8584 = vunpack.c.l.b16 %v7842
      %v8585 = vunpack.c.h.b16 %v7842
      %v8586 = vunpack.c.l.b16 %v7843
      %v8587 = vunpack.c.h.b16 %v7843
      %v8588 = vunpack.c.l.b16 %v7844
      %v8589 = vunpack.c.h.b16 %v7844
      %v8590 = vunpack.c.l.b16 %v7845
      %v8591 = vunpack.c.h.b16 %v7845
      %v8592 = vunpack.c.l.b16 %v7846
      %v8593 = vunpack.c.h.b16 %v7846
      %v8594 = vunpack.c.l.b16 %v7847
      %v8595 = vunpack.c.h.b16 %v7847
      %v8596 = vunpack.c.l.b16 %v7848
      %v8597 = vunpack.c.h.b16 %v7848
      %v8598 = vunpack.c.l.b16 %v7849
      %v8599 = vunpack.c.h.b16 %v7849
      %v8600 = vunpack.c.l.b16 %v7850
      %v8601 = vunpack.c.h.b16 %v7850
      %v8602 = vunpack.c.l.b16 %v7851
      %v8603 = vunpack.c.h.b16 %v7851
      %v8604 = vunpack.c.l.b16 %v7852
      %v8605 = vunpack.c.h.b16 %v7852
      %v8606 = vunpack.c.l.b16 %v7853
      %v8607 = vunpack.c.h.b16 %v7853
      %v8608 = vunpack.c.l.b16 %v7854
      %v8609 = vunpack.c.h.b16 %v7854
      %v8610 = vunpack.c.l.b16 %v7855
      %v8611 = vunpack.c.h.b16 %v7855
      %v8612 = vunpack.c.l.b16 %v7856
      %v8613 = vunpack.c.h.b16 %v7856
      %v8614 = vunpack.c.l.b16 %v7857
      %v8615 = vunpack.c.h.b16 %v7857
      %v8616 = vunpack.c.l.b16 %v7858
      %v8617 = vunpack.c.h.b16 %v7858
      %v8618 = vunpack.c.l.b16 %v7859
      %v8619 = vunpack.c.h.b16 %v7859
      %v8620 = vunpack.c.l.b16 %v7860
      %v8621 = vunpack.c.h.b16 %v7860
      %v8622 = vunpack.c.l.b16 %v7861
      %v8623 = vunpack.c.h.b16 %v7861
      %v8624 = vunpack.c.l.b16 %v7862
      %v8625 = vunpack.c.h.b16 %v7862
      %v8626 = vunpack.c.l.b16 %v7863
      %v8627 = vunpack.c.h.b16 %v7863
      %v8628 = vunpack.c.l.b16 %v7864
      %v8629 = vunpack.c.h.b16 %v7864
      %v8630 = vunpack.c.l.b16 %v7865
      %v8631 = vunpack.c.h.b16 %v7865
      %v8632 = vunpack.c.l.b16 %v7866
      %v8633 = vunpack.c.h.b16 %v7866
      %v8634 = vunpack.c.l.b16 %v7867
      %v8635 = vunpack.c.h.b16 %v7867
      %v8636 = vunpack.c.l.b16 %v7868
      %v8637 = vunpack.c.h.b16 %v7868
      %v8638 = vunpack.c.l.b16 %v7869
      %v8639 = vunpack.c.h.b16 %v7869
      %v8640 = vunpack.c.l.b16 %v7870
      %v8641 = vunpack.c.h.b16 %v7870
      %v8642 = vunpack.c.l.b16 %v7871
      %v8643 = vunpack.c.h.b16 %v7871
      %v8644 = vunpack.c.l.b16 %v7872
      %v8645 = vunpack.c.h.b16 %v7872
      %v8646 = vunpack.c.l.b16 %v7873
      %v8647 = vunpack.c.h.b16 %v7873
      %v8648 = vunpack.c.l.b16 %v7874
      %v8649 = vunpack.c.h.b16 %v7874
      %v8650 = vunpack.c.l.b16 %v7875
      %v8651 = vunpack.c.h.b16 %v7875
      %v8652 = vunpack.c.l.b16 %v7876
      %v8653 = vunpack.c.h.b16 %v7876
      %v8654 = vunpack.c.l.b16 %v7877
      %v8655 = vunpack.c.h.b16 %v7877
      %v8656 = vunpack.c.l.b16 %v7878
      %v8657 = vunpack.c.h.b16 %v7878
      %v8658 = vunpack.c.l.b16 %v7879
      %v8659 = vunpack.c.h.b16 %v7879
      %v8660 = vunpack.c.l.b16 %v7880
      %v8661 = vunpack.c.h.b16 %v7880
      %v8662 = vunpack.c.l.b16 %v7881
      %v8663 = vunpack.c.h.b16 %v7881
      %v8664 = vunpack.c.l.b16 %v7882
      %v8665 = vunpack.c.h.b16 %v7882
      %v8666 = vunpack.c.l.b16 %v7883
      %v8667 = vunpack.c.h.b16 %v7883
      %v8668 = vunpack.c.l.b16 %v7884
      %v8669 = vunpack.c.h.b16 %v7884
      %v8670 = vunpack.c.l.b16 %v7885
      %v8671 = vunpack.c.h.b16 %v7885
      %v8672 = vunpack.c.l.b16 %v7886
      %v8673 = vunpack.c.h.b16 %v7886
      %v8674 = vunpack.c.l.b16 %v7887
      %v8675 = vunpack.c.h.b16 %v7887
      %v8676 = vunpack.c.l.b16 %v7888
      %v8677 = vunpack.c.h.b16 %v7888
      %v8678 = vunpack.c.l.b16 %v7889
      %v8679 = vunpack.c.h.b16 %v7889
      %v8680 = vpack.c.b16 %v8172, %v8168
      %v8681 = vpack.c.b16 %v8173, %v8169
      %v8682 = vpack.c.b16 %v8174, %v8170
      %v8683 = vpack.c.b16 %v8175, %v8171
      %v8684 = vpack.c.b16 %v8180, %v8176
      %v8685 = vpack.c.b16 %v8181, %v8177
      %v8686 = vpack.c.b16 %v8182, %v8178
      %v8687 = vpack.c.b16 %v8183, %v8179
      %v8688 = vpack.c.b16 %v8188, %v8184
      %v8689 = vpack.c.b16 %v8189, %v8185
      %v8690 = vpack.c.b16 %v8190, %v8186
      %v8691 = vpack.c.b16 %v8191, %v8187
      %v8692 = vpack.c.b16 %v8196, %v8192
      %v8693 = vpack.c.b16 %v8197, %v8193
      %v8694 = vpack.c.b16 %v8198, %v8194
      %v8695 = vpack.c.b16 %v8199, %v8195
      %v8696 = vpack.c.b16 %v8204, %v8200
      %v8697 = vpack.c.b16 %v8205, %v8201
      %v8698 = vpack.c.b16 %v8206, %v8202
      %v8699 = vpack.c.b16 %v8207, %v8203
      %v8700 = vpack.c.b16 %v8212, %v8208
      %v8701 = vpack.c.b16 %v8213, %v8209
      %v8702 = vpack.c.b16 %v8214, %v8210
      %v8703 = vpack.c.b16 %v8215, %v8211
      %v8704 = vpack.c.b16 %v8220, %v8216
      %v8705 = vpack.c.b16 %v8221, %v8217
      %v8706 = vpack.c.b16 %v8222, %v8218
      %v8707 = vpack.c.b16 %v8223, %v8219
      %v8708 = vpack.c.b16 %v8228, %v8224
      %v8709 = vpack.c.b16 %v8229, %v8225
      %v8710 = vpack.c.b16 %v8230, %v8226
      %v8711 = vpack.c.b16 %v8231, %v8227
      %v8712 = vpack.c.b16 %v8236, %v8232
      %v8713 = vpack.c.b16 %v8237, %v8233
      %v8714 = vpack.c.b16 %v8238, %v8234
      %v8715 = vpack.c.b16 %v8239, %v8235
      %v8716 = vpack.c.b16 %v8244, %v8240
      %v8717 = vpack.c.b16 %v8245, %v8241
      %v8718 = vpack.c.b16 %v8246, %v8242
      %v8719 = vpack.c.b16 %v8247, %v8243
      %v8720 = vpack.c.b16 %v8252, %v8248
      %v8721 = vpack.c.b16 %v8253, %v8249
      %v8722 = vpack.c.b16 %v8254, %v8250
      %v8723 = vpack.c.b16 %v8255, %v8251
      %v8724 = vpack.c.b16 %v8260, %v8256
      %v8725 = vpack.c.b16 %v8261, %v8257
      %v8726 = vpack.c.b16 %v8262, %v8258
      %v8727 = vpack.c.b16 %v8263, %v8259
      %v8728 = vpack.c.b16 %v8268, %v8264
      %v8729 = vpack.c.b16 %v8269, %v8265
      %v8730 = vpack.c.b16 %v8270, %v8266
      %v8731 = vpack.c.b16 %v8271, %v8267
      %v8732 = vpack.c.b16 %v8276, %v8272
      %v8733 = vpack.c.b16 %v8277, %v8273
      %v8734 = vpack.c.b16 %v8278, %v8274
      %v8735 = vpack.c.b16 %v8279, %v8275
      %v8736 = vpack.c.b16 %v8284, %v8280
      %v8737 = vpack.c.b16 %v8285, %v8281
      %v8738 = vpack.c.b16 %v8286, %v8282
      %v8739 = vpack.c.b16 %v8287, %v8283
      %v8740 = vpack.c.b16 %v8292, %v8288
      %v8741 = vpack.c.b16 %v8293, %v8289
      %v8742 = vpack.c.b16 %v8294, %v8290
      %v8743 = vpack.c.b16 %v8295, %v8291
      %v8744 = vpack.c.b16 %v8300, %v8296
      %v8745 = vpack.c.b16 %v8301, %v8297
      %v8746 = vpack.c.b16 %v8302, %v8298
      %v8747 = vpack.c.b16 %v8303, %v8299
      %v8748 = vpack.c.b16 %v8308, %v8304
      %v8749 = vpack.c.b16 %v8309, %v8305
      %v8750 = vpack.c.b16 %v8310, %v8306
      %v8751 = vpack.c.b16 %v8311, %v8307
      %v8752 = vpack.c.b16 %v8316, %v8312
      %v8753 = vpack.c.b16 %v8317, %v8313
      %v8754 = vpack.c.b16 %v8318, %v8314
      %v8755 = vpack.c.b16 %v8319, %v8315
      %v8756 = vpack.c.b16 %v8324, %v8320
      %v8757 = vpack.c.b16 %v8325, %v8321
      %v8758 = vpack.c.b16 %v8326, %v8322
      %v8759 = vpack.c.b16 %v8327, %v8323
      %v8760 = vpack.c.b16 %v8332, %v8328
      %v8761 = vpack.c.b16 %v8333, %v8329
      %v8762 = vpack.c.b16 %v8334, %v8330
      %v8763 = vpack.c.b16 %v8335, %v8331
      %v8764 = vpack.c.b16 %v8340, %v8336
      %v8765 = vpack.c.b16 %v8341, %v8337
      %v8766 = vpack.c.b16 %v8342, %v8338
      %v8767 = vpack.c.b16 %v8343, %v8339
      %v8768 = vpack.c.b16 %v8348, %v8344
      %v8769 = vpack.c.b16 %v8349, %v8345
      %v8770 = vpack.c.b16 %v8350, %v8346
      %v8771 = vpack.c.b16 %v8351, %v8347
      %v8772 = vpack.c.b16 %v8356, %v8352
      %v8773 = vpack.c.b16 %v8357, %v8353
      %v8774 = vpack.c.b16 %v8358, %v8354
      %v8775 = vpack.c.b16 %v8359, %v8355
      %v8776 = vpack.c.b16 %v8364, %v8360
      %v8777 = vpack.c.b16 %v8365, %v8361
      %v8778 = vpack.c.b16 %v8366, %v8362
      %v8779 = vpack.c.b16 %v8367, %v8363
      %v8780 = vpack.c.b16 %v8372, %v8368
      %v8781 = vpack.c.b16 %v8373, %v8369
      %v8782 = vpack.c.b16 %v8374, %v8370
      %v8783 = vpack.c.b16 %v8375, %v8371
      %v8784 = vpack.c.b16 %v8380, %v8376
      %v8785 = vpack.c.b16 %v8381, %v8377
      %v8786 = vpack.c.b16 %v8382, %v8378
      %v8787 = vpack.c.b16 %v8383, %v8379
      %v8788 = vpack.c.b16 %v8388, %v8384
      %v8789 = vpack.c.b16 %v8389, %v8385
      %v8790 = vpack.c.b16 %v8390, %v8386
      %v8791 = vpack.c.b16 %v8391, %v8387
      %v8792 = vpack.c.b16 %v8396, %v8392
      %v8793 = vpack.c.b16 %v8397, %v8393
      %v8794 = vpack.c.b16 %v8398, %v8394
      %v8795 = vpack.c.b16 %v8399, %v8395
      %v8796 = vpack.c.b16 %v8404, %v8400
      %v8797 = vpack.c.b16 %v8405, %v8401
      %v8798 = vpack.c.b16 %v8406, %v8402
      %v8799 = vpack.c.b16 %v8407, %v8403
      %v8800 = vpack.c.b16 %v8412, %v8408
      %v8801 = vpack.c.b16 %v8413, %v8409
      %v8802 = vpack.c.b16 %v8414, %v8410
      %v8803 = vpack.c.b16 %v8415, %v8411
      %v8804 = vpack.c.b16 %v8420, %v8416
      %v8805 = vpack.c.b16 %v8421, %v8417
      %v8806 = vpack.c.b16 %v8422, %v8418
      %v8807 = vpack.c.b16 %v8423, %v8419
      %v8808 = vpack.c.b16 %v8428, %v8424
      %v8809 = vpack.c.b16 %v8429, %v8425
      %v8810 = vpack.c.b16 %v8430, %v8426
      %v8811 = vpack.c.b16 %v8431, %v8427
      %v8812 = vpack.c.b16 %v8436, %v8432
      %v8813 = vpack.c.b16 %v8437, %v8433
      %v8814 = vpack.c.b16 %v8438, %v8434
      %v8815 = vpack.c.b16 %v8439, %v8435
      %v8816 = vpack.c.b16 %v8444, %v8440
      %v8817 = vpack.c.b16 %v8445, %v8441
      %v8818 = vpack.c.b16 %v8446, %v8442
      %v8819 = vpack.c.b16 %v8447, %v8443
      %v8820 = vpack.c.b16 %v8452, %v8448
      %v8821 = vpack.c.b16 %v8453, %v8449
      %v8822 = vpack.c.b16 %v8454, %v8450
      %v8823 = vpack.c.b16 %v8455, %v8451
      %v8824 = vpack.c.b16 %v8460, %v8456
      %v8825 = vpack.c.b16 %v8461, %v8457
      %v8826 = vpack.c.b16 %v8462, %v8458
      %v8827 = vpack.c.b16 %v8463, %v8459
      %v8828 = vpack.c.b16 %v8468, %v8464
      %v8829 = vpack.c.b16 %v8469, %v8465
      %v8830 = vpack.c.b16 %v8470, %v8466
      %v8831 = vpack.c.b16 %v8471, %v8467
      %v8832 = vpack.c.b16 %v8476, %v8472
      %v8833 = vpack.c.b16 %v8477, %v8473
      %v8834 = vpack.c.b16 %v8478, %v8474
      %v8835 = vpack.c.b16 %v8479, %v8475
      %v8836 = vpack.c.b16 %v8484, %v8480
      %v8837 = vpack.c.b16 %v8485, %v8481
      %v8838 = vpack.c.b16 %v8486, %v8482
      %v8839 = vpack.c.b16 %v8487, %v8483
      %v8840 = vpack.c.b16 %v8492, %v8488
      %v8841 = vpack.c.b16 %v8493, %v8489
      %v8842 = vpack.c.b16 %v8494, %v8490
      %v8843 = vpack.c.b16 %v8495, %v8491
      %v8844 = vpack.c.b16 %v8500, %v8496
      %v8845 = vpack.c.b16 %v8501, %v8497
      %v8846 = vpack.c.b16 %v8502, %v8498
      %v8847 = vpack.c.b16 %v8503, %v8499
      %v8848 = vpack.c.b16 %v8508, %v8504
      %v8849 = vpack.c.b16 %v8509, %v8505
      %v8850 = vpack.c.b16 %v8510, %v8506
      %v8851 = vpack.c.b16 %v8511, %v8507
      %v8852 = vpack.c.b16 %v8516, %v8512
      %v8853 = vpack.c.b16 %v8517, %v8513
      %v8854 = vpack.c.b16 %v8518, %v8514
      %v8855 = vpack.c.b16 %v8519, %v8515
      %v8856 = vpack.c.b16 %v8524, %v8520
      %v8857 = vpack.c.b16 %v8525, %v8521
      %v8858 = vpack.c.b16 %v8526, %v8522
      %v8859 = vpack.c.b16 %v8527, %v8523
      %v8860 = vpack.c.b16 %v8532, %v8528
      %v8861 = vpack.c.b16 %v8533, %v8529
      %v8862 = vpack.c.b16 %v8534, %v8530
      %v8863 = vpack.c.b16 %v8535, %v8531
      %v8864 = vpack.c.b16 %v8540, %v8536
      %v8865 = vpack.c.b16 %v8541, %v8537
      %v8866 = vpack.c.b16 %v8542, %v8538
      %v8867 = vpack.c.b16 %v8543, %v8539
      %v8868 = vpack.c.b16 %v8548, %v8544
      %v8869 = vpack.c.b16 %v8549, %v8545
      %v8870 = vpack.c.b16 %v8550, %v8546
      %v8871 = vpack.c.b16 %v8551, %v8547
      %v8872 = vpack.c.b16 %v8556, %v8552
      %v8873 = vpack.c.b16 %v8557, %v8553
      %v8874 = vpack.c.b16 %v8558, %v8554
      %v8875 = vpack.c.b16 %v8559, %v8555
      %v8876 = vpack.c.b16 %v8564, %v8560
      %v8877 = vpack.c.b16 %v8565, %v8561
      %v8878 = vpack.c.b16 %v8566, %v8562
      %v8879 = vpack.c.b16 %v8567, %v8563
      %v8880 = vpack.c.b16 %v8572, %v8568
      %v8881 = vpack.c.b16 %v8573, %v8569
      %v8882 = vpack.c.b16 %v8574, %v8570
      %v8883 = vpack.c.b16 %v8575, %v8571
      %v8884 = vpack.c.b16 %v8580, %v8576
      %v8885 = vpack.c.b16 %v8581, %v8577
      %v8886 = vpack.c.b16 %v8582, %v8578
      %v8887 = vpack.c.b16 %v8583, %v8579
      %v8888 = vpack.c.b16 %v8588, %v8584
      %v8889 = vpack.c.b16 %v8589, %v8585
      %v8890 = vpack.c.b16 %v8590, %v8586
      %v8891 = vpack.c.b16 %v8591, %v8587
      %v8892 = vpack.c.b16 %v8596, %v8592
      %v8893 = vpack.c.b16 %v8597, %v8593
      %v8894 = vpack.c.b16 %v8598, %v8594
      %v8895 = vpack.c.b16 %v8599, %v8595
      %v8896 = vpack.c.b16 %v8604, %v8600
      %v8897 = vpack.c.b16 %v8605, %v8601
      %v8898 = vpack.c.b16 %v8606, %v8602
      %v8899 = vpack.c.b16 %v8607, %v8603
      %v8900 = vpack.c.b16 %v8612, %v8608
      %v8901 = vpack.c.b16 %v8613, %v8609
      %v8902 = vpack.c.b16 %v8614, %v8610
      %v8903 = vpack.c.b16 %v8615, %v8611
      %v8904 = vpack.c.b16 %v8620, %v8616
      %v8905 = vpack.c.b16 %v8621, %v8617
      %v8906 = vpack.c.b16 %v8622, %v8618
      %v8907 = vpack.c.b16 %v8623, %v8619
      %v8908 = vpack.c.b16 %v8628, %v8624
      %v8909 = vpack.c.b16 %v8629, %v8625
      %v8910 = vpack.c.b16 %v8630, %v8626
      %v8911 = vpack.c.b16 %v8631, %v8627
      %v8912 = vpack.c.b16 %v8636, %v8632
      %v8913 = vpack.c.b16 %v8637, %v8633
      %v8914 = vpack.c.b16 %v8638, %v8634
      %v8915 = vpack.c.b16 %v8639, %v8635
      %v8916 = vpack.c.b16 %v8644, %v8640
      %v8917 = vpack.c.b16 %v8645, %v8641
      %v8918 = vpack.c.b16 %v8646, %v8642
      %v8919 = vpack.c.b16 %v8647, %v8643
      %v8920 = vpack.c.b16 %v8652, %v8648
      %v8921 = vpack.c.b16 %v8653, %v8649
      %v8922 = vpack.c.b16 %v8654, %v8650
      %v8923 = vpack.c.b16 %v8655, %v8651
      %v8924 = vpack.c.b16 %v8660, %v8656
      %v8925 = vpack.c.b16 %v8661, %v8657
      %v8926 = vpack.c.b16 %v8662, %v8658
      %v8927 = vpack.c.b16 %v8663, %v8659
      %v8928 = vpack.c.b16 %v8668, %v8664
      %v8929 = vpack.c.b16 %v8669, %v8665
      %v8930 = vpack.c.b16 %v8670, %v8666
      %v8931 = vpack.c.b16 %v8671, %v8667
      %v8932 = vpack.c.b16 %v8676, %v8672
      %v8933 = vpack.c.b16 %v8677, %v8673
      %v8934 = vpack.c.b16 %v8678, %v8674
      %v8935 = vpack.c.b16 %v8679, %v8675
      %9192 = vmatprep.subr.bf16.mxu0 %v8681
      %9193 = vmatpush1.bf16.msra.mxu0 %v8680
      %9194 = vmatprep.subr.bf16.mxu0 %v8685
      %9195 = vmatpush1.bf16.msra.mxu0 %v8684
      %9196 = vmatprep.subr.bf16.mxu0 %v8689
      %9197 = vmatpush1.bf16.msra.mxu0 %v8688
      %9198 = vmatprep.subr.bf16.mxu0 %v8693
      %9199 = vmatpush1.bf16.msra.mxu0 %v8692
      %9200 = vmatprep.subr.bf16.mxu0 %v8697
      %9201 = vmatpush1.bf16.msra.mxu0 %v8696
      %9202 = vmatprep.subr.bf16.mxu0 %v8701
      %9203 = vmatpush1.bf16.msra.mxu0 %v8700
      %9204 = vmatprep.subr.bf16.mxu0 %v8705
      %9205 = vmatpush1.bf16.msra.mxu0 %v8704
      %9206 = vmatprep.subr.bf16.mxu0 %v8709
      %9207 = vmatpush1.bf16.msra.mxu0 %v8708
      %9208 = vmatprep.subr.bf16.mxu0 %v8713
      %9209 = vmatpush1.bf16.msra.mxu0 %v8712
      %9210 = vmatprep.subr.bf16.mxu0 %v8717
      %9211 = vmatpush1.bf16.msra.mxu0 %v8716
      %9212 = vmatprep.subr.bf16.mxu0 %v8721
      %9213 = vmatpush1.bf16.msra.mxu0 %v8720
      %9214 = vmatprep.subr.bf16.mxu0 %v8725
      %9215 = vmatpush1.bf16.msra.mxu0 %v8724
      %9216 = vmatprep.subr.bf16.mxu0 %v8729
      %9217 = vmatpush1.bf16.msra.mxu0 %v8728
      %9218 = vmatprep.subr.bf16.mxu0 %v8733
      %9219 = vmatpush1.bf16.msra.mxu0 %v8732
      %9220 = vmatprep.subr.bf16.mxu0 %v8737
      %9221 = vmatpush1.bf16.msra.mxu0 %v8736
      %9222 = vmatprep.subr.bf16.mxu0 %v8741
      %9223 = vmatpush1.bf16.msra.mxu0 %v8740
      %9224 = vmatprep.mubr.bf16.mxu0 %v7627
      %9225 = vmatmul.mubr.bf16.gmra.mrb[0].mxu0 %v7626
      %v9226 = vpop.f32.mrb[0].mxu0
      %v9227 = vadd.f32 %v7895, %v9226
      %v9228 = vpop.f32.mrb[0].mxu0
      %v9229 = vadd.f32 %v7899, %v9228
      %v9230 = vpop.f32.mrb[0].mxu0
      %v9231 = vpop.f32.mrb[0].mxu0
      %9232 = vdwg.mxu0
      %9233 = vmatprep.subr.bf16.mxu0 %v8745
      %9234 = vmatpush1.bf16.msra.mxu0 %v8744
      %9235 = vmatprep.subr.bf16.mxu0 %v8749
      %9236 = vmatpush1.bf16.msra.mxu0 %v8748
      %9237 = vmatprep.subr.bf16.mxu0 %v8753
      %9238 = vmatpush1.bf16.msra.mxu0 %v8752
      %9239 = vmatprep.subr.bf16.mxu0 %v8757
      %9240 = vmatpush1.bf16.msra.mxu0 %v8756
      %9241 = vmatprep.subr.bf16.mxu0 %v8761
      %9242 = vmatpush1.bf16.msra.mxu0 %v8760
      %9243 = vmatprep.subr.bf16.mxu0 %v8765
      %9244 = vmatpush1.bf16.msra.mxu0 %v8764
      %9245 = vmatprep.subr.bf16.mxu0 %v8769
      %9246 = vmatpush1.bf16.msra.mxu0 %v8768
      %9247 = vmatprep.subr.bf16.mxu0 %v8773
      %9248 = vmatpush1.bf16.msra.mxu0 %v8772
      %9249 = vmatprep.subr.bf16.mxu0 %v8777
      %9250 = vmatpush1.bf16.msra.mxu0 %v8776
      %9251 = vmatprep.subr.bf16.mxu0 %v8781
      %9252 = vmatpush1.bf16.msra.mxu0 %v8780
      %9253 = vmatprep.subr.bf16.mxu0 %v8785
      %9254 = vmatpush1.bf16.msra.mxu0 %v8784
      %9255 = vmatprep.subr.bf16.mxu0 %v8789
      %9256 = vmatpush1.bf16.msra.mxu0 %v8788
      %9257 = vmatprep.subr.bf16.mxu0 %v8793
      %9258 = vmatpush1.bf16.msra.mxu0 %v8792
      %9259 = vmatprep.subr.bf16.mxu0 %v8797
      %9260 = vmatpush1.bf16.msra.mxu0 %v8796
      %9261 = vmatprep.subr.bf16.mxu0 %v8801
      %9262 = vmatpush1.bf16.msra.mxu0 %v8800
      %9263 = vmatprep.subr.bf16.mxu0 %v8805
      %9264 = vmatpush1.bf16.msra.mxu0 %v8804
      %9265 = vmatprep.mubr.bf16.mxu0 %v7629
      %9266 = vmatmul.mubr.bf16.gmra.mrb[0].mxu0 %v7628
      %v9267 = vpop.f32.mrb[0].mxu0
      %v9268 = vadd.f32 %v9227, %v9267
      %v9269 = vpop.f32.mrb[0].mxu0
      %v9270 = vadd.f32 %v9229, %v9269
      %v9271 = vpop.f32.mrb[0].mxu0
      %v9272 = vpop.f32.mrb[0].mxu0
      %9273 = vdwg.mxu0
      %9274 = vmatprep.subr.bf16.mxu0 %v8809
      %9275 = vmatpush1.bf16.msra.mxu0 %v8808
      %9276 = vmatprep.subr.bf16.mxu0 %v8813
      %9277 = vmatpush1.bf16.msra.mxu0 %v8812
      %9278 = vmatprep.subr.bf16.mxu0 %v8817
      %9279 = vmatpush1.bf16.msra.mxu0 %v8816
      %9280 = vmatprep.subr.bf16.mxu0 %v8821
      %9281 = vmatpush1.bf16.msra.mxu0 %v8820
      %9282 = vmatprep.subr.bf16.mxu0 %v8825
      %9283 = vmatpush1.bf16.msra.mxu0 %v8824
      %9284 = vmatprep.subr.bf16.mxu0 %v8829
      %9285 = vmatpush1.bf16.msra.mxu0 %v8828
      %9286 = vmatprep.subr.bf16.mxu0 %v8833
      %9287 = vmatpush1.bf16.msra.mxu0 %v8832
      %9288 = vmatprep.subr.bf16.mxu0 %v8837
      %9289 = vmatpush1.bf16.msra.mxu0 %v8836
      %9290 = vmatprep.subr.bf16.mxu0 %v8841
      %9291 = vmatpush1.bf16.msra.mxu0 %v8840
      %9292 = vmatprep.subr.bf16.mxu0 %v8845
      %9293 = vmatpush1.bf16.msra.mxu0 %v8844
      %9294 = vmatprep.subr.bf16.mxu0 %v8849
      %9295 = vmatpush1.bf16.msra.mxu0 %v8848
      %9296 = vmatprep.subr.bf16.mxu0 %v8853
      %9297 = vmatpush1.bf16.msra.mxu0 %v8852
      %9298 = vmatprep.subr.bf16.mxu0 %v8857
      %9299 = vmatpush1.bf16.msra.mxu0 %v8856
      %9300 = vmatprep.subr.bf16.mxu0 %v8861
      %9301 = vmatpush1.bf16.msra.mxu0 %v8860
      %9302 = vmatprep.subr.bf16.mxu0 %v8865
      %9303 = vmatpush1.bf16.msra.mxu0 %v8864
      %9304 = vmatprep.subr.bf16.mxu0 %v8869
      %9305 = vmatpush1.bf16.msra.mxu0 %v8868
      %9306 = vmatprep.mubr.bf16.mxu0 %v7631
      %9307 = vmatmul.mubr.bf16.gmra.mrb[0].mxu0 %v7630
      %v9308 = vpop.f32.mrb[0].mxu0
      %v9309 = vadd.f32 %v9268, %v9308
      %v9310 = vpop.f32.mrb[0].mxu0
      %v9311 = vadd.f32 %v9270, %v9310
      %v9312 = vpop.f32.mrb[0].mxu0
      %v9313 = vpop.f32.mrb[0].mxu0
      %9314 = vdwg.mxu0
      %9315 = vmatprep.subr.bf16.mxu0 %v8873
      %9316 = vmatpush1.bf16.msra.mxu0 %v8872
      %9317 = vmatprep.subr.bf16.mxu0 %v8877
      %9318 = vmatpush1.bf16.msra.mxu0 %v8876
      %9319 = vmatprep.subr.bf16.mxu0 %v8881
      %9320 = vmatpush1.bf16.msra.mxu0 %v8880
      %9321 = vmatprep.subr.bf16.mxu0 %v8885
      %9322 = vmatpush1.bf16.msra.mxu0 %v8884
      %9323 = vmatprep.subr.bf16.mxu0 %v8889
      %9324 = vmatpush1.bf16.msra.mxu0 %v8888
      %9325 = vmatprep.subr.bf16.mxu0 %v8893
      %9326 = vmatpush1.bf16.msra.mxu0 %v8892
      %9327 = vmatprep.subr.bf16.mxu0 %v8897
      %9328 = vmatpush1.bf16.msra.mxu0 %v8896
      %9329 = vmatprep.subr.bf16.mxu0 %v8901
      %9330 = vmatpush1.bf16.msra.mxu0 %v8900
      %9331 = vmatprep.subr.bf16.mxu0 %v8905
      %9332 = vmatpush1.bf16.msra.mxu0 %v8904
      %9333 = vmatprep.subr.bf16.mxu0 %v8909
      %9334 = vmatpush1.bf16.msra.mxu0 %v8908
      %9335 = vmatprep.subr.bf16.mxu0 %v8913
      %9336 = vmatpush1.bf16.msra.mxu0 %v8912
      %9337 = vmatprep.subr.bf16.mxu0 %v8917
      %9338 = vmatpush1.bf16.msra.mxu0 %v8916
      %9339 = vmatprep.subr.bf16.mxu0 %v8921
      %9340 = vmatpush1.bf16.msra.mxu0 %v8920
      %9341 = vmatprep.subr.bf16.mxu0 %v8925
      %9342 = vmatpush1.bf16.msra.mxu0 %v8924
      %9343 = vmatprep.subr.bf16.mxu0 %v8929
      %9344 = vmatpush1.bf16.msra.mxu0 %v8928
      %9345 = vmatprep.subr.bf16.mxu0 %v8933
      %9346 = vmatpush1.bf16.msra.mxu0 %v8932
      %9347 = vmatprep.mubr.bf16.mxu0 %v7633
      %9348 = vmatmul.mubr.bf16.gmra.mrb[0].mxu0 %v7632
      %v9349 = vpop.f32.mrb[0].mxu0
      %v9350 = vadd.f32 %v9309, %v9349
      %v9351 = vpop.f32.mrb[0].mxu0
      %v9352 = vadd.f32 %v9311, %v9351
      %v9353 = vpop.f32.mrb[0].mxu0
      %v9354 = vpop.f32.mrb[0].mxu0
      %9355 = vdwg.mxu0
      %9356 = vmatprep.subr.bf16.mxu0 %v8683
      %9357 = vmatpush1.bf16.msra.mxu0 %v8682
      %9358 = vmatprep.subr.bf16.mxu0 %v8687
      %9359 = vmatpush1.bf16.msra.mxu0 %v8686
      %9360 = vmatprep.subr.bf16.mxu0 %v8691
      %9361 = vmatpush1.bf16.msra.mxu0 %v8690
      %9362 = vmatprep.subr.bf16.mxu0 %v8695
      %9363 = vmatpush1.bf16.msra.mxu0 %v8694
      %9364 = vmatprep.subr.bf16.mxu0 %v8699
      %9365 = vmatpush1.bf16.msra.mxu0 %v8698
      %9366 = vmatprep.subr.bf16.mxu0 %v8703
      %9367 = vmatpush1.bf16.msra.mxu0 %v8702
      %9368 = vmatprep.subr.bf16.mxu0 %v8707
      %9369 = vmatpush1.bf16.msra.mxu0 %v8706
      %9370 = vmatprep.subr.bf16.mxu0 %v8711
      %9371 = vmatpush1.bf16.msra.mxu0 %v8710
      %9372 = vmatprep.subr.bf16.mxu0 %v8715
      %9373 = vmatpush1.bf16.msra.mxu0 %v8714
      %9374 = vmatprep.subr.bf16.mxu0 %v8719
      %9375 = vmatpush1.bf16.msra.mxu0 %v8718
      %9376 = vmatprep.subr.bf16.mxu0 %v8723
      %9377 = vmatpush1.bf16.msra.mxu0 %v8722
      %9378 = vmatprep.subr.bf16.mxu0 %v8727
      %9379 = vmatpush1.bf16.msra.mxu0 %v8726
      %9380 = vmatprep.subr.bf16.mxu0 %v8731
      %9381 = vmatpush1.bf16.msra.mxu0 %v8730
      %9382 = vmatprep.subr.bf16.mxu0 %v8735
      %9383 = vmatpush1.bf16.msra.mxu0 %v8734
      %9384 = vmatprep.subr.bf16.mxu0 %v8739
      %9385 = vmatpush1.bf16.msra.mxu0 %v8738
      %9386 = vmatprep.subr.bf16.mxu0 %v8743
      %9387 = vmatpush1.bf16.msra.mxu0 %v8742
      %9388 = vmatprep.mubr.bf16.mxu0 %v7627
      %9389 = vmatmul.mubr.bf16.gmra.mrb[0].mxu0 %v7626
      %v9390 = vpop.f32.mrb[0].mxu0
      %v9391 = vadd.f32 %v7903, %v9390
      %v9392 = vpop.f32.mrb[0].mxu0
      %v9393 = vadd.f32 %v7907, %v9392
      %v9394 = vpop.f32.mrb[0].mxu0
      %v9395 = vpop.f32.mrb[0].mxu0
      %9396 = vdwg.mxu0
      %9397 = vmatprep.subr.bf16.mxu0 %v8747
      %9398 = vmatpush1.bf16.msra.mxu0 %v8746
      %9399 = vmatprep.subr.bf16.mxu0 %v8751
      %9400 = vmatpush1.bf16.msra.mxu0 %v8750
      %9401 = vmatprep.subr.bf16.mxu0 %v8755
      %9402 = vmatpush1.bf16.msra.mxu0 %v8754
      %9403 = vmatprep.subr.bf16.mxu0 %v8759
      %9404 = vmatpush1.bf16.msra.mxu0 %v8758
      %9405 = vmatprep.subr.bf16.mxu0 %v8763
      %9406 = vmatpush1.bf16.msra.mxu0 %v8762
      %9407 = vmatprep.subr.bf16.mxu0 %v8767
      %9408 = vmatpush1.bf16.msra.mxu0 %v8766
      %9409 = vmatprep.subr.bf16.mxu0 %v8771
      %9410 = vmatpush1.bf16.msra.mxu0 %v8770
      %9411 = vmatprep.subr.bf16.mxu0 %v8775
      %9412 = vmatpush1.bf16.msra.mxu0 %v8774
      %9413 = vmatprep.subr.bf16.mxu0 %v8779
      %9414 = vmatpush1.bf16.msra.mxu0 %v8778
      %9415 = vmatprep.subr.bf16.mxu0 %v8783
      %9416 = vmatpush1.bf16.msra.mxu0 %v8782
      %9417 = vmatprep.subr.bf16.mxu0 %v8787
      %9418 = vmatpush1.bf16.msra.mxu0 %v8786
      %9419 = vmatprep.subr.bf16.mxu0 %v8791
      %9420 = vmatpush1.bf16.msra.mxu0 %v8790
      %9421 = vmatprep.subr.bf16.mxu0 %v8795
      %9422 = vmatpush1.bf16.msra.mxu0 %v8794
      %9423 = vmatprep.subr.bf16.mxu0 %v8799
      %9424 = vmatpush1.bf16.msra.mxu0 %v8798
      %9425 = vmatprep.subr.bf16.mxu0 %v8803
      %9426 = vmatpush1.bf16.msra.mxu0 %v8802
      %9427 = vmatprep.subr.bf16.mxu0 %v8807
      %9428 = vmatpush1.bf16.msra.mxu0 %v8806
      %9429 = vmatprep.mubr.bf16.mxu0 %v7629
      %9430 = vmatmul.mubr.bf16.gmra.mrb[0].mxu0 %v7628
      %v9431 = vpop.f32.mrb[0].mxu0
      %v9432 = vadd.f32 %v9391, %v9431
      %v9433 = vpop.f32.mrb[0].mxu0
      %v9434 = vadd.f32 %v9393, %v9433
      %v9435 = vpop.f32.mrb[0].mxu0
      %v9436 = vpop.f32.mrb[0].mxu0
      %9437 = vdwg.mxu0
      %9438 = vmatprep.subr.bf16.mxu0 %v8811
      %9439 = vmatpush1.bf16.msra.mxu0 %v8810
      %9440 = vmatprep.subr.bf16.mxu0 %v8815
      %9441 = vmatpush1.bf16.msra.mxu0 %v8814
      %9442 = vmatprep.subr.bf16.mxu0 %v8819
      %9443 = vmatpush1.bf16.msra.mxu0 %v8818
      %9444 = vmatprep.subr.bf16.mxu0 %v8823
      %9445 = vmatpush1.bf16.msra.mxu0 %v8822
      %9446 = vmatprep.subr.bf16.mxu0 %v8827
      %9447 = vmatpush1.bf16.msra.mxu0 %v8826
      %9448 = vmatprep.subr.bf16.mxu0 %v8831
      %9449 = vmatpush1.bf16.msra.mxu0 %v8830
      %9450 = vmatprep.subr.bf16.mxu0 %v8835
      %9451 = vmatpush1.bf16.msra.mxu0 %v8834
      %9452 = vmatprep.subr.bf16.mxu0 %v8839
      %9453 = vmatpush1.bf16.msra.mxu0 %v8838
      %9454 = vmatprep.subr.bf16.mxu0 %v8843
      %9455 = vmatpush1.bf16.msra.mxu0 %v8842
      %9456 = vmatprep.subr.bf16.mxu0 %v8847
      %9457 = vmatpush1.bf16.msra.mxu0 %v8846
      %9458 = vmatprep.subr.bf16.mxu0 %v8851
      %9459 = vmatpush1.bf16.msra.mxu0 %v8850
      %9460 = vmatprep.subr.bf16.mxu0 %v8855
      %9461 = vmatpush1.bf16.msra.mxu0 %v8854
      %9462 = vmatprep.subr.bf16.mxu0 %v8859
      %9463 = vmatpush1.bf16.msra.mxu0 %v8858
      %9464 = vmatprep.subr.bf16.mxu0 %v8863
      %9465 = vmatpush1.bf16.msra.mxu0 %v8862
      %9466 = vmatprep.subr.bf16.mxu0 %v8867
      %9467 = vmatpush1.bf16.msra.mxu0 %v8866
      %9468 = vmatprep.subr.bf16.mxu0 %v8871
      %9469 = vmatpush1.bf16.msra.mxu0 %v8870
      %9470 = vmatprep.mubr.bf16.mxu0 %v7631
      %9471 = vmatmul.mubr.bf16.gmra.mrb[0].mxu0 %v7630
      %v9472 = vpop.f32.mrb[0].mxu0
      %v9473 = vadd.f32 %v9432, %v9472
      %v9474 = vpop.f32.mrb[0].mxu0
      %v9475 = vadd.f32 %v9434, %v9474
      %v9476 = vpop.f32.mrb[0].mxu0
      %v9477 = vpop.f32.mrb[0].mxu0
      %9478 = vdwg.mxu0
      %9479 = vmatprep.subr.bf16.mxu0 %v8875
      %9480 = vmatpush1.bf16.msra.mxu0 %v8874
      %9481 = vmatprep.subr.bf16.mxu0 %v8879
      %9482 = vmatpush1.bf16.msra.mxu0 %v8878
      %9483 = vmatprep.subr.bf16.mxu0 %v8883
      %9484 = vmatpush1.bf16.msra.mxu0 %v8882
      %9485 = vmatprep.subr.bf16.mxu0 %v8887
      %9486 = vmatpush1.bf16.msra.mxu0 %v8886
      %9487 = vmatprep.subr.bf16.mxu0 %v8891
      %9488 = vmatpush1.bf16.msra.mxu0 %v8890
      %9489 = vmatprep.subr.bf16.mxu0 %v8895
      %9490 = vmatpush1.bf16.msra.mxu0 %v8894
      %9491 = vmatprep.subr.bf16.mxu0 %v8899
      %9492 = vmatpush1.bf16.msra.mxu0 %v8898
      %9493 = vmatprep.subr.bf16.mxu0 %v8903
      %9494 = vmatpush1.bf16.msra.mxu0 %v8902
      %9495 = vmatprep.subr.bf16.mxu0 %v8907
      %9496 = vmatpush1.bf16.msra.mxu0 %v8906
      %9497 = vmatprep.subr.bf16.mxu0 %v8911
      %9498 = vmatpush1.bf16.msra.mxu0 %v8910
      %9499 = vmatprep.subr.bf16.mxu0 %v8915
      %9500 = vmatpush1.bf16.msra.mxu0 %v8914
      %9501 = vmatprep.subr.bf16.mxu0 %v8919
      %9502 = vmatpush1.bf16.msra.mxu0 %v8918
      %9503 = vmatprep.subr.bf16.mxu0 %v8923
      %9504 = vmatpush1.bf16.msra.mxu0 %v8922
      %9505 = vmatprep.subr.bf16.mxu0 %v8927
      %9506 = vmatpush1.bf16.msra.mxu0 %v8926
      %9507 = vmatprep.subr.bf16.mxu0 %v8931
      %9508 = vmatpush1.bf16.msra.mxu0 %v8930
      %9509 = vmatprep.subr.bf16.mxu0 %v8935
      %9510 = vmatpush1.bf16.msra.mxu0 %v8934
      %9511 = vmatprep.mubr.bf16.mxu0 %v7633
      %9512 = vmatmul.mubr.bf16.gmra.mrb[0].mxu0 %v7632
      %v9513 = vpop.f32.mrb[0].mxu0
      %v9514 = vadd.f32 %v9473, %v9513
      %v9515 = vpop.f32.mrb[0].mxu0
      %v9516 = vadd.f32 %v9475, %v9515
      %v9517 = vpop.f32.mrb[0].mxu0
      %v9518 = vpop.f32.mrb[0].mxu0
      %9519 = vdwg.mxu0
      %v9520 = vmax.f32 %v9350, 0.0
      %v9521 = vmax.f32 %v9352, 0.0
      %v9522 = vmax.f32 %v9514, 0.0
      %v9523 = vmax.f32 %v9516, 0.0
      %v9524 = vpack.c.bf16 %v9520, %v9520
      %v9525 = vpack.c.bf16 %v9521, %v9521
      %v9526 = vpack.c.bf16 %v9522, %v9522
      %v9527 = vpack.c.bf16 %v9523, %v9523
      %v9528 = vld [vmem:[%s819] sm:$0xf]
      %v9529 = vld [vmem:[%s819 + $0x4] sm:$0xf]
      %v9530 = vld [vmem:[%s819 + $0x8] sm:$0xf]
      %v9531 = vld [vmem:[%s819 + $0xc] sm:$0xf]
      %v9532 = vld [vmem:[%s819 + $0x10] sm:$0xf]
      %v9533 = vld [vmem:[%s819 + $0x14] sm:$0xf]
      %v9534 = vld [vmem:[%s819 + $0x18] sm:$0xf]
      %v9535 = vld [vmem:[%s819 + $0x1c] sm:$0xf]
      %v9536 = vld [vmem:[%s819 + $0x20] sm:$0xf]
      %v9537 = vld [vmem:[%s819 + $0x24] sm:$0xf]
      %v9538 = vld [vmem:[%s819 + $0x28] sm:$0xf]
      %v9539 = vld [vmem:[%s819 + $0x2c] sm:$0xf]
      %v9540 = vld [vmem:[%s819 + $0x30] sm:$0xf]
      %v9541 = vld [vmem:[%s819 + $0x34] sm:$0xf]
      %v9542 = vld [vmem:[%s819 + $0x38] sm:$0xf]
      %v9543 = vld [vmem:[%s819 + $0x3c] sm:$0xf]
      %v9544 = vld [vmem:[%s819 + $0x40] sm:$0xf]
      %v9545 = vld [vmem:[%s819 + $0x44] sm:$0xf]
      %v9546 = vld [vmem:[%s819 + $0x48] sm:$0xf]
      %v9547 = vld [vmem:[%s819 + $0x4c] sm:$0xf]
      %v9548 = vld [vmem:[%s819 + $0x50] sm:$0xf]
      %v9549 = vld [vmem:[%s819 + $0x54] sm:$0xf]
      %v9550 = vld [vmem:[%s819 + $0x58] sm:$0xf]
      %v9551 = vld [vmem:[%s819 + $0x5c] sm:$0xf]
      %v9552 = vld [vmem:[%s819 + $0x60] sm:$0xf]
      %v9553 = vld [vmem:[%s819 + $0x64] sm:$0xf]
      %v9554 = vld [vmem:[%s819 + $0x68] sm:$0xf]
      %v9555 = vld [vmem:[%s819 + $0x6c] sm:$0xf]
      %v9556 = vld [vmem:[%s819 + $0x70] sm:$0xf]
      %v9557 = vld [vmem:[%s819 + $0x74] sm:$0xf]
      %v9558 = vld [vmem:[%s819 + $0x78] sm:$0xf]
      %v9559 = vld [vmem:[%s819 + $0x7c] sm:$0xf]
      %v9560 = vld [vmem:[%s819 + $0x80] sm:$0xf]
      %v9561 = vld [vmem:[%s819 + $0x84] sm:$0xf]
      %v9562 = vld [vmem:[%s819 + $0x88] sm:$0xf]
      %v9563 = vld [vmem:[%s819 + $0x8c] sm:$0xf]
      %v9564 = vld [vmem:[%s819 + $0x90] sm:$0xf]
      %v9565 = vld [vmem:[%s819 + $0x94] sm:$0xf]
      %v9566 = vld [vmem:[%s819 + $0x98] sm:$0xf]
      %v9567 = vld [vmem:[%s819 + $0x9c] sm:$0xf]
      %v9568 = vld [vmem:[%s819 + $0xa0] sm:$0xf]
      %v9569 = vld [vmem:[%s819 + $0xa4] sm:$0xf]
      %v9570 = vld [vmem:[%s819 + $0xa8] sm:$0xf]
      %v9571 = vld [vmem:[%s819 + $0xac] sm:$0xf]
      %v9572 = vld [vmem:[%s819 + $0xb0] sm:$0xf]
      %v9573 = vld [vmem:[%s819 + $0xb4] sm:$0xf]
      %v9574 = vld [vmem:[%s819 + $0xb8] sm:$0xf]
      %v9575 = vld [vmem:[%s819 + $0xbc] sm:$0xf]
      %v9576 = vld [vmem:[%s819 + $0xc0] sm:$0xf]
      %v9577 = vld [vmem:[%s819 + $0xc4] sm:$0xf]
      %v9578 = vld [vmem:[%s819 + $0xc8] sm:$0xf]
      %v9579 = vld [vmem:[%s819 + $0xcc] sm:$0xf]
      %v9580 = vld [vmem:[%s819 + $0xd0] sm:$0xf]
      %v9581 = vld [vmem:[%s819 + $0xd4] sm:$0xf]
      %v9582 = vld [vmem:[%s819 + $0xd8] sm:$0xf]
      %v9583 = vld [vmem:[%s819 + $0xdc] sm:$0xf]
      %v9584 = vld [vmem:[%s819 + $0xe0] sm:$0xf]
      %v9585 = vld [vmem:[%s819 + $0xe4] sm:$0xf]
      %v9586 = vld [vmem:[%s819 + $0xe8] sm:$0xf]
      %v9587 = vld [vmem:[%s819 + $0xec] sm:$0xf]
      %v9588 = vld [vmem:[%s819 + $0xf0] sm:$0xf]
      %v9589 = vld [vmem:[%s819 + $0xf4] sm:$0xf]
      %v9590 = vld [vmem:[%s819 + $0xf8] sm:$0xf]
      %v9591 = vld [vmem:[%s819 + $0xfc] sm:$0xf]
      %v9592 = vld [vmem:[%s843] sm:$0x1]
      %v9594 = vlaneseq
      %v9595 = vshrl.u32 %v9594, 7
      %v9596 = vsub.s32 0, %v9595
      %v9597 = vrot.slane %v9592, %v9596
      %v9663 = vunpack.c.l.b16 %v9528
      %v9664 = vunpack.c.l.b16 %v9529
      %v9665 = vunpack.c.l.b16 %v9530
      %v9666 = vunpack.c.l.b16 %v9531
      %v9667 = vunpack.c.l.b16 %v9532
      %v9668 = vunpack.c.l.b16 %v9533
      %v9669 = vunpack.c.l.b16 %v9534
      %v9670 = vunpack.c.l.b16 %v9535
      %v9671 = vunpack.c.l.b16 %v9536
      %v9672 = vunpack.c.l.b16 %v9537
      %v9673 = vunpack.c.l.b16 %v9538
      %v9674 = vunpack.c.l.b16 %v9539
      %v9675 = vunpack.c.l.b16 %v9540
      %v9676 = vunpack.c.l.b16 %v9541
      %v9677 = vunpack.c.l.b16 %v9542
      %v9678 = vunpack.c.l.b16 %v9543
      %v9679 = vunpack.c.l.b16 %v9544
      %v9680 = vunpack.c.l.b16 %v9545
      %v9681 = vunpack.c.l.b16 %v9546
      %v9682 = vunpack.c.l.b16 %v9547
      %v9683 = vunpack.c.l.b16 %v9548
      %v9684 = vunpack.c.l.b16 %v9549
      %v9685 = vunpack.c.l.b16 %v9550
      %v9686 = vunpack.c.l.b16 %v9551
      %v9687 = vunpack.c.l.b16 %v9552
      %v9688 = vunpack.c.l.b16 %v9553
      %v9689 = vunpack.c.l.b16 %v9554
      %v9690 = vunpack.c.l.b16 %v9555
      %v9691 = vunpack.c.l.b16 %v9556
      %v9692 = vunpack.c.l.b16 %v9557
      %v9693 = vunpack.c.l.b16 %v9558
      %v9694 = vunpack.c.l.b16 %v9559
      %v9695 = vunpack.c.l.b16 %v9560
      %v9696 = vunpack.c.l.b16 %v9561
      %v9697 = vunpack.c.l.b16 %v9562
      %v9698 = vunpack.c.l.b16 %v9563
      %v9699 = vunpack.c.l.b16 %v9564
      %v9700 = vunpack.c.l.b16 %v9565
      %v9701 = vunpack.c.l.b16 %v9566
      %v9702 = vunpack.c.l.b16 %v9567
      %v9703 = vunpack.c.l.b16 %v9568
      %v9704 = vunpack.c.l.b16 %v9569
      %v9705 = vunpack.c.l.b16 %v9570
      %v9706 = vunpack.c.l.b16 %v9571
      %v9707 = vunpack.c.l.b16 %v9572
      %v9708 = vunpack.c.l.b16 %v9573
      %v9709 = vunpack.c.l.b16 %v9574
      %v9710 = vunpack.c.l.b16 %v9575
      %v9711 = vunpack.c.l.b16 %v9576
      %v9712 = vunpack.c.l.b16 %v9577
      %v9713 = vunpack.c.l.b16 %v9578
      %v9714 = vunpack.c.l.b16 %v9579
      %v9715 = vunpack.c.l.b16 %v9580
      %v9716 = vunpack.c.l.b16 %v9581
      %v9717 = vunpack.c.l.b16 %v9582
      %v9718 = vunpack.c.l.b16 %v9583
      %v9719 = vunpack.c.l.b16 %v9584
      %v9720 = vunpack.c.l.b16 %v9585
      %v9721 = vunpack.c.l.b16 %v9586
      %v9722 = vunpack.c.l.b16 %v9587
      %v9723 = vunpack.c.l.b16 %v9588
      %v9724 = vunpack.c.l.b16 %v9589
      %v9725 = vunpack.c.l.b16 %v9590
      %v9726 = vunpack.c.l.b16 %v9591
      %v9727 = vpack.c.b16 %v9664, %v9663
      %v9728 = vpack.c.b16 %v9666, %v9665
      %v9729 = vpack.c.b16 %v9668, %v9667
      %v9730 = vpack.c.b16 %v9670, %v9669
      %v9731 = vpack.c.b16 %v9672, %v9671
      %v9732 = vpack.c.b16 %v9674, %v9673
      %v9733 = vpack.c.b16 %v9676, %v9675
      %v9734 = vpack.c.b16 %v9678, %v9677
      %v9735 = vpack.c.b16 %v9680, %v9679
      %v9736 = vpack.c.b16 %v9682, %v9681
      %v9737 = vpack.c.b16 %v9684, %v9683
      %v9738 = vpack.c.b16 %v9686, %v9685
      %v9739 = vpack.c.b16 %v9688, %v9687
      %v9740 = vpack.c.b16 %v9690, %v9689
      %v9741 = vpack.c.b16 %v9692, %v9691
      %v9742 = vpack.c.b16 %v9694, %v9693
      %v9743 = vpack.c.b16 %v9696, %v9695
      %v9744 = vpack.c.b16 %v9698, %v9697
      %v9745 = vpack.c.b16 %v9700, %v9699
      %v9746 = vpack.c.b16 %v9702, %v9701
      %v9747 = vpack.c.b16 %v9704, %v9703
      %v9748 = vpack.c.b16 %v9706, %v9705
      %v9749 = vpack.c.b16 %v9708, %v9707
      %v9750 = vpack.c.b16 %v9710, %v9709
      %v9751 = vpack.c.b16 %v9712, %v9711
      %v9752 = vpack.c.b16 %v9714, %v9713
      %v9753 = vpack.c.b16 %v9716, %v9715
      %v9754 = vpack.c.b16 %v9718, %v9717
      %v9755 = vpack.c.b16 %v9720, %v9719
      %v9756 = vpack.c.b16 %v9722, %v9721
      %v9757 = vpack.c.b16 %v9724, %v9723
      %v9758 = vpack.c.b16 %v9726, %v9725
      %9791 = vmatprep.subr.bf16.mxu0 0
      %9792 = vmatpush1.bf16.msra.mxu0 %v9727
      %9793 = vmatprep.subr.bf16.mxu0 0
      %9794 = vmatpush1.bf16.msra.mxu0 %v9728
      %9795 = vmatprep.subr.bf16.mxu0 0
      %9796 = vmatpush1.bf16.msra.mxu0 %v9729
      %9797 = vmatprep.subr.bf16.mxu0 0
      %9798 = vmatpush1.bf16.msra.mxu0 %v9730
      %9799 = vmatprep.subr.bf16.mxu0 0
      %9800 = vmatpush1.bf16.msra.mxu0 %v9731
      %9801 = vmatprep.subr.bf16.mxu0 0
      %9802 = vmatpush1.bf16.msra.mxu0 %v9732
      %9803 = vmatprep.subr.bf16.mxu0 0
      %9804 = vmatpush1.bf16.msra.mxu0 %v9733
      %9805 = vmatprep.subr.bf16.mxu0 0
      %9806 = vmatpush1.bf16.msra.mxu0 %v9734
      %9807 = vmatprep.subr.bf16.mxu0 0
      %9808 = vmatpush1.bf16.msra.mxu0 %v9735
      %9809 = vmatprep.subr.bf16.mxu0 0
      %9810 = vmatpush1.bf16.msra.mxu0 %v9736
      %9811 = vmatprep.subr.bf16.mxu0 0
      %9812 = vmatpush1.bf16.msra.mxu0 %v9737
      %9813 = vmatprep.subr.bf16.mxu0 0
      %9814 = vmatpush1.bf16.msra.mxu0 %v9738
      %9815 = vmatprep.subr.bf16.mxu0 0
      %9816 = vmatpush1.bf16.msra.mxu0 %v9739
      %9817 = vmatprep.subr.bf16.mxu0 0
      %9818 = vmatpush1.bf16.msra.mxu0 %v9740
      %9819 = vmatprep.subr.bf16.mxu0 0
      %9820 = vmatpush1.bf16.msra.mxu0 %v9741
      %9821 = vmatprep.subr.bf16.mxu0 0
      %9822 = vmatpush1.bf16.msra.mxu0 %v9742
      %9823 = vmatprep.mubr.bf16.mxu0 %v9525
      %9824 = vmatmul.mubr.bf16.gmra.mrb[0].mxu0 %v9524
      %v9825 = vpop.f32.mrb[0].mxu0
      %v9826 = vadd.f32 %v9597, %v9825
      %v9827 = vpop.f32.mrb[0].mxu0
      %v9828 = vpop.f32.mrb[0].mxu0
      %v9829 = vpop.f32.mrb[0].mxu0
      %9830 = vdwg.mxu0
      %9831 = vmatprep.subr.bf16.mxu0 0
      %9832 = vmatpush1.bf16.msra.mxu0 %v9743
      %9833 = vmatprep.subr.bf16.mxu0 0
      %9834 = vmatpush1.bf16.msra.mxu0 %v9744
      %9835 = vmatprep.subr.bf16.mxu0 0
      %9836 = vmatpush1.bf16.msra.mxu0 %v9745
      %9837 = vmatprep.subr.bf16.mxu0 0
      %9838 = vmatpush1.bf16.msra.mxu0 %v9746
      %9839 = vmatprep.subr.bf16.mxu0 0
      %9840 = vmatpush1.bf16.msra.mxu0 %v9747
      %9841 = vmatprep.subr.bf16.mxu0 0
      %9842 = vmatpush1.bf16.msra.mxu0 %v9748
      %9843 = vmatprep.subr.bf16.mxu0 0
      %9844 = vmatpush1.bf16.msra.mxu0 %v9749
      %9845 = vmatprep.subr.bf16.mxu0 0
      %9846 = vmatpush1.bf16.msra.mxu0 %v9750
      %9847 = vmatprep.subr.bf16.mxu0 0
      %9848 = vmatpush1.bf16.msra.mxu0 %v9751
      %9849 = vmatprep.subr.bf16.mxu0 0
      %9850 = vmatpush1.bf16.msra.mxu0 %v9752
      %9851 = vmatprep.subr.bf16.mxu0 0
      %9852 = vmatpush1.bf16.msra.mxu0 %v9753
      %9853 = vmatprep.subr.bf16.mxu0 0
      %9854 = vmatpush1.bf16.msra.mxu0 %v9754
      %9855 = vmatprep.subr.bf16.mxu0 0
      %9856 = vmatpush1.bf16.msra.mxu0 %v9755
      %9857 = vmatprep.subr.bf16.mxu0 0
      %9858 = vmatpush1.bf16.msra.mxu0 %v9756
      %9859 = vmatprep.subr.bf16.mxu0 0
      %9860 = vmatpush1.bf16.msra.mxu0 %v9757
      %9861 = vmatprep.subr.bf16.mxu0 0
      %9862 = vmatpush1.bf16.msra.mxu0 %v9758
      %9863 = vmatprep.mubr.bf16.mxu0 %v9527
      %9864 = vmatmul.mubr.bf16.gmra.mrb[0].mxu0 %v9526
      %v9865 = vpop.f32.mrb[0].mxu0
      %v9866 = vadd.f32 %v9826, %v9865
      %v9867 = vpop.f32.mrb[0].mxu0
      %v9868 = vpop.f32.mrb[0].mxu0
      %v9869 = vpop.f32.mrb[0].mxu0
      %9870 = vdwg.mxu0
      %v9871 = vmax.f32 %v9866, 0.0
      %v9872 = vpack.c.bf16 %v9871, %v9871
      %v9873 = vld [vmem:[%s824] sm:$0xf]
      %v9874 = vld [vmem:[%s824 + $0x4] sm:$0xf]
      %v9875 = vld [vmem:[%s824 + $0x8] sm:$0xf]
      %v9876 = vld [vmem:[%s824 + $0xc] sm:$0xf]
      %v9877 = vld [vmem:[%s824 + $0x10] sm:$0xf]
      %v9878 = vld [vmem:[%s824 + $0x14] sm:$0xf]
      %v9879 = vld [vmem:[%s824 + $0x18] sm:$0xf]
      %v9880 = vld [vmem:[%s824 + $0x1c] sm:$0xf]
      %v9881 = vld [vmem:[%s824 + $0x20] sm:$0xf]
      %v9882 = vld [vmem:[%s824 + $0x24] sm:$0xf]
      %v9883 = vld [vmem:[%s824 + $0x28] sm:$0xf]
      %v9884 = vld [vmem:[%s824 + $0x2c] sm:$0xf]
      %v9885 = vld [vmem:[%s824 + $0x30] sm:$0xf]
      %v9886 = vld [vmem:[%s824 + $0x34] sm:$0xf]
      %v9887 = vld [vmem:[%s824 + $0x38] sm:$0xf]
      %v9888 = vld [vmem:[%s824 + $0x3c] sm:$0xf]
      %v9889 = vld [vmem:[%s846] sm:$0x1]
      %v9891 = vlaneseq
      %v9892 = vshrl.u32 %v9891, 7
      %v9893 = vsub.s32 0, %v9892
      %v9894 = vrot.slane %v9889, %v9893
      %v9912 = vunpack.c.l.b16 %v9873
      %v9913 = vunpack.c.l.b16 %v9874
      %v9914 = vunpack.c.l.b16 %v9875
      %v9915 = vunpack.c.l.b16 %v9876
      %v9916 = vunpack.c.l.b16 %v9877
      %v9917 = vunpack.c.l.b16 %v9878
      %v9918 = vunpack.c.l.b16 %v9879
      %v9919 = vunpack.c.l.b16 %v9880
      %v9920 = vunpack.c.l.b16 %v9881
      %v9921 = vunpack.c.l.b16 %v9882
      %v9922 = vunpack.c.l.b16 %v9883
      %v9923 = vunpack.c.l.b16 %v9884
      %v9924 = vunpack.c.l.b16 %v9885
      %v9925 = vunpack.c.l.b16 %v9886
      %v9926 = vunpack.c.l.b16 %v9887
      %v9927 = vunpack.c.l.b16 %v9888
      %v9928 = vpack.c.b16 %v9913, %v9912
      %v9929 = vpack.c.b16 %v9915, %v9914
      %v9930 = vpack.c.b16 %v9917, %v9916
      %v9931 = vpack.c.b16 %v9919, %v9918
      %v9932 = vpack.c.b16 %v9921, %v9920
      %v9933 = vpack.c.b16 %v9923, %v9922
      %v9934 = vpack.c.b16 %v9925, %v9924
      %v9935 = vpack.c.b16 %v9927, %v9926
      %9944 = vmatprep.subr.bf16.mxu0 0
      %9945 = vmatpush1.bf16.msra.mxu0 %v9928
      %9946 = vmatprep.subr.bf16.mxu0 0
      %9947 = vmatpush1.bf16.msra.mxu0 %v9929
      %9948 = vmatprep.subr.bf16.mxu0 0
      %9949 = vmatpush1.bf16.msra.mxu0 %v9930
      %9950 = vmatprep.subr.bf16.mxu0 0
      %9951 = vmatpush1.bf16.msra.mxu0 %v9931
      %9952 = vmatprep.subr.bf16.mxu0 0
      %9953 = vmatpush1.bf16.msra.mxu0 %v9932
      %9954 = vmatprep.subr.bf16.mxu0 0
      %9955 = vmatpush1.bf16.msra.mxu0 %v9933
      %9956 = vmatprep.subr.bf16.mxu0 0
      %9957 = vmatpush1.bf16.msra.mxu0 %v9934
      %9958 = vmatprep.subr.bf16.mxu0 0
      %9959 = vmatpush1.bf16.msra.mxu0 %v9935
      %9960 = vmatprep.subr.bf16.mxu0 0
      %9961 = vmatpush1.bf16.msra.mxu0 0
      %9962 = vmatprep.subr.bf16.mxu0 0
      %9963 = vmatpush1.bf16.msra.mxu0 0
      %9964 = vmatprep.subr.bf16.mxu0 0
      %9965 = vmatpush1.bf16.msra.mxu0 0
      %9966 = vmatprep.subr.bf16.mxu0 0
      %9967 = vmatpush1.bf16.msra.mxu0 0
      %9968 = vmatprep.subr.bf16.mxu0 0
      %9969 = vmatpush1.bf16.msra.mxu0 0
      %9970 = vmatprep.subr.bf16.mxu0 0
      %9971 = vmatpush1.bf16.msra.mxu0 0
      %9972 = vmatprep.subr.bf16.mxu0 0
      %9973 = vmatpush1.bf16.msra.mxu0 0
      %9974 = vmatprep.subr.bf16.mxu0 0
      %9975 = vmatpush1.bf16.msra.mxu0 0
      %9976 = vmatprep.mubr.bf16.mxu0 0
      %9977 = vmatmul.mubr.bf16.gmra.mrb[0].mxu0 %v9872
      %v9978 = vpop.f32.mrb[0].mxu0
      %v9979 = vadd.f32 %v9894, %v9978
      %v9980 = vpop.f32.mrb[0].mxu0
      %v9981 = vpop.f32.mrb[0].mxu0
      %v9982 = vpop.f32.mrb[0].mxu0
      %9983 = vdwg.mxu0
      %vm9984 = vcmask 33792
      %9985 = vst.msk [vmem:[%s850] sm:$0x3] %vm9984, %v9979
      %p9986 = scmp.lt.s32.totalorder %s32, 1
      %s9987 = scalar_select %p9986, %s32, 1
      %s9988 = smul.addr %s9987, 2
      %s9989 = scalar_lea.vmem %s21, %s9988
      // Predicated region
      $region105: #{sheepherding_a2c_forward.1} parent=103 // pred_check
        %p9990 = pneg %p551
      $region106: #{sheepherding_a2c_forward.1} parent=103 // pred_check_branch
        %9992 = sbr.rel (%p9990) target = $region108
      $region107: #{sheepherding_a2c_forward.1} parent=103 // pred_region
        _
      $region108: #{sheepherding_a2c_forward.1} parent=103 // pred_fallthru
        _
    $region104: #{sheepherding_a2c_forward.1} parent=5 // pred_fallthru
      _
    %p9993 = scmp.le.s32.totalorder 2, %s27
    // Predicated region
    $region109: #{sheepherding_a2c_forward.1} parent=5 // pred_check
      %p9994 = pneg %p9993
    $region110: #{sheepherding_a2c_forward.1} parent=5 // pred_check_branch
      %9996 = sbr.rel (%p9994) target = $region112
    $region111: #{sheepherding_a2c_forward.1} parent=5 // pred_region
      %s9997 = ssub.s32 %s27, 2
      // Predicated region
      $region113: #{sheepherding_a2c_forward.1} parent=111 // pred_check
        %p9998 = pneg %p557
      $region114: #{sheepherding_a2c_forward.1} parent=111 // pred_check_branch
        %10000 = sbr.rel (%p9998) target = $region116
      $region115: #{sheepherding_a2c_forward.1} parent=111 // pred_region
        %p10001 = scmp.lt.s32.totalorder %s33, 1
        %s10002 = scalar_select %p10001, %s33, 1
        %s10003 = smul.addr %s10002, 2
        %s10004 = scalar_lea.vmem %s21, %s10003
      $region116: #{sheepherding_a2c_forward.1} parent=111 // pred_fallthru
        _
    $region112: #{sheepherding_a2c_forward.1} parent=5 // pred_fallthru
      _
  $region6: #{sheepherding_a2c_forward.1} parent=0 // loop_footer
    %s31 = sadd.s32 1, %s27
  $region7: #{sheepherding_a2c_forward.1} parent=0 // loop_footer_branch
    %26 = sbr.rel target = $region3
  $region8: #{sheepherding_a2c_forward.1} parent=0 // loop_exit
    _

</llo_original>
